<compile_context>
chip_gen: v7x
topology: tpu7x:2x2x1
jax: 0.10.0
libtpu: 0.0.40
codegen_flags: <defaults>
</compile_context>

<pallas_src>
import functools
import math

import jax
import jax.numpy as jnp
from jax.experimental import pallas as pl
from jax.experimental.pallas import tpu as pltpu

LN_EPS = 1e-5


# ----------------------------------------------------------------------------
# In-kernel math helpers (operate on jnp values already loaded from refs)
# ----------------------------------------------------------------------------
def _gelu_tanh(x):
    # tanh-approximate GELU (EUP transcendental); |err| vs exact erf ~4e-4.
    c = math.sqrt(2.0 / math.pi)
    return 0.5 * x * (1.0 + jnp.tanh(c * (x + 0.044715 * x * x * x)))


def _layernorm(x, g, b):
    mu = jnp.mean(x, axis=-1, keepdims=True)
    var = jnp.mean(jnp.square(x - mu), axis=-1, keepdims=True)
    return (x - mu) * jax.lax.rsqrt(var + LN_EPS) * g + b


def _cast(x, dt):
    return x if dt is None else x.astype(dt)


def _mm(a, b, dt):
    # MXU matmul with optional operand cast (f32 accumulation either way).
    return jnp.dot(_cast(a, dt), _cast(b, dt), preferred_element_type=jnp.float32)


def _softmax_lastdim(dots):
    dots = dots - jnp.max(dots, axis=-1, keepdims=True)
    e = jnp.exp(dots)
    return e * pl.reciprocal(jnp.sum(e, axis=-1, keepdims=True), approx=True)


# ----------------------------------------------------------------------------
# Sub-layer bodies
# ----------------------------------------------------------------------------
def _spatial_attn_residual(x4, g, b, wqkv, wo, bo, heads, dim_head, scale, dt):
    """Residual(PreNorm(Attention)) with sequences along J.  x4: (Bb,T,J,D)."""
    Bb, T, J, D = x4.shape
    inner = heads * dim_head
    S = Bb * T
    M = S * J

    x2 = x4.reshape(M, D)                                   # J=8 sublane-aligned merge
    xn = _layernorm(x2, g, b)
    qkv = _mm(xn, wqkv, dt).reshape(S, J, 3 * inner)

    acc = None
    for h in range(heads):
        q = qkv[:, :, h * dim_head:(h + 1) * dim_head]
        k = qkv[:, :, inner + h * dim_head: inner + (h + 1) * dim_head]
        v = qkv[:, :, 2 * inner + h * dim_head: 2 * inner + (h + 1) * dim_head]
        dots = jnp.einsum('sid,sjd->sij', _cast(q, dt), _cast(k, dt),
                          preferred_element_type=jnp.float32) * scale
        p = _softmax_lastdim(dots)
        ho = jnp.einsum('sij,sjd->sid', _cast(p, dt), _cast(v, dt),
                        preferred_element_type=jnp.float32)            # (S,J,dh)
        # Per-head accumulation into the output projection instead of a
        # lane-wise concat of 8-wide head slabs.
        c = _mm(ho.reshape(M, dim_head), wo[h * dim_head:(h + 1) * dim_head, :], dt)
        acc = c if acc is None else acc + c
    return (x2 + acc + bo).reshape(Bb, T, J, D)


def _temporal_attn_proj(x4, g, b, wqkv, wo, heads, dim_head, scale, dt):
    """Attention output (incl. Wo, excl. bias/residual) with sequences along T,
    computed without transposing the activation.  Returns a list of T arrays
    of shape (Bb, J, D) (one per query frame t)."""
    Bb, T, J, D = x4.shape
    inner = heads * dim_head
    M = Bb * T * J

    x2 = x4.reshape(M, D)
    xn = _layernorm(x2, g, b)
    qkv = _mm(xn, wqkv, dt).reshape(Bb, T, J, 3 * inner)

    proj = [None] * T
    for h in range(heads):
        q = qkv[..., h * dim_head:(h + 1) * dim_head]                    # (Bb,T,J,dh)
        k = qkv[..., inner + h * dim_head: inner + (h + 1) * dim_head]
        v = qkv[..., 2 * inner + h * dim_head: 2 * inner + (h + 1) * dim_head]
        wo_h = wo[h * dim_head:(h + 1) * dim_head, :]                    # (dh, D)
        for t in range(T):                      # query frame
            q_t = q[:, t]                                                # (Bb,J,dh)
            scores = [jnp.sum(q_t * k[:, s], axis=-1, keepdims=True) * scale
                      for s in range(T)]                                 # T x (Bb,J,1)
            m = scores[0]
            for s in range(1, T):
                m = jnp.maximum(m, scores[s])
            es = [jnp.exp(sc - m) for sc in scores]
            den = es[0]
            for s in range(1, T):
                den = den + es[s]
            inv = pl.reciprocal(den, approx=True)
            o_t = es[0] * inv * v[:, 0]
            for s in range(1, T):
                o_t = o_t + es[s] * inv * v[:, s]                        # (Bb,J,dh)
            c = _mm(o_t.reshape(Bb * J, dim_head), wo_h, dt).reshape(Bb, J, D)
            proj[t] = c if proj[t] is None else proj[t] + c
    return proj


def _ff_residual(x2, g, b, w1, b1, w2, b2, dt):
    """Residual(PreNorm(FeedForward)) on a (M, D) token slab."""
    xn = _layernorm(x2, g, b)
    hid = _gelu_tanh(_mm(xn, w1, dt) + b1)
    return x2 + _mm(hid, w2, dt) + b2


# ----------------------------------------------------------------------------
# Fused per-layer Pallas kernel: spatial attn + FF + temporal attn + FF
# ----------------------------------------------------------------------------
def _st_layer_kernel(x_ref,
                     sag_ref, sab_ref, saw_ref, sao_ref, sabo_ref,
                     f1g_ref, f1b_ref, f1w1_ref, f1b1_ref, f1w2_ref, f1b2_ref,
                     tag_ref, tab_ref, taw_ref, tao_ref, tabo_ref,
                     f2g_ref, f2b_ref, f2w1_ref, f2b1_ref, f2w2_ref, f2b2_ref,
                     o_ref, xacc_ref,
                     *, heads, dim_head, scale, compute_dtype):
    Bb, T, J, D = x_ref.shape
    M = Bb * T * J
    dt = compute_dtype

    x = x_ref[...].astype(jnp.float32)                                   # (Bb,T,J,D)

    # ---- Residual(PreNorm(SpatialAttention)) : sequences along J ----
    x = _spatial_attn_residual(x, sag_ref[...], sab_ref[...], saw_ref[...],
                               sao_ref[...], sabo_ref[...],
                               heads, dim_head, scale, dt)

    # ---- Residual(PreNorm(FeedForward)) #1 ----
    x2 = _ff_residual(x.reshape(M, D), f1g_ref[...], f1b_ref[...],
                      f1w1_ref[...], f1b1_ref[...], f1w2_ref[...], f1b2_ref[...], dt)
    x = x2.reshape(Bb, T, J, D)

    # ---- Residual(PreNorm(TemporalAttention)) : sequences along T ----
    proj = _temporal_attn_proj(x, tag_ref[...], tab_ref[...], taw_ref[...],
                               tao_ref[...], heads, dim_head, scale, dt)
    bo = tabo_ref[...]                                                   # (1, D)
    for t in range(T):
        # Leading-axis window store: reassembles the updated activation in a
        # VMEM scratch without any 4-D transpose.
        xacc_ref[:, t, :, :] = x[:, t] + proj[t] + bo
    x2 = xacc_ref[...].reshape(M, D)

    # ---- Residual(PreNorm(FeedForward)) #2 ----
    x2 = _ff_residual(x2, f2g_ref[...], f2b_ref[...],
                      f2w1_ref[...], f2b1_ref[...], f2w2_ref[...], f2b2_ref[...], dt)

    o_ref[...] = x2.reshape(Bb, T, J, D).astype(o_ref.dtype)


# ----------------------------------------------------------------------------
# Wrapper (pallas_call)
# ----------------------------------------------------------------------------
def _const_spec(arr):
    # Whole weight broadcast to every grid step (block == full array).
    nd = arr.ndim
    return pl.BlockSpec(arr.shape, lambda i, _nd=nd: (0,) * _nd)


def _pick_block_batch(B, tokens_per_elem, elem_bytes, weight_bytes,
                      tokens_per_tile, vmem_cap):
    """Largest divisor of B under both a token budget and a VMEM budget."""
    vmem_budget = int(0.55 * vmem_cap) - 2 * weight_bytes - (4 << 20)
    per_elem_cost = 21 * elem_bytes       # in/out (double-buffered) + scratch + temps
    bb_vmem = max(1, vmem_budget // max(per_elem_cost, 1))
    bb_tok = max(1, tokens_per_tile // max(tokens_per_elem, 1))
    bb_max = int(max(1, min(bb_vmem, bb_tok, B)))
    bb = 1
    for d in range(1, bb_max + 1):
        if B % d == 0:
            bb = d
    # Prefer >=2 balanced grid steps so both v7x TensorCores get work; on
    # single-core v5e/v6e this only costs one extra pipeline step.
    if B // bb == 1 and B % 2 == 0:
        bb = B // 2
    return bb


def spatial_temporal_layer(x, sa, ff1, ta, ff2, heads, dim_head,
                           tokens_per_tile=4096, compute_dtype=None):
    """One transformer layer on x: (B, T, J, D)."""
    B, T, J, D = x.shape

    weights = [sa["g"], sa["b"], sa["wqkv"], sa["wo"], sa["bo"],
               ff1["g"], ff1["b"], ff1["w1"], ff1["b1"], ff1["w2"], ff1["b2"],
               ta["g"], ta["b"], ta["wqkv"], ta["wo"], ta["bo"],
               ff2["g"], ff2["b"], ff2["w1"], ff2["b1"], ff2["w2"], ff2["b2"]]

    elem_bytes = T * J * D * 4
    weight_bytes = sum(int(w.size) * w.dtype.itemsize for w in weights)
    try:
        vmem_cap = int(pltpu.get_tpu_info().vmem_capacity_bytes)
    except Exception:
        vmem_cap = 64 * 1024 * 1024       # assume the smallest (v7x) per-core VMEM

    Bb = _pick_block_batch(B, T * J, elem_bytes, weight_bytes,
                           tokens_per_tile, vmem_cap)
    grid = (B // Bb,)

    # VMEM limit derived from actual footprint, with headroom for Mosaic
    # internal scratch even on the 64 MiB v7x part.
    needed = 21 * Bb * elem_bytes + 2 * weight_bytes + (4 << 20)
    upper = max(int(0.55 * vmem_cap), 32 << 20)
    vmem_limit = int(min(max(needed, 32 << 20), upper))

    kernel = functools.partial(_st_layer_kernel, heads=heads, dim_head=dim_head,
                               scale=dim_head ** -0.5, compute_dtype=compute_dtype)

    return pl.pallas_call(
        kernel,
        out_shape=jax.ShapeDtypeStruct((B, T, J, D), x.dtype),
        grid=grid,
        in_specs=[pl.BlockSpec((Bb, T, J, D), lambda i: (i, 0, 0, 0))] +
                 [_const_spec(w) for w in weights],
        out_specs=pl.BlockSpec((Bb, T, J, D), lambda i: (i, 0, 0, 0)),
        scratch_shapes=[pltpu.VMEM((Bb, T, J, D), jnp.float32)],
        compiler_params=pltpu.CompilerParams(
            dimension_semantics=("parallel",),
            vmem_limit_bytes=vmem_limit,
        ),
    )(x, *weights)


def transformer_forward(x, params, heads, dim_head,
                        tokens_per_tile=4096, compute_dtype=None):
    """SpatialTemporalTransformer.forward.  x: (B, T, J, D)."""
    for (sa, ff1, ta, ff2) in params:
        x = spatial_temporal_layer(x, sa, ff1, ta, ff2, heads, dim_head,
                                   tokens_per_tile=tokens_per_tile,
                                   compute_dtype=compute_dtype)
    return x


# ----------------------------------------------------------------------------
# Deterministic parameter init (shapes from the PyTorch module __init__)
# ----------------------------------------------------------------------------
def init_params(key, depth, dim, heads, dim_head, mlp_dim):
    inner = heads * dim_head

    def nrm(k, shape, s=0.05):
        return (s * jax.random.normal(k, shape)).astype(jnp.float32)

    params = []
    for _ in range(depth):
        key, *ks = jax.random.split(key, 23)
        sa = dict(g=1.0 + nrm(ks[0], (1, dim)), b=nrm(ks[1], (1, dim)),
                  wqkv=nrm(ks[2], (dim, 3 * inner)),
                  wo=nrm(ks[3], (inner, dim)), bo=nrm(ks[4], (1, dim)))
        ff1 = dict(g=1.0 + nrm(ks[5], (1, dim)), b=nrm(ks[6], (1, dim)),
                   w1=nrm(ks[7], (dim, mlp_dim)), b1=nrm(ks[8], (1, mlp_dim)),
                   w2=nrm(ks[9], (mlp_dim, dim)), b2=nrm(ks[10], (1, dim)))
        ta = dict(g=1.0 + nrm(ks[11], (1, dim)), b=nrm(ks[12], (1, dim)),
                  wqkv=nrm(ks[13], (dim, 3 * inner)),
                  wo=nrm(ks[14], (inner, dim)), bo=nrm(ks[15], (1, dim)))
        ff2 = dict(g=1.0 + nrm(ks[16], (1, dim)), b=nrm(ks[17], (1, dim)),
                   w1=nrm(ks[18], (dim, mlp_dim)), b1=nrm(ks[19], (1, mlp_dim)),
                   w2=nrm(ks[20], (mlp_dim, dim)), b2=nrm(ks[21], (1, dim)))
        params.append((sa, ff1, ta, ff2))
    return params


# ----------------------------------------------------------------------------
# Pure-JAX reference (exact erf GELU / exact softmax), for the self-check
# ----------------------------------------------------------------------------
def _ref_ln(x, g, b):
    mu = x.mean(-1, keepdims=True)
    var = ((x - mu) ** 2).mean(-1, keepdims=True)
    return (x - mu) / jnp.sqrt(var + LN_EPS) * g + b


def _ref_attn(x, p, heads, dim_head):
    S, N, D = x.shape
    xn = _ref_ln(x, p["g"], p["b"])
    qkv = xn @ p["wqkv"]
    q, k, v = jnp.split(qkv, 3, axis=-1)
    sh = lambda t: t.reshape(S, N, heads, dim_head).transpose(0, 2, 1, 3)
    q, k, v = sh(q), sh(k), sh(v)
    dots = jnp.einsum("shid,shjd->shij", q, k) * (dim_head ** -0.5)
    attn = jax.nn.softmax(dots, axis=-1)
    out = jnp.einsum("shij,shjd->shid", attn, v)
    out = out.transpose(0, 2, 1, 3).reshape(S, N, heads * dim_head)
    return x + out @ p["wo"] + p["bo"]


def _ref_ff(x, p):
    xn = _ref_ln(x, p["g"], p["b"])
    h = jax.nn.gelu(xn @ p["w1"] + p["b1"], approximate=False)
    return x + h @ p["w2"] + p["b2"]


def reference_forward(x, params, heads, dim_head):
    B, T, J, D = x.shape
    for (sa, ff1, ta, ff2) in params:
        x = _ref_attn(x.reshape(B * T, J, D), sa, heads, dim_head).reshape(B, T, J, D)
        x = _ref_ff(x.reshape(B * T * J, D), ff1).reshape(B, T, J, D)
        xt = jnp.transpose(x, (0, 2, 1, 3)).reshape(B * J, T, D)
        xt = _ref_attn(xt, ta, heads, dim_head)
        x = jnp.transpose(xt.reshape(B, J, T, D), (0, 2, 1, 3))
        x = _ref_ff(x.reshape(B * T * J, D), ff2).reshape(B, T, J, D)
    return x


# ----------------------------------------------------------------------------
if __name__ == "__main__":
    # Small shapes consistent with the module: x is (B, T, J, dim).
    B, T, J = 2, 4, 8
    depth, dim, heads, dim_head, mlp_dim = 2, 32, 4, 8, 64

    key = jax.random.PRNGKey(0)
    kx, kp = jax.random.split(key)
    x = jax.random.normal(kx, (B, T, J, dim), dtype=jnp.float32)
    params = init_params(kp, depth, dim, heads, dim_head, mlp_dim)

    out = transformer_forward(x, params, heads, dim_head)
    out = jax.block_until_ready(out)
    assert out.shape == (B, T, J, dim)

    ref = reference_forward(x, params, heads, dim_head)
    if not bool(jnp.allclose(out, ref, atol=2e-2, rtol=2e-2)):
        max_err = float(jnp.max(jnp.abs(out - ref)))
        raise AssertionError(f"Pallas kernel mismatch vs reference (max abs err {max_err})")

    print("KERNEL_OK")
</pallas_src>

<mosaic_0001>
module attributes {stable_mosaic.version = 11 : i64} {
  func.func @_st_layer_kernel(%arg0: i32, %arg1: memref<1x4x8x32xf32, #tpu.memory_space<vmem>>, %arg2: memref<1x32xf32, #tpu.memory_space<vmem>>, %arg3: memref<1x32xf32, #tpu.memory_space<vmem>>, %arg4: memref<32x96xf32, #tpu.memory_space<vmem>>, %arg5: memref<32x32xf32, #tpu.memory_space<vmem>>, %arg6: memref<1x32xf32, #tpu.memory_space<vmem>>, %arg7: memref<1x32xf32, #tpu.memory_space<vmem>>, %arg8: memref<1x32xf32, #tpu.memory_space<vmem>>, %arg9: memref<32x64xf32, #tpu.memory_space<vmem>>, %arg10: memref<1x64xf32, #tpu.memory_space<vmem>>, %arg11: memref<64x32xf32, #tpu.memory_space<vmem>>, %arg12: memref<1x32xf32, #tpu.memory_space<vmem>>, %arg13: memref<1x32xf32, #tpu.memory_space<vmem>>, %arg14: memref<1x32xf32, #tpu.memory_space<vmem>>, %arg15: memref<32x96xf32, #tpu.memory_space<vmem>>, %arg16: memref<32x32xf32, #tpu.memory_space<vmem>>, %arg17: memref<1x32xf32, #tpu.memory_space<vmem>>, %arg18: memref<1x32xf32, #tpu.memory_space<vmem>>, %arg19: memref<1x32xf32, #tpu.memory_space<vmem>>, %arg20: memref<32x64xf32, #tpu.memory_space<vmem>>, %arg21: memref<1x64xf32, #tpu.memory_space<vmem>>, %arg22: memref<64x32xf32, #tpu.memory_space<vmem>>, %arg23: memref<1x32xf32, #tpu.memory_space<vmem>>, %arg24: memref<1x4x8x32xf32, #tpu.memory_space<vmem>>, %arg25: memref<1x4x8x32xf32, #tpu.memory_space<vmem>>) attributes {dimension_semantics = [#tpu.dimension_semantics<parallel>], iteration_bounds = array<i64: 2>, scalar_prefetch = 0 : i64, scratch_operands = 1 : i64, tpu.core_type = #tpu.core_type<tc>, window_params = [{transform_indices = @transform_0, window_bounds = array<i64: 1, 4, 8, 32>}, {pipeline_mode = #tpu.pipeline_mode<synchronous>, transform_indices = @transform_1, window_bounds = array<i64: 1, 32>}, {pipeline_mode = #tpu.pipeline_mode<synchronous>, transform_indices = @transform_2, window_bounds = array<i64: 1, 32>}, {pipeline_mode = #tpu.pipeline_mode<synchronous>, transform_indices = @transform_3, window_bounds = array<i64: 32, 96>}, {pipeline_mode = #tpu.pipeline_mode<synchronous>, transform_indices = @transform_4, window_bounds = array<i64: 32, 32>}, {pipeline_mode = #tpu.pipeline_mode<synchronous>, transform_indices = @transform_5, window_bounds = array<i64: 1, 32>}, {pipeline_mode = #tpu.pipeline_mode<synchronous>, transform_indices = @transform_6, window_bounds = array<i64: 1, 32>}, {pipeline_mode = #tpu.pipeline_mode<synchronous>, transform_indices = @transform_7, window_bounds = array<i64: 1, 32>}, {pipeline_mode = #tpu.pipeline_mode<synchronous>, transform_indices = @transform_8, window_bounds = array<i64: 32, 64>}, {pipeline_mode = #tpu.pipeline_mode<synchronous>, transform_indices = @transform_9, window_bounds = array<i64: 1, 64>}, {pipeline_mode = #tpu.pipeline_mode<synchronous>, transform_indices = @transform_10, window_bounds = array<i64: 64, 32>}, {pipeline_mode = #tpu.pipeline_mode<synchronous>, transform_indices = @transform_11, window_bounds = array<i64: 1, 32>}, {pipeline_mode = #tpu.pipeline_mode<synchronous>, transform_indices = @transform_12, window_bounds = array<i64: 1, 32>}, {pipeline_mode = #tpu.pipeline_mode<synchronous>, transform_indices = @transform_13, window_bounds = array<i64: 1, 32>}, {pipeline_mode = #tpu.pipeline_mode<synchronous>, transform_indices = @transform_14, window_bounds = array<i64: 32, 96>}, {pipeline_mode = #tpu.pipeline_mode<synchronous>, transform_indices = @transform_15, window_bounds = array<i64: 32, 32>}, {pipeline_mode = #tpu.pipeline_mode<synchronous>, transform_indices = @transform_16, window_bounds = array<i64: 1, 32>}, {pipeline_mode = #tpu.pipeline_mode<synchronous>, transform_indices = @transform_17, window_bounds = array<i64: 1, 32>}, {pipeline_mode = #tpu.pipeline_mode<synchronous>, transform_indices = @transform_18, window_bounds = array<i64: 1, 32>}, {pipeline_mode = #tpu.pipeline_mode<synchronous>, transform_indices = @transform_19, window_bounds = array<i64: 32, 64>}, {pipeline_mode = #tpu.pipeline_mode<synchronous>, transform_indices = @transform_20, window_bounds = array<i64: 1, 64>}, {pipeline_mode = #tpu.pipeline_mode<synchronous>, transform_indices = @transform_21, window_bounds = array<i64: 64, 32>}, {pipeline_mode = #tpu.pipeline_mode<synchronous>, transform_indices = @transform_22, window_bounds = array<i64: 1, 32>}, {transform_indices = @transform_23, window_bounds = array<i64: 1, 4, 8, 32>}]} {
    %c0 = arith.constant 0 : index
    %c0_0 = arith.constant 0 : index
    %c0_1 = arith.constant 0 : index
    %c0_2 = arith.constant 0 : index
    %0 = vector.load %arg1[%c0, %c0_0, %c0_1, %c0_2] : memref<1x4x8x32xf32, #tpu.memory_space<vmem>>, vector<1x4x8x32xf32>
    %c0_3 = arith.constant 0 : index
    %c0_4 = arith.constant 0 : index
    %1 = vector.load %arg2[%c0_3, %c0_4] : memref<1x32xf32, #tpu.memory_space<vmem>>, vector<1x32xf32>
    %c0_5 = arith.constant 0 : index
    %c0_6 = arith.constant 0 : index
    %2 = vector.load %arg3[%c0_5, %c0_6] : memref<1x32xf32, #tpu.memory_space<vmem>>, vector<1x32xf32>
    %c0_7 = arith.constant 0 : index
    %c0_8 = arith.constant 0 : index
    %3 = vector.load %arg4[%c0_7, %c0_8] : memref<32x96xf32, #tpu.memory_space<vmem>>, vector<32x96xf32>
    %c0_9 = arith.constant 0 : index
    %c0_10 = arith.constant 0 : index
    %4 = vector.load %arg5[%c0_9, %c0_10] : memref<32x32xf32, #tpu.memory_space<vmem>>, vector<32x32xf32>
    %c0_11 = arith.constant 0 : index
    %c0_12 = arith.constant 0 : index
    %5 = vector.load %arg6[%c0_11, %c0_12] : memref<1x32xf32, #tpu.memory_space<vmem>>, vector<1x32xf32>
    %6 = vector.shape_cast %0 : vector<1x4x8x32xf32> to vector<32x32xf32>
    %cst = arith.constant dense<0.000000e+00> : vector<32xf32>
    %7 = vector.multi_reduction <add>, %6, %cst [1] : vector<32x32xf32> to vector<32xf32>
    %8 = vector.shape_cast %7 : vector<32xf32> to vector<32x1xf32>
    %cst_13 = arith.constant 3.200000e+01 : f32
    %9 = vector.broadcast %cst_13 : f32 to vector<32x1xf32>
    %10 = arith.divf %8, %9 : vector<32x1xf32>
    %11 = vector.broadcast %10 : vector<32x1xf32> to vector<32x32xf32>
    %12 = arith.subf %6, %11 : vector<32x32xf32>
    %13 = arith.mulf %12, %12 : vector<32x32xf32>
    %cst_14 = arith.constant dense<0.000000e+00> : vector<32xf32>
    %14 = vector.multi_reduction <add>, %13, %cst_14 [1] : vector<32x32xf32> to vector<32xf32>
    %15 = vector.shape_cast %14 : vector<32xf32> to vector<32x1xf32>
    %cst_15 = arith.constant 3.200000e+01 : f32
    %16 = vector.broadcast %cst_15 : f32 to vector<32x1xf32>
    %17 = arith.divf %15, %16 : vector<32x1xf32>
    %18 = vector.broadcast %10 : vector<32x1xf32> to vector<32x32xf32>
    %19 = arith.subf %6, %18 : vector<32x32xf32>
    %cst_16 = arith.constant 9.99999974E-6 : f32
    %20 = vector.broadcast %cst_16 : f32 to vector<32x1xf32>
    %21 = arith.addf %17, %20 : vector<32x1xf32>
    %22 = math.rsqrt %21 : vector<32x1xf32>
    %23 = vector.broadcast %22 : vector<32x1xf32> to vector<32x32xf32>
    %24 = arith.mulf %19, %23 : vector<32x32xf32>
    %25 = vector.broadcast %1 : vector<1x32xf32> to vector<32x32xf32>
    %26 = arith.mulf %24, %25 : vector<32x32xf32>
    %27 = vector.broadcast %2 : vector<1x32xf32> to vector<32x32xf32>
    %28 = arith.addf %26, %27 : vector<32x32xf32>
    %cst_17 = arith.constant dense<0.000000e+00> : vector<32x96xf32>
    %29 = tpu.matmul %28, %3, %cst_17 {dimension_numbers = #tpu.dot_dimension_numbers<[1], [0], [0], [1], [0, 0, 1, 1], [], []>} : vector<32x32xf32>, vector<32x96xf32>, vector<32x96xf32> -> vector<32x96xf32>
    %30 = vector.shape_cast %29 : vector<32x96xf32> to vector<4x8x96xf32>
    %31 = vector.extract_strided_slice %30 {offsets = [0, 0, 0], sizes = [4, 8, 8], strides = [1, 1, 1]} : vector<4x8x96xf32> to vector<4x8x8xf32>
    %32 = vector.extract_strided_slice %30 {offsets = [0, 0, 32], sizes = [4, 8, 8], strides = [1, 1, 1]} : vector<4x8x96xf32> to vector<4x8x8xf32>
    %33 = vector.extract_strided_slice %30 {offsets = [0, 0, 64], sizes = [4, 8, 8], strides = [1, 1, 1]} : vector<4x8x96xf32> to vector<4x8x8xf32>
    "tpu.trace_start"() <{level = 10 : i32, message = "sid,sjd->sij"}> : () -> ()
    %cst_18 = arith.constant dense<0.000000e+00> : vector<4x8x8xf32>
    %34 = tpu.matmul %31, %32, %cst_18 {dimension_numbers = #tpu.dot_dimension_numbers<[2], [2], [1], [1], [0, 0, 0, 1, 1, 1], [0], [0]>} : vector<4x8x8xf32>, vector<4x8x8xf32>, vector<4x8x8xf32> -> vector<4x8x8xf32>
    "tpu.trace_stop"() : () -> ()
    %cst_19 = arith.constant 0.353553385 : f32
    %35 = vector.broadcast %cst_19 : f32 to vector<4x8x8xf32>
    %36 = arith.mulf %34, %35 : vector<4x8x8xf32>
    %cst_20 = arith.constant dense<0xFF800000> : vector<4x8xf32>
    %37 = vector.multi_reduction <maximumf>, %36, %cst_20 [2] : vector<4x8x8xf32> to vector<4x8xf32>
    %38 = vector.shape_cast %37 : vector<4x8xf32> to vector<4x8x1xf32>
    %39 = vector.broadcast %38 : vector<4x8x1xf32> to vector<4x8x8xf32>
    %40 = arith.subf %36, %39 : vector<4x8x8xf32>
    %41 = math.exp %40 : vector<4x8x8xf32>
    %cst_21 = arith.constant dense<0.000000e+00> : vector<4x8xf32>
    %42 = vector.multi_reduction <add>, %41, %cst_21 [2] : vector<4x8x8xf32> to vector<4x8xf32>
    %43 = vector.shape_cast %42 : vector<4x8xf32> to vector<4x8x1xf32>
    %44 = tpu.reciprocal %43 {approx = true} : vector<4x8x1xf32> -> vector<4x8x1xf32>
    %45 = vector.broadcast %44 : vector<4x8x1xf32> to vector<4x8x8xf32>
    %46 = arith.mulf %41, %45 : vector<4x8x8xf32>
    "tpu.trace_start"() <{level = 10 : i32, message = "sij,sjd->sid"}> : () -> ()
    %cst_22 = arith.constant dense<0.000000e+00> : vector<4x8x8xf32>
    %47 = tpu.matmul %46, %33, %cst_22 {dimension_numbers = #tpu.dot_dimension_numbers<[2], [1], [1], [2], [0, 0, 0, 1, 1, 2], [0], [0]>} : vector<4x8x8xf32>, vector<4x8x8xf32>, vector<4x8x8xf32> -> vector<4x8x8xf32>
    "tpu.trace_stop"() : () -> ()
    %48 = vector.shape_cast %47 : vector<4x8x8xf32> to vector<32x8xf32>
    %49 = vector.extract_strided_slice %4 {offsets = [0, 0], sizes = [8, 32], strides = [1, 1]} : vector<32x32xf32> to vector<8x32xf32>
    %cst_23 = arith.constant dense<0.000000e+00> : vector<32x32xf32>
    %50 = tpu.matmul %48, %49, %cst_23 {dimension_numbers = #tpu.dot_dimension_numbers<[1], [0], [0], [1], [0, 0, 1, 1], [], []>} : vector<32x8xf32>, vector<8x32xf32>, vector<32x32xf32> -> vector<32x32xf32>
    %51 = vector.extract_strided_slice %30 {offsets = [0, 0, 8], sizes = [4, 8, 8], strides = [1, 1, 1]} : vector<4x8x96xf32> to vector<4x8x8xf32>
    %52 = vector.extract_strided_slice %30 {offsets = [0, 0, 40], sizes = [4, 8, 8], strides = [1, 1, 1]} : vector<4x8x96xf32> to vector<4x8x8xf32>
    %53 = vector.extract_strided_slice %30 {offsets = [0, 0, 72], sizes = [4, 8, 8], strides = [1, 1, 1]} : vector<4x8x96xf32> to vector<4x8x8xf32>
    "tpu.trace_start"() <{level = 10 : i32, message = "sid,sjd->sij"}> : () -> ()
    %cst_24 = arith.constant dense<0.000000e+00> : vector<4x8x8xf32>
    %54 = tpu.matmul %51, %52, %cst_24 {dimension_numbers = #tpu.dot_dimension_numbers<[2], [2], [1], [1], [0, 0, 0, 1, 1, 1], [0], [0]>} : vector<4x8x8xf32>, vector<4x8x8xf32>, vector<4x8x8xf32> -> vector<4x8x8xf32>
    "tpu.trace_stop"() : () -> ()
    %cst_25 = arith.constant 0.353553385 : f32
    %55 = vector.broadcast %cst_25 : f32 to vector<4x8x8xf32>
    %56 = arith.mulf %54, %55 : vector<4x8x8xf32>
    %cst_26 = arith.constant dense<0xFF800000> : vector<4x8xf32>
    %57 = vector.multi_reduction <maximumf>, %56, %cst_26 [2] : vector<4x8x8xf32> to vector<4x8xf32>
    %58 = vector.shape_cast %57 : vector<4x8xf32> to vector<4x8x1xf32>
    %59 = vector.broadcast %58 : vector<4x8x1xf32> to vector<4x8x8xf32>
    %60 = arith.subf %56, %59 : vector<4x8x8xf32>
    %61 = math.exp %60 : vector<4x8x8xf32>
    %cst_27 = arith.constant dense<0.000000e+00> : vector<4x8xf32>
    %62 = vector.multi_reduction <add>, %61, %cst_27 [2] : vector<4x8x8xf32> to vector<4x8xf32>
    %63 = vector.shape_cast %62 : vector<4x8xf32> to vector<4x8x1xf32>
    %64 = tpu.reciprocal %63 {approx = true} : vector<4x8x1xf32> -> vector<4x8x1xf32>
    %65 = vector.broadcast %64 : vector<4x8x1xf32> to vector<4x8x8xf32>
    %66 = arith.mulf %61, %65 : vector<4x8x8xf32>
    "tpu.trace_start"() <{level = 10 : i32, message = "sij,sjd->sid"}> : () -> ()
    %cst_28 = arith.constant dense<0.000000e+00> : vector<4x8x8xf32>
    %67 = tpu.matmul %66, %53, %cst_28 {dimension_numbers = #tpu.dot_dimension_numbers<[2], [1], [1], [2], [0, 0, 0, 1, 1, 2], [0], [0]>} : vector<4x8x8xf32>, vector<4x8x8xf32>, vector<4x8x8xf32> -> vector<4x8x8xf32>
    "tpu.trace_stop"() : () -> ()
    %68 = vector.shape_cast %67 : vector<4x8x8xf32> to vector<32x8xf32>
    %69 = vector.extract_strided_slice %4 {offsets = [8, 0], sizes = [8, 32], strides = [1, 1]} : vector<32x32xf32> to vector<8x32xf32>
    %cst_29 = arith.constant dense<0.000000e+00> : vector<32x32xf32>
    %70 = tpu.matmul %68, %69, %cst_29 {dimension_numbers = #tpu.dot_dimension_numbers<[1], [0], [0], [1], [0, 0, 1, 1], [], []>} : vector<32x8xf32>, vector<8x32xf32>, vector<32x32xf32> -> vector<32x32xf32>
    %71 = arith.addf %50, %70 : vector<32x32xf32>
    %72 = vector.extract_strided_slice %30 {offsets = [0, 0, 16], sizes = [4, 8, 8], strides = [1, 1, 1]} : vector<4x8x96xf32> to vector<4x8x8xf32>
    %73 = vector.extract_strided_slice %30 {offsets = [0, 0, 48], sizes = [4, 8, 8], strides = [1, 1, 1]} : vector<4x8x96xf32> to vector<4x8x8xf32>
    %74 = vector.extract_strided_slice %30 {offsets = [0, 0, 80], sizes = [4, 8, 8], strides = [1, 1, 1]} : vector<4x8x96xf32> to vector<4x8x8xf32>
    "tpu.trace_start"() <{level = 10 : i32, message = "sid,sjd->sij"}> : () -> ()
    %cst_30 = arith.constant dense<0.000000e+00> : vector<4x8x8xf32>
    %75 = tpu.matmul %72, %73, %cst_30 {dimension_numbers = #tpu.dot_dimension_numbers<[2], [2], [1], [1], [0, 0, 0, 1, 1, 1], [0], [0]>} : vector<4x8x8xf32>, vector<4x8x8xf32>, vector<4x8x8xf32> -> vector<4x8x8xf32>
    "tpu.trace_stop"() : () -> ()
    %cst_31 = arith.constant 0.353553385 : f32
    %76 = vector.broadcast %cst_31 : f32 to vector<4x8x8xf32>
    %77 = arith.mulf %75, %76 : vector<4x8x8xf32>
    %cst_32 = arith.constant dense<0xFF800000> : vector<4x8xf32>
    %78 = vector.multi_reduction <maximumf>, %77, %cst_32 [2] : vector<4x8x8xf32> to vector<4x8xf32>
    %79 = vector.shape_cast %78 : vector<4x8xf32> to vector<4x8x1xf32>
    %80 = vector.broadcast %79 : vector<4x8x1xf32> to vector<4x8x8xf32>
    %81 = arith.subf %77, %80 : vector<4x8x8xf32>
    %82 = math.exp %81 : vector<4x8x8xf32>
    %cst_33 = arith.constant dense<0.000000e+00> : vector<4x8xf32>
    %83 = vector.multi_reduction <add>, %82, %cst_33 [2] : vector<4x8x8xf32> to vector<4x8xf32>
    %84 = vector.shape_cast %83 : vector<4x8xf32> to vector<4x8x1xf32>
    %85 = tpu.reciprocal %84 {approx = true} : vector<4x8x1xf32> -> vector<4x8x1xf32>
    %86 = vector.broadcast %85 : vector<4x8x1xf32> to vector<4x8x8xf32>
    %87 = arith.mulf %82, %86 : vector<4x8x8xf32>
    "tpu.trace_start"() <{level = 10 : i32, message = "sij,sjd->sid"}> : () -> ()
    %cst_34 = arith.constant dense<0.000000e+00> : vector<4x8x8xf32>
    %88 = tpu.matmul %87, %74, %cst_34 {dimension_numbers = #tpu.dot_dimension_numbers<[2], [1], [1], [2], [0, 0, 0, 1, 1, 2], [0], [0]>} : vector<4x8x8xf32>, vector<4x8x8xf32>, vector<4x8x8xf32> -> vector<4x8x8xf32>
    "tpu.trace_stop"() : () -> ()
    %89 = vector.shape_cast %88 : vector<4x8x8xf32> to vector<32x8xf32>
    %90 = vector.extract_strided_slice %4 {offsets = [16, 0], sizes = [8, 32], strides = [1, 1]} : vector<32x32xf32> to vector<8x32xf32>
    %cst_35 = arith.constant dense<0.000000e+00> : vector<32x32xf32>
    %91 = tpu.matmul %89, %90, %cst_35 {dimension_numbers = #tpu.dot_dimension_numbers<[1], [0], [0], [1], [0, 0, 1, 1], [], []>} : vector<32x8xf32>, vector<8x32xf32>, vector<32x32xf32> -> vector<32x32xf32>
    %92 = arith.addf %71, %91 : vector<32x32xf32>
    %93 = vector.extract_strided_slice %30 {offsets = [0, 0, 24], sizes = [4, 8, 8], strides = [1, 1, 1]} : vector<4x8x96xf32> to vector<4x8x8xf32>
    %94 = vector.extract_strided_slice %30 {offsets = [0, 0, 56], sizes = [4, 8, 8], strides = [1, 1, 1]} : vector<4x8x96xf32> to vector<4x8x8xf32>
    %95 = vector.extract_strided_slice %30 {offsets = [0, 0, 88], sizes = [4, 8, 8], strides = [1, 1, 1]} : vector<4x8x96xf32> to vector<4x8x8xf32>
    "tpu.trace_start"() <{level = 10 : i32, message = "sid,sjd->sij"}> : () -> ()
    %cst_36 = arith.constant dense<0.000000e+00> : vector<4x8x8xf32>
    %96 = tpu.matmul %93, %94, %cst_36 {dimension_numbers = #tpu.dot_dimension_numbers<[2], [2], [1], [1], [0, 0, 0, 1, 1, 1], [0], [0]>} : vector<4x8x8xf32>, vector<4x8x8xf32>, vector<4x8x8xf32> -> vector<4x8x8xf32>
    "tpu.trace_stop"() : () -> ()
    %cst_37 = arith.constant 0.353553385 : f32
    %97 = vector.broadcast %cst_37 : f32 to vector<4x8x8xf32>
    %98 = arith.mulf %96, %97 : vector<4x8x8xf32>
    %cst_38 = arith.constant dense<0xFF800000> : vector<4x8xf32>
    %99 = vector.multi_reduction <maximumf>, %98, %cst_38 [2] : vector<4x8x8xf32> to vector<4x8xf32>
    %100 = vector.shape_cast %99 : vector<4x8xf32> to vector<4x8x1xf32>
    %101 = vector.broadcast %100 : vector<4x8x1xf32> to vector<4x8x8xf32>
    %102 = arith.subf %98, %101 : vector<4x8x8xf32>
    %103 = math.exp %102 : vector<4x8x8xf32>
    %cst_39 = arith.constant dense<0.000000e+00> : vector<4x8xf32>
    %104 = vector.multi_reduction <add>, %103, %cst_39 [2] : vector<4x8x8xf32> to vector<4x8xf32>
    %105 = vector.shape_cast %104 : vector<4x8xf32> to vector<4x8x1xf32>
    %106 = tpu.reciprocal %105 {approx = true} : vector<4x8x1xf32> -> vector<4x8x1xf32>
    %107 = vector.broadcast %106 : vector<4x8x1xf32> to vector<4x8x8xf32>
    %108 = arith.mulf %103, %107 : vector<4x8x8xf32>
    "tpu.trace_start"() <{level = 10 : i32, message = "sij,sjd->sid"}> : () -> ()
    %cst_40 = arith.constant dense<0.000000e+00> : vector<4x8x8xf32>
    %109 = tpu.matmul %108, %95, %cst_40 {dimension_numbers = #tpu.dot_dimension_numbers<[2], [1], [1], [2], [0, 0, 0, 1, 1, 2], [0], [0]>} : vector<4x8x8xf32>, vector<4x8x8xf32>, vector<4x8x8xf32> -> vector<4x8x8xf32>
    "tpu.trace_stop"() : () -> ()
    %110 = vector.shape_cast %109 : vector<4x8x8xf32> to vector<32x8xf32>
    %111 = vector.extract_strided_slice %4 {offsets = [24, 0], sizes = [8, 32], strides = [1, 1]} : vector<32x32xf32> to vector<8x32xf32>
    %cst_41 = arith.constant dense<0.000000e+00> : vector<32x32xf32>
    %112 = tpu.matmul %110, %111, %cst_41 {dimension_numbers = #tpu.dot_dimension_numbers<[1], [0], [0], [1], [0, 0, 1, 1], [], []>} : vector<32x8xf32>, vector<8x32xf32>, vector<32x32xf32> -> vector<32x32xf32>
    %113 = arith.addf %92, %112 : vector<32x32xf32>
    %114 = arith.addf %6, %113 : vector<32x32xf32>
    %115 = vector.broadcast %5 : vector<1x32xf32> to vector<32x32xf32>
    %116 = arith.addf %114, %115 : vector<32x32xf32>
    %117 = vector.shape_cast %116 : vector<32x32xf32> to vector<1x4x8x32xf32>
    %118 = vector.shape_cast %117 : vector<1x4x8x32xf32> to vector<32x32xf32>
    %c0_42 = arith.constant 0 : index
    %c0_43 = arith.constant 0 : index
    %119 = vector.load %arg7[%c0_42, %c0_43] : memref<1x32xf32, #tpu.memory_space<vmem>>, vector<1x32xf32>
    %c0_44 = arith.constant 0 : index
    %c0_45 = arith.constant 0 : index
    %120 = vector.load %arg8[%c0_44, %c0_45] : memref<1x32xf32, #tpu.memory_space<vmem>>, vector<1x32xf32>
    %c0_46 = arith.constant 0 : index
    %c0_47 = arith.constant 0 : index
    %121 = vector.load %arg9[%c0_46, %c0_47] : memref<32x64xf32, #tpu.memory_space<vmem>>, vector<32x64xf32>
    %c0_48 = arith.constant 0 : index
    %c0_49 = arith.constant 0 : index
    %122 = vector.load %arg10[%c0_48, %c0_49] : memref<1x64xf32, #tpu.memory_space<vmem>>, vector<1x64xf32>
    %c0_50 = arith.constant 0 : index
    %c0_51 = arith.constant 0 : index
    %123 = vector.load %arg11[%c0_50, %c0_51] : memref<64x32xf32, #tpu.memory_space<vmem>>, vector<64x32xf32>
    %c0_52 = arith.constant 0 : index
    %c0_53 = arith.constant 0 : index
    %124 = vector.load %arg12[%c0_52, %c0_53] : memref<1x32xf32, #tpu.memory_space<vmem>>, vector<1x32xf32>
    %cst_54 = arith.constant dense<0.000000e+00> : vector<32xf32>
    %125 = vector.multi_reduction <add>, %118, %cst_54 [1] : vector<32x32xf32> to vector<32xf32>
    %126 = vector.shape_cast %125 : vector<32xf32> to vector<32x1xf32>
    %cst_55 = arith.constant 3.200000e+01 : f32
    %127 = vector.broadcast %cst_55 : f32 to vector<32x1xf32>
    %128 = arith.divf %126, %127 : vector<32x1xf32>
    %129 = vector.broadcast %128 : vector<32x1xf32> to vector<32x32xf32>
    %130 = arith.subf %118, %129 : vector<32x32xf32>
    %131 = arith.mulf %130, %130 : vector<32x32xf32>
    %cst_56 = arith.constant dense<0.000000e+00> : vector<32xf32>
    %132 = vector.multi_reduction <add>, %131, %cst_56 [1] : vector<32x32xf32> to vector<32xf32>
    %133 = vector.shape_cast %132 : vector<32xf32> to vector<32x1xf32>
    %cst_57 = arith.constant 3.200000e+01 : f32
    %134 = vector.broadcast %cst_57 : f32 to vector<32x1xf32>
    %135 = arith.divf %133, %134 : vector<32x1xf32>
    %136 = vector.broadcast %128 : vector<32x1xf32> to vector<32x32xf32>
    %137 = arith.subf %118, %136 : vector<32x32xf32>
    %cst_58 = arith.constant 9.99999974E-6 : f32
    %138 = vector.broadcast %cst_58 : f32 to vector<32x1xf32>
    %139 = arith.addf %135, %138 : vector<32x1xf32>
    %140 = math.rsqrt %139 : vector<32x1xf32>
    %141 = vector.broadcast %140 : vector<32x1xf32> to vector<32x32xf32>
    %142 = arith.mulf %137, %141 : vector<32x32xf32>
    %143 = vector.broadcast %119 : vector<1x32xf32> to vector<32x32xf32>
    %144 = arith.mulf %142, %143 : vector<32x32xf32>
    %145 = vector.broadcast %120 : vector<1x32xf32> to vector<32x32xf32>
    %146 = arith.addf %144, %145 : vector<32x32xf32>
    %cst_59 = arith.constant dense<0.000000e+00> : vector<32x64xf32>
    %147 = tpu.matmul %146, %121, %cst_59 {dimension_numbers = #tpu.dot_dimension_numbers<[1], [0], [0], [1], [0, 0, 1, 1], [], []>} : vector<32x32xf32>, vector<32x64xf32>, vector<32x64xf32> -> vector<32x64xf32>
    %148 = vector.broadcast %122 : vector<1x64xf32> to vector<32x64xf32>
    %149 = arith.addf %147, %148 : vector<32x64xf32>
    %cst_60 = arith.constant 5.000000e-01 : f32
    %150 = vector.broadcast %cst_60 : f32 to vector<32x64xf32>
    %151 = arith.mulf %150, %149 : vector<32x64xf32>
    %cst_61 = arith.constant 4.471500e-02 : f32
    %152 = vector.broadcast %cst_61 : f32 to vector<32x64xf32>
    %153 = arith.mulf %152, %149 : vector<32x64xf32>
    %154 = arith.mulf %153, %149 : vector<32x64xf32>
    %155 = arith.mulf %154, %149 : vector<32x64xf32>
    %156 = arith.addf %149, %155 : vector<32x64xf32>
    %cst_62 = arith.constant 0.797884583 : f32
    %157 = vector.broadcast %cst_62 : f32 to vector<32x64xf32>
    %158 = arith.mulf %157, %156 : vector<32x64xf32>
    %159 = math.tanh %158 : vector<32x64xf32>
    %cst_63 = arith.constant 1.000000e+00 : f32
    %160 = vector.broadcast %cst_63 : f32 to vector<32x64xf32>
    %161 = arith.addf %160, %159 : vector<32x64xf32>
    %162 = arith.mulf %151, %161 : vector<32x64xf32>
    %cst_64 = arith.constant dense<0.000000e+00> : vector<32x32xf32>
    %163 = tpu.matmul %162, %123, %cst_64 {dimension_numbers = #tpu.dot_dimension_numbers<[1], [0], [0], [1], [0, 0, 1, 1], [], []>} : vector<32x64xf32>, vector<64x32xf32>, vector<32x32xf32> -> vector<32x32xf32>
    %164 = arith.addf %118, %163 : vector<32x32xf32>
    %165 = vector.broadcast %124 : vector<1x32xf32> to vector<32x32xf32>
    %166 = arith.addf %164, %165 : vector<32x32xf32>
    %167 = vector.shape_cast %166 : vector<32x32xf32> to vector<1x4x8x32xf32>
    %c0_65 = arith.constant 0 : index
    %c0_66 = arith.constant 0 : index
    %168 = vector.load %arg13[%c0_65, %c0_66] : memref<1x32xf32, #tpu.memory_space<vmem>>, vector<1x32xf32>
    %c0_67 = arith.constant 0 : index
    %c0_68 = arith.constant 0 : index
    %169 = vector.load %arg14[%c0_67, %c0_68] : memref<1x32xf32, #tpu.memory_space<vmem>>, vector<1x32xf32>
    %c0_69 = arith.constant 0 : index
    %c0_70 = arith.constant 0 : index
    %170 = vector.load %arg15[%c0_69, %c0_70] : memref<32x96xf32, #tpu.memory_space<vmem>>, vector<32x96xf32>
    %c0_71 = arith.constant 0 : index
    %c0_72 = arith.constant 0 : index
    %171 = vector.load %arg16[%c0_71, %c0_72] : memref<32x32xf32, #tpu.memory_space<vmem>>, vector<32x32xf32>
    %172 = vector.shape_cast %167 : vector<1x4x8x32xf32> to vector<32x32xf32>
    %cst_73 = arith.constant dense<0.000000e+00> : vector<32xf32>
    %173 = vector.multi_reduction <add>, %172, %cst_73 [1] : vector<32x32xf32> to vector<32xf32>
    %174 = vector.shape_cast %173 : vector<32xf32> to vector<32x1xf32>
    %cst_74 = arith.constant 3.200000e+01 : f32
    %175 = vector.broadcast %cst_74 : f32 to vector<32x1xf32>
    %176 = arith.divf %174, %175 : vector<32x1xf32>
    %177 = vector.broadcast %176 : vector<32x1xf32> to vector<32x32xf32>
    %178 = arith.subf %172, %177 : vector<32x32xf32>
    %179 = arith.mulf %178, %178 : vector<32x32xf32>
    %cst_75 = arith.constant dense<0.000000e+00> : vector<32xf32>
    %180 = vector.multi_reduction <add>, %179, %cst_75 [1] : vector<32x32xf32> to vector<32xf32>
    %181 = vector.shape_cast %180 : vector<32xf32> to vector<32x1xf32>
    %cst_76 = arith.constant 3.200000e+01 : f32
    %182 = vector.broadcast %cst_76 : f32 to vector<32x1xf32>
    %183 = arith.divf %181, %182 : vector<32x1xf32>
    %184 = vector.broadcast %176 : vector<32x1xf32> to vector<32x32xf32>
    %185 = arith.subf %172, %184 : vector<32x32xf32>
    %cst_77 = arith.constant 9.99999974E-6 : f32
    %186 = vector.broadcast %cst_77 : f32 to vector<32x1xf32>
    %187 = arith.addf %183, %186 : vector<32x1xf32>
    %188 = math.rsqrt %187 : vector<32x1xf32>
    %189 = vector.broadcast %188 : vector<32x1xf32> to vector<32x32xf32>
    %190 = arith.mulf %185, %189 : vector<32x32xf32>
    %191 = vector.broadcast %168 : vector<1x32xf32> to vector<32x32xf32>
    %192 = arith.mulf %190, %191 : vector<32x32xf32>
    %193 = vector.broadcast %169 : vector<1x32xf32> to vector<32x32xf32>
    %194 = arith.addf %192, %193 : vector<32x32xf32>
    %cst_78 = arith.constant dense<0.000000e+00> : vector<32x96xf32>
    %195 = tpu.matmul %194, %170, %cst_78 {dimension_numbers = #tpu.dot_dimension_numbers<[1], [0], [0], [1], [0, 0, 1, 1], [], []>} : vector<32x32xf32>, vector<32x96xf32>, vector<32x96xf32> -> vector<32x96xf32>
    %196 = vector.shape_cast %195 : vector<32x96xf32> to vector<1x4x8x96xf32>
    %197 = vector.extract_strided_slice %196 {offsets = [0, 0, 0, 0], sizes = [1, 4, 8, 8], strides = [1, 1, 1, 1]} : vector<1x4x8x96xf32> to vector<1x4x8x8xf32>
    %198 = vector.extract_strided_slice %196 {offsets = [0, 0, 0, 32], sizes = [1, 4, 8, 8], strides = [1, 1, 1, 1]} : vector<1x4x8x96xf32> to vector<1x4x8x8xf32>
    %199 = vector.extract_strided_slice %196 {offsets = [0, 0, 0, 64], sizes = [1, 4, 8, 8], strides = [1, 1, 1, 1]} : vector<1x4x8x96xf32> to vector<1x4x8x8xf32>
    %200 = vector.extract_strided_slice %171 {offsets = [0, 0], sizes = [8, 32], strides = [1, 1]} : vector<32x32xf32> to vector<8x32xf32>
    %201 = vector.extract_strided_slice %197 {offsets = [0, 0, 0, 0], sizes = [1, 1, 8, 8], strides = [1, 1, 1, 1]} : vector<1x4x8x8xf32> to vector<1x1x8x8xf32>
    %202 = vector.shape_cast %201 : vector<1x1x8x8xf32> to vector<1x8x8xf32>
    %203 = vector.extract_strided_slice %198 {offsets = [0, 0, 0, 0], sizes = [1, 1, 8, 8], strides = [1, 1, 1, 1]} : vector<1x4x8x8xf32> to vector<1x1x8x8xf32>
    %204 = vector.shape_cast %203 : vector<1x1x8x8xf32> to vector<1x8x8xf32>
    %205 = arith.mulf %202, %204 : vector<1x8x8xf32>
    %cst_79 = arith.constant dense<0.000000e+00> : vector<1x8xf32>
    %206 = vector.multi_reduction <add>, %205, %cst_79 [2] : vector<1x8x8xf32> to vector<1x8xf32>
    %207 = vector.shape_cast %206 : vector<1x8xf32> to vector<1x8x1xf32>
    %cst_80 = arith.constant 0.353553385 : f32
    %208 = vector.broadcast %cst_80 : f32 to vector<1x8x1xf32>
    %209 = arith.mulf %207, %208 : vector<1x8x1xf32>
    %210 = vector.extract_strided_slice %198 {offsets = [0, 1, 0, 0], sizes = [1, 1, 8, 8], strides = [1, 1, 1, 1]} : vector<1x4x8x8xf32> to vector<1x1x8x8xf32>
    %211 = vector.shape_cast %210 : vector<1x1x8x8xf32> to vector<1x8x8xf32>
    %212 = arith.mulf %202, %211 : vector<1x8x8xf32>
    %cst_81 = arith.constant dense<0.000000e+00> : vector<1x8xf32>
    %213 = vector.multi_reduction <add>, %212, %cst_81 [2] : vector<1x8x8xf32> to vector<1x8xf32>
    %214 = vector.shape_cast %213 : vector<1x8xf32> to vector<1x8x1xf32>
    %cst_82 = arith.constant 0.353553385 : f32
    %215 = vector.broadcast %cst_82 : f32 to vector<1x8x1xf32>
    %216 = arith.mulf %214, %215 : vector<1x8x1xf32>
    %217 = vector.extract_strided_slice %198 {offsets = [0, 2, 0, 0], sizes = [1, 1, 8, 8], strides = [1, 1, 1, 1]} : vector<1x4x8x8xf32> to vector<1x1x8x8xf32>
    %218 = vector.shape_cast %217 : vector<1x1x8x8xf32> to vector<1x8x8xf32>
    %219 = arith.mulf %202, %218 : vector<1x8x8xf32>
    %cst_83 = arith.constant dense<0.000000e+00> : vector<1x8xf32>
    %220 = vector.multi_reduction <add>, %219, %cst_83 [2] : vector<1x8x8xf32> to vector<1x8xf32>
    %221 = vector.shape_cast %220 : vector<1x8xf32> to vector<1x8x1xf32>
    %cst_84 = arith.constant 0.353553385 : f32
    %222 = vector.broadcast %cst_84 : f32 to vector<1x8x1xf32>
    %223 = arith.mulf %221, %222 : vector<1x8x1xf32>
    %224 = vector.extract_strided_slice %198 {offsets = [0, 3, 0, 0], sizes = [1, 1, 8, 8], strides = [1, 1, 1, 1]} : vector<1x4x8x8xf32> to vector<1x1x8x8xf32>
    %225 = vector.shape_cast %224 : vector<1x1x8x8xf32> to vector<1x8x8xf32>
    %226 = arith.mulf %202, %225 : vector<1x8x8xf32>
    %cst_85 = arith.constant dense<0.000000e+00> : vector<1x8xf32>
    %227 = vector.multi_reduction <add>, %226, %cst_85 [2] : vector<1x8x8xf32> to vector<1x8xf32>
    %228 = vector.shape_cast %227 : vector<1x8xf32> to vector<1x8x1xf32>
    %cst_86 = arith.constant 0.353553385 : f32
    %229 = vector.broadcast %cst_86 : f32 to vector<1x8x1xf32>
    %230 = arith.mulf %228, %229 : vector<1x8x1xf32>
    %231 = arith.maximumf %209, %216 : vector<1x8x1xf32>
    %232 = arith.maximumf %231, %223 : vector<1x8x1xf32>
    %233 = arith.maximumf %232, %230 : vector<1x8x1xf32>
    %234 = arith.subf %209, %233 : vector<1x8x1xf32>
    %235 = math.exp %234 : vector<1x8x1xf32>
    %236 = arith.subf %216, %233 : vector<1x8x1xf32>
    %237 = math.exp %236 : vector<1x8x1xf32>
    %238 = arith.subf %223, %233 : vector<1x8x1xf32>
    %239 = math.exp %238 : vector<1x8x1xf32>
    %240 = arith.subf %230, %233 : vector<1x8x1xf32>
    %241 = math.exp %240 : vector<1x8x1xf32>
    %242 = arith.addf %235, %237 : vector<1x8x1xf32>
    %243 = arith.addf %242, %239 : vector<1x8x1xf32>
    %244 = arith.addf %243, %241 : vector<1x8x1xf32>
    %245 = tpu.reciprocal %244 {approx = true} : vector<1x8x1xf32> -> vector<1x8x1xf32>
    %246 = arith.mulf %235, %245 : vector<1x8x1xf32>
    %247 = vector.extract_strided_slice %199 {offsets = [0, 0, 0, 0], sizes = [1, 1, 8, 8], strides = [1, 1, 1, 1]} : vector<1x4x8x8xf32> to vector<1x1x8x8xf32>
    %248 = vector.shape_cast %247 : vector<1x1x8x8xf32> to vector<1x8x8xf32>
    %249 = vector.broadcast %246 : vector<1x8x1xf32> to vector<1x8x8xf32>
    %250 = arith.mulf %249, %248 : vector<1x8x8xf32>
    %251 = arith.mulf %237, %245 : vector<1x8x1xf32>
    %252 = vector.extract_strided_slice %199 {offsets = [0, 1, 0, 0], sizes = [1, 1, 8, 8], strides = [1, 1, 1, 1]} : vector<1x4x8x8xf32> to vector<1x1x8x8xf32>
    %253 = vector.shape_cast %252 : vector<1x1x8x8xf32> to vector<1x8x8xf32>
    %254 = vector.broadcast %251 : vector<1x8x1xf32> to vector<1x8x8xf32>
    %255 = arith.mulf %254, %253 : vector<1x8x8xf32>
    %256 = arith.addf %250, %255 : vector<1x8x8xf32>
    %257 = arith.mulf %239, %245 : vector<1x8x1xf32>
    %258 = vector.extract_strided_slice %199 {offsets = [0, 2, 0, 0], sizes = [1, 1, 8, 8], strides = [1, 1, 1, 1]} : vector<1x4x8x8xf32> to vector<1x1x8x8xf32>
    %259 = vector.shape_cast %258 : vector<1x1x8x8xf32> to vector<1x8x8xf32>
    %260 = vector.broadcast %257 : vector<1x8x1xf32> to vector<1x8x8xf32>
    %261 = arith.mulf %260, %259 : vector<1x8x8xf32>
    %262 = arith.addf %256, %261 : vector<1x8x8xf32>
    %263 = arith.mulf %241, %245 : vector<1x8x1xf32>
    %264 = vector.extract_strided_slice %199 {offsets = [0, 3, 0, 0], sizes = [1, 1, 8, 8], strides = [1, 1, 1, 1]} : vector<1x4x8x8xf32> to vector<1x1x8x8xf32>
    %265 = vector.shape_cast %264 : vector<1x1x8x8xf32> to vector<1x8x8xf32>
    %266 = vector.broadcast %263 : vector<1x8x1xf32> to vector<1x8x8xf32>
    %267 = arith.mulf %266, %265 : vector<1x8x8xf32>
    %268 = arith.addf %262, %267 : vector<1x8x8xf32>
    %269 = vector.shape_cast %268 : vector<1x8x8xf32> to vector<8x8xf32>
    %cst_87 = arith.constant dense<0.000000e+00> : vector<8x32xf32>
    %270 = tpu.matmul %269, %200, %cst_87 {dimension_numbers = #tpu.dot_dimension_numbers<[1], [0], [0], [1], [0, 0, 1, 1], [], []>} : vector<8x8xf32>, vector<8x32xf32>, vector<8x32xf32> -> vector<8x32xf32>
    %271 = vector.shape_cast %270 : vector<8x32xf32> to vector<1x8x32xf32>
    %272 = vector.extract_strided_slice %197 {offsets = [0, 1, 0, 0], sizes = [1, 1, 8, 8], strides = [1, 1, 1, 1]} : vector<1x4x8x8xf32> to vector<1x1x8x8xf32>
    %273 = vector.shape_cast %272 : vector<1x1x8x8xf32> to vector<1x8x8xf32>
    %274 = vector.extract_strided_slice %198 {offsets = [0, 0, 0, 0], sizes = [1, 1, 8, 8], strides = [1, 1, 1, 1]} : vector<1x4x8x8xf32> to vector<1x1x8x8xf32>
    %275 = vector.shape_cast %274 : vector<1x1x8x8xf32> to vector<1x8x8xf32>
    %276 = arith.mulf %273, %275 : vector<1x8x8xf32>
    %cst_88 = arith.constant dense<0.000000e+00> : vector<1x8xf32>
    %277 = vector.multi_reduction <add>, %276, %cst_88 [2] : vector<1x8x8xf32> to vector<1x8xf32>
    %278 = vector.shape_cast %277 : vector<1x8xf32> to vector<1x8x1xf32>
    %cst_89 = arith.constant 0.353553385 : f32
    %279 = vector.broadcast %cst_89 : f32 to vector<1x8x1xf32>
    %280 = arith.mulf %278, %279 : vector<1x8x1xf32>
    %281 = vector.extract_strided_slice %198 {offsets = [0, 1, 0, 0], sizes = [1, 1, 8, 8], strides = [1, 1, 1, 1]} : vector<1x4x8x8xf32> to vector<1x1x8x8xf32>
    %282 = vector.shape_cast %281 : vector<1x1x8x8xf32> to vector<1x8x8xf32>
    %283 = arith.mulf %273, %282 : vector<1x8x8xf32>
    %cst_90 = arith.constant dense<0.000000e+00> : vector<1x8xf32>
    %284 = vector.multi_reduction <add>, %283, %cst_90 [2] : vector<1x8x8xf32> to vector<1x8xf32>
    %285 = vector.shape_cast %284 : vector<1x8xf32> to vector<1x8x1xf32>
    %cst_91 = arith.constant 0.353553385 : f32
    %286 = vector.broadcast %cst_91 : f32 to vector<1x8x1xf32>
    %287 = arith.mulf %285, %286 : vector<1x8x1xf32>
    %288 = vector.extract_strided_slice %198 {offsets = [0, 2, 0, 0], sizes = [1, 1, 8, 8], strides = [1, 1, 1, 1]} : vector<1x4x8x8xf32> to vector<1x1x8x8xf32>
    %289 = vector.shape_cast %288 : vector<1x1x8x8xf32> to vector<1x8x8xf32>
    %290 = arith.mulf %273, %289 : vector<1x8x8xf32>
    %cst_92 = arith.constant dense<0.000000e+00> : vector<1x8xf32>
    %291 = vector.multi_reduction <add>, %290, %cst_92 [2] : vector<1x8x8xf32> to vector<1x8xf32>
    %292 = vector.shape_cast %291 : vector<1x8xf32> to vector<1x8x1xf32>
    %cst_93 = arith.constant 0.353553385 : f32
    %293 = vector.broadcast %cst_93 : f32 to vector<1x8x1xf32>
    %294 = arith.mulf %292, %293 : vector<1x8x1xf32>
    %295 = vector.extract_strided_slice %198 {offsets = [0, 3, 0, 0], sizes = [1, 1, 8, 8], strides = [1, 1, 1, 1]} : vector<1x4x8x8xf32> to vector<1x1x8x8xf32>
    %296 = vector.shape_cast %295 : vector<1x1x8x8xf32> to vector<1x8x8xf32>
    %297 = arith.mulf %273, %296 : vector<1x8x8xf32>
    %cst_94 = arith.constant dense<0.000000e+00> : vector<1x8xf32>
    %298 = vector.multi_reduction <add>, %297, %cst_94 [2] : vector<1x8x8xf32> to vector<1x8xf32>
    %299 = vector.shape_cast %298 : vector<1x8xf32> to vector<1x8x1xf32>
    %cst_95 = arith.constant 0.353553385 : f32
    %300 = vector.broadcast %cst_95 : f32 to vector<1x8x1xf32>
    %301 = arith.mulf %299, %300 : vector<1x8x1xf32>
    %302 = arith.maximumf %280, %287 : vector<1x8x1xf32>
    %303 = arith.maximumf %302, %294 : vector<1x8x1xf32>
    %304 = arith.maximumf %303, %301 : vector<1x8x1xf32>
    %305 = arith.subf %280, %304 : vector<1x8x1xf32>
    %306 = math.exp %305 : vector<1x8x1xf32>
    %307 = arith.subf %287, %304 : vector<1x8x1xf32>
    %308 = math.exp %307 : vector<1x8x1xf32>
    %309 = arith.subf %294, %304 : vector<1x8x1xf32>
    %310 = math.exp %309 : vector<1x8x1xf32>
    %311 = arith.subf %301, %304 : vector<1x8x1xf32>
    %312 = math.exp %311 : vector<1x8x1xf32>
    %313 = arith.addf %306, %308 : vector<1x8x1xf32>
    %314 = arith.addf %313, %310 : vector<1x8x1xf32>
    %315 = arith.addf %314, %312 : vector<1x8x1xf32>
    %316 = tpu.reciprocal %315 {approx = true} : vector<1x8x1xf32> -> vector<1x8x1xf32>
    %317 = arith.mulf %306, %316 : vector<1x8x1xf32>
    %318 = vector.extract_strided_slice %199 {offsets = [0, 0, 0, 0], sizes = [1, 1, 8, 8], strides = [1, 1, 1, 1]} : vector<1x4x8x8xf32> to vector<1x1x8x8xf32>
    %319 = vector.shape_cast %318 : vector<1x1x8x8xf32> to vector<1x8x8xf32>
    %320 = vector.broadcast %317 : vector<1x8x1xf32> to vector<1x8x8xf32>
    %321 = arith.mulf %320, %319 : vector<1x8x8xf32>
    %322 = arith.mulf %308, %316 : vector<1x8x1xf32>
    %323 = vector.extract_strided_slice %199 {offsets = [0, 1, 0, 0], sizes = [1, 1, 8, 8], strides = [1, 1, 1, 1]} : vector<1x4x8x8xf32> to vector<1x1x8x8xf32>
    %324 = vector.shape_cast %323 : vector<1x1x8x8xf32> to vector<1x8x8xf32>
    %325 = vector.broadcast %322 : vector<1x8x1xf32> to vector<1x8x8xf32>
    %326 = arith.mulf %325, %324 : vector<1x8x8xf32>
    %327 = arith.addf %321, %326 : vector<1x8x8xf32>
    %328 = arith.mulf %310, %316 : vector<1x8x1xf32>
    %329 = vector.extract_strided_slice %199 {offsets = [0, 2, 0, 0], sizes = [1, 1, 8, 8], strides = [1, 1, 1, 1]} : vector<1x4x8x8xf32> to vector<1x1x8x8xf32>
    %330 = vector.shape_cast %329 : vector<1x1x8x8xf32> to vector<1x8x8xf32>
    %331 = vector.broadcast %328 : vector<1x8x1xf32> to vector<1x8x8xf32>
    %332 = arith.mulf %331, %330 : vector<1x8x8xf32>
    %333 = arith.addf %327, %332 : vector<1x8x8xf32>
    %334 = arith.mulf %312, %316 : vector<1x8x1xf32>
    %335 = vector.extract_strided_slice %199 {offsets = [0, 3, 0, 0], sizes = [1, 1, 8, 8], strides = [1, 1, 1, 1]} : vector<1x4x8x8xf32> to vector<1x1x8x8xf32>
    %336 = vector.shape_cast %335 : vector<1x1x8x8xf32> to vector<1x8x8xf32>
    %337 = vector.broadcast %334 : vector<1x8x1xf32> to vector<1x8x8xf32>
    %338 = arith.mulf %337, %336 : vector<1x8x8xf32>
    %339 = arith.addf %333, %338 : vector<1x8x8xf32>
    %340 = vector.shape_cast %339 : vector<1x8x8xf32> to vector<8x8xf32>
    %cst_96 = arith.constant dense<0.000000e+00> : vector<8x32xf32>
    %341 = tpu.matmul %340, %200, %cst_96 {dimension_numbers = #tpu.dot_dimension_numbers<[1], [0], [0], [1], [0, 0, 1, 1], [], []>} : vector<8x8xf32>, vector<8x32xf32>, vector<8x32xf32> -> vector<8x32xf32>
    %342 = vector.shape_cast %341 : vector<8x32xf32> to vector<1x8x32xf32>
    %343 = vector.extract_strided_slice %197 {offsets = [0, 2, 0, 0], sizes = [1, 1, 8, 8], strides = [1, 1, 1, 1]} : vector<1x4x8x8xf32> to vector<1x1x8x8xf32>
    %344 = vector.shape_cast %343 : vector<1x1x8x8xf32> to vector<1x8x8xf32>
    %345 = vector.extract_strided_slice %198 {offsets = [0, 0, 0, 0], sizes = [1, 1, 8, 8], strides = [1, 1, 1, 1]} : vector<1x4x8x8xf32> to vector<1x1x8x8xf32>
    %346 = vector.shape_cast %345 : vector<1x1x8x8xf32> to vector<1x8x8xf32>
    %347 = arith.mulf %344, %346 : vector<1x8x8xf32>
    %cst_97 = arith.constant dense<0.000000e+00> : vector<1x8xf32>
    %348 = vector.multi_reduction <add>, %347, %cst_97 [2] : vector<1x8x8xf32> to vector<1x8xf32>
    %349 = vector.shape_cast %348 : vector<1x8xf32> to vector<1x8x1xf32>
    %cst_98 = arith.constant 0.353553385 : f32
    %350 = vector.broadcast %cst_98 : f32 to vector<1x8x1xf32>
    %351 = arith.mulf %349, %350 : vector<1x8x1xf32>
    %352 = vector.extract_strided_slice %198 {offsets = [0, 1, 0, 0], sizes = [1, 1, 8, 8], strides = [1, 1, 1, 1]} : vector<1x4x8x8xf32> to vector<1x1x8x8xf32>
    %353 = vector.shape_cast %352 : vector<1x1x8x8xf32> to vector<1x8x8xf32>
    %354 = arith.mulf %344, %353 : vector<1x8x8xf32>
    %cst_99 = arith.constant dense<0.000000e+00> : vector<1x8xf32>
    %355 = vector.multi_reduction <add>, %354, %cst_99 [2] : vector<1x8x8xf32> to vector<1x8xf32>
    %356 = vector.shape_cast %355 : vector<1x8xf32> to vector<1x8x1xf32>
    %cst_100 = arith.constant 0.353553385 : f32
    %357 = vector.broadcast %cst_100 : f32 to vector<1x8x1xf32>
    %358 = arith.mulf %356, %357 : vector<1x8x1xf32>
    %359 = vector.extract_strided_slice %198 {offsets = [0, 2, 0, 0], sizes = [1, 1, 8, 8], strides = [1, 1, 1, 1]} : vector<1x4x8x8xf32> to vector<1x1x8x8xf32>
    %360 = vector.shape_cast %359 : vector<1x1x8x8xf32> to vector<1x8x8xf32>
    %361 = arith.mulf %344, %360 : vector<1x8x8xf32>
    %cst_101 = arith.constant dense<0.000000e+00> : vector<1x8xf32>
    %362 = vector.multi_reduction <add>, %361, %cst_101 [2] : vector<1x8x8xf32> to vector<1x8xf32>
    %363 = vector.shape_cast %362 : vector<1x8xf32> to vector<1x8x1xf32>
    %cst_102 = arith.constant 0.353553385 : f32
    %364 = vector.broadcast %cst_102 : f32 to vector<1x8x1xf32>
    %365 = arith.mulf %363, %364 : vector<1x8x1xf32>
    %366 = vector.extract_strided_slice %198 {offsets = [0, 3, 0, 0], sizes = [1, 1, 8, 8], strides = [1, 1, 1, 1]} : vector<1x4x8x8xf32> to vector<1x1x8x8xf32>
    %367 = vector.shape_cast %366 : vector<1x1x8x8xf32> to vector<1x8x8xf32>
    %368 = arith.mulf %344, %367 : vector<1x8x8xf32>
    %cst_103 = arith.constant dense<0.000000e+00> : vector<1x8xf32>
    %369 = vector.multi_reduction <add>, %368, %cst_103 [2] : vector<1x8x8xf32> to vector<1x8xf32>
    %370 = vector.shape_cast %369 : vector<1x8xf32> to vector<1x8x1xf32>
    %cst_104 = arith.constant 0.353553385 : f32
    %371 = vector.broadcast %cst_104 : f32 to vector<1x8x1xf32>
    %372 = arith.mulf %370, %371 : vector<1x8x1xf32>
    %373 = arith.maximumf %351, %358 : vector<1x8x1xf32>
    %374 = arith.maximumf %373, %365 : vector<1x8x1xf32>
    %375 = arith.maximumf %374, %372 : vector<1x8x1xf32>
    %376 = arith.subf %351, %375 : vector<1x8x1xf32>
    %377 = math.exp %376 : vector<1x8x1xf32>
    %378 = arith.subf %358, %375 : vector<1x8x1xf32>
    %379 = math.exp %378 : vector<1x8x1xf32>
    %380 = arith.subf %365, %375 : vector<1x8x1xf32>
    %381 = math.exp %380 : vector<1x8x1xf32>
    %382 = arith.subf %372, %375 : vector<1x8x1xf32>
    %383 = math.exp %382 : vector<1x8x1xf32>
    %384 = arith.addf %377, %379 : vector<1x8x1xf32>
    %385 = arith.addf %384, %381 : vector<1x8x1xf32>
    %386 = arith.addf %385, %383 : vector<1x8x1xf32>
    %387 = tpu.reciprocal %386 {approx = true} : vector<1x8x1xf32> -> vector<1x8x1xf32>
    %388 = arith.mulf %377, %387 : vector<1x8x1xf32>
    %389 = vector.extract_strided_slice %199 {offsets = [0, 0, 0, 0], sizes = [1, 1, 8, 8], strides = [1, 1, 1, 1]} : vector<1x4x8x8xf32> to vector<1x1x8x8xf32>
    %390 = vector.shape_cast %389 : vector<1x1x8x8xf32> to vector<1x8x8xf32>
    %391 = vector.broadcast %388 : vector<1x8x1xf32> to vector<1x8x8xf32>
    %392 = arith.mulf %391, %390 : vector<1x8x8xf32>
    %393 = arith.mulf %379, %387 : vector<1x8x1xf32>
    %394 = vector.extract_strided_slice %199 {offsets = [0, 1, 0, 0], sizes = [1, 1, 8, 8], strides = [1, 1, 1, 1]} : vector<1x4x8x8xf32> to vector<1x1x8x8xf32>
    %395 = vector.shape_cast %394 : vector<1x1x8x8xf32> to vector<1x8x8xf32>
    %396 = vector.broadcast %393 : vector<1x8x1xf32> to vector<1x8x8xf32>
    %397 = arith.mulf %396, %395 : vector<1x8x8xf32>
    %398 = arith.addf %392, %397 : vector<1x8x8xf32>
    %399 = arith.mulf %381, %387 : vector<1x8x1xf32>
    %400 = vector.extract_strided_slice %199 {offsets = [0, 2, 0, 0], sizes = [1, 1, 8, 8], strides = [1, 1, 1, 1]} : vector<1x4x8x8xf32> to vector<1x1x8x8xf32>
    %401 = vector.shape_cast %400 : vector<1x1x8x8xf32> to vector<1x8x8xf32>
    %402 = vector.broadcast %399 : vector<1x8x1xf32> to vector<1x8x8xf32>
    %403 = arith.mulf %402, %401 : vector<1x8x8xf32>
    %404 = arith.addf %398, %403 : vector<1x8x8xf32>
    %405 = arith.mulf %383, %387 : vector<1x8x1xf32>
    %406 = vector.extract_strided_slice %199 {offsets = [0, 3, 0, 0], sizes = [1, 1, 8, 8], strides = [1, 1, 1, 1]} : vector<1x4x8x8xf32> to vector<1x1x8x8xf32>
    %407 = vector.shape_cast %406 : vector<1x1x8x8xf32> to vector<1x8x8xf32>
    %408 = vector.broadcast %405 : vector<1x8x1xf32> to vector<1x8x8xf32>
    %409 = arith.mulf %408, %407 : vector<1x8x8xf32>
    %410 = arith.addf %404, %409 : vector<1x8x8xf32>
    %411 = vector.shape_cast %410 : vector<1x8x8xf32> to vector<8x8xf32>
    %cst_105 = arith.constant dense<0.000000e+00> : vector<8x32xf32>
    %412 = tpu.matmul %411, %200, %cst_105 {dimension_numbers = #tpu.dot_dimension_numbers<[1], [0], [0], [1], [0, 0, 1, 1], [], []>} : vector<8x8xf32>, vector<8x32xf32>, vector<8x32xf32> -> vector<8x32xf32>
    %413 = vector.shape_cast %412 : vector<8x32xf32> to vector<1x8x32xf32>
    %414 = vector.extract_strided_slice %197 {offsets = [0, 3, 0, 0], sizes = [1, 1, 8, 8], strides = [1, 1, 1, 1]} : vector<1x4x8x8xf32> to vector<1x1x8x8xf32>
    %415 = vector.shape_cast %414 : vector<1x1x8x8xf32> to vector<1x8x8xf32>
    %416 = vector.extract_strided_slice %198 {offsets = [0, 0, 0, 0], sizes = [1, 1, 8, 8], strides = [1, 1, 1, 1]} : vector<1x4x8x8xf32> to vector<1x1x8x8xf32>
    %417 = vector.shape_cast %416 : vector<1x1x8x8xf32> to vector<1x8x8xf32>
    %418 = arith.mulf %415, %417 : vector<1x8x8xf32>
    %cst_106 = arith.constant dense<0.000000e+00> : vector<1x8xf32>
    %419 = vector.multi_reduction <add>, %418, %cst_106 [2] : vector<1x8x8xf32> to vector<1x8xf32>
    %420 = vector.shape_cast %419 : vector<1x8xf32> to vector<1x8x1xf32>
    %cst_107 = arith.constant 0.353553385 : f32
    %421 = vector.broadcast %cst_107 : f32 to vector<1x8x1xf32>
    %422 = arith.mulf %420, %421 : vector<1x8x1xf32>
    %423 = vector.extract_strided_slice %198 {offsets = [0, 1, 0, 0], sizes = [1, 1, 8, 8], strides = [1, 1, 1, 1]} : vector<1x4x8x8xf32> to vector<1x1x8x8xf32>
    %424 = vector.shape_cast %423 : vector<1x1x8x8xf32> to vector<1x8x8xf32>
    %425 = arith.mulf %415, %424 : vector<1x8x8xf32>
    %cst_108 = arith.constant dense<0.000000e+00> : vector<1x8xf32>
    %426 = vector.multi_reduction <add>, %425, %cst_108 [2] : vector<1x8x8xf32> to vector<1x8xf32>
    %427 = vector.shape_cast %426 : vector<1x8xf32> to vector<1x8x1xf32>
    %cst_109 = arith.constant 0.353553385 : f32
    %428 = vector.broadcast %cst_109 : f32 to vector<1x8x1xf32>
    %429 = arith.mulf %427, %428 : vector<1x8x1xf32>
    %430 = vector.extract_strided_slice %198 {offsets = [0, 2, 0, 0], sizes = [1, 1, 8, 8], strides = [1, 1, 1, 1]} : vector<1x4x8x8xf32> to vector<1x1x8x8xf32>
    %431 = vector.shape_cast %430 : vector<1x1x8x8xf32> to vector<1x8x8xf32>
    %432 = arith.mulf %415, %431 : vector<1x8x8xf32>
    %cst_110 = arith.constant dense<0.000000e+00> : vector<1x8xf32>
    %433 = vector.multi_reduction <add>, %432, %cst_110 [2] : vector<1x8x8xf32> to vector<1x8xf32>
    %434 = vector.shape_cast %433 : vector<1x8xf32> to vector<1x8x1xf32>
    %cst_111 = arith.constant 0.353553385 : f32
    %435 = vector.broadcast %cst_111 : f32 to vector<1x8x1xf32>
    %436 = arith.mulf %434, %435 : vector<1x8x1xf32>
    %437 = vector.extract_strided_slice %198 {offsets = [0, 3, 0, 0], sizes = [1, 1, 8, 8], strides = [1, 1, 1, 1]} : vector<1x4x8x8xf32> to vector<1x1x8x8xf32>
    %438 = vector.shape_cast %437 : vector<1x1x8x8xf32> to vector<1x8x8xf32>
    %439 = arith.mulf %415, %438 : vector<1x8x8xf32>
    %cst_112 = arith.constant dense<0.000000e+00> : vector<1x8xf32>
    %440 = vector.multi_reduction <add>, %439, %cst_112 [2] : vector<1x8x8xf32> to vector<1x8xf32>
    %441 = vector.shape_cast %440 : vector<1x8xf32> to vector<1x8x1xf32>
    %cst_113 = arith.constant 0.353553385 : f32
    %442 = vector.broadcast %cst_113 : f32 to vector<1x8x1xf32>
    %443 = arith.mulf %441, %442 : vector<1x8x1xf32>
    %444 = arith.maximumf %422, %429 : vector<1x8x1xf32>
    %445 = arith.maximumf %444, %436 : vector<1x8x1xf32>
    %446 = arith.maximumf %445, %443 : vector<1x8x1xf32>
    %447 = arith.subf %422, %446 : vector<1x8x1xf32>
    %448 = math.exp %447 : vector<1x8x1xf32>
    %449 = arith.subf %429, %446 : vector<1x8x1xf32>
    %450 = math.exp %449 : vector<1x8x1xf32>
    %451 = arith.subf %436, %446 : vector<1x8x1xf32>
    %452 = math.exp %451 : vector<1x8x1xf32>
    %453 = arith.subf %443, %446 : vector<1x8x1xf32>
    %454 = math.exp %453 : vector<1x8x1xf32>
    %455 = arith.addf %448, %450 : vector<1x8x1xf32>
    %456 = arith.addf %455, %452 : vector<1x8x1xf32>
    %457 = arith.addf %456, %454 : vector<1x8x1xf32>
    %458 = tpu.reciprocal %457 {approx = true} : vector<1x8x1xf32> -> vector<1x8x1xf32>
    %459 = arith.mulf %448, %458 : vector<1x8x1xf32>
    %460 = vector.extract_strided_slice %199 {offsets = [0, 0, 0, 0], sizes = [1, 1, 8, 8], strides = [1, 1, 1, 1]} : vector<1x4x8x8xf32> to vector<1x1x8x8xf32>
    %461 = vector.shape_cast %460 : vector<1x1x8x8xf32> to vector<1x8x8xf32>
    %462 = vector.broadcast %459 : vector<1x8x1xf32> to vector<1x8x8xf32>
    %463 = arith.mulf %462, %461 : vector<1x8x8xf32>
    %464 = arith.mulf %450, %458 : vector<1x8x1xf32>
    %465 = vector.extract_strided_slice %199 {offsets = [0, 1, 0, 0], sizes = [1, 1, 8, 8], strides = [1, 1, 1, 1]} : vector<1x4x8x8xf32> to vector<1x1x8x8xf32>
    %466 = vector.shape_cast %465 : vector<1x1x8x8xf32> to vector<1x8x8xf32>
    %467 = vector.broadcast %464 : vector<1x8x1xf32> to vector<1x8x8xf32>
    %468 = arith.mulf %467, %466 : vector<1x8x8xf32>
    %469 = arith.addf %463, %468 : vector<1x8x8xf32>
    %470 = arith.mulf %452, %458 : vector<1x8x1xf32>
    %471 = vector.extract_strided_slice %199 {offsets = [0, 2, 0, 0], sizes = [1, 1, 8, 8], strides = [1, 1, 1, 1]} : vector<1x4x8x8xf32> to vector<1x1x8x8xf32>
    %472 = vector.shape_cast %471 : vector<1x1x8x8xf32> to vector<1x8x8xf32>
    %473 = vector.broadcast %470 : vector<1x8x1xf32> to vector<1x8x8xf32>
    %474 = arith.mulf %473, %472 : vector<1x8x8xf32>
    %475 = arith.addf %469, %474 : vector<1x8x8xf32>
    %476 = arith.mulf %454, %458 : vector<1x8x1xf32>
    %477 = vector.extract_strided_slice %199 {offsets = [0, 3, 0, 0], sizes = [1, 1, 8, 8], strides = [1, 1, 1, 1]} : vector<1x4x8x8xf32> to vector<1x1x8x8xf32>
    %478 = vector.shape_cast %477 : vector<1x1x8x8xf32> to vector<1x8x8xf32>
    %479 = vector.broadcast %476 : vector<1x8x1xf32> to vector<1x8x8xf32>
    %480 = arith.mulf %479, %478 : vector<1x8x8xf32>
    %481 = arith.addf %475, %480 : vector<1x8x8xf32>
    %482 = vector.shape_cast %481 : vector<1x8x8xf32> to vector<8x8xf32>
    %cst_114 = arith.constant dense<0.000000e+00> : vector<8x32xf32>
    %483 = tpu.matmul %482, %200, %cst_114 {dimension_numbers = #tpu.dot_dimension_numbers<[1], [0], [0], [1], [0, 0, 1, 1], [], []>} : vector<8x8xf32>, vector<8x32xf32>, vector<8x32xf32> -> vector<8x32xf32>
    %484 = vector.shape_cast %483 : vector<8x32xf32> to vector<1x8x32xf32>
    %485 = vector.extract_strided_slice %196 {offsets = [0, 0, 0, 8], sizes = [1, 4, 8, 8], strides = [1, 1, 1, 1]} : vector<1x4x8x96xf32> to vector<1x4x8x8xf32>
    %486 = vector.extract_strided_slice %196 {offsets = [0, 0, 0, 40], sizes = [1, 4, 8, 8], strides = [1, 1, 1, 1]} : vector<1x4x8x96xf32> to vector<1x4x8x8xf32>
    %487 = vector.extract_strided_slice %196 {offsets = [0, 0, 0, 72], sizes = [1, 4, 8, 8], strides = [1, 1, 1, 1]} : vector<1x4x8x96xf32> to vector<1x4x8x8xf32>
    %488 = vector.extract_strided_slice %171 {offsets = [8, 0], sizes = [8, 32], strides = [1, 1]} : vector<32x32xf32> to vector<8x32xf32>
    %489 = vector.extract_strided_slice %485 {offsets = [0, 0, 0, 0], sizes = [1, 1, 8, 8], strides = [1, 1, 1, 1]} : vector<1x4x8x8xf32> to vector<1x1x8x8xf32>
    %490 = vector.shape_cast %489 : vector<1x1x8x8xf32> to vector<1x8x8xf32>
    %491 = vector.extract_strided_slice %486 {offsets = [0, 0, 0, 0], sizes = [1, 1, 8, 8], strides = [1, 1, 1, 1]} : vector<1x4x8x8xf32> to vector<1x1x8x8xf32>
    %492 = vector.shape_cast %491 : vector<1x1x8x8xf32> to vector<1x8x8xf32>
    %493 = arith.mulf %490, %492 : vector<1x8x8xf32>
    %cst_115 = arith.constant dense<0.000000e+00> : vector<1x8xf32>
    %494 = vector.multi_reduction <add>, %493, %cst_115 [2] : vector<1x8x8xf32> to vector<1x8xf32>
    %495 = vector.shape_cast %494 : vector<1x8xf32> to vector<1x8x1xf32>
    %cst_116 = arith.constant 0.353553385 : f32
    %496 = vector.broadcast %cst_116 : f32 to vector<1x8x1xf32>
    %497 = arith.mulf %495, %496 : vector<1x8x1xf32>
    %498 = vector.extract_strided_slice %486 {offsets = [0, 1, 0, 0], sizes = [1, 1, 8, 8], strides = [1, 1, 1, 1]} : vector<1x4x8x8xf32> to vector<1x1x8x8xf32>
    %499 = vector.shape_cast %498 : vector<1x1x8x8xf32> to vector<1x8x8xf32>
    %500 = arith.mulf %490, %499 : vector<1x8x8xf32>
    %cst_117 = arith.constant dense<0.000000e+00> : vector<1x8xf32>
    %501 = vector.multi_reduction <add>, %500, %cst_117 [2] : vector<1x8x8xf32> to vector<1x8xf32>
    %502 = vector.shape_cast %501 : vector<1x8xf32> to vector<1x8x1xf32>
    %cst_118 = arith.constant 0.353553385 : f32
    %503 = vector.broadcast %cst_118 : f32 to vector<1x8x1xf32>
    %504 = arith.mulf %502, %503 : vector<1x8x1xf32>
    %505 = vector.extract_strided_slice %486 {offsets = [0, 2, 0, 0], sizes = [1, 1, 8, 8], strides = [1, 1, 1, 1]} : vector<1x4x8x8xf32> to vector<1x1x8x8xf32>
    %506 = vector.shape_cast %505 : vector<1x1x8x8xf32> to vector<1x8x8xf32>
    %507 = arith.mulf %490, %506 : vector<1x8x8xf32>
    %cst_119 = arith.constant dense<0.000000e+00> : vector<1x8xf32>
    %508 = vector.multi_reduction <add>, %507, %cst_119 [2] : vector<1x8x8xf32> to vector<1x8xf32>
    %509 = vector.shape_cast %508 : vector<1x8xf32> to vector<1x8x1xf32>
    %cst_120 = arith.constant 0.353553385 : f32
    %510 = vector.broadcast %cst_120 : f32 to vector<1x8x1xf32>
    %511 = arith.mulf %509, %510 : vector<1x8x1xf32>
    %512 = vector.extract_strided_slice %486 {offsets = [0, 3, 0, 0], sizes = [1, 1, 8, 8], strides = [1, 1, 1, 1]} : vector<1x4x8x8xf32> to vector<1x1x8x8xf32>
    %513 = vector.shape_cast %512 : vector<1x1x8x8xf32> to vector<1x8x8xf32>
    %514 = arith.mulf %490, %513 : vector<1x8x8xf32>
    %cst_121 = arith.constant dense<0.000000e+00> : vector<1x8xf32>
    %515 = vector.multi_reduction <add>, %514, %cst_121 [2] : vector<1x8x8xf32> to vector<1x8xf32>
    %516 = vector.shape_cast %515 : vector<1x8xf32> to vector<1x8x1xf32>
    %cst_122 = arith.constant 0.353553385 : f32
    %517 = vector.broadcast %cst_122 : f32 to vector<1x8x1xf32>
    %518 = arith.mulf %516, %517 : vector<1x8x1xf32>
    %519 = arith.maximumf %497, %504 : vector<1x8x1xf32>
    %520 = arith.maximumf %519, %511 : vector<1x8x1xf32>
    %521 = arith.maximumf %520, %518 : vector<1x8x1xf32>
    %522 = arith.subf %497, %521 : vector<1x8x1xf32>
    %523 = math.exp %522 : vector<1x8x1xf32>
    %524 = arith.subf %504, %521 : vector<1x8x1xf32>
    %525 = math.exp %524 : vector<1x8x1xf32>
    %526 = arith.subf %511, %521 : vector<1x8x1xf32>
    %527 = math.exp %526 : vector<1x8x1xf32>
    %528 = arith.subf %518, %521 : vector<1x8x1xf32>
    %529 = math.exp %528 : vector<1x8x1xf32>
    %530 = arith.addf %523, %525 : vector<1x8x1xf32>
    %531 = arith.addf %530, %527 : vector<1x8x1xf32>
    %532 = arith.addf %531, %529 : vector<1x8x1xf32>
    %533 = tpu.reciprocal %532 {approx = true} : vector<1x8x1xf32> -> vector<1x8x1xf32>
    %534 = arith.mulf %523, %533 : vector<1x8x1xf32>
    %535 = vector.extract_strided_slice %487 {offsets = [0, 0, 0, 0], sizes = [1, 1, 8, 8], strides = [1, 1, 1, 1]} : vector<1x4x8x8xf32> to vector<1x1x8x8xf32>
    %536 = vector.shape_cast %535 : vector<1x1x8x8xf32> to vector<1x8x8xf32>
    %537 = vector.broadcast %534 : vector<1x8x1xf32> to vector<1x8x8xf32>
    %538 = arith.mulf %537, %536 : vector<1x8x8xf32>
    %539 = arith.mulf %525, %533 : vector<1x8x1xf32>
    %540 = vector.extract_strided_slice %487 {offsets = [0, 1, 0, 0], sizes = [1, 1, 8, 8], strides = [1, 1, 1, 1]} : vector<1x4x8x8xf32> to vector<1x1x8x8xf32>
    %541 = vector.shape_cast %540 : vector<1x1x8x8xf32> to vector<1x8x8xf32>
    %542 = vector.broadcast %539 : vector<1x8x1xf32> to vector<1x8x8xf32>
    %543 = arith.mulf %542, %541 : vector<1x8x8xf32>
    %544 = arith.addf %538, %543 : vector<1x8x8xf32>
    %545 = arith.mulf %527, %533 : vector<1x8x1xf32>
    %546 = vector.extract_strided_slice %487 {offsets = [0, 2, 0, 0], sizes = [1, 1, 8, 8], strides = [1, 1, 1, 1]} : vector<1x4x8x8xf32> to vector<1x1x8x8xf32>
    %547 = vector.shape_cast %546 : vector<1x1x8x8xf32> to vector<1x8x8xf32>
    %548 = vector.broadcast %545 : vector<1x8x1xf32> to vector<1x8x8xf32>
    %549 = arith.mulf %548, %547 : vector<1x8x8xf32>
    %550 = arith.addf %544, %549 : vector<1x8x8xf32>
    %551 = arith.mulf %529, %533 : vector<1x8x1xf32>
    %552 = vector.extract_strided_slice %487 {offsets = [0, 3, 0, 0], sizes = [1, 1, 8, 8], strides = [1, 1, 1, 1]} : vector<1x4x8x8xf32> to vector<1x1x8x8xf32>
    %553 = vector.shape_cast %552 : vector<1x1x8x8xf32> to vector<1x8x8xf32>
    %554 = vector.broadcast %551 : vector<1x8x1xf32> to vector<1x8x8xf32>
    %555 = arith.mulf %554, %553 : vector<1x8x8xf32>
    %556 = arith.addf %550, %555 : vector<1x8x8xf32>
    %557 = vector.shape_cast %556 : vector<1x8x8xf32> to vector<8x8xf32>
    %cst_123 = arith.constant dense<0.000000e+00> : vector<8x32xf32>
    %558 = tpu.matmul %557, %488, %cst_123 {dimension_numbers = #tpu.dot_dimension_numbers<[1], [0], [0], [1], [0, 0, 1, 1], [], []>} : vector<8x8xf32>, vector<8x32xf32>, vector<8x32xf32> -> vector<8x32xf32>
    %559 = vector.shape_cast %558 : vector<8x32xf32> to vector<1x8x32xf32>
    %560 = arith.addf %271, %559 : vector<1x8x32xf32>
    %561 = vector.extract_strided_slice %485 {offsets = [0, 1, 0, 0], sizes = [1, 1, 8, 8], strides = [1, 1, 1, 1]} : vector<1x4x8x8xf32> to vector<1x1x8x8xf32>
    %562 = vector.shape_cast %561 : vector<1x1x8x8xf32> to vector<1x8x8xf32>
    %563 = vector.extract_strided_slice %486 {offsets = [0, 0, 0, 0], sizes = [1, 1, 8, 8], strides = [1, 1, 1, 1]} : vector<1x4x8x8xf32> to vector<1x1x8x8xf32>
    %564 = vector.shape_cast %563 : vector<1x1x8x8xf32> to vector<1x8x8xf32>
    %565 = arith.mulf %562, %564 : vector<1x8x8xf32>
    %cst_124 = arith.constant dense<0.000000e+00> : vector<1x8xf32>
    %566 = vector.multi_reduction <add>, %565, %cst_124 [2] : vector<1x8x8xf32> to vector<1x8xf32>
    %567 = vector.shape_cast %566 : vector<1x8xf32> to vector<1x8x1xf32>
    %cst_125 = arith.constant 0.353553385 : f32
    %568 = vector.broadcast %cst_125 : f32 to vector<1x8x1xf32>
    %569 = arith.mulf %567, %568 : vector<1x8x1xf32>
    %570 = vector.extract_strided_slice %486 {offsets = [0, 1, 0, 0], sizes = [1, 1, 8, 8], strides = [1, 1, 1, 1]} : vector<1x4x8x8xf32> to vector<1x1x8x8xf32>
    %571 = vector.shape_cast %570 : vector<1x1x8x8xf32> to vector<1x8x8xf32>
    %572 = arith.mulf %562, %571 : vector<1x8x8xf32>
    %cst_126 = arith.constant dense<0.000000e+00> : vector<1x8xf32>
    %573 = vector.multi_reduction <add>, %572, %cst_126 [2] : vector<1x8x8xf32> to vector<1x8xf32>
    %574 = vector.shape_cast %573 : vector<1x8xf32> to vector<1x8x1xf32>
    %cst_127 = arith.constant 0.353553385 : f32
    %575 = vector.broadcast %cst_127 : f32 to vector<1x8x1xf32>
    %576 = arith.mulf %574, %575 : vector<1x8x1xf32>
    %577 = vector.extract_strided_slice %486 {offsets = [0, 2, 0, 0], sizes = [1, 1, 8, 8], strides = [1, 1, 1, 1]} : vector<1x4x8x8xf32> to vector<1x1x8x8xf32>
    %578 = vector.shape_cast %577 : vector<1x1x8x8xf32> to vector<1x8x8xf32>
    %579 = arith.mulf %562, %578 : vector<1x8x8xf32>
    %cst_128 = arith.constant dense<0.000000e+00> : vector<1x8xf32>
    %580 = vector.multi_reduction <add>, %579, %cst_128 [2] : vector<1x8x8xf32> to vector<1x8xf32>
    %581 = vector.shape_cast %580 : vector<1x8xf32> to vector<1x8x1xf32>
    %cst_129 = arith.constant 0.353553385 : f32
    %582 = vector.broadcast %cst_129 : f32 to vector<1x8x1xf32>
    %583 = arith.mulf %581, %582 : vector<1x8x1xf32>
    %584 = vector.extract_strided_slice %486 {offsets = [0, 3, 0, 0], sizes = [1, 1, 8, 8], strides = [1, 1, 1, 1]} : vector<1x4x8x8xf32> to vector<1x1x8x8xf32>
    %585 = vector.shape_cast %584 : vector<1x1x8x8xf32> to vector<1x8x8xf32>
    %586 = arith.mulf %562, %585 : vector<1x8x8xf32>
    %cst_130 = arith.constant dense<0.000000e+00> : vector<1x8xf32>
    %587 = vector.multi_reduction <add>, %586, %cst_130 [2] : vector<1x8x8xf32> to vector<1x8xf32>
    %588 = vector.shape_cast %587 : vector<1x8xf32> to vector<1x8x1xf32>
    %cst_131 = arith.constant 0.353553385 : f32
    %589 = vector.broadcast %cst_131 : f32 to vector<1x8x1xf32>
    %590 = arith.mulf %588, %589 : vector<1x8x1xf32>
    %591 = arith.maximumf %569, %576 : vector<1x8x1xf32>
    %592 = arith.maximumf %591, %583 : vector<1x8x1xf32>
    %593 = arith.maximumf %592, %590 : vector<1x8x1xf32>
    %594 = arith.subf %569, %593 : vector<1x8x1xf32>
    %595 = math.exp %594 : vector<1x8x1xf32>
    %596 = arith.subf %576, %593 : vector<1x8x1xf32>
    %597 = math.exp %596 : vector<1x8x1xf32>
    %598 = arith.subf %583, %593 : vector<1x8x1xf32>
    %599 = math.exp %598 : vector<1x8x1xf32>
    %600 = arith.subf %590, %593 : vector<1x8x1xf32>
    %601 = math.exp %600 : vector<1x8x1xf32>
    %602 = arith.addf %595, %597 : vector<1x8x1xf32>
    %603 = arith.addf %602, %599 : vector<1x8x1xf32>
    %604 = arith.addf %603, %601 : vector<1x8x1xf32>
    %605 = tpu.reciprocal %604 {approx = true} : vector<1x8x1xf32> -> vector<1x8x1xf32>
    %606 = arith.mulf %595, %605 : vector<1x8x1xf32>
    %607 = vector.extract_strided_slice %487 {offsets = [0, 0, 0, 0], sizes = [1, 1, 8, 8], strides = [1, 1, 1, 1]} : vector<1x4x8x8xf32> to vector<1x1x8x8xf32>
    %608 = vector.shape_cast %607 : vector<1x1x8x8xf32> to vector<1x8x8xf32>
    %609 = vector.broadcast %606 : vector<1x8x1xf32> to vector<1x8x8xf32>
    %610 = arith.mulf %609, %608 : vector<1x8x8xf32>
    %611 = arith.mulf %597, %605 : vector<1x8x1xf32>
    %612 = vector.extract_strided_slice %487 {offsets = [0, 1, 0, 0], sizes = [1, 1, 8, 8], strides = [1, 1, 1, 1]} : vector<1x4x8x8xf32> to vector<1x1x8x8xf32>
    %613 = vector.shape_cast %612 : vector<1x1x8x8xf32> to vector<1x8x8xf32>
    %614 = vector.broadcast %611 : vector<1x8x1xf32> to vector<1x8x8xf32>
    %615 = arith.mulf %614, %613 : vector<1x8x8xf32>
    %616 = arith.addf %610, %615 : vector<1x8x8xf32>
    %617 = arith.mulf %599, %605 : vector<1x8x1xf32>
    %618 = vector.extract_strided_slice %487 {offsets = [0, 2, 0, 0], sizes = [1, 1, 8, 8], strides = [1, 1, 1, 1]} : vector<1x4x8x8xf32> to vector<1x1x8x8xf32>
    %619 = vector.shape_cast %618 : vector<1x1x8x8xf32> to vector<1x8x8xf32>
    %620 = vector.broadcast %617 : vector<1x8x1xf32> to vector<1x8x8xf32>
    %621 = arith.mulf %620, %619 : vector<1x8x8xf32>
    %622 = arith.addf %616, %621 : vector<1x8x8xf32>
    %623 = arith.mulf %601, %605 : vector<1x8x1xf32>
    %624 = vector.extract_strided_slice %487 {offsets = [0, 3, 0, 0], sizes = [1, 1, 8, 8], strides = [1, 1, 1, 1]} : vector<1x4x8x8xf32> to vector<1x1x8x8xf32>
    %625 = vector.shape_cast %624 : vector<1x1x8x8xf32> to vector<1x8x8xf32>
    %626 = vector.broadcast %623 : vector<1x8x1xf32> to vector<1x8x8xf32>
    %627 = arith.mulf %626, %625 : vector<1x8x8xf32>
    %628 = arith.addf %622, %627 : vector<1x8x8xf32>
    %629 = vector.shape_cast %628 : vector<1x8x8xf32> to vector<8x8xf32>
    %cst_132 = arith.constant dense<0.000000e+00> : vector<8x32xf32>
    %630 = tpu.matmul %629, %488, %cst_132 {dimension_numbers = #tpu.dot_dimension_numbers<[1], [0], [0], [1], [0, 0, 1, 1], [], []>} : vector<8x8xf32>, vector<8x32xf32>, vector<8x32xf32> -> vector<8x32xf32>
    %631 = vector.shape_cast %630 : vector<8x32xf32> to vector<1x8x32xf32>
    %632 = arith.addf %342, %631 : vector<1x8x32xf32>
    %633 = vector.extract_strided_slice %485 {offsets = [0, 2, 0, 0], sizes = [1, 1, 8, 8], strides = [1, 1, 1, 1]} : vector<1x4x8x8xf32> to vector<1x1x8x8xf32>
    %634 = vector.shape_cast %633 : vector<1x1x8x8xf32> to vector<1x8x8xf32>
    %635 = vector.extract_strided_slice %486 {offsets = [0, 0, 0, 0], sizes = [1, 1, 8, 8], strides = [1, 1, 1, 1]} : vector<1x4x8x8xf32> to vector<1x1x8x8xf32>
    %636 = vector.shape_cast %635 : vector<1x1x8x8xf32> to vector<1x8x8xf32>
    %637 = arith.mulf %634, %636 : vector<1x8x8xf32>
    %cst_133 = arith.constant dense<0.000000e+00> : vector<1x8xf32>
    %638 = vector.multi_reduction <add>, %637, %cst_133 [2] : vector<1x8x8xf32> to vector<1x8xf32>
    %639 = vector.shape_cast %638 : vector<1x8xf32> to vector<1x8x1xf32>
    %cst_134 = arith.constant 0.353553385 : f32
    %640 = vector.broadcast %cst_134 : f32 to vector<1x8x1xf32>
    %641 = arith.mulf %639, %640 : vector<1x8x1xf32>
    %642 = vector.extract_strided_slice %486 {offsets = [0, 1, 0, 0], sizes = [1, 1, 8, 8], strides = [1, 1, 1, 1]} : vector<1x4x8x8xf32> to vector<1x1x8x8xf32>
    %643 = vector.shape_cast %642 : vector<1x1x8x8xf32> to vector<1x8x8xf32>
    %644 = arith.mulf %634, %643 : vector<1x8x8xf32>
    %cst_135 = arith.constant dense<0.000000e+00> : vector<1x8xf32>
    %645 = vector.multi_reduction <add>, %644, %cst_135 [2] : vector<1x8x8xf32> to vector<1x8xf32>
    %646 = vector.shape_cast %645 : vector<1x8xf32> to vector<1x8x1xf32>
    %cst_136 = arith.constant 0.353553385 : f32
    %647 = vector.broadcast %cst_136 : f32 to vector<1x8x1xf32>
    %648 = arith.mulf %646, %647 : vector<1x8x1xf32>
    %649 = vector.extract_strided_slice %486 {offsets = [0, 2, 0, 0], sizes = [1, 1, 8, 8], strides = [1, 1, 1, 1]} : vector<1x4x8x8xf32> to vector<1x1x8x8xf32>
    %650 = vector.shape_cast %649 : vector<1x1x8x8xf32> to vector<1x8x8xf32>
    %651 = arith.mulf %634, %650 : vector<1x8x8xf32>
    %cst_137 = arith.constant dense<0.000000e+00> : vector<1x8xf32>
    %652 = vector.multi_reduction <add>, %651, %cst_137 [2] : vector<1x8x8xf32> to vector<1x8xf32>
    %653 = vector.shape_cast %652 : vector<1x8xf32> to vector<1x8x1xf32>
    %cst_138 = arith.constant 0.353553385 : f32
    %654 = vector.broadcast %cst_138 : f32 to vector<1x8x1xf32>
    %655 = arith.mulf %653, %654 : vector<1x8x1xf32>
    %656 = vector.extract_strided_slice %486 {offsets = [0, 3, 0, 0], sizes = [1, 1, 8, 8], strides = [1, 1, 1, 1]} : vector<1x4x8x8xf32> to vector<1x1x8x8xf32>
    %657 = vector.shape_cast %656 : vector<1x1x8x8xf32> to vector<1x8x8xf32>
    %658 = arith.mulf %634, %657 : vector<1x8x8xf32>
    %cst_139 = arith.constant dense<0.000000e+00> : vector<1x8xf32>
    %659 = vector.multi_reduction <add>, %658, %cst_139 [2] : vector<1x8x8xf32> to vector<1x8xf32>
    %660 = vector.shape_cast %659 : vector<1x8xf32> to vector<1x8x1xf32>
    %cst_140 = arith.constant 0.353553385 : f32
    %661 = vector.broadcast %cst_140 : f32 to vector<1x8x1xf32>
    %662 = arith.mulf %660, %661 : vector<1x8x1xf32>
    %663 = arith.maximumf %641, %648 : vector<1x8x1xf32>
    %664 = arith.maximumf %663, %655 : vector<1x8x1xf32>
    %665 = arith.maximumf %664, %662 : vector<1x8x1xf32>
    %666 = arith.subf %641, %665 : vector<1x8x1xf32>
    %667 = math.exp %666 : vector<1x8x1xf32>
    %668 = arith.subf %648, %665 : vector<1x8x1xf32>
    %669 = math.exp %668 : vector<1x8x1xf32>
    %670 = arith.subf %655, %665 : vector<1x8x1xf32>
    %671 = math.exp %670 : vector<1x8x1xf32>
    %672 = arith.subf %662, %665 : vector<1x8x1xf32>
    %673 = math.exp %672 : vector<1x8x1xf32>
    %674 = arith.addf %667, %669 : vector<1x8x1xf32>
    %675 = arith.addf %674, %671 : vector<1x8x1xf32>
    %676 = arith.addf %675, %673 : vector<1x8x1xf32>
    %677 = tpu.reciprocal %676 {approx = true} : vector<1x8x1xf32> -> vector<1x8x1xf32>
    %678 = arith.mulf %667, %677 : vector<1x8x1xf32>
    %679 = vector.extract_strided_slice %487 {offsets = [0, 0, 0, 0], sizes = [1, 1, 8, 8], strides = [1, 1, 1, 1]} : vector<1x4x8x8xf32> to vector<1x1x8x8xf32>
    %680 = vector.shape_cast %679 : vector<1x1x8x8xf32> to vector<1x8x8xf32>
    %681 = vector.broadcast %678 : vector<1x8x1xf32> to vector<1x8x8xf32>
    %682 = arith.mulf %681, %680 : vector<1x8x8xf32>
    %683 = arith.mulf %669, %677 : vector<1x8x1xf32>
    %684 = vector.extract_strided_slice %487 {offsets = [0, 1, 0, 0], sizes = [1, 1, 8, 8], strides = [1, 1, 1, 1]} : vector<1x4x8x8xf32> to vector<1x1x8x8xf32>
    %685 = vector.shape_cast %684 : vector<1x1x8x8xf32> to vector<1x8x8xf32>
    %686 = vector.broadcast %683 : vector<1x8x1xf32> to vector<1x8x8xf32>
    %687 = arith.mulf %686, %685 : vector<1x8x8xf32>
    %688 = arith.addf %682, %687 : vector<1x8x8xf32>
    %689 = arith.mulf %671, %677 : vector<1x8x1xf32>
    %690 = vector.extract_strided_slice %487 {offsets = [0, 2, 0, 0], sizes = [1, 1, 8, 8], strides = [1, 1, 1, 1]} : vector<1x4x8x8xf32> to vector<1x1x8x8xf32>
    %691 = vector.shape_cast %690 : vector<1x1x8x8xf32> to vector<1x8x8xf32>
    %692 = vector.broadcast %689 : vector<1x8x1xf32> to vector<1x8x8xf32>
    %693 = arith.mulf %692, %691 : vector<1x8x8xf32>
    %694 = arith.addf %688, %693 : vector<1x8x8xf32>
    %695 = arith.mulf %673, %677 : vector<1x8x1xf32>
    %696 = vector.extract_strided_slice %487 {offsets = [0, 3, 0, 0], sizes = [1, 1, 8, 8], strides = [1, 1, 1, 1]} : vector<1x4x8x8xf32> to vector<1x1x8x8xf32>
    %697 = vector.shape_cast %696 : vector<1x1x8x8xf32> to vector<1x8x8xf32>
    %698 = vector.broadcast %695 : vector<1x8x1xf32> to vector<1x8x8xf32>
    %699 = arith.mulf %698, %697 : vector<1x8x8xf32>
    %700 = arith.addf %694, %699 : vector<1x8x8xf32>
    %701 = vector.shape_cast %700 : vector<1x8x8xf32> to vector<8x8xf32>
    %cst_141 = arith.constant dense<0.000000e+00> : vector<8x32xf32>
    %702 = tpu.matmul %701, %488, %cst_141 {dimension_numbers = #tpu.dot_dimension_numbers<[1], [0], [0], [1], [0, 0, 1, 1], [], []>} : vector<8x8xf32>, vector<8x32xf32>, vector<8x32xf32> -> vector<8x32xf32>
    %703 = vector.shape_cast %702 : vector<8x32xf32> to vector<1x8x32xf32>
    %704 = arith.addf %413, %703 : vector<1x8x32xf32>
    %705 = vector.extract_strided_slice %485 {offsets = [0, 3, 0, 0], sizes = [1, 1, 8, 8], strides = [1, 1, 1, 1]} : vector<1x4x8x8xf32> to vector<1x1x8x8xf32>
    %706 = vector.shape_cast %705 : vector<1x1x8x8xf32> to vector<1x8x8xf32>
    %707 = vector.extract_strided_slice %486 {offsets = [0, 0, 0, 0], sizes = [1, 1, 8, 8], strides = [1, 1, 1, 1]} : vector<1x4x8x8xf32> to vector<1x1x8x8xf32>
    %708 = vector.shape_cast %707 : vector<1x1x8x8xf32> to vector<1x8x8xf32>
    %709 = arith.mulf %706, %708 : vector<1x8x8xf32>
    %cst_142 = arith.constant dense<0.000000e+00> : vector<1x8xf32>
    %710 = vector.multi_reduction <add>, %709, %cst_142 [2] : vector<1x8x8xf32> to vector<1x8xf32>
    %711 = vector.shape_cast %710 : vector<1x8xf32> to vector<1x8x1xf32>
    %cst_143 = arith.constant 0.353553385 : f32
    %712 = vector.broadcast %cst_143 : f32 to vector<1x8x1xf32>
    %713 = arith.mulf %711, %712 : vector<1x8x1xf32>
    %714 = vector.extract_strided_slice %486 {offsets = [0, 1, 0, 0], sizes = [1, 1, 8, 8], strides = [1, 1, 1, 1]} : vector<1x4x8x8xf32> to vector<1x1x8x8xf32>
    %715 = vector.shape_cast %714 : vector<1x1x8x8xf32> to vector<1x8x8xf32>
    %716 = arith.mulf %706, %715 : vector<1x8x8xf32>
    %cst_144 = arith.constant dense<0.000000e+00> : vector<1x8xf32>
    %717 = vector.multi_reduction <add>, %716, %cst_144 [2] : vector<1x8x8xf32> to vector<1x8xf32>
    %718 = vector.shape_cast %717 : vector<1x8xf32> to vector<1x8x1xf32>
    %cst_145 = arith.constant 0.353553385 : f32
    %719 = vector.broadcast %cst_145 : f32 to vector<1x8x1xf32>
    %720 = arith.mulf %718, %719 : vector<1x8x1xf32>
    %721 = vector.extract_strided_slice %486 {offsets = [0, 2, 0, 0], sizes = [1, 1, 8, 8], strides = [1, 1, 1, 1]} : vector<1x4x8x8xf32> to vector<1x1x8x8xf32>
    %722 = vector.shape_cast %721 : vector<1x1x8x8xf32> to vector<1x8x8xf32>
    %723 = arith.mulf %706, %722 : vector<1x8x8xf32>
    %cst_146 = arith.constant dense<0.000000e+00> : vector<1x8xf32>
    %724 = vector.multi_reduction <add>, %723, %cst_146 [2] : vector<1x8x8xf32> to vector<1x8xf32>
    %725 = vector.shape_cast %724 : vector<1x8xf32> to vector<1x8x1xf32>
    %cst_147 = arith.constant 0.353553385 : f32
    %726 = vector.broadcast %cst_147 : f32 to vector<1x8x1xf32>
    %727 = arith.mulf %725, %726 : vector<1x8x1xf32>
    %728 = vector.extract_strided_slice %486 {offsets = [0, 3, 0, 0], sizes = [1, 1, 8, 8], strides = [1, 1, 1, 1]} : vector<1x4x8x8xf32> to vector<1x1x8x8xf32>
    %729 = vector.shape_cast %728 : vector<1x1x8x8xf32> to vector<1x8x8xf32>
    %730 = arith.mulf %706, %729 : vector<1x8x8xf32>
    %cst_148 = arith.constant dense<0.000000e+00> : vector<1x8xf32>
    %731 = vector.multi_reduction <add>, %730, %cst_148 [2] : vector<1x8x8xf32> to vector<1x8xf32>
    %732 = vector.shape_cast %731 : vector<1x8xf32> to vector<1x8x1xf32>
    %cst_149 = arith.constant 0.353553385 : f32
    %733 = vector.broadcast %cst_149 : f32 to vector<1x8x1xf32>
    %734 = arith.mulf %732, %733 : vector<1x8x1xf32>
    %735 = arith.maximumf %713, %720 : vector<1x8x1xf32>
    %736 = arith.maximumf %735, %727 : vector<1x8x1xf32>
    %737 = arith.maximumf %736, %734 : vector<1x8x1xf32>
    %738 = arith.subf %713, %737 : vector<1x8x1xf32>
    %739 = math.exp %738 : vector<1x8x1xf32>
    %740 = arith.subf %720, %737 : vector<1x8x1xf32>
    %741 = math.exp %740 : vector<1x8x1xf32>
    %742 = arith.subf %727, %737 : vector<1x8x1xf32>
    %743 = math.exp %742 : vector<1x8x1xf32>
    %744 = arith.subf %734, %737 : vector<1x8x1xf32>
    %745 = math.exp %744 : vector<1x8x1xf32>
    %746 = arith.addf %739, %741 : vector<1x8x1xf32>
    %747 = arith.addf %746, %743 : vector<1x8x1xf32>
    %748 = arith.addf %747, %745 : vector<1x8x1xf32>
    %749 = tpu.reciprocal %748 {approx = true} : vector<1x8x1xf32> -> vector<1x8x1xf32>
    %750 = arith.mulf %739, %749 : vector<1x8x1xf32>
    %751 = vector.extract_strided_slice %487 {offsets = [0, 0, 0, 0], sizes = [1, 1, 8, 8], strides = [1, 1, 1, 1]} : vector<1x4x8x8xf32> to vector<1x1x8x8xf32>
    %752 = vector.shape_cast %751 : vector<1x1x8x8xf32> to vector<1x8x8xf32>
    %753 = vector.broadcast %750 : vector<1x8x1xf32> to vector<1x8x8xf32>
    %754 = arith.mulf %753, %752 : vector<1x8x8xf32>
    %755 = arith.mulf %741, %749 : vector<1x8x1xf32>
    %756 = vector.extract_strided_slice %487 {offsets = [0, 1, 0, 0], sizes = [1, 1, 8, 8], strides = [1, 1, 1, 1]} : vector<1x4x8x8xf32> to vector<1x1x8x8xf32>
    %757 = vector.shape_cast %756 : vector<1x1x8x8xf32> to vector<1x8x8xf32>
    %758 = vector.broadcast %755 : vector<1x8x1xf32> to vector<1x8x8xf32>
    %759 = arith.mulf %758, %757 : vector<1x8x8xf32>
    %760 = arith.addf %754, %759 : vector<1x8x8xf32>
    %761 = arith.mulf %743, %749 : vector<1x8x1xf32>
    %762 = vector.extract_strided_slice %487 {offsets = [0, 2, 0, 0], sizes = [1, 1, 8, 8], strides = [1, 1, 1, 1]} : vector<1x4x8x8xf32> to vector<1x1x8x8xf32>
    %763 = vector.shape_cast %762 : vector<1x1x8x8xf32> to vector<1x8x8xf32>
    %764 = vector.broadcast %761 : vector<1x8x1xf32> to vector<1x8x8xf32>
    %765 = arith.mulf %764, %763 : vector<1x8x8xf32>
    %766 = arith.addf %760, %765 : vector<1x8x8xf32>
    %767 = arith.mulf %745, %749 : vector<1x8x1xf32>
    %768 = vector.extract_strided_slice %487 {offsets = [0, 3, 0, 0], sizes = [1, 1, 8, 8], strides = [1, 1, 1, 1]} : vector<1x4x8x8xf32> to vector<1x1x8x8xf32>
    %769 = vector.shape_cast %768 : vector<1x1x8x8xf32> to vector<1x8x8xf32>
    %770 = vector.broadcast %767 : vector<1x8x1xf32> to vector<1x8x8xf32>
    %771 = arith.mulf %770, %769 : vector<1x8x8xf32>
    %772 = arith.addf %766, %771 : vector<1x8x8xf32>
    %773 = vector.shape_cast %772 : vector<1x8x8xf32> to vector<8x8xf32>
    %cst_150 = arith.constant dense<0.000000e+00> : vector<8x32xf32>
    %774 = tpu.matmul %773, %488, %cst_150 {dimension_numbers = #tpu.dot_dimension_numbers<[1], [0], [0], [1], [0, 0, 1, 1], [], []>} : vector<8x8xf32>, vector<8x32xf32>, vector<8x32xf32> -> vector<8x32xf32>
    %775 = vector.shape_cast %774 : vector<8x32xf32> to vector<1x8x32xf32>
    %776 = arith.addf %484, %775 : vector<1x8x32xf32>
    %777 = vector.extract_strided_slice %196 {offsets = [0, 0, 0, 16], sizes = [1, 4, 8, 8], strides = [1, 1, 1, 1]} : vector<1x4x8x96xf32> to vector<1x4x8x8xf32>
    %778 = vector.extract_strided_slice %196 {offsets = [0, 0, 0, 48], sizes = [1, 4, 8, 8], strides = [1, 1, 1, 1]} : vector<1x4x8x96xf32> to vector<1x4x8x8xf32>
    %779 = vector.extract_strided_slice %196 {offsets = [0, 0, 0, 80], sizes = [1, 4, 8, 8], strides = [1, 1, 1, 1]} : vector<1x4x8x96xf32> to vector<1x4x8x8xf32>
    %780 = vector.extract_strided_slice %171 {offsets = [16, 0], sizes = [8, 32], strides = [1, 1]} : vector<32x32xf32> to vector<8x32xf32>
    %781 = vector.extract_strided_slice %777 {offsets = [0, 0, 0, 0], sizes = [1, 1, 8, 8], strides = [1, 1, 1, 1]} : vector<1x4x8x8xf32> to vector<1x1x8x8xf32>
    %782 = vector.shape_cast %781 : vector<1x1x8x8xf32> to vector<1x8x8xf32>
    %783 = vector.extract_strided_slice %778 {offsets = [0, 0, 0, 0], sizes = [1, 1, 8, 8], strides = [1, 1, 1, 1]} : vector<1x4x8x8xf32> to vector<1x1x8x8xf32>
    %784 = vector.shape_cast %783 : vector<1x1x8x8xf32> to vector<1x8x8xf32>
    %785 = arith.mulf %782, %784 : vector<1x8x8xf32>
    %cst_151 = arith.constant dense<0.000000e+00> : vector<1x8xf32>
    %786 = vector.multi_reduction <add>, %785, %cst_151 [2] : vector<1x8x8xf32> to vector<1x8xf32>
    %787 = vector.shape_cast %786 : vector<1x8xf32> to vector<1x8x1xf32>
    %cst_152 = arith.constant 0.353553385 : f32
    %788 = vector.broadcast %cst_152 : f32 to vector<1x8x1xf32>
    %789 = arith.mulf %787, %788 : vector<1x8x1xf32>
    %790 = vector.extract_strided_slice %778 {offsets = [0, 1, 0, 0], sizes = [1, 1, 8, 8], strides = [1, 1, 1, 1]} : vector<1x4x8x8xf32> to vector<1x1x8x8xf32>
    %791 = vector.shape_cast %790 : vector<1x1x8x8xf32> to vector<1x8x8xf32>
    %792 = arith.mulf %782, %791 : vector<1x8x8xf32>
    %cst_153 = arith.constant dense<0.000000e+00> : vector<1x8xf32>
    %793 = vector.multi_reduction <add>, %792, %cst_153 [2] : vector<1x8x8xf32> to vector<1x8xf32>
    %794 = vector.shape_cast %793 : vector<1x8xf32> to vector<1x8x1xf32>
    %cst_154 = arith.constant 0.353553385 : f32
    %795 = vector.broadcast %cst_154 : f32 to vector<1x8x1xf32>
    %796 = arith.mulf %794, %795 : vector<1x8x1xf32>
    %797 = vector.extract_strided_slice %778 {offsets = [0, 2, 0, 0], sizes = [1, 1, 8, 8], strides = [1, 1, 1, 1]} : vector<1x4x8x8xf32> to vector<1x1x8x8xf32>
    %798 = vector.shape_cast %797 : vector<1x1x8x8xf32> to vector<1x8x8xf32>
    %799 = arith.mulf %782, %798 : vector<1x8x8xf32>
    %cst_155 = arith.constant dense<0.000000e+00> : vector<1x8xf32>
    %800 = vector.multi_reduction <add>, %799, %cst_155 [2] : vector<1x8x8xf32> to vector<1x8xf32>
    %801 = vector.shape_cast %800 : vector<1x8xf32> to vector<1x8x1xf32>
    %cst_156 = arith.constant 0.353553385 : f32
    %802 = vector.broadcast %cst_156 : f32 to vector<1x8x1xf32>
    %803 = arith.mulf %801, %802 : vector<1x8x1xf32>
    %804 = vector.extract_strided_slice %778 {offsets = [0, 3, 0, 0], sizes = [1, 1, 8, 8], strides = [1, 1, 1, 1]} : vector<1x4x8x8xf32> to vector<1x1x8x8xf32>
    %805 = vector.shape_cast %804 : vector<1x1x8x8xf32> to vector<1x8x8xf32>
    %806 = arith.mulf %782, %805 : vector<1x8x8xf32>
    %cst_157 = arith.constant dense<0.000000e+00> : vector<1x8xf32>
    %807 = vector.multi_reduction <add>, %806, %cst_157 [2] : vector<1x8x8xf32> to vector<1x8xf32>
    %808 = vector.shape_cast %807 : vector<1x8xf32> to vector<1x8x1xf32>
    %cst_158 = arith.constant 0.353553385 : f32
    %809 = vector.broadcast %cst_158 : f32 to vector<1x8x1xf32>
    %810 = arith.mulf %808, %809 : vector<1x8x1xf32>
    %811 = arith.maximumf %789, %796 : vector<1x8x1xf32>
    %812 = arith.maximumf %811, %803 : vector<1x8x1xf32>
    %813 = arith.maximumf %812, %810 : vector<1x8x1xf32>
    %814 = arith.subf %789, %813 : vector<1x8x1xf32>
    %815 = math.exp %814 : vector<1x8x1xf32>
    %816 = arith.subf %796, %813 : vector<1x8x1xf32>
    %817 = math.exp %816 : vector<1x8x1xf32>
    %818 = arith.subf %803, %813 : vector<1x8x1xf32>
    %819 = math.exp %818 : vector<1x8x1xf32>
    %820 = arith.subf %810, %813 : vector<1x8x1xf32>
    %821 = math.exp %820 : vector<1x8x1xf32>
    %822 = arith.addf %815, %817 : vector<1x8x1xf32>
    %823 = arith.addf %822, %819 : vector<1x8x1xf32>
    %824 = arith.addf %823, %821 : vector<1x8x1xf32>
    %825 = tpu.reciprocal %824 {approx = true} : vector<1x8x1xf32> -> vector<1x8x1xf32>
    %826 = arith.mulf %815, %825 : vector<1x8x1xf32>
    %827 = vector.extract_strided_slice %779 {offsets = [0, 0, 0, 0], sizes = [1, 1, 8, 8], strides = [1, 1, 1, 1]} : vector<1x4x8x8xf32> to vector<1x1x8x8xf32>
    %828 = vector.shape_cast %827 : vector<1x1x8x8xf32> to vector<1x8x8xf32>
    %829 = vector.broadcast %826 : vector<1x8x1xf32> to vector<1x8x8xf32>
    %830 = arith.mulf %829, %828 : vector<1x8x8xf32>
    %831 = arith.mulf %817, %825 : vector<1x8x1xf32>
    %832 = vector.extract_strided_slice %779 {offsets = [0, 1, 0, 0], sizes = [1, 1, 8, 8], strides = [1, 1, 1, 1]} : vector<1x4x8x8xf32> to vector<1x1x8x8xf32>
    %833 = vector.shape_cast %832 : vector<1x1x8x8xf32> to vector<1x8x8xf32>
    %834 = vector.broadcast %831 : vector<1x8x1xf32> to vector<1x8x8xf32>
    %835 = arith.mulf %834, %833 : vector<1x8x8xf32>
    %836 = arith.addf %830, %835 : vector<1x8x8xf32>
    %837 = arith.mulf %819, %825 : vector<1x8x1xf32>
    %838 = vector.extract_strided_slice %779 {offsets = [0, 2, 0, 0], sizes = [1, 1, 8, 8], strides = [1, 1, 1, 1]} : vector<1x4x8x8xf32> to vector<1x1x8x8xf32>
    %839 = vector.shape_cast %838 : vector<1x1x8x8xf32> to vector<1x8x8xf32>
    %840 = vector.broadcast %837 : vector<1x8x1xf32> to vector<1x8x8xf32>
    %841 = arith.mulf %840, %839 : vector<1x8x8xf32>
    %842 = arith.addf %836, %841 : vector<1x8x8xf32>
    %843 = arith.mulf %821, %825 : vector<1x8x1xf32>
    %844 = vector.extract_strided_slice %779 {offsets = [0, 3, 0, 0], sizes = [1, 1, 8, 8], strides = [1, 1, 1, 1]} : vector<1x4x8x8xf32> to vector<1x1x8x8xf32>
    %845 = vector.shape_cast %844 : vector<1x1x8x8xf32> to vector<1x8x8xf32>
    %846 = vector.broadcast %843 : vector<1x8x1xf32> to vector<1x8x8xf32>
    %847 = arith.mulf %846, %845 : vector<1x8x8xf32>
    %848 = arith.addf %842, %847 : vector<1x8x8xf32>
    %849 = vector.shape_cast %848 : vector<1x8x8xf32> to vector<8x8xf32>
    %cst_159 = arith.constant dense<0.000000e+00> : vector<8x32xf32>
    %850 = tpu.matmul %849, %780, %cst_159 {dimension_numbers = #tpu.dot_dimension_numbers<[1], [0], [0], [1], [0, 0, 1, 1], [], []>} : vector<8x8xf32>, vector<8x32xf32>, vector<8x32xf32> -> vector<8x32xf32>
    %851 = vector.shape_cast %850 : vector<8x32xf32> to vector<1x8x32xf32>
    %852 = arith.addf %560, %851 : vector<1x8x32xf32>
    %853 = vector.extract_strided_slice %777 {offsets = [0, 1, 0, 0], sizes = [1, 1, 8, 8], strides = [1, 1, 1, 1]} : vector<1x4x8x8xf32> to vector<1x1x8x8xf32>
    %854 = vector.shape_cast %853 : vector<1x1x8x8xf32> to vector<1x8x8xf32>
    %855 = vector.extract_strided_slice %778 {offsets = [0, 0, 0, 0], sizes = [1, 1, 8, 8], strides = [1, 1, 1, 1]} : vector<1x4x8x8xf32> to vector<1x1x8x8xf32>
    %856 = vector.shape_cast %855 : vector<1x1x8x8xf32> to vector<1x8x8xf32>
    %857 = arith.mulf %854, %856 : vector<1x8x8xf32>
    %cst_160 = arith.constant dense<0.000000e+00> : vector<1x8xf32>
    %858 = vector.multi_reduction <add>, %857, %cst_160 [2] : vector<1x8x8xf32> to vector<1x8xf32>
    %859 = vector.shape_cast %858 : vector<1x8xf32> to vector<1x8x1xf32>
    %cst_161 = arith.constant 0.353553385 : f32
    %860 = vector.broadcast %cst_161 : f32 to vector<1x8x1xf32>
    %861 = arith.mulf %859, %860 : vector<1x8x1xf32>
    %862 = vector.extract_strided_slice %778 {offsets = [0, 1, 0, 0], sizes = [1, 1, 8, 8], strides = [1, 1, 1, 1]} : vector<1x4x8x8xf32> to vector<1x1x8x8xf32>
    %863 = vector.shape_cast %862 : vector<1x1x8x8xf32> to vector<1x8x8xf32>
    %864 = arith.mulf %854, %863 : vector<1x8x8xf32>
    %cst_162 = arith.constant dense<0.000000e+00> : vector<1x8xf32>
    %865 = vector.multi_reduction <add>, %864, %cst_162 [2] : vector<1x8x8xf32> to vector<1x8xf32>
    %866 = vector.shape_cast %865 : vector<1x8xf32> to vector<1x8x1xf32>
    %cst_163 = arith.constant 0.353553385 : f32
    %867 = vector.broadcast %cst_163 : f32 to vector<1x8x1xf32>
    %868 = arith.mulf %866, %867 : vector<1x8x1xf32>
    %869 = vector.extract_strided_slice %778 {offsets = [0, 2, 0, 0], sizes = [1, 1, 8, 8], strides = [1, 1, 1, 1]} : vector<1x4x8x8xf32> to vector<1x1x8x8xf32>
    %870 = vector.shape_cast %869 : vector<1x1x8x8xf32> to vector<1x8x8xf32>
    %871 = arith.mulf %854, %870 : vector<1x8x8xf32>
    %cst_164 = arith.constant dense<0.000000e+00> : vector<1x8xf32>
    %872 = vector.multi_reduction <add>, %871, %cst_164 [2] : vector<1x8x8xf32> to vector<1x8xf32>
    %873 = vector.shape_cast %872 : vector<1x8xf32> to vector<1x8x1xf32>
    %cst_165 = arith.constant 0.353553385 : f32
    %874 = vector.broadcast %cst_165 : f32 to vector<1x8x1xf32>
    %875 = arith.mulf %873, %874 : vector<1x8x1xf32>
    %876 = vector.extract_strided_slice %778 {offsets = [0, 3, 0, 0], sizes = [1, 1, 8, 8], strides = [1, 1, 1, 1]} : vector<1x4x8x8xf32> to vector<1x1x8x8xf32>
    %877 = vector.shape_cast %876 : vector<1x1x8x8xf32> to vector<1x8x8xf32>
    %878 = arith.mulf %854, %877 : vector<1x8x8xf32>
    %cst_166 = arith.constant dense<0.000000e+00> : vector<1x8xf32>
    %879 = vector.multi_reduction <add>, %878, %cst_166 [2] : vector<1x8x8xf32> to vector<1x8xf32>
    %880 = vector.shape_cast %879 : vector<1x8xf32> to vector<1x8x1xf32>
    %cst_167 = arith.constant 0.353553385 : f32
    %881 = vector.broadcast %cst_167 : f32 to vector<1x8x1xf32>
    %882 = arith.mulf %880, %881 : vector<1x8x1xf32>
    %883 = arith.maximumf %861, %868 : vector<1x8x1xf32>
    %884 = arith.maximumf %883, %875 : vector<1x8x1xf32>
    %885 = arith.maximumf %884, %882 : vector<1x8x1xf32>
    %886 = arith.subf %861, %885 : vector<1x8x1xf32>
    %887 = math.exp %886 : vector<1x8x1xf32>
    %888 = arith.subf %868, %885 : vector<1x8x1xf32>
    %889 = math.exp %888 : vector<1x8x1xf32>
    %890 = arith.subf %875, %885 : vector<1x8x1xf32>
    %891 = math.exp %890 : vector<1x8x1xf32>
    %892 = arith.subf %882, %885 : vector<1x8x1xf32>
    %893 = math.exp %892 : vector<1x8x1xf32>
    %894 = arith.addf %887, %889 : vector<1x8x1xf32>
    %895 = arith.addf %894, %891 : vector<1x8x1xf32>
    %896 = arith.addf %895, %893 : vector<1x8x1xf32>
    %897 = tpu.reciprocal %896 {approx = true} : vector<1x8x1xf32> -> vector<1x8x1xf32>
    %898 = arith.mulf %887, %897 : vector<1x8x1xf32>
    %899 = vector.extract_strided_slice %779 {offsets = [0, 0, 0, 0], sizes = [1, 1, 8, 8], strides = [1, 1, 1, 1]} : vector<1x4x8x8xf32> to vector<1x1x8x8xf32>
    %900 = vector.shape_cast %899 : vector<1x1x8x8xf32> to vector<1x8x8xf32>
    %901 = vector.broadcast %898 : vector<1x8x1xf32> to vector<1x8x8xf32>
    %902 = arith.mulf %901, %900 : vector<1x8x8xf32>
    %903 = arith.mulf %889, %897 : vector<1x8x1xf32>
    %904 = vector.extract_strided_slice %779 {offsets = [0, 1, 0, 0], sizes = [1, 1, 8, 8], strides = [1, 1, 1, 1]} : vector<1x4x8x8xf32> to vector<1x1x8x8xf32>
    %905 = vector.shape_cast %904 : vector<1x1x8x8xf32> to vector<1x8x8xf32>
    %906 = vector.broadcast %903 : vector<1x8x1xf32> to vector<1x8x8xf32>
    %907 = arith.mulf %906, %905 : vector<1x8x8xf32>
    %908 = arith.addf %902, %907 : vector<1x8x8xf32>
    %909 = arith.mulf %891, %897 : vector<1x8x1xf32>
    %910 = vector.extract_strided_slice %779 {offsets = [0, 2, 0, 0], sizes = [1, 1, 8, 8], strides = [1, 1, 1, 1]} : vector<1x4x8x8xf32> to vector<1x1x8x8xf32>
    %911 = vector.shape_cast %910 : vector<1x1x8x8xf32> to vector<1x8x8xf32>
    %912 = vector.broadcast %909 : vector<1x8x1xf32> to vector<1x8x8xf32>
    %913 = arith.mulf %912, %911 : vector<1x8x8xf32>
    %914 = arith.addf %908, %913 : vector<1x8x8xf32>
    %915 = arith.mulf %893, %897 : vector<1x8x1xf32>
    %916 = vector.extract_strided_slice %779 {offsets = [0, 3, 0, 0], sizes = [1, 1, 8, 8], strides = [1, 1, 1, 1]} : vector<1x4x8x8xf32> to vector<1x1x8x8xf32>
    %917 = vector.shape_cast %916 : vector<1x1x8x8xf32> to vector<1x8x8xf32>
    %918 = vector.broadcast %915 : vector<1x8x1xf32> to vector<1x8x8xf32>
    %919 = arith.mulf %918, %917 : vector<1x8x8xf32>
    %920 = arith.addf %914, %919 : vector<1x8x8xf32>
    %921 = vector.shape_cast %920 : vector<1x8x8xf32> to vector<8x8xf32>
    %cst_168 = arith.constant dense<0.000000e+00> : vector<8x32xf32>
    %922 = tpu.matmul %921, %780, %cst_168 {dimension_numbers = #tpu.dot_dimension_numbers<[1], [0], [0], [1], [0, 0, 1, 1], [], []>} : vector<8x8xf32>, vector<8x32xf32>, vector<8x32xf32> -> vector<8x32xf32>
    %923 = vector.shape_cast %922 : vector<8x32xf32> to vector<1x8x32xf32>
    %924 = arith.addf %632, %923 : vector<1x8x32xf32>
    %925 = vector.extract_strided_slice %777 {offsets = [0, 2, 0, 0], sizes = [1, 1, 8, 8], strides = [1, 1, 1, 1]} : vector<1x4x8x8xf32> to vector<1x1x8x8xf32>
    %926 = vector.shape_cast %925 : vector<1x1x8x8xf32> to vector<1x8x8xf32>
    %927 = vector.extract_strided_slice %778 {offsets = [0, 0, 0, 0], sizes = [1, 1, 8, 8], strides = [1, 1, 1, 1]} : vector<1x4x8x8xf32> to vector<1x1x8x8xf32>
    %928 = vector.shape_cast %927 : vector<1x1x8x8xf32> to vector<1x8x8xf32>
    %929 = arith.mulf %926, %928 : vector<1x8x8xf32>
    %cst_169 = arith.constant dense<0.000000e+00> : vector<1x8xf32>
    %930 = vector.multi_reduction <add>, %929, %cst_169 [2] : vector<1x8x8xf32> to vector<1x8xf32>
    %931 = vector.shape_cast %930 : vector<1x8xf32> to vector<1x8x1xf32>
    %cst_170 = arith.constant 0.353553385 : f32
    %932 = vector.broadcast %cst_170 : f32 to vector<1x8x1xf32>
    %933 = arith.mulf %931, %932 : vector<1x8x1xf32>
    %934 = vector.extract_strided_slice %778 {offsets = [0, 1, 0, 0], sizes = [1, 1, 8, 8], strides = [1, 1, 1, 1]} : vector<1x4x8x8xf32> to vector<1x1x8x8xf32>
    %935 = vector.shape_cast %934 : vector<1x1x8x8xf32> to vector<1x8x8xf32>
    %936 = arith.mulf %926, %935 : vector<1x8x8xf32>
    %cst_171 = arith.constant dense<0.000000e+00> : vector<1x8xf32>
    %937 = vector.multi_reduction <add>, %936, %cst_171 [2] : vector<1x8x8xf32> to vector<1x8xf32>
    %938 = vector.shape_cast %937 : vector<1x8xf32> to vector<1x8x1xf32>
    %cst_172 = arith.constant 0.353553385 : f32
    %939 = vector.broadcast %cst_172 : f32 to vector<1x8x1xf32>
    %940 = arith.mulf %938, %939 : vector<1x8x1xf32>
    %941 = vector.extract_strided_slice %778 {offsets = [0, 2, 0, 0], sizes = [1, 1, 8, 8], strides = [1, 1, 1, 1]} : vector<1x4x8x8xf32> to vector<1x1x8x8xf32>
    %942 = vector.shape_cast %941 : vector<1x1x8x8xf32> to vector<1x8x8xf32>
    %943 = arith.mulf %926, %942 : vector<1x8x8xf32>
    %cst_173 = arith.constant dense<0.000000e+00> : vector<1x8xf32>
    %944 = vector.multi_reduction <add>, %943, %cst_173 [2] : vector<1x8x8xf32> to vector<1x8xf32>
    %945 = vector.shape_cast %944 : vector<1x8xf32> to vector<1x8x1xf32>
    %cst_174 = arith.constant 0.353553385 : f32
    %946 = vector.broadcast %cst_174 : f32 to vector<1x8x1xf32>
    %947 = arith.mulf %945, %946 : vector<1x8x1xf32>
    %948 = vector.extract_strided_slice %778 {offsets = [0, 3, 0, 0], sizes = [1, 1, 8, 8], strides = [1, 1, 1, 1]} : vector<1x4x8x8xf32> to vector<1x1x8x8xf32>
    %949 = vector.shape_cast %948 : vector<1x1x8x8xf32> to vector<1x8x8xf32>
    %950 = arith.mulf %926, %949 : vector<1x8x8xf32>
    %cst_175 = arith.constant dense<0.000000e+00> : vector<1x8xf32>
    %951 = vector.multi_reduction <add>, %950, %cst_175 [2] : vector<1x8x8xf32> to vector<1x8xf32>
    %952 = vector.shape_cast %951 : vector<1x8xf32> to vector<1x8x1xf32>
    %cst_176 = arith.constant 0.353553385 : f32
    %953 = vector.broadcast %cst_176 : f32 to vector<1x8x1xf32>
    %954 = arith.mulf %952, %953 : vector<1x8x1xf32>
    %955 = arith.maximumf %933, %940 : vector<1x8x1xf32>
    %956 = arith.maximumf %955, %947 : vector<1x8x1xf32>
    %957 = arith.maximumf %956, %954 : vector<1x8x1xf32>
    %958 = arith.subf %933, %957 : vector<1x8x1xf32>
    %959 = math.exp %958 : vector<1x8x1xf32>
    %960 = arith.subf %940, %957 : vector<1x8x1xf32>
    %961 = math.exp %960 : vector<1x8x1xf32>
    %962 = arith.subf %947, %957 : vector<1x8x1xf32>
    %963 = math.exp %962 : vector<1x8x1xf32>
    %964 = arith.subf %954, %957 : vector<1x8x1xf32>
    %965 = math.exp %964 : vector<1x8x1xf32>
    %966 = arith.addf %959, %961 : vector<1x8x1xf32>
    %967 = arith.addf %966, %963 : vector<1x8x1xf32>
    %968 = arith.addf %967, %965 : vector<1x8x1xf32>
    %969 = tpu.reciprocal %968 {approx = true} : vector<1x8x1xf32> -> vector<1x8x1xf32>
    %970 = arith.mulf %959, %969 : vector<1x8x1xf32>
    %971 = vector.extract_strided_slice %779 {offsets = [0, 0, 0, 0], sizes = [1, 1, 8, 8], strides = [1, 1, 1, 1]} : vector<1x4x8x8xf32> to vector<1x1x8x8xf32>
    %972 = vector.shape_cast %971 : vector<1x1x8x8xf32> to vector<1x8x8xf32>
    %973 = vector.broadcast %970 : vector<1x8x1xf32> to vector<1x8x8xf32>
    %974 = arith.mulf %973, %972 : vector<1x8x8xf32>
    %975 = arith.mulf %961, %969 : vector<1x8x1xf32>
    %976 = vector.extract_strided_slice %779 {offsets = [0, 1, 0, 0], sizes = [1, 1, 8, 8], strides = [1, 1, 1, 1]} : vector<1x4x8x8xf32> to vector<1x1x8x8xf32>
    %977 = vector.shape_cast %976 : vector<1x1x8x8xf32> to vector<1x8x8xf32>
    %978 = vector.broadcast %975 : vector<1x8x1xf32> to vector<1x8x8xf32>
    %979 = arith.mulf %978, %977 : vector<1x8x8xf32>
    %980 = arith.addf %974, %979 : vector<1x8x8xf32>
    %981 = arith.mulf %963, %969 : vector<1x8x1xf32>
    %982 = vector.extract_strided_slice %779 {offsets = [0, 2, 0, 0], sizes = [1, 1, 8, 8], strides = [1, 1, 1, 1]} : vector<1x4x8x8xf32> to vector<1x1x8x8xf32>
    %983 = vector.shape_cast %982 : vector<1x1x8x8xf32> to vector<1x8x8xf32>
    %984 = vector.broadcast %981 : vector<1x8x1xf32> to vector<1x8x8xf32>
    %985 = arith.mulf %984, %983 : vector<1x8x8xf32>
    %986 = arith.addf %980, %985 : vector<1x8x8xf32>
    %987 = arith.mulf %965, %969 : vector<1x8x1xf32>
    %988 = vector.extract_strided_slice %779 {offsets = [0, 3, 0, 0], sizes = [1, 1, 8, 8], strides = [1, 1, 1, 1]} : vector<1x4x8x8xf32> to vector<1x1x8x8xf32>
    %989 = vector.shape_cast %988 : vector<1x1x8x8xf32> to vector<1x8x8xf32>
    %990 = vector.broadcast %987 : vector<1x8x1xf32> to vector<1x8x8xf32>
    %991 = arith.mulf %990, %989 : vector<1x8x8xf32>
    %992 = arith.addf %986, %991 : vector<1x8x8xf32>
    %993 = vector.shape_cast %992 : vector<1x8x8xf32> to vector<8x8xf32>
    %cst_177 = arith.constant dense<0.000000e+00> : vector<8x32xf32>
    %994 = tpu.matmul %993, %780, %cst_177 {dimension_numbers = #tpu.dot_dimension_numbers<[1], [0], [0], [1], [0, 0, 1, 1], [], []>} : vector<8x8xf32>, vector<8x32xf32>, vector<8x32xf32> -> vector<8x32xf32>
    %995 = vector.shape_cast %994 : vector<8x32xf32> to vector<1x8x32xf32>
    %996 = arith.addf %704, %995 : vector<1x8x32xf32>
    %997 = vector.extract_strided_slice %777 {offsets = [0, 3, 0, 0], sizes = [1, 1, 8, 8], strides = [1, 1, 1, 1]} : vector<1x4x8x8xf32> to vector<1x1x8x8xf32>
    %998 = vector.shape_cast %997 : vector<1x1x8x8xf32> to vector<1x8x8xf32>
    %999 = vector.extract_strided_slice %778 {offsets = [0, 0, 0, 0], sizes = [1, 1, 8, 8], strides = [1, 1, 1, 1]} : vector<1x4x8x8xf32> to vector<1x1x8x8xf32>
    %1000 = vector.shape_cast %999 : vector<1x1x8x8xf32> to vector<1x8x8xf32>
    %1001 = arith.mulf %998, %1000 : vector<1x8x8xf32>
    %cst_178 = arith.constant dense<0.000000e+00> : vector<1x8xf32>
    %1002 = vector.multi_reduction <add>, %1001, %cst_178 [2] : vector<1x8x8xf32> to vector<1x8xf32>
    %1003 = vector.shape_cast %1002 : vector<1x8xf32> to vector<1x8x1xf32>
    %cst_179 = arith.constant 0.353553385 : f32
    %1004 = vector.broadcast %cst_179 : f32 to vector<1x8x1xf32>
    %1005 = arith.mulf %1003, %1004 : vector<1x8x1xf32>
    %1006 = vector.extract_strided_slice %778 {offsets = [0, 1, 0, 0], sizes = [1, 1, 8, 8], strides = [1, 1, 1, 1]} : vector<1x4x8x8xf32> to vector<1x1x8x8xf32>
    %1007 = vector.shape_cast %1006 : vector<1x1x8x8xf32> to vector<1x8x8xf32>
    %1008 = arith.mulf %998, %1007 : vector<1x8x8xf32>
    %cst_180 = arith.constant dense<0.000000e+00> : vector<1x8xf32>
    %1009 = vector.multi_reduction <add>, %1008, %cst_180 [2] : vector<1x8x8xf32> to vector<1x8xf32>
    %1010 = vector.shape_cast %1009 : vector<1x8xf32> to vector<1x8x1xf32>
    %cst_181 = arith.constant 0.353553385 : f32
    %1011 = vector.broadcast %cst_181 : f32 to vector<1x8x1xf32>
    %1012 = arith.mulf %1010, %1011 : vector<1x8x1xf32>
    %1013 = vector.extract_strided_slice %778 {offsets = [0, 2, 0, 0], sizes = [1, 1, 8, 8], strides = [1, 1, 1, 1]} : vector<1x4x8x8xf32> to vector<1x1x8x8xf32>
    %1014 = vector.shape_cast %1013 : vector<1x1x8x8xf32> to vector<1x8x8xf32>
    %1015 = arith.mulf %998, %1014 : vector<1x8x8xf32>
    %cst_182 = arith.constant dense<0.000000e+00> : vector<1x8xf32>
    %1016 = vector.multi_reduction <add>, %1015, %cst_182 [2] : vector<1x8x8xf32> to vector<1x8xf32>
    %1017 = vector.shape_cast %1016 : vector<1x8xf32> to vector<1x8x1xf32>
    %cst_183 = arith.constant 0.353553385 : f32
    %1018 = vector.broadcast %cst_183 : f32 to vector<1x8x1xf32>
    %1019 = arith.mulf %1017, %1018 : vector<1x8x1xf32>
    %1020 = vector.extract_strided_slice %778 {offsets = [0, 3, 0, 0], sizes = [1, 1, 8, 8], strides = [1, 1, 1, 1]} : vector<1x4x8x8xf32> to vector<1x1x8x8xf32>
    %1021 = vector.shape_cast %1020 : vector<1x1x8x8xf32> to vector<1x8x8xf32>
    %1022 = arith.mulf %998, %1021 : vector<1x8x8xf32>
    %cst_184 = arith.constant dense<0.000000e+00> : vector<1x8xf32>
    %1023 = vector.multi_reduction <add>, %1022, %cst_184 [2] : vector<1x8x8xf32> to vector<1x8xf32>
    %1024 = vector.shape_cast %1023 : vector<1x8xf32> to vector<1x8x1xf32>
    %cst_185 = arith.constant 0.353553385 : f32
    %1025 = vector.broadcast %cst_185 : f32 to vector<1x8x1xf32>
    %1026 = arith.mulf %1024, %1025 : vector<1x8x1xf32>
    %1027 = arith.maximumf %1005, %1012 : vector<1x8x1xf32>
    %1028 = arith.maximumf %1027, %1019 : vector<1x8x1xf32>
    %1029 = arith.maximumf %1028, %1026 : vector<1x8x1xf32>
    %1030 = arith.subf %1005, %1029 : vector<1x8x1xf32>
    %1031 = math.exp %1030 : vector<1x8x1xf32>
    %1032 = arith.subf %1012, %1029 : vector<1x8x1xf32>
    %1033 = math.exp %1032 : vector<1x8x1xf32>
    %1034 = arith.subf %1019, %1029 : vector<1x8x1xf32>
    %1035 = math.exp %1034 : vector<1x8x1xf32>
    %1036 = arith.subf %1026, %1029 : vector<1x8x1xf32>
    %1037 = math.exp %1036 : vector<1x8x1xf32>
    %1038 = arith.addf %1031, %1033 : vector<1x8x1xf32>
    %1039 = arith.addf %1038, %1035 : vector<1x8x1xf32>
    %1040 = arith.addf %1039, %1037 : vector<1x8x1xf32>
    %1041 = tpu.reciprocal %1040 {approx = true} : vector<1x8x1xf32> -> vector<1x8x1xf32>
    %1042 = arith.mulf %1031, %1041 : vector<1x8x1xf32>
    %1043 = vector.extract_strided_slice %779 {offsets = [0, 0, 0, 0], sizes = [1, 1, 8, 8], strides = [1, 1, 1, 1]} : vector<1x4x8x8xf32> to vector<1x1x8x8xf32>
    %1044 = vector.shape_cast %1043 : vector<1x1x8x8xf32> to vector<1x8x8xf32>
    %1045 = vector.broadcast %1042 : vector<1x8x1xf32> to vector<1x8x8xf32>
    %1046 = arith.mulf %1045, %1044 : vector<1x8x8xf32>
    %1047 = arith.mulf %1033, %1041 : vector<1x8x1xf32>
    %1048 = vector.extract_strided_slice %779 {offsets = [0, 1, 0, 0], sizes = [1, 1, 8, 8], strides = [1, 1, 1, 1]} : vector<1x4x8x8xf32> to vector<1x1x8x8xf32>
    %1049 = vector.shape_cast %1048 : vector<1x1x8x8xf32> to vector<1x8x8xf32>
    %1050 = vector.broadcast %1047 : vector<1x8x1xf32> to vector<1x8x8xf32>
    %1051 = arith.mulf %1050, %1049 : vector<1x8x8xf32>
    %1052 = arith.addf %1046, %1051 : vector<1x8x8xf32>
    %1053 = arith.mulf %1035, %1041 : vector<1x8x1xf32>
    %1054 = vector.extract_strided_slice %779 {offsets = [0, 2, 0, 0], sizes = [1, 1, 8, 8], strides = [1, 1, 1, 1]} : vector<1x4x8x8xf32> to vector<1x1x8x8xf32>
    %1055 = vector.shape_cast %1054 : vector<1x1x8x8xf32> to vector<1x8x8xf32>
    %1056 = vector.broadcast %1053 : vector<1x8x1xf32> to vector<1x8x8xf32>
    %1057 = arith.mulf %1056, %1055 : vector<1x8x8xf32>
    %1058 = arith.addf %1052, %1057 : vector<1x8x8xf32>
    %1059 = arith.mulf %1037, %1041 : vector<1x8x1xf32>
    %1060 = vector.extract_strided_slice %779 {offsets = [0, 3, 0, 0], sizes = [1, 1, 8, 8], strides = [1, 1, 1, 1]} : vector<1x4x8x8xf32> to vector<1x1x8x8xf32>
    %1061 = vector.shape_cast %1060 : vector<1x1x8x8xf32> to vector<1x8x8xf32>
    %1062 = vector.broadcast %1059 : vector<1x8x1xf32> to vector<1x8x8xf32>
    %1063 = arith.mulf %1062, %1061 : vector<1x8x8xf32>
    %1064 = arith.addf %1058, %1063 : vector<1x8x8xf32>
    %1065 = vector.shape_cast %1064 : vector<1x8x8xf32> to vector<8x8xf32>
    %cst_186 = arith.constant dense<0.000000e+00> : vector<8x32xf32>
    %1066 = tpu.matmul %1065, %780, %cst_186 {dimension_numbers = #tpu.dot_dimension_numbers<[1], [0], [0], [1], [0, 0, 1, 1], [], []>} : vector<8x8xf32>, vector<8x32xf32>, vector<8x32xf32> -> vector<8x32xf32>
    %1067 = vector.shape_cast %1066 : vector<8x32xf32> to vector<1x8x32xf32>
    %1068 = arith.addf %776, %1067 : vector<1x8x32xf32>
    %1069 = vector.extract_strided_slice %196 {offsets = [0, 0, 0, 24], sizes = [1, 4, 8, 8], strides = [1, 1, 1, 1]} : vector<1x4x8x96xf32> to vector<1x4x8x8xf32>
    %1070 = vector.extract_strided_slice %196 {offsets = [0, 0, 0, 56], sizes = [1, 4, 8, 8], strides = [1, 1, 1, 1]} : vector<1x4x8x96xf32> to vector<1x4x8x8xf32>
    %1071 = vector.extract_strided_slice %196 {offsets = [0, 0, 0, 88], sizes = [1, 4, 8, 8], strides = [1, 1, 1, 1]} : vector<1x4x8x96xf32> to vector<1x4x8x8xf32>
    %1072 = vector.extract_strided_slice %171 {offsets = [24, 0], sizes = [8, 32], strides = [1, 1]} : vector<32x32xf32> to vector<8x32xf32>
    %1073 = vector.extract_strided_slice %1069 {offsets = [0, 0, 0, 0], sizes = [1, 1, 8, 8], strides = [1, 1, 1, 1]} : vector<1x4x8x8xf32> to vector<1x1x8x8xf32>
    %1074 = vector.shape_cast %1073 : vector<1x1x8x8xf32> to vector<1x8x8xf32>
    %1075 = vector.extract_strided_slice %1070 {offsets = [0, 0, 0, 0], sizes = [1, 1, 8, 8], strides = [1, 1, 1, 1]} : vector<1x4x8x8xf32> to vector<1x1x8x8xf32>
    %1076 = vector.shape_cast %1075 : vector<1x1x8x8xf32> to vector<1x8x8xf32>
    %1077 = arith.mulf %1074, %1076 : vector<1x8x8xf32>
    %cst_187 = arith.constant dense<0.000000e+00> : vector<1x8xf32>
    %1078 = vector.multi_reduction <add>, %1077, %cst_187 [2] : vector<1x8x8xf32> to vector<1x8xf32>
    %1079 = vector.shape_cast %1078 : vector<1x8xf32> to vector<1x8x1xf32>
    %cst_188 = arith.constant 0.353553385 : f32
    %1080 = vector.broadcast %cst_188 : f32 to vector<1x8x1xf32>
    %1081 = arith.mulf %1079, %1080 : vector<1x8x1xf32>
    %1082 = vector.extract_strided_slice %1070 {offsets = [0, 1, 0, 0], sizes = [1, 1, 8, 8], strides = [1, 1, 1, 1]} : vector<1x4x8x8xf32> to vector<1x1x8x8xf32>
    %1083 = vector.shape_cast %1082 : vector<1x1x8x8xf32> to vector<1x8x8xf32>
    %1084 = arith.mulf %1074, %1083 : vector<1x8x8xf32>
    %cst_189 = arith.constant dense<0.000000e+00> : vector<1x8xf32>
    %1085 = vector.multi_reduction <add>, %1084, %cst_189 [2] : vector<1x8x8xf32> to vector<1x8xf32>
    %1086 = vector.shape_cast %1085 : vector<1x8xf32> to vector<1x8x1xf32>
    %cst_190 = arith.constant 0.353553385 : f32
    %1087 = vector.broadcast %cst_190 : f32 to vector<1x8x1xf32>
    %1088 = arith.mulf %1086, %1087 : vector<1x8x1xf32>
    %1089 = vector.extract_strided_slice %1070 {offsets = [0, 2, 0, 0], sizes = [1, 1, 8, 8], strides = [1, 1, 1, 1]} : vector<1x4x8x8xf32> to vector<1x1x8x8xf32>
    %1090 = vector.shape_cast %1089 : vector<1x1x8x8xf32> to vector<1x8x8xf32>
    %1091 = arith.mulf %1074, %1090 : vector<1x8x8xf32>
    %cst_191 = arith.constant dense<0.000000e+00> : vector<1x8xf32>
    %1092 = vector.multi_reduction <add>, %1091, %cst_191 [2] : vector<1x8x8xf32> to vector<1x8xf32>
    %1093 = vector.shape_cast %1092 : vector<1x8xf32> to vector<1x8x1xf32>
    %cst_192 = arith.constant 0.353553385 : f32
    %1094 = vector.broadcast %cst_192 : f32 to vector<1x8x1xf32>
    %1095 = arith.mulf %1093, %1094 : vector<1x8x1xf32>
    %1096 = vector.extract_strided_slice %1070 {offsets = [0, 3, 0, 0], sizes = [1, 1, 8, 8], strides = [1, 1, 1, 1]} : vector<1x4x8x8xf32> to vector<1x1x8x8xf32>
    %1097 = vector.shape_cast %1096 : vector<1x1x8x8xf32> to vector<1x8x8xf32>
    %1098 = arith.mulf %1074, %1097 : vector<1x8x8xf32>
    %cst_193 = arith.constant dense<0.000000e+00> : vector<1x8xf32>
    %1099 = vector.multi_reduction <add>, %1098, %cst_193 [2] : vector<1x8x8xf32> to vector<1x8xf32>
    %1100 = vector.shape_cast %1099 : vector<1x8xf32> to vector<1x8x1xf32>
    %cst_194 = arith.constant 0.353553385 : f32
    %1101 = vector.broadcast %cst_194 : f32 to vector<1x8x1xf32>
    %1102 = arith.mulf %1100, %1101 : vector<1x8x1xf32>
    %1103 = arith.maximumf %1081, %1088 : vector<1x8x1xf32>
    %1104 = arith.maximumf %1103, %1095 : vector<1x8x1xf32>
    %1105 = arith.maximumf %1104, %1102 : vector<1x8x1xf32>
    %1106 = arith.subf %1081, %1105 : vector<1x8x1xf32>
    %1107 = math.exp %1106 : vector<1x8x1xf32>
    %1108 = arith.subf %1088, %1105 : vector<1x8x1xf32>
    %1109 = math.exp %1108 : vector<1x8x1xf32>
    %1110 = arith.subf %1095, %1105 : vector<1x8x1xf32>
    %1111 = math.exp %1110 : vector<1x8x1xf32>
    %1112 = arith.subf %1102, %1105 : vector<1x8x1xf32>
    %1113 = math.exp %1112 : vector<1x8x1xf32>
    %1114 = arith.addf %1107, %1109 : vector<1x8x1xf32>
    %1115 = arith.addf %1114, %1111 : vector<1x8x1xf32>
    %1116 = arith.addf %1115, %1113 : vector<1x8x1xf32>
    %1117 = tpu.reciprocal %1116 {approx = true} : vector<1x8x1xf32> -> vector<1x8x1xf32>
    %1118 = arith.mulf %1107, %1117 : vector<1x8x1xf32>
    %1119 = vector.extract_strided_slice %1071 {offsets = [0, 0, 0, 0], sizes = [1, 1, 8, 8], strides = [1, 1, 1, 1]} : vector<1x4x8x8xf32> to vector<1x1x8x8xf32>
    %1120 = vector.shape_cast %1119 : vector<1x1x8x8xf32> to vector<1x8x8xf32>
    %1121 = vector.broadcast %1118 : vector<1x8x1xf32> to vector<1x8x8xf32>
    %1122 = arith.mulf %1121, %1120 : vector<1x8x8xf32>
    %1123 = arith.mulf %1109, %1117 : vector<1x8x1xf32>
    %1124 = vector.extract_strided_slice %1071 {offsets = [0, 1, 0, 0], sizes = [1, 1, 8, 8], strides = [1, 1, 1, 1]} : vector<1x4x8x8xf32> to vector<1x1x8x8xf32>
    %1125 = vector.shape_cast %1124 : vector<1x1x8x8xf32> to vector<1x8x8xf32>
    %1126 = vector.broadcast %1123 : vector<1x8x1xf32> to vector<1x8x8xf32>
    %1127 = arith.mulf %1126, %1125 : vector<1x8x8xf32>
    %1128 = arith.addf %1122, %1127 : vector<1x8x8xf32>
    %1129 = arith.mulf %1111, %1117 : vector<1x8x1xf32>
    %1130 = vector.extract_strided_slice %1071 {offsets = [0, 2, 0, 0], sizes = [1, 1, 8, 8], strides = [1, 1, 1, 1]} : vector<1x4x8x8xf32> to vector<1x1x8x8xf32>
    %1131 = vector.shape_cast %1130 : vector<1x1x8x8xf32> to vector<1x8x8xf32>
    %1132 = vector.broadcast %1129 : vector<1x8x1xf32> to vector<1x8x8xf32>
    %1133 = arith.mulf %1132, %1131 : vector<1x8x8xf32>
    %1134 = arith.addf %1128, %1133 : vector<1x8x8xf32>
    %1135 = arith.mulf %1113, %1117 : vector<1x8x1xf32>
    %1136 = vector.extract_strided_slice %1071 {offsets = [0, 3, 0, 0], sizes = [1, 1, 8, 8], strides = [1, 1, 1, 1]} : vector<1x4x8x8xf32> to vector<1x1x8x8xf32>
    %1137 = vector.shape_cast %1136 : vector<1x1x8x8xf32> to vector<1x8x8xf32>
    %1138 = vector.broadcast %1135 : vector<1x8x1xf32> to vector<1x8x8xf32>
    %1139 = arith.mulf %1138, %1137 : vector<1x8x8xf32>
    %1140 = arith.addf %1134, %1139 : vector<1x8x8xf32>
    %1141 = vector.shape_cast %1140 : vector<1x8x8xf32> to vector<8x8xf32>
    %cst_195 = arith.constant dense<0.000000e+00> : vector<8x32xf32>
    %1142 = tpu.matmul %1141, %1072, %cst_195 {dimension_numbers = #tpu.dot_dimension_numbers<[1], [0], [0], [1], [0, 0, 1, 1], [], []>} : vector<8x8xf32>, vector<8x32xf32>, vector<8x32xf32> -> vector<8x32xf32>
    %1143 = vector.shape_cast %1142 : vector<8x32xf32> to vector<1x8x32xf32>
    %1144 = arith.addf %852, %1143 : vector<1x8x32xf32>
    %1145 = vector.extract_strided_slice %1069 {offsets = [0, 1, 0, 0], sizes = [1, 1, 8, 8], strides = [1, 1, 1, 1]} : vector<1x4x8x8xf32> to vector<1x1x8x8xf32>
    %1146 = vector.shape_cast %1145 : vector<1x1x8x8xf32> to vector<1x8x8xf32>
    %1147 = vector.extract_strided_slice %1070 {offsets = [0, 0, 0, 0], sizes = [1, 1, 8, 8], strides = [1, 1, 1, 1]} : vector<1x4x8x8xf32> to vector<1x1x8x8xf32>
    %1148 = vector.shape_cast %1147 : vector<1x1x8x8xf32> to vector<1x8x8xf32>
    %1149 = arith.mulf %1146, %1148 : vector<1x8x8xf32>
    %cst_196 = arith.constant dense<0.000000e+00> : vector<1x8xf32>
    %1150 = vector.multi_reduction <add>, %1149, %cst_196 [2] : vector<1x8x8xf32> to vector<1x8xf32>
    %1151 = vector.shape_cast %1150 : vector<1x8xf32> to vector<1x8x1xf32>
    %cst_197 = arith.constant 0.353553385 : f32
    %1152 = vector.broadcast %cst_197 : f32 to vector<1x8x1xf32>
    %1153 = arith.mulf %1151, %1152 : vector<1x8x1xf32>
    %1154 = vector.extract_strided_slice %1070 {offsets = [0, 1, 0, 0], sizes = [1, 1, 8, 8], strides = [1, 1, 1, 1]} : vector<1x4x8x8xf32> to vector<1x1x8x8xf32>
    %1155 = vector.shape_cast %1154 : vector<1x1x8x8xf32> to vector<1x8x8xf32>
    %1156 = arith.mulf %1146, %1155 : vector<1x8x8xf32>
    %cst_198 = arith.constant dense<0.000000e+00> : vector<1x8xf32>
    %1157 = vector.multi_reduction <add>, %1156, %cst_198 [2] : vector<1x8x8xf32> to vector<1x8xf32>
    %1158 = vector.shape_cast %1157 : vector<1x8xf32> to vector<1x8x1xf32>
    %cst_199 = arith.constant 0.353553385 : f32
    %1159 = vector.broadcast %cst_199 : f32 to vector<1x8x1xf32>
    %1160 = arith.mulf %1158, %1159 : vector<1x8x1xf32>
    %1161 = vector.extract_strided_slice %1070 {offsets = [0, 2, 0, 0], sizes = [1, 1, 8, 8], strides = [1, 1, 1, 1]} : vector<1x4x8x8xf32> to vector<1x1x8x8xf32>
    %1162 = vector.shape_cast %1161 : vector<1x1x8x8xf32> to vector<1x8x8xf32>
    %1163 = arith.mulf %1146, %1162 : vector<1x8x8xf32>
    %cst_200 = arith.constant dense<0.000000e+00> : vector<1x8xf32>
    %1164 = vector.multi_reduction <add>, %1163, %cst_200 [2] : vector<1x8x8xf32> to vector<1x8xf32>
    %1165 = vector.shape_cast %1164 : vector<1x8xf32> to vector<1x8x1xf32>
    %cst_201 = arith.constant 0.353553385 : f32
    %1166 = vector.broadcast %cst_201 : f32 to vector<1x8x1xf32>
    %1167 = arith.mulf %1165, %1166 : vector<1x8x1xf32>
    %1168 = vector.extract_strided_slice %1070 {offsets = [0, 3, 0, 0], sizes = [1, 1, 8, 8], strides = [1, 1, 1, 1]} : vector<1x4x8x8xf32> to vector<1x1x8x8xf32>
    %1169 = vector.shape_cast %1168 : vector<1x1x8x8xf32> to vector<1x8x8xf32>
    %1170 = arith.mulf %1146, %1169 : vector<1x8x8xf32>
    %cst_202 = arith.constant dense<0.000000e+00> : vector<1x8xf32>
    %1171 = vector.multi_reduction <add>, %1170, %cst_202 [2] : vector<1x8x8xf32> to vector<1x8xf32>
    %1172 = vector.shape_cast %1171 : vector<1x8xf32> to vector<1x8x1xf32>
    %cst_203 = arith.constant 0.353553385 : f32
    %1173 = vector.broadcast %cst_203 : f32 to vector<1x8x1xf32>
    %1174 = arith.mulf %1172, %1173 : vector<1x8x1xf32>
    %1175 = arith.maximumf %1153, %1160 : vector<1x8x1xf32>
    %1176 = arith.maximumf %1175, %1167 : vector<1x8x1xf32>
    %1177 = arith.maximumf %1176, %1174 : vector<1x8x1xf32>
    %1178 = arith.subf %1153, %1177 : vector<1x8x1xf32>
    %1179 = math.exp %1178 : vector<1x8x1xf32>
    %1180 = arith.subf %1160, %1177 : vector<1x8x1xf32>
    %1181 = math.exp %1180 : vector<1x8x1xf32>
    %1182 = arith.subf %1167, %1177 : vector<1x8x1xf32>
    %1183 = math.exp %1182 : vector<1x8x1xf32>
    %1184 = arith.subf %1174, %1177 : vector<1x8x1xf32>
    %1185 = math.exp %1184 : vector<1x8x1xf32>
    %1186 = arith.addf %1179, %1181 : vector<1x8x1xf32>
    %1187 = arith.addf %1186, %1183 : vector<1x8x1xf32>
    %1188 = arith.addf %1187, %1185 : vector<1x8x1xf32>
    %1189 = tpu.reciprocal %1188 {approx = true} : vector<1x8x1xf32> -> vector<1x8x1xf32>
    %1190 = arith.mulf %1179, %1189 : vector<1x8x1xf32>
    %1191 = vector.extract_strided_slice %1071 {offsets = [0, 0, 0, 0], sizes = [1, 1, 8, 8], strides = [1, 1, 1, 1]} : vector<1x4x8x8xf32> to vector<1x1x8x8xf32>
    %1192 = vector.shape_cast %1191 : vector<1x1x8x8xf32> to vector<1x8x8xf32>
    %1193 = vector.broadcast %1190 : vector<1x8x1xf32> to vector<1x8x8xf32>
    %1194 = arith.mulf %1193, %1192 : vector<1x8x8xf32>
    %1195 = arith.mulf %1181, %1189 : vector<1x8x1xf32>
    %1196 = vector.extract_strided_slice %1071 {offsets = [0, 1, 0, 0], sizes = [1, 1, 8, 8], strides = [1, 1, 1, 1]} : vector<1x4x8x8xf32> to vector<1x1x8x8xf32>
    %1197 = vector.shape_cast %1196 : vector<1x1x8x8xf32> to vector<1x8x8xf32>
    %1198 = vector.broadcast %1195 : vector<1x8x1xf32> to vector<1x8x8xf32>
    %1199 = arith.mulf %1198, %1197 : vector<1x8x8xf32>
    %1200 = arith.addf %1194, %1199 : vector<1x8x8xf32>
    %1201 = arith.mulf %1183, %1189 : vector<1x8x1xf32>
    %1202 = vector.extract_strided_slice %1071 {offsets = [0, 2, 0, 0], sizes = [1, 1, 8, 8], strides = [1, 1, 1, 1]} : vector<1x4x8x8xf32> to vector<1x1x8x8xf32>
    %1203 = vector.shape_cast %1202 : vector<1x1x8x8xf32> to vector<1x8x8xf32>
    %1204 = vector.broadcast %1201 : vector<1x8x1xf32> to vector<1x8x8xf32>
    %1205 = arith.mulf %1204, %1203 : vector<1x8x8xf32>
    %1206 = arith.addf %1200, %1205 : vector<1x8x8xf32>
    %1207 = arith.mulf %1185, %1189 : vector<1x8x1xf32>
    %1208 = vector.extract_strided_slice %1071 {offsets = [0, 3, 0, 0], sizes = [1, 1, 8, 8], strides = [1, 1, 1, 1]} : vector<1x4x8x8xf32> to vector<1x1x8x8xf32>
    %1209 = vector.shape_cast %1208 : vector<1x1x8x8xf32> to vector<1x8x8xf32>
    %1210 = vector.broadcast %1207 : vector<1x8x1xf32> to vector<1x8x8xf32>
    %1211 = arith.mulf %1210, %1209 : vector<1x8x8xf32>
    %1212 = arith.addf %1206, %1211 : vector<1x8x8xf32>
    %1213 = vector.shape_cast %1212 : vector<1x8x8xf32> to vector<8x8xf32>
    %cst_204 = arith.constant dense<0.000000e+00> : vector<8x32xf32>
    %1214 = tpu.matmul %1213, %1072, %cst_204 {dimension_numbers = #tpu.dot_dimension_numbers<[1], [0], [0], [1], [0, 0, 1, 1], [], []>} : vector<8x8xf32>, vector<8x32xf32>, vector<8x32xf32> -> vector<8x32xf32>
    %1215 = vector.shape_cast %1214 : vector<8x32xf32> to vector<1x8x32xf32>
    %1216 = arith.addf %924, %1215 : vector<1x8x32xf32>
    %1217 = vector.extract_strided_slice %1069 {offsets = [0, 2, 0, 0], sizes = [1, 1, 8, 8], strides = [1, 1, 1, 1]} : vector<1x4x8x8xf32> to vector<1x1x8x8xf32>
    %1218 = vector.shape_cast %1217 : vector<1x1x8x8xf32> to vector<1x8x8xf32>
    %1219 = vector.extract_strided_slice %1070 {offsets = [0, 0, 0, 0], sizes = [1, 1, 8, 8], strides = [1, 1, 1, 1]} : vector<1x4x8x8xf32> to vector<1x1x8x8xf32>
    %1220 = vector.shape_cast %1219 : vector<1x1x8x8xf32> to vector<1x8x8xf32>
    %1221 = arith.mulf %1218, %1220 : vector<1x8x8xf32>
    %cst_205 = arith.constant dense<0.000000e+00> : vector<1x8xf32>
    %1222 = vector.multi_reduction <add>, %1221, %cst_205 [2] : vector<1x8x8xf32> to vector<1x8xf32>
    %1223 = vector.shape_cast %1222 : vector<1x8xf32> to vector<1x8x1xf32>
    %cst_206 = arith.constant 0.353553385 : f32
    %1224 = vector.broadcast %cst_206 : f32 to vector<1x8x1xf32>
    %1225 = arith.mulf %1223, %1224 : vector<1x8x1xf32>
    %1226 = vector.extract_strided_slice %1070 {offsets = [0, 1, 0, 0], sizes = [1, 1, 8, 8], strides = [1, 1, 1, 1]} : vector<1x4x8x8xf32> to vector<1x1x8x8xf32>
    %1227 = vector.shape_cast %1226 : vector<1x1x8x8xf32> to vector<1x8x8xf32>
    %1228 = arith.mulf %1218, %1227 : vector<1x8x8xf32>
    %cst_207 = arith.constant dense<0.000000e+00> : vector<1x8xf32>
    %1229 = vector.multi_reduction <add>, %1228, %cst_207 [2] : vector<1x8x8xf32> to vector<1x8xf32>
    %1230 = vector.shape_cast %1229 : vector<1x8xf32> to vector<1x8x1xf32>
    %cst_208 = arith.constant 0.353553385 : f32
    %1231 = vector.broadcast %cst_208 : f32 to vector<1x8x1xf32>
    %1232 = arith.mulf %1230, %1231 : vector<1x8x1xf32>
    %1233 = vector.extract_strided_slice %1070 {offsets = [0, 2, 0, 0], sizes = [1, 1, 8, 8], strides = [1, 1, 1, 1]} : vector<1x4x8x8xf32> to vector<1x1x8x8xf32>
    %1234 = vector.shape_cast %1233 : vector<1x1x8x8xf32> to vector<1x8x8xf32>
    %1235 = arith.mulf %1218, %1234 : vector<1x8x8xf32>
    %cst_209 = arith.constant dense<0.000000e+00> : vector<1x8xf32>
    %1236 = vector.multi_reduction <add>, %1235, %cst_209 [2] : vector<1x8x8xf32> to vector<1x8xf32>
    %1237 = vector.shape_cast %1236 : vector<1x8xf32> to vector<1x8x1xf32>
    %cst_210 = arith.constant 0.353553385 : f32
    %1238 = vector.broadcast %cst_210 : f32 to vector<1x8x1xf32>
    %1239 = arith.mulf %1237, %1238 : vector<1x8x1xf32>
    %1240 = vector.extract_strided_slice %1070 {offsets = [0, 3, 0, 0], sizes = [1, 1, 8, 8], strides = [1, 1, 1, 1]} : vector<1x4x8x8xf32> to vector<1x1x8x8xf32>
    %1241 = vector.shape_cast %1240 : vector<1x1x8x8xf32> to vector<1x8x8xf32>
    %1242 = arith.mulf %1218, %1241 : vector<1x8x8xf32>
    %cst_211 = arith.constant dense<0.000000e+00> : vector<1x8xf32>
    %1243 = vector.multi_reduction <add>, %1242, %cst_211 [2] : vector<1x8x8xf32> to vector<1x8xf32>
    %1244 = vector.shape_cast %1243 : vector<1x8xf32> to vector<1x8x1xf32>
    %cst_212 = arith.constant 0.353553385 : f32
    %1245 = vector.broadcast %cst_212 : f32 to vector<1x8x1xf32>
    %1246 = arith.mulf %1244, %1245 : vector<1x8x1xf32>
    %1247 = arith.maximumf %1225, %1232 : vector<1x8x1xf32>
    %1248 = arith.maximumf %1247, %1239 : vector<1x8x1xf32>
    %1249 = arith.maximumf %1248, %1246 : vector<1x8x1xf32>
    %1250 = arith.subf %1225, %1249 : vector<1x8x1xf32>
    %1251 = math.exp %1250 : vector<1x8x1xf32>
    %1252 = arith.subf %1232, %1249 : vector<1x8x1xf32>
    %1253 = math.exp %1252 : vector<1x8x1xf32>
    %1254 = arith.subf %1239, %1249 : vector<1x8x1xf32>
    %1255 = math.exp %1254 : vector<1x8x1xf32>
    %1256 = arith.subf %1246, %1249 : vector<1x8x1xf32>
    %1257 = math.exp %1256 : vector<1x8x1xf32>
    %1258 = arith.addf %1251, %1253 : vector<1x8x1xf32>
    %1259 = arith.addf %1258, %1255 : vector<1x8x1xf32>
    %1260 = arith.addf %1259, %1257 : vector<1x8x1xf32>
    %1261 = tpu.reciprocal %1260 {approx = true} : vector<1x8x1xf32> -> vector<1x8x1xf32>
    %1262 = arith.mulf %1251, %1261 : vector<1x8x1xf32>
    %1263 = vector.extract_strided_slice %1071 {offsets = [0, 0, 0, 0], sizes = [1, 1, 8, 8], strides = [1, 1, 1, 1]} : vector<1x4x8x8xf32> to vector<1x1x8x8xf32>
    %1264 = vector.shape_cast %1263 : vector<1x1x8x8xf32> to vector<1x8x8xf32>
    %1265 = vector.broadcast %1262 : vector<1x8x1xf32> to vector<1x8x8xf32>
    %1266 = arith.mulf %1265, %1264 : vector<1x8x8xf32>
    %1267 = arith.mulf %1253, %1261 : vector<1x8x1xf32>
    %1268 = vector.extract_strided_slice %1071 {offsets = [0, 1, 0, 0], sizes = [1, 1, 8, 8], strides = [1, 1, 1, 1]} : vector<1x4x8x8xf32> to vector<1x1x8x8xf32>
    %1269 = vector.shape_cast %1268 : vector<1x1x8x8xf32> to vector<1x8x8xf32>
    %1270 = vector.broadcast %1267 : vector<1x8x1xf32> to vector<1x8x8xf32>
    %1271 = arith.mulf %1270, %1269 : vector<1x8x8xf32>
    %1272 = arith.addf %1266, %1271 : vector<1x8x8xf32>
    %1273 = arith.mulf %1255, %1261 : vector<1x8x1xf32>
    %1274 = vector.extract_strided_slice %1071 {offsets = [0, 2, 0, 0], sizes = [1, 1, 8, 8], strides = [1, 1, 1, 1]} : vector<1x4x8x8xf32> to vector<1x1x8x8xf32>
    %1275 = vector.shape_cast %1274 : vector<1x1x8x8xf32> to vector<1x8x8xf32>
    %1276 = vector.broadcast %1273 : vector<1x8x1xf32> to vector<1x8x8xf32>
    %1277 = arith.mulf %1276, %1275 : vector<1x8x8xf32>
    %1278 = arith.addf %1272, %1277 : vector<1x8x8xf32>
    %1279 = arith.mulf %1257, %1261 : vector<1x8x1xf32>
    %1280 = vector.extract_strided_slice %1071 {offsets = [0, 3, 0, 0], sizes = [1, 1, 8, 8], strides = [1, 1, 1, 1]} : vector<1x4x8x8xf32> to vector<1x1x8x8xf32>
    %1281 = vector.shape_cast %1280 : vector<1x1x8x8xf32> to vector<1x8x8xf32>
    %1282 = vector.broadcast %1279 : vector<1x8x1xf32> to vector<1x8x8xf32>
    %1283 = arith.mulf %1282, %1281 : vector<1x8x8xf32>
    %1284 = arith.addf %1278, %1283 : vector<1x8x8xf32>
    %1285 = vector.shape_cast %1284 : vector<1x8x8xf32> to vector<8x8xf32>
    %cst_213 = arith.constant dense<0.000000e+00> : vector<8x32xf32>
    %1286 = tpu.matmul %1285, %1072, %cst_213 {dimension_numbers = #tpu.dot_dimension_numbers<[1], [0], [0], [1], [0, 0, 1, 1], [], []>} : vector<8x8xf32>, vector<8x32xf32>, vector<8x32xf32> -> vector<8x32xf32>
    %1287 = vector.shape_cast %1286 : vector<8x32xf32> to vector<1x8x32xf32>
    %1288 = arith.addf %996, %1287 : vector<1x8x32xf32>
    %1289 = vector.extract_strided_slice %1069 {offsets = [0, 3, 0, 0], sizes = [1, 1, 8, 8], strides = [1, 1, 1, 1]} : vector<1x4x8x8xf32> to vector<1x1x8x8xf32>
    %1290 = vector.shape_cast %1289 : vector<1x1x8x8xf32> to vector<1x8x8xf32>
    %1291 = vector.extract_strided_slice %1070 {offsets = [0, 0, 0, 0], sizes = [1, 1, 8, 8], strides = [1, 1, 1, 1]} : vector<1x4x8x8xf32> to vector<1x1x8x8xf32>
    %1292 = vector.shape_cast %1291 : vector<1x1x8x8xf32> to vector<1x8x8xf32>
    %1293 = arith.mulf %1290, %1292 : vector<1x8x8xf32>
    %cst_214 = arith.constant dense<0.000000e+00> : vector<1x8xf32>
    %1294 = vector.multi_reduction <add>, %1293, %cst_214 [2] : vector<1x8x8xf32> to vector<1x8xf32>
    %1295 = vector.shape_cast %1294 : vector<1x8xf32> to vector<1x8x1xf32>
    %cst_215 = arith.constant 0.353553385 : f32
    %1296 = vector.broadcast %cst_215 : f32 to vector<1x8x1xf32>
    %1297 = arith.mulf %1295, %1296 : vector<1x8x1xf32>
    %1298 = vector.extract_strided_slice %1070 {offsets = [0, 1, 0, 0], sizes = [1, 1, 8, 8], strides = [1, 1, 1, 1]} : vector<1x4x8x8xf32> to vector<1x1x8x8xf32>
    %1299 = vector.shape_cast %1298 : vector<1x1x8x8xf32> to vector<1x8x8xf32>
    %1300 = arith.mulf %1290, %1299 : vector<1x8x8xf32>
    %cst_216 = arith.constant dense<0.000000e+00> : vector<1x8xf32>
    %1301 = vector.multi_reduction <add>, %1300, %cst_216 [2] : vector<1x8x8xf32> to vector<1x8xf32>
    %1302 = vector.shape_cast %1301 : vector<1x8xf32> to vector<1x8x1xf32>
    %cst_217 = arith.constant 0.353553385 : f32
    %1303 = vector.broadcast %cst_217 : f32 to vector<1x8x1xf32>
    %1304 = arith.mulf %1302, %1303 : vector<1x8x1xf32>
    %1305 = vector.extract_strided_slice %1070 {offsets = [0, 2, 0, 0], sizes = [1, 1, 8, 8], strides = [1, 1, 1, 1]} : vector<1x4x8x8xf32> to vector<1x1x8x8xf32>
    %1306 = vector.shape_cast %1305 : vector<1x1x8x8xf32> to vector<1x8x8xf32>
    %1307 = arith.mulf %1290, %1306 : vector<1x8x8xf32>
    %cst_218 = arith.constant dense<0.000000e+00> : vector<1x8xf32>
    %1308 = vector.multi_reduction <add>, %1307, %cst_218 [2] : vector<1x8x8xf32> to vector<1x8xf32>
    %1309 = vector.shape_cast %1308 : vector<1x8xf32> to vector<1x8x1xf32>
    %cst_219 = arith.constant 0.353553385 : f32
    %1310 = vector.broadcast %cst_219 : f32 to vector<1x8x1xf32>
    %1311 = arith.mulf %1309, %1310 : vector<1x8x1xf32>
    %1312 = vector.extract_strided_slice %1070 {offsets = [0, 3, 0, 0], sizes = [1, 1, 8, 8], strides = [1, 1, 1, 1]} : vector<1x4x8x8xf32> to vector<1x1x8x8xf32>
    %1313 = vector.shape_cast %1312 : vector<1x1x8x8xf32> to vector<1x8x8xf32>
    %1314 = arith.mulf %1290, %1313 : vector<1x8x8xf32>
    %cst_220 = arith.constant dense<0.000000e+00> : vector<1x8xf32>
    %1315 = vector.multi_reduction <add>, %1314, %cst_220 [2] : vector<1x8x8xf32> to vector<1x8xf32>
    %1316 = vector.shape_cast %1315 : vector<1x8xf32> to vector<1x8x1xf32>
    %cst_221 = arith.constant 0.353553385 : f32
    %1317 = vector.broadcast %cst_221 : f32 to vector<1x8x1xf32>
    %1318 = arith.mulf %1316, %1317 : vector<1x8x1xf32>
    %1319 = arith.maximumf %1297, %1304 : vector<1x8x1xf32>
    %1320 = arith.maximumf %1319, %1311 : vector<1x8x1xf32>
    %1321 = arith.maximumf %1320, %1318 : vector<1x8x1xf32>
    %1322 = arith.subf %1297, %1321 : vector<1x8x1xf32>
    %1323 = math.exp %1322 : vector<1x8x1xf32>
    %1324 = arith.subf %1304, %1321 : vector<1x8x1xf32>
    %1325 = math.exp %1324 : vector<1x8x1xf32>
    %1326 = arith.subf %1311, %1321 : vector<1x8x1xf32>
    %1327 = math.exp %1326 : vector<1x8x1xf32>
    %1328 = arith.subf %1318, %1321 : vector<1x8x1xf32>
    %1329 = math.exp %1328 : vector<1x8x1xf32>
    %1330 = arith.addf %1323, %1325 : vector<1x8x1xf32>
    %1331 = arith.addf %1330, %1327 : vector<1x8x1xf32>
    %1332 = arith.addf %1331, %1329 : vector<1x8x1xf32>
    %1333 = tpu.reciprocal %1332 {approx = true} : vector<1x8x1xf32> -> vector<1x8x1xf32>
    %1334 = arith.mulf %1323, %1333 : vector<1x8x1xf32>
    %1335 = vector.extract_strided_slice %1071 {offsets = [0, 0, 0, 0], sizes = [1, 1, 8, 8], strides = [1, 1, 1, 1]} : vector<1x4x8x8xf32> to vector<1x1x8x8xf32>
    %1336 = vector.shape_cast %1335 : vector<1x1x8x8xf32> to vector<1x8x8xf32>
    %1337 = vector.broadcast %1334 : vector<1x8x1xf32> to vector<1x8x8xf32>
    %1338 = arith.mulf %1337, %1336 : vector<1x8x8xf32>
    %1339 = arith.mulf %1325, %1333 : vector<1x8x1xf32>
    %1340 = vector.extract_strided_slice %1071 {offsets = [0, 1, 0, 0], sizes = [1, 1, 8, 8], strides = [1, 1, 1, 1]} : vector<1x4x8x8xf32> to vector<1x1x8x8xf32>
    %1341 = vector.shape_cast %1340 : vector<1x1x8x8xf32> to vector<1x8x8xf32>
    %1342 = vector.broadcast %1339 : vector<1x8x1xf32> to vector<1x8x8xf32>
    %1343 = arith.mulf %1342, %1341 : vector<1x8x8xf32>
    %1344 = arith.addf %1338, %1343 : vector<1x8x8xf32>
    %1345 = arith.mulf %1327, %1333 : vector<1x8x1xf32>
    %1346 = vector.extract_strided_slice %1071 {offsets = [0, 2, 0, 0], sizes = [1, 1, 8, 8], strides = [1, 1, 1, 1]} : vector<1x4x8x8xf32> to vector<1x1x8x8xf32>
    %1347 = vector.shape_cast %1346 : vector<1x1x8x8xf32> to vector<1x8x8xf32>
    %1348 = vector.broadcast %1345 : vector<1x8x1xf32> to vector<1x8x8xf32>
    %1349 = arith.mulf %1348, %1347 : vector<1x8x8xf32>
    %1350 = arith.addf %1344, %1349 : vector<1x8x8xf32>
    %1351 = arith.mulf %1329, %1333 : vector<1x8x1xf32>
    %1352 = vector.extract_strided_slice %1071 {offsets = [0, 3, 0, 0], sizes = [1, 1, 8, 8], strides = [1, 1, 1, 1]} : vector<1x4x8x8xf32> to vector<1x1x8x8xf32>
    %1353 = vector.shape_cast %1352 : vector<1x1x8x8xf32> to vector<1x8x8xf32>
    %1354 = vector.broadcast %1351 : vector<1x8x1xf32> to vector<1x8x8xf32>
    %1355 = arith.mulf %1354, %1353 : vector<1x8x8xf32>
    %1356 = arith.addf %1350, %1355 : vector<1x8x8xf32>
    %1357 = vector.shape_cast %1356 : vector<1x8x8xf32> to vector<8x8xf32>
    %cst_222 = arith.constant dense<0.000000e+00> : vector<8x32xf32>
    %1358 = tpu.matmul %1357, %1072, %cst_222 {dimension_numbers = #tpu.dot_dimension_numbers<[1], [0], [0], [1], [0, 0, 1, 1], [], []>} : vector<8x8xf32>, vector<8x32xf32>, vector<8x32xf32> -> vector<8x32xf32>
    %1359 = vector.shape_cast %1358 : vector<8x32xf32> to vector<1x8x32xf32>
    %1360 = arith.addf %1068, %1359 : vector<1x8x32xf32>
    %c0_223 = arith.constant 0 : index
    %c0_224 = arith.constant 0 : index
    %1361 = vector.load %arg17[%c0_223, %c0_224] : memref<1x32xf32, #tpu.memory_space<vmem>>, vector<1x32xf32>
    %1362 = vector.extract_strided_slice %167 {offsets = [0, 0, 0, 0], sizes = [1, 1, 8, 32], strides = [1, 1, 1, 1]} : vector<1x4x8x32xf32> to vector<1x1x8x32xf32>
    %1363 = vector.shape_cast %1362 : vector<1x1x8x32xf32> to vector<1x8x32xf32>
    %1364 = arith.addf %1363, %1144 : vector<1x8x32xf32>
    %1365 = vector.shape_cast %1361 : vector<1x32xf32> to vector<1x1x32xf32>
    %1366 = vector.broadcast %1365 : vector<1x1x32xf32> to vector<1x8x32xf32>
    %1367 = arith.addf %1364, %1366 : vector<1x8x32xf32>
    %c0_225 = arith.constant 0 : index
    %c0_226 = arith.constant 0 : index
    %c0_227 = arith.constant 0 : index
    %c0_228 = arith.constant 0 : index
    %1368 = vector.load %arg25[%c0_225, %c0_226, %c0_227, %c0_228] : memref<1x4x8x32xf32, #tpu.memory_space<vmem>>, vector<1x1x8x32xf32>
    %1369 = vector.shape_cast %1368 : vector<1x1x8x32xf32> to vector<1x8x32xf32>
    %1370 = vector.shape_cast %1367 : vector<1x8x32xf32> to vector<1x1x8x32xf32>
    tpu.vector_store %arg25[%c0_225, %c0_226, %c0_227, %c0_228], %1370 {strides = array<i32>} : memref<1x4x8x32xf32, #tpu.memory_space<vmem>>, vector<1x1x8x32xf32>,
    %1371 = vector.extract_strided_slice %167 {offsets = [0, 1, 0, 0], sizes = [1, 1, 8, 32], strides = [1, 1, 1, 1]} : vector<1x4x8x32xf32> to vector<1x1x8x32xf32>
    %1372 = vector.shape_cast %1371 : vector<1x1x8x32xf32> to vector<1x8x32xf32>
    %1373 = arith.addf %1372, %1216 : vector<1x8x32xf32>
    %1374 = vector.shape_cast %1361 : vector<1x32xf32> to vector<1x1x32xf32>
    %1375 = vector.broadcast %1374 : vector<1x1x32xf32> to vector<1x8x32xf32>
    %1376 = arith.addf %1373, %1375 : vector<1x8x32xf32>
    %c0_229 = arith.constant 0 : index
    %c1 = arith.constant 1 : index
    %c0_230 = arith.constant 0 : index
    %c0_231 = arith.constant 0 : index
    %1377 = vector.load %arg25[%c0_229, %c1, %c0_230, %c0_231] : memref<1x4x8x32xf32, #tpu.memory_space<vmem>>, vector<1x1x8x32xf32>
    %1378 = vector.shape_cast %1377 : vector<1x1x8x32xf32> to vector<1x8x32xf32>
    %1379 = vector.shape_cast %1376 : vector<1x8x32xf32> to vector<1x1x8x32xf32>
    tpu.vector_store %arg25[%c0_229, %c1, %c0_230, %c0_231], %1379 {strides = array<i32>} : memref<1x4x8x32xf32, #tpu.memory_space<vmem>>, vector<1x1x8x32xf32>,
    %1380 = vector.extract_strided_slice %167 {offsets = [0, 2, 0, 0], sizes = [1, 1, 8, 32], strides = [1, 1, 1, 1]} : vector<1x4x8x32xf32> to vector<1x1x8x32xf32>
    %1381 = vector.shape_cast %1380 : vector<1x1x8x32xf32> to vector<1x8x32xf32>
    %1382 = arith.addf %1381, %1288 : vector<1x8x32xf32>
    %1383 = vector.shape_cast %1361 : vector<1x32xf32> to vector<1x1x32xf32>
    %1384 = vector.broadcast %1383 : vector<1x1x32xf32> to vector<1x8x32xf32>
    %1385 = arith.addf %1382, %1384 : vector<1x8x32xf32>
    %c0_232 = arith.constant 0 : index
    %c2 = arith.constant 2 : index
    %c0_233 = arith.constant 0 : index
    %c0_234 = arith.constant 0 : index
    %1386 = vector.load %arg25[%c0_232, %c2, %c0_233, %c0_234] : memref<1x4x8x32xf32, #tpu.memory_space<vmem>>, vector<1x1x8x32xf32>
    %1387 = vector.shape_cast %1386 : vector<1x1x8x32xf32> to vector<1x8x32xf32>
    %1388 = vector.shape_cast %1385 : vector<1x8x32xf32> to vector<1x1x8x32xf32>
    tpu.vector_store %arg25[%c0_232, %c2, %c0_233, %c0_234], %1388 {strides = array<i32>} : memref<1x4x8x32xf32, #tpu.memory_space<vmem>>, vector<1x1x8x32xf32>,
    %1389 = vector.extract_strided_slice %167 {offsets = [0, 3, 0, 0], sizes = [1, 1, 8, 32], strides = [1, 1, 1, 1]} : vector<1x4x8x32xf32> to vector<1x1x8x32xf32>
    %1390 = vector.shape_cast %1389 : vector<1x1x8x32xf32> to vector<1x8x32xf32>
    %1391 = arith.addf %1390, %1360 : vector<1x8x32xf32>
    %1392 = vector.shape_cast %1361 : vector<1x32xf32> to vector<1x1x32xf32>
    %1393 = vector.broadcast %1392 : vector<1x1x32xf32> to vector<1x8x32xf32>
    %1394 = arith.addf %1391, %1393 : vector<1x8x32xf32>
    %c0_235 = arith.constant 0 : index
    %c3 = arith.constant 3 : index
    %c0_236 = arith.constant 0 : index
    %c0_237 = arith.constant 0 : index
    %1395 = vector.load %arg25[%c0_235, %c3, %c0_236, %c0_237] : memref<1x4x8x32xf32, #tpu.memory_space<vmem>>, vector<1x1x8x32xf32>
    %1396 = vector.shape_cast %1395 : vector<1x1x8x32xf32> to vector<1x8x32xf32>
    %1397 = vector.shape_cast %1394 : vector<1x8x32xf32> to vector<1x1x8x32xf32>
    tpu.vector_store %arg25[%c0_235, %c3, %c0_236, %c0_237], %1397 {strides = array<i32>} : memref<1x4x8x32xf32, #tpu.memory_space<vmem>>, vector<1x1x8x32xf32>,
    %c0_238 = arith.constant 0 : index
    %c0_239 = arith.constant 0 : index
    %c0_240 = arith.constant 0 : index
    %c0_241 = arith.constant 0 : index
    %1398 = vector.load %arg25[%c0_238, %c0_239, %c0_240, %c0_241] : memref<1x4x8x32xf32, #tpu.memory_space<vmem>>, vector<1x4x8x32xf32>
    %1399 = vector.shape_cast %1398 : vector<1x4x8x32xf32> to vector<32x32xf32>
    %c0_242 = arith.constant 0 : index
    %c0_243 = arith.constant 0 : index
    %1400 = vector.load %arg18[%c0_242, %c0_243] : memref<1x32xf32, #tpu.memory_space<vmem>>, vector<1x32xf32>
    %c0_244 = arith.constant 0 : index
    %c0_245 = arith.constant 0 : index
    %1401 = vector.load %arg19[%c0_244, %c0_245] : memref<1x32xf32, #tpu.memory_space<vmem>>, vector<1x32xf32>
    %c0_246 = arith.constant 0 : index
    %c0_247 = arith.constant 0 : index
    %1402 = vector.load %arg20[%c0_246, %c0_247] : memref<32x64xf32, #tpu.memory_space<vmem>>, vector<32x64xf32>
    %c0_248 = arith.constant 0 : index
    %c0_249 = arith.constant 0 : index
    %1403 = vector.load %arg21[%c0_248, %c0_249] : memref<1x64xf32, #tpu.memory_space<vmem>>, vector<1x64xf32>
    %c0_250 = arith.constant 0 : index
    %c0_251 = arith.constant 0 : index
    %1404 = vector.load %arg22[%c0_250, %c0_251] : memref<64x32xf32, #tpu.memory_space<vmem>>, vector<64x32xf32>
    %c0_252 = arith.constant 0 : index
    %c0_253 = arith.constant 0 : index
    %1405 = vector.load %arg23[%c0_252, %c0_253] : memref<1x32xf32, #tpu.memory_space<vmem>>, vector<1x32xf32>
    %cst_254 = arith.constant dense<0.000000e+00> : vector<32xf32>
    %1406 = vector.multi_reduction <add>, %1399, %cst_254 [1] : vector<32x32xf32> to vector<32xf32>
    %1407 = vector.shape_cast %1406 : vector<32xf32> to vector<32x1xf32>
    %cst_255 = arith.constant 3.200000e+01 : f32
    %1408 = vector.broadcast %cst_255 : f32 to vector<32x1xf32>
    %1409 = arith.divf %1407, %1408 : vector<32x1xf32>
    %1410 = vector.broadcast %1409 : vector<32x1xf32> to vector<32x32xf32>
    %1411 = arith.subf %1399, %1410 : vector<32x32xf32>
    %1412 = arith.mulf %1411, %1411 : vector<32x32xf32>
    %cst_256 = arith.constant dense<0.000000e+00> : vector<32xf32>
    %1413 = vector.multi_reduction <add>, %1412, %cst_256 [1] : vector<32x32xf32> to vector<32xf32>
    %1414 = vector.shape_cast %1413 : vector<32xf32> to vector<32x1xf32>
    %cst_257 = arith.constant 3.200000e+01 : f32
    %1415 = vector.broadcast %cst_257 : f32 to vector<32x1xf32>
    %1416 = arith.divf %1414, %1415 : vector<32x1xf32>
    %1417 = vector.broadcast %1409 : vector<32x1xf32> to vector<32x32xf32>
    %1418 = arith.subf %1399, %1417 : vector<32x32xf32>
    %cst_258 = arith.constant 9.99999974E-6 : f32
    %1419 = vector.broadcast %cst_258 : f32 to vector<32x1xf32>
    %1420 = arith.addf %1416, %1419 : vector<32x1xf32>
    %1421 = math.rsqrt %1420 : vector<32x1xf32>
    %1422 = vector.broadcast %1421 : vector<32x1xf32> to vector<32x32xf32>
    %1423 = arith.mulf %1418, %1422 : vector<32x32xf32>
    %1424 = vector.broadcast %1400 : vector<1x32xf32> to vector<32x32xf32>
    %1425 = arith.mulf %1423, %1424 : vector<32x32xf32>
    %1426 = vector.broadcast %1401 : vector<1x32xf32> to vector<32x32xf32>
    %1427 = arith.addf %1425, %1426 : vector<32x32xf32>
    %cst_259 = arith.constant dense<0.000000e+00> : vector<32x64xf32>
    %1428 = tpu.matmul %1427, %1402, %cst_259 {dimension_numbers = #tpu.dot_dimension_numbers<[1], [0], [0], [1], [0, 0, 1, 1], [], []>} : vector<32x32xf32>, vector<32x64xf32>, vector<32x64xf32> -> vector<32x64xf32>
    %1429 = vector.broadcast %1403 : vector<1x64xf32> to vector<32x64xf32>
    %1430 = arith.addf %1428, %1429 : vector<32x64xf32>
    %cst_260 = arith.constant 5.000000e-01 : f32
    %1431 = vector.broadcast %cst_260 : f32 to vector<32x64xf32>
    %1432 = arith.mulf %1431, %1430 : vector<32x64xf32>
    %cst_261 = arith.constant 4.471500e-02 : f32
    %1433 = vector.broadcast %cst_261 : f32 to vector<32x64xf32>
    %1434 = arith.mulf %1433, %1430 : vector<32x64xf32>
    %1435 = arith.mulf %1434, %1430 : vector<32x64xf32>
    %1436 = arith.mulf %1435, %1430 : vector<32x64xf32>
    %1437 = arith.addf %1430, %1436 : vector<32x64xf32>
    %cst_262 = arith.constant 0.797884583 : f32
    %1438 = vector.broadcast %cst_262 : f32 to vector<32x64xf32>
    %1439 = arith.mulf %1438, %1437 : vector<32x64xf32>
    %1440 = math.tanh %1439 : vector<32x64xf32>
    %cst_263 = arith.constant 1.000000e+00 : f32
    %1441 = vector.broadcast %cst_263 : f32 to vector<32x64xf32>
    %1442 = arith.addf %1441, %1440 : vector<32x64xf32>
    %1443 = arith.mulf %1432, %1442 : vector<32x64xf32>
    %cst_264 = arith.constant dense<0.000000e+00> : vector<32x32xf32>
    %1444 = tpu.matmul %1443, %1404, %cst_264 {dimension_numbers = #tpu.dot_dimension_numbers<[1], [0], [0], [1], [0, 0, 1, 1], [], []>} : vector<32x64xf32>, vector<64x32xf32>, vector<32x32xf32> -> vector<32x32xf32>
    %1445 = arith.addf %1399, %1444 : vector<32x32xf32>
    %1446 = vector.broadcast %1405 : vector<1x32xf32> to vector<32x32xf32>
    %1447 = arith.addf %1445, %1446 : vector<32x32xf32>
    %1448 = vector.shape_cast %1447 : vector<32x32xf32> to vector<1x4x8x32xf32>
    %c0_265 = arith.constant 0 : index
    %c0_266 = arith.constant 0 : index
    %c0_267 = arith.constant 0 : index
    %c0_268 = arith.constant 0 : index
    %1449 = vector.load %arg24[%c0_265, %c0_266, %c0_267, %c0_268] : memref<1x4x8x32xf32, #tpu.memory_space<vmem>>, vector<1x4x8x32xf32>
    tpu.vector_store %arg24[%c0_265, %c0_266, %c0_267, %c0_268], %1448 {strides = array<i32>} : memref<1x4x8x32xf32, #tpu.memory_space<vmem>>, vector<1x4x8x32xf32>,
    return
  }
  func.func @transform_0(%arg0: i32) -> (i32, i32, i32, i32) {
    %c0_i32 = arith.constant 0 : i32
    %c0_i32_0 = arith.constant 0 : i32
    %c0_i32_1 = arith.constant 0 : i32
    %c0_i32_2 = arith.constant 0 : i32
    return %arg0, %c0_i32, %c0_i32_0, %c0_i32_1 : i32, i32, i32, i32
  }
  func.func @transform_1(%arg0: i32) -> (i32, i32) {
    %c0_i32 = arith.constant 0 : i32
    %c0_i32_0 = arith.constant 0 : i32
    %c0_i32_1 = arith.constant 0 : i32
    return %c0_i32, %c0_i32_0 : i32, i32
  }
  func.func @transform_2(%arg0: i32) -> (i32, i32) {
    %c0_i32 = arith.constant 0 : i32
    %c0_i32_0 = arith.constant 0 : i32
    %c0_i32_1 = arith.constant 0 : i32
    return %c0_i32, %c0_i32_0 : i32, i32
  }
  func.func @transform_3(%arg0: i32) -> (i32, i32) {
    %c0_i32 = arith.constant 0 : i32
    %c0_i32_0 = arith.constant 0 : i32
    %c0_i32_1 = arith.constant 0 : i32
    return %c0_i32, %c0_i32_0 : i32, i32
  }
  func.func @transform_4(%arg0: i32) -> (i32, i32) {
    %c0_i32 = arith.constant 0 : i32
    %c0_i32_0 = arith.constant 0 : i32
    %c0_i32_1 = arith.constant 0 : i32
    return %c0_i32, %c0_i32_0 : i32, i32
  }
  func.func @transform_5(%arg0: i32) -> (i32, i32) {
    %c0_i32 = arith.constant 0 : i32
    %c0_i32_0 = arith.constant 0 : i32
    %c0_i32_1 = arith.constant 0 : i32
    return %c0_i32, %c0_i32_0 : i32, i32
  }
  func.func @transform_6(%arg0: i32) -> (i32, i32) {
    %c0_i32 = arith.constant 0 : i32
    %c0_i32_0 = arith.constant 0 : i32
    %c0_i32_1 = arith.constant 0 : i32
    return %c0_i32, %c0_i32_0 : i32, i32
  }
  func.func @transform_7(%arg0: i32) -> (i32, i32) {
    %c0_i32 = arith.constant 0 : i32
    %c0_i32_0 = arith.constant 0 : i32
    %c0_i32_1 = arith.constant 0 : i32
    return %c0_i32, %c0_i32_0 : i32, i32
  }
  func.func @transform_8(%arg0: i32) -> (i32, i32) {
    %c0_i32 = arith.constant 0 : i32
    %c0_i32_0 = arith.constant 0 : i32
    %c0_i32_1 = arith.constant 0 : i32
    return %c0_i32, %c0_i32_0 : i32, i32
  }
  func.func @transform_9(%arg0: i32) -> (i32, i32) {
    %c0_i32 = arith.constant 0 : i32
    %c0_i32_0 = arith.constant 0 : i32
    %c0_i32_1 = arith.constant 0 : i32
    return %c0_i32, %c0_i32_0 : i32, i32
  }
  func.func @transform_10(%arg0: i32) -> (i32, i32) {
    %c0_i32 = arith.constant 0 : i32
    %c0_i32_0 = arith.constant 0 : i32
    %c0_i32_1 = arith.constant 0 : i32
    return %c0_i32, %c0_i32_0 : i32, i32
  }
  func.func @transform_11(%arg0: i32) -> (i32, i32) {
    %c0_i32 = arith.constant 0 : i32
    %c0_i32_0 = arith.constant 0 : i32
    %c0_i32_1 = arith.constant 0 : i32
    return %c0_i32, %c0_i32_0 : i32, i32
  }
  func.func @transform_12(%arg0: i32) -> (i32, i32) {
    %c0_i32 = arith.constant 0 : i32
    %c0_i32_0 = arith.constant 0 : i32
    %c0_i32_1 = arith.constant 0 : i32
    return %c0_i32, %c0_i32_0 : i32, i32
  }
  func.func @transform_13(%arg0: i32) -> (i32, i32) {
    %c0_i32 = arith.constant 0 : i32
    %c0_i32_0 = arith.constant 0 : i32
    %c0_i32_1 = arith.constant 0 : i32
    return %c0_i32, %c0_i32_0 : i32, i32
  }
  func.func @transform_14(%arg0: i32) -> (i32, i32) {
    %c0_i32 = arith.constant 0 : i32
    %c0_i32_0 = arith.constant 0 : i32
    %c0_i32_1 = arith.constant 0 : i32
    return %c0_i32, %c0_i32_0 : i32, i32
  }
  func.func @transform_15(%arg0: i32) -> (i32, i32) {
    %c0_i32 = arith.constant 0 : i32
    %c0_i32_0 = arith.constant 0 : i32
    %c0_i32_1 = arith.constant 0 : i32
    return %c0_i32, %c0_i32_0 : i32, i32
  }
  func.func @transform_16(%arg0: i32) -> (i32, i32) {
    %c0_i32 = arith.constant 0 : i32
    %c0_i32_0 = arith.constant 0 : i32
    %c0_i32_1 = arith.constant 0 : i32
    return %c0_i32, %c0_i32_0 : i32, i32
  }
  func.func @transform_17(%arg0: i32) -> (i32, i32) {
    %c0_i32 = arith.constant 0 : i32
    %c0_i32_0 = arith.constant 0 : i32
    %c0_i32_1 = arith.constant 0 : i32
    return %c0_i32, %c0_i32_0 : i32, i32
  }
  func.func @transform_18(%arg0: i32) -> (i32, i32) {
    %c0_i32 = arith.constant 0 : i32
    %c0_i32_0 = arith.constant 0 : i32
    %c0_i32_1 = arith.constant 0 : i32
    return %c0_i32, %c0_i32_0 : i32, i32
  }
  func.func @transform_19(%arg0: i32) -> (i32, i32) {
    %c0_i32 = arith.constant 0 : i32
    %c0_i32_0 = arith.constant 0 : i32
    %c0_i32_1 = arith.constant 0 : i32
    return %c0_i32, %c0_i32_0 : i32, i32
  }
  func.func @transform_20(%arg0: i32) -> (i32, i32) {
    %c0_i32 = arith.constant 0 : i32
    %c0_i32_0 = arith.constant 0 : i32
    %c0_i32_1 = arith.constant 0 : i32
    return %c0_i32, %c0_i32_0 : i32, i32
  }
  func.func @transform_21(%arg0: i32) -> (i32, i32) {
    %c0_i32 = arith.constant 0 : i32
    %c0_i32_0 = arith.constant 0 : i32
    %c0_i32_1 = arith.constant 0 : i32
    return %c0_i32, %c0_i32_0 : i32, i32
  }
  func.func @transform_22(%arg0: i32) -> (i32, i32) {
    %c0_i32 = arith.constant 0 : i32
    %c0_i32_0 = arith.constant 0 : i32
    %c0_i32_1 = arith.constant 0 : i32
    return %c0_i32, %c0_i32_0 : i32, i32
  }
  func.func @transform_23(%arg0: i32) -> (i32, i32, i32, i32) {
    %c0_i32 = arith.constant 0 : i32
    %c0_i32_0 = arith.constant 0 : i32
    %c0_i32_1 = arith.constant 0 : i32
    %c0_i32_2 = arith.constant 0 : i32
    return %arg0, %c0_i32, %c0_i32_0, %c0_i32_1 : i32, i32, i32, i32
  }
}

</mosaic_0001>

<llo_original>
// kernel: tpu_custom_call.1
$region0: #{tpu_custom_call.1}
  #allocation0 [shape = 'u32[]', space=smem, size = 0x4, offset = 0x4, fixed_abs, tag = 'smem constant byte address 0x4 - core index']
  #allocation1 [shape = 'u32[144,128]{1,0:T(1,128)}', space=vmem, size = 0x12000, scoped, tag = 'internal scratch']
  #allocation2 [shape = 'f32[1,4,8,32]{3,2,1,0:T(8,128)}', space=vmem, size = 0x4000, scoped, tag = 'scratch operand']
  %s0 = inlined_call_operand.vmem [shape: f32[2,4,8,32], index: 0, kind: input, shape index: {}]
  %s1 = inlined_call_operand.hbm [shape: f32[1,32], index: 1, kind: input, shape index: {}]
  %s2 = inlined_call_operand.hbm [shape: f32[1,32], index: 2, kind: input, shape index: {}]
  %s3 = inlined_call_operand.vmem [shape: f32[32,96], index: 3, kind: input, shape index: {}]
  %s4 = inlined_call_operand.vmem [shape: f32[32,32], index: 4, kind: input, shape index: {}]
  %s5 = inlined_call_operand.hbm [shape: f32[1,32], index: 5, kind: input, shape index: {}]
  %s6 = inlined_call_operand.hbm [shape: f32[1,32], index: 6, kind: input, shape index: {}]
  %s7 = inlined_call_operand.hbm [shape: f32[1,32], index: 7, kind: input, shape index: {}]
  %s8 = inlined_call_operand.vmem [shape: f32[32,64], index: 8, kind: input, shape index: {}]
  %s9 = inlined_call_operand.hbm [shape: f32[1,64], index: 9, kind: input, shape index: {}]
  %s10 = inlined_call_operand.vmem [shape: f32[64,32], index: 10, kind: input, shape index: {}]
  %s11 = inlined_call_operand.hbm [shape: f32[1,32], index: 11, kind: input, shape index: {}]
  %s12 = inlined_call_operand.hbm [shape: f32[1,32], index: 12, kind: input, shape index: {}]
  %s13 = inlined_call_operand.hbm [shape: f32[1,32], index: 13, kind: input, shape index: {}]
  %s14 = inlined_call_operand.hbm [shape: f32[32,96], index: 14, kind: input, shape index: {}]
  %s15 = inlined_call_operand.hbm [shape: f32[32,32], index: 15, kind: input, shape index: {}]
  %s16 = inlined_call_operand.hbm [shape: f32[1,32], index: 16, kind: input, shape index: {}]
  %s17 = inlined_call_operand.hbm [shape: f32[1,32], index: 17, kind: input, shape index: {}]
  %s18 = inlined_call_operand.vmem [shape: f32[1,32], index: 18, kind: input, shape index: {}]
  %s19 = inlined_call_operand.vmem [shape: f32[32,64], index: 19, kind: input, shape index: {}]
  %s20 = inlined_call_operand.vmem [shape: f32[1,64], index: 20, kind: input, shape index: {}]
  %s21 = inlined_call_operand.vmem [shape: f32[64,32], index: 21, kind: input, shape index: {}]
  %s22 = inlined_call_operand.vmem [shape: f32[1,32], index: 22, kind: input, shape index: {}]
  %s23 = inlined_call_operand.hbm [shape: f32[2,4,8,32], index: 23, kind: output, shape index: {}]
  %s24 = sld [smem:[#allocation0]]
  $region177: #{tpu_custom_call.1} parent=0
    _
  %s26 = ssub.s32 1, %s24
  %s27 = scalar_select 0, %s26, %s24
  $region1: #{tpu_custom_call.1} parent=0
    #allocation3 [shape = 'u8[512]{0}', space=vmem, size = 0x400, scoped, tag = 'input window, operand 1, single buffered']
    #allocation4 [shape = 's32[2]{0}', space=sflag, size = 0x8, scoped, tag = 'scoped memory for tpu_custom_call.1']
    #allocation5 [shape = 's32[2]{0}', space=sflag, size = 0x8, scoped, tag = 'scoped memory for tpu_custom_call.1']
    #allocation6 [shape = 'u8[512]{0}', space=vmem, size = 0x400, scoped, tag = 'input window, operand 2, single buffered']
    #allocation7 [shape = 's32[1]{0}', space=sflag, size = 0x4, scoped, tag = 'scoped memory for tpu_custom_call.1']
    #allocation8 [shape = 'u8[512]{0}', space=vmem, size = 0x400, scoped, tag = 'input window, operand 5, single buffered']
    #allocation9 [shape = 'u8[512]{0}', space=vmem, size = 0x400, scoped, tag = 'input window, operand 6, single buffered']
    #allocation10 [shape = 's32[1]{0}', space=sflag, size = 0x4, scoped, tag = 'scoped memory for tpu_custom_call.1']
    #allocation11 [shape = 'u8[512]{0}', space=vmem, size = 0x400, scoped, tag = 'input window, operand 7, single buffered']
    #allocation12 [shape = 'u8[512]{0}', space=vmem, size = 0x400, scoped, tag = 'input window, operand 9, single buffered']
    #allocation13 [shape = 's32[1]{0}', space=sflag, size = 0x4, scoped, tag = 'scoped memory for tpu_custom_call.1']
    #allocation14 [shape = 'u8[512]{0}', space=vmem, size = 0x400, scoped, tag = 'input window, operand 11, single buffered']
    #allocation15 [shape = 'u8[512]{0}', space=vmem, size = 0x400, scoped, tag = 'input window, operand 12, single buffered']
    #allocation16 [shape = 's32[1]{0}', space=sflag, size = 0x4, scoped, tag = 'scoped memory for tpu_custom_call.1']
    #allocation17 [shape = 'u8[512]{0}', space=vmem, size = 0x400, scoped, tag = 'input window, operand 13, single buffered']
    #allocation18 [shape = 'u8[16384]{0}', space=vmem, size = 0x4000, scoped, tag = 'input window, operand 14, single buffered']
    #allocation19 [shape = 's32[1]{0}', space=sflag, size = 0x4, scoped, tag = 'scoped memory for tpu_custom_call.1']
    #allocation20 [shape = 'u8[16384]{0}', space=vmem, size = 0x4000, scoped, tag = 'input window, operand 15, single buffered']
    #allocation21 [shape = 'u8[512]{0}', space=vmem, size = 0x400, scoped, tag = 'input window, operand 16, single buffered']
    #allocation22 [shape = 's32[1]{0}', space=sflag, size = 0x4, scoped, tag = 'scoped memory for tpu_custom_call.1']
    #allocation23 [shape = 'u8[512]{0}', space=vmem, size = 0x400, scoped, tag = 'input window, operand 17, single buffered']
    #allocation24 [shape = 'u8[32768]{0}', space=vmem, size = 0x8000, scoped, tag = 'output window, operand 0']
    %28 = vsyncpa [#allocation4], 0
    %29 = vsyncpa [#allocation7], 0
    %30 = vsyncpa [#allocation10], 0
    %31 = vsyncpa [#allocation13], 0
    %32 = vsyncpa [#allocation16], 0
    %33 = vsyncpa [#allocation19], 0
    %34 = vsyncpa [#allocation22], 0
    %35 = vsyncpa [#allocation5], 0
    %s36 = scalar_lea.sflag [#allocation5], 1
    %37 = vsyncpa %s36, 0
    loop: start=0, step=1, limit=4
    $region2: #{tpu_custom_call.1} parent=1 // loop_pre_header
      _
    $region3: #{tpu_custom_call.1} parent=1 // loop_header
      %s39 = sphi 0, %s43
      %p40 = scmp.ge.s32.totalorder %s39, 4
      %s49 = sphi 0, %s51
      %s52 = sphi 0, %s49
      %s53 = sphi 0, %s52
      %s69 = sphi 0, %s53
      %s73 = sphi 0, %s73
      %s75 = sphi 0, %s73
      %s76 = sphi 0, %s75
      %s90 = sphi 0, %s76
      %s94 = sphi 0, %s94
      %s96 = sphi 0, %s94
      %s97 = sphi 0, %s96
      %s111 = sphi 0, %s97
      %s115 = sphi 0, %s115
      %s117 = sphi 0, %s115
      %s118 = sphi 0, %s117
      %s132 = sphi 0, %s118
      %s136 = sphi 0, %s136
      %s138 = sphi 0, %s136
      %s139 = sphi 0, %s138
      %s153 = sphi 0, %s139
      %s157 = sphi 0, %s157
      %s159 = sphi 0, %s157
      %s160 = sphi 0, %s159
      %s174 = sphi 0, %s160
      %s178 = sphi 0, %s178
      %s180 = sphi 0, %s178
      %s181 = sphi 0, %s180
      %s195 = sphi 0, %s181
      %s199 = sphi 0, %s199
      %s201 = sphi 0, %s199
      %s202 = sphi 0, %s201
      %s216 = sphi 0, %s202
      %s220 = sphi 0, %s220
      %s222 = sphi 0, %s220
      %s223 = sphi 0, %s222
      %s237 = sphi 0, %s223
      %s241 = sphi 0, %s241
      %s243 = sphi 0, %s241
      %s244 = sphi 0, %s243
      %s258 = sphi 0, %s244
      %s262 = sphi 0, %s262
      %s264 = sphi 0, %s262
      %s265 = sphi 0, %s264
      %s279 = sphi 0, %s265
      %s283 = sphi 0, %s283
      %s285 = sphi 0, %s283
      %s286 = sphi 0, %s285
      %s300 = sphi 0, %s286
      %s304 = sphi 0, %s304
      %s306 = sphi 0, %s304
      %s307 = sphi 0, %s306
      %s321 = sphi 0, %s307
      %s325 = sphi 0, %s325
      %s327 = sphi 0, %s325
      %s328 = sphi 0, %s327
      %s342 = sphi 0, %s328
      %s346 = sphi 0, %s346
      %s348 = sphi 0, %s346
      %s349 = sphi 0, %s348
      %s363 = sphi 0, %s349
      %s367 = sphi 0, %s367
      %s369 = sphi 0, %s367
      %s370 = sphi 0, %s369
      %s384 = sphi 0, %s370
      %s388 = sphi 0, %s388
      %s390 = sphi 0, %s388
      %s391 = sphi 0, %s390
      %s405 = sphi 0, %s391
      %s409 = sphi 0, %s409
      %s411 = sphi 0, %s409
      %s412 = sphi 0, %s411
      %s426 = sphi 0, %s412
      %s430 = sphi 0, %s430
      %s432 = sphi 0, %s430
      %s433 = sphi 0, %s432
      %s447 = sphi 0, %s433
      %s451 = sphi 0, %s451
      %s453 = sphi 0, %s451
      %s454 = sphi 0, %s453
      %s468 = sphi 0, %s454
      %s472 = sphi 0, %s472
      %s474 = sphi 0, %s472
      %s475 = sphi 0, %s474
      %s489 = sphi 0, %s475
      %s493 = sphi 0, %s493
      %s495 = sphi 0, %s493
      %s496 = sphi 0, %s495
      %s510 = sphi 0, %s496
      %s514 = sphi 0, %s514
      %s516 = sphi 0, %s514
      %s517 = sphi 0, %s516
      %s531 = sphi 0, %s517
      %s537 = sphi 0, %s539
      %s540 = sphi 0, %s537
      %s541 = sphi 0, %s540
      %s557 = sphi 0, %s541
    $region4: #{tpu_custom_call.1} parent=1 // loop_header_branch
      %42 = sbr.rel (%p40) target = $region8
    $region5: #{tpu_custom_call.1} parent=1 // loop_body
      %s44 = ssub.s32 %s39, 1
      %s45 = ssub.s32 %s39, 2
      %s46 = sadd.s32 %s39, 1
      %s47 = ssub.s32 %s39, %s46
      %p48 = scmp.eq.s32.totalorder %s47, 0
      %s50 = sadd.s32 %s49, 1
      %s51 = scalar_select %p48, %s49, %s50
      %p54 = pneg %p48
      %p55 = scmp.eq.s32.totalorder %s39, 1
      %p56 = por %p54, %p55
      %p57 = scmp.ne.s32.totalorder %s49, %s52
      %p58 = scmp.eq.s32.totalorder %s39, 0
      %p59 = por %p57, %p58
      %p60 = scmp.ne.s32.totalorder %s49, %s52
      %p61 = scmp.eq.s32.totalorder %s44, 1
      %p62 = por %p60, %p61
      %p63 = scmp.ne.s32.totalorder %s52, %s53
      %p64 = scmp.eq.s32.totalorder %s44, 0
      %p65 = por %p63, %p64
      %p66 = scmp.ne.s32.totalorder %s52, %s53
      %p67 = scmp.eq.s32.totalorder %s45, 1
      %p68 = por %p66, %p67
      %p70 = scmp.ne.s32.totalorder %s53, %s69
      %p71 = scmp.eq.s32.totalorder %s45, 0
      %p72 = por %p70, %p71
      %s74 = sadd.s32 %s73, 1
      %p77 = scmp.eq.s32.totalorder %s39, 1
      %p78 = scmp.ne.s32.totalorder %s73, %s75
      %p79 = scmp.eq.s32.totalorder %s39, 0
      %p80 = por %p78, %p79
      %p81 = scmp.ne.s32.totalorder %s73, %s75
      %p82 = scmp.eq.s32.totalorder %s44, 1
      %p83 = por %p81, %p82
      %p84 = scmp.ne.s32.totalorder %s75, %s76
      %p85 = scmp.eq.s32.totalorder %s44, 0
      %p86 = por %p84, %p85
      %p87 = scmp.ne.s32.totalorder %s75, %s76
      %p88 = scmp.eq.s32.totalorder %s45, 1
      %p89 = por %p87, %p88
      %p91 = scmp.ne.s32.totalorder %s76, %s90
      %p92 = scmp.eq.s32.totalorder %s45, 0
      %p93 = por %p91, %p92
      %s95 = sadd.s32 %s94, 1
      %p98 = scmp.eq.s32.totalorder %s39, 1
      %p99 = scmp.ne.s32.totalorder %s94, %s96
      %p100 = scmp.eq.s32.totalorder %s39, 0
      %p101 = por %p99, %p100
      %p102 = scmp.ne.s32.totalorder %s94, %s96
      %p103 = scmp.eq.s32.totalorder %s44, 1
      %p104 = por %p102, %p103
      %p105 = scmp.ne.s32.totalorder %s96, %s97
      %p106 = scmp.eq.s32.totalorder %s44, 0
      %p107 = por %p105, %p106
      %p108 = scmp.ne.s32.totalorder %s96, %s97
      %p109 = scmp.eq.s32.totalorder %s45, 1
      %p110 = por %p108, %p109
      %p112 = scmp.ne.s32.totalorder %s97, %s111
      %p113 = scmp.eq.s32.totalorder %s45, 0
      %p114 = por %p112, %p113
      %s116 = sadd.s32 %s115, 1
      %p119 = scmp.eq.s32.totalorder %s39, 1
      %p120 = scmp.ne.s32.totalorder %s115, %s117
      %p121 = scmp.eq.s32.totalorder %s39, 0
      %p122 = por %p120, %p121
      %p123 = scmp.ne.s32.totalorder %s115, %s117
      %p124 = scmp.eq.s32.totalorder %s44, 1
      %p125 = por %p123, %p124
      %p126 = scmp.ne.s32.totalorder %s117, %s118
      %p127 = scmp.eq.s32.totalorder %s44, 0
      %p128 = por %p126, %p127
      %p129 = scmp.ne.s32.totalorder %s117, %s118
      %p130 = scmp.eq.s32.totalorder %s45, 1
      %p131 = por %p129, %p130
      %p133 = scmp.ne.s32.totalorder %s118, %s132
      %p134 = scmp.eq.s32.totalorder %s45, 0
      %p135 = por %p133, %p134
      %s137 = sadd.s32 %s136, 1
      %p140 = scmp.eq.s32.totalorder %s39, 1
      %p141 = scmp.ne.s32.totalorder %s136, %s138
      %p142 = scmp.eq.s32.totalorder %s39, 0
      %p143 = por %p141, %p142
      %p144 = scmp.ne.s32.totalorder %s136, %s138
      %p145 = scmp.eq.s32.totalorder %s44, 1
      %p146 = por %p144, %p145
      %p147 = scmp.ne.s32.totalorder %s138, %s139
      %p148 = scmp.eq.s32.totalorder %s44, 0
      %p149 = por %p147, %p148
      %p150 = scmp.ne.s32.totalorder %s138, %s139
      %p151 = scmp.eq.s32.totalorder %s45, 1
      %p152 = por %p150, %p151
      %p154 = scmp.ne.s32.totalorder %s139, %s153
      %p155 = scmp.eq.s32.totalorder %s45, 0
      %p156 = por %p154, %p155
      %s158 = sadd.s32 %s157, 1
      %p161 = scmp.eq.s32.totalorder %s39, 1
      %p162 = scmp.ne.s32.totalorder %s157, %s159
      %p163 = scmp.eq.s32.totalorder %s39, 0
      %p164 = por %p162, %p163
      %p165 = scmp.ne.s32.totalorder %s157, %s159
      %p166 = scmp.eq.s32.totalorder %s44, 1
      %p167 = por %p165, %p166
      %p168 = scmp.ne.s32.totalorder %s159, %s160
      %p169 = scmp.eq.s32.totalorder %s44, 0
      %p170 = por %p168, %p169
      %p171 = scmp.ne.s32.totalorder %s159, %s160
      %p172 = scmp.eq.s32.totalorder %s45, 1
      %p173 = por %p171, %p172
      %p175 = scmp.ne.s32.totalorder %s160, %s174
      %p176 = scmp.eq.s32.totalorder %s45, 0
      %p177 = por %p175, %p176
      %s179 = sadd.s32 %s178, 1
      %p182 = scmp.eq.s32.totalorder %s39, 1
      %p183 = scmp.ne.s32.totalorder %s178, %s180
      %p184 = scmp.eq.s32.totalorder %s39, 0
      %p185 = por %p183, %p184
      %p186 = scmp.ne.s32.totalorder %s178, %s180
      %p187 = scmp.eq.s32.totalorder %s44, 1
      %p188 = por %p186, %p187
      %p189 = scmp.ne.s32.totalorder %s180, %s181
      %p190 = scmp.eq.s32.totalorder %s44, 0
      %p191 = por %p189, %p190
      %p192 = scmp.ne.s32.totalorder %s180, %s181
      %p193 = scmp.eq.s32.totalorder %s45, 1
      %p194 = por %p192, %p193
      %p196 = scmp.ne.s32.totalorder %s181, %s195
      %p197 = scmp.eq.s32.totalorder %s45, 0
      %p198 = por %p196, %p197
      %s200 = sadd.s32 %s199, 1
      %p203 = scmp.eq.s32.totalorder %s39, 1
      %p204 = scmp.ne.s32.totalorder %s199, %s201
      %p205 = scmp.eq.s32.totalorder %s39, 0
      %p206 = por %p204, %p205
      %p207 = scmp.ne.s32.totalorder %s199, %s201
      %p208 = scmp.eq.s32.totalorder %s44, 1
      %p209 = por %p207, %p208
      %p210 = scmp.ne.s32.totalorder %s201, %s202
      %p211 = scmp.eq.s32.totalorder %s44, 0
      %p212 = por %p210, %p211
      %p213 = scmp.ne.s32.totalorder %s201, %s202
      %p214 = scmp.eq.s32.totalorder %s45, 1
      %p215 = por %p213, %p214
      %p217 = scmp.ne.s32.totalorder %s202, %s216
      %p218 = scmp.eq.s32.totalorder %s45, 0
      %p219 = por %p217, %p218
      %s221 = sadd.s32 %s220, 1
      %p224 = scmp.eq.s32.totalorder %s39, 1
      %p225 = scmp.ne.s32.totalorder %s220, %s222
      %p226 = scmp.eq.s32.totalorder %s39, 0
      %p227 = por %p225, %p226
      %p228 = scmp.ne.s32.totalorder %s220, %s222
      %p229 = scmp.eq.s32.totalorder %s44, 1
      %p230 = por %p228, %p229
      %p231 = scmp.ne.s32.totalorder %s222, %s223
      %p232 = scmp.eq.s32.totalorder %s44, 0
      %p233 = por %p231, %p232
      %p234 = scmp.ne.s32.totalorder %s222, %s223
      %p235 = scmp.eq.s32.totalorder %s45, 1
      %p236 = por %p234, %p235
      %p238 = scmp.ne.s32.totalorder %s223, %s237
      %p239 = scmp.eq.s32.totalorder %s45, 0
      %p240 = por %p238, %p239
      %s242 = sadd.s32 %s241, 1
      %p245 = scmp.eq.s32.totalorder %s39, 1
      %p246 = scmp.ne.s32.totalorder %s241, %s243
      %p247 = scmp.eq.s32.totalorder %s39, 0
      %p248 = por %p246, %p247
      %p249 = scmp.ne.s32.totalorder %s241, %s243
      %p250 = scmp.eq.s32.totalorder %s44, 1
      %p251 = por %p249, %p250
      %p252 = scmp.ne.s32.totalorder %s243, %s244
      %p253 = scmp.eq.s32.totalorder %s44, 0
      %p254 = por %p252, %p253
      %p255 = scmp.ne.s32.totalorder %s243, %s244
      %p256 = scmp.eq.s32.totalorder %s45, 1
      %p257 = por %p255, %p256
      %p259 = scmp.ne.s32.totalorder %s244, %s258
      %p260 = scmp.eq.s32.totalorder %s45, 0
      %p261 = por %p259, %p260
      %s263 = sadd.s32 %s262, 1
      %p266 = scmp.eq.s32.totalorder %s39, 1
      %p267 = scmp.ne.s32.totalorder %s262, %s264
      %p268 = scmp.eq.s32.totalorder %s39, 0
      %p269 = por %p267, %p268
      %p270 = scmp.ne.s32.totalorder %s262, %s264
      %p271 = scmp.eq.s32.totalorder %s44, 1
      %p272 = por %p270, %p271
      %p273 = scmp.ne.s32.totalorder %s264, %s265
      %p274 = scmp.eq.s32.totalorder %s44, 0
      %p275 = por %p273, %p274
      %p276 = scmp.ne.s32.totalorder %s264, %s265
      %p277 = scmp.eq.s32.totalorder %s45, 1
      %p278 = por %p276, %p277
      %p280 = scmp.ne.s32.totalorder %s265, %s279
      %p281 = scmp.eq.s32.totalorder %s45, 0
      %p282 = por %p280, %p281
      %s284 = sadd.s32 %s283, 1
      %p287 = scmp.eq.s32.totalorder %s39, 1
      %p288 = scmp.ne.s32.totalorder %s283, %s285
      %p289 = scmp.eq.s32.totalorder %s39, 0
      %p290 = por %p288, %p289
      %p291 = scmp.ne.s32.totalorder %s283, %s285
      %p292 = scmp.eq.s32.totalorder %s44, 1
      %p293 = por %p291, %p292
      %p294 = scmp.ne.s32.totalorder %s285, %s286
      %p295 = scmp.eq.s32.totalorder %s44, 0
      %p296 = por %p294, %p295
      %p297 = scmp.ne.s32.totalorder %s285, %s286
      %p298 = scmp.eq.s32.totalorder %s45, 1
      %p299 = por %p297, %p298
      %p301 = scmp.ne.s32.totalorder %s286, %s300
      %p302 = scmp.eq.s32.totalorder %s45, 0
      %p303 = por %p301, %p302
      %s305 = sadd.s32 %s304, 1
      %p308 = scmp.eq.s32.totalorder %s39, 1
      %p309 = scmp.ne.s32.totalorder %s304, %s306
      %p310 = scmp.eq.s32.totalorder %s39, 0
      %p311 = por %p309, %p310
      %p312 = scmp.ne.s32.totalorder %s304, %s306
      %p313 = scmp.eq.s32.totalorder %s44, 1
      %p314 = por %p312, %p313
      %p315 = scmp.ne.s32.totalorder %s306, %s307
      %p316 = scmp.eq.s32.totalorder %s44, 0
      %p317 = por %p315, %p316
      %p318 = scmp.ne.s32.totalorder %s306, %s307
      %p319 = scmp.eq.s32.totalorder %s45, 1
      %p320 = por %p318, %p319
      %p322 = scmp.ne.s32.totalorder %s307, %s321
      %p323 = scmp.eq.s32.totalorder %s45, 0
      %p324 = por %p322, %p323
      %s326 = sadd.s32 %s325, 1
      %p329 = scmp.eq.s32.totalorder %s39, 1
      %p330 = scmp.ne.s32.totalorder %s325, %s327
      %p331 = scmp.eq.s32.totalorder %s39, 0
      %p332 = por %p330, %p331
      %p333 = scmp.ne.s32.totalorder %s325, %s327
      %p334 = scmp.eq.s32.totalorder %s44, 1
      %p335 = por %p333, %p334
      %p336 = scmp.ne.s32.totalorder %s327, %s328
      %p337 = scmp.eq.s32.totalorder %s44, 0
      %p338 = por %p336, %p337
      %p339 = scmp.ne.s32.totalorder %s327, %s328
      %p340 = scmp.eq.s32.totalorder %s45, 1
      %p341 = por %p339, %p340
      %p343 = scmp.ne.s32.totalorder %s328, %s342
      %p344 = scmp.eq.s32.totalorder %s45, 0
      %p345 = por %p343, %p344
      %s347 = sadd.s32 %s346, 1
      %p350 = scmp.eq.s32.totalorder %s39, 1
      %p351 = scmp.ne.s32.totalorder %s346, %s348
      %p352 = scmp.eq.s32.totalorder %s39, 0
      %p353 = por %p351, %p352
      %p354 = scmp.ne.s32.totalorder %s346, %s348
      %p355 = scmp.eq.s32.totalorder %s44, 1
      %p356 = por %p354, %p355
      %p357 = scmp.ne.s32.totalorder %s348, %s349
      %p358 = scmp.eq.s32.totalorder %s44, 0
      %p359 = por %p357, %p358
      %p360 = scmp.ne.s32.totalorder %s348, %s349
      %p361 = scmp.eq.s32.totalorder %s45, 1
      %p362 = por %p360, %p361
      %p364 = scmp.ne.s32.totalorder %s349, %s363
      %p365 = scmp.eq.s32.totalorder %s45, 0
      %p366 = por %p364, %p365
      %s368 = sadd.s32 %s367, 1
      %p371 = scmp.eq.s32.totalorder %s39, 1
      %p372 = scmp.ne.s32.totalorder %s367, %s369
      %p373 = scmp.eq.s32.totalorder %s39, 0
      %p374 = por %p372, %p373
      %p375 = scmp.ne.s32.totalorder %s367, %s369
      %p376 = scmp.eq.s32.totalorder %s44, 1
      %p377 = por %p375, %p376
      %p378 = scmp.ne.s32.totalorder %s369, %s370
      %p379 = scmp.eq.s32.totalorder %s44, 0
      %p380 = por %p378, %p379
      %p381 = scmp.ne.s32.totalorder %s369, %s370
      %p382 = scmp.eq.s32.totalorder %s45, 1
      %p383 = por %p381, %p382
      %p385 = scmp.ne.s32.totalorder %s370, %s384
      %p386 = scmp.eq.s32.totalorder %s45, 0
      %p387 = por %p385, %p386
      %s389 = sadd.s32 %s388, 1
      %p392 = scmp.eq.s32.totalorder %s39, 1
      %p393 = scmp.ne.s32.totalorder %s388, %s390
      %p394 = scmp.eq.s32.totalorder %s39, 0
      %p395 = por %p393, %p394
      %p396 = scmp.ne.s32.totalorder %s388, %s390
      %p397 = scmp.eq.s32.totalorder %s44, 1
      %p398 = por %p396, %p397
      %p399 = scmp.ne.s32.totalorder %s390, %s391
      %p400 = scmp.eq.s32.totalorder %s44, 0
      %p401 = por %p399, %p400
      %p402 = scmp.ne.s32.totalorder %s390, %s391
      %p403 = scmp.eq.s32.totalorder %s45, 1
      %p404 = por %p402, %p403
      %p406 = scmp.ne.s32.totalorder %s391, %s405
      %p407 = scmp.eq.s32.totalorder %s45, 0
      %p408 = por %p406, %p407
      %s410 = sadd.s32 %s409, 1
      %p413 = scmp.eq.s32.totalorder %s39, 1
      %p414 = scmp.ne.s32.totalorder %s409, %s411
      %p415 = scmp.eq.s32.totalorder %s39, 0
      %p416 = por %p414, %p415
      %p417 = scmp.ne.s32.totalorder %s409, %s411
      %p418 = scmp.eq.s32.totalorder %s44, 1
      %p419 = por %p417, %p418
      %p420 = scmp.ne.s32.totalorder %s411, %s412
      %p421 = scmp.eq.s32.totalorder %s44, 0
      %p422 = por %p420, %p421
      %p423 = scmp.ne.s32.totalorder %s411, %s412
      %p424 = scmp.eq.s32.totalorder %s45, 1
      %p425 = por %p423, %p424
      %p427 = scmp.ne.s32.totalorder %s412, %s426
      %p428 = scmp.eq.s32.totalorder %s45, 0
      %p429 = por %p427, %p428
      %s431 = sadd.s32 %s430, 1
      %p434 = scmp.eq.s32.totalorder %s39, 1
      %p435 = scmp.ne.s32.totalorder %s430, %s432
      %p436 = scmp.eq.s32.totalorder %s39, 0
      %p437 = por %p435, %p436
      %p438 = scmp.ne.s32.totalorder %s430, %s432
      %p439 = scmp.eq.s32.totalorder %s44, 1
      %p440 = por %p438, %p439
      %p441 = scmp.ne.s32.totalorder %s432, %s433
      %p442 = scmp.eq.s32.totalorder %s44, 0
      %p443 = por %p441, %p442
      %p444 = scmp.ne.s32.totalorder %s432, %s433
      %p445 = scmp.eq.s32.totalorder %s45, 1
      %p446 = por %p444, %p445
      %p448 = scmp.ne.s32.totalorder %s433, %s447
      %p449 = scmp.eq.s32.totalorder %s45, 0
      %p450 = por %p448, %p449
      %s452 = sadd.s32 %s451, 1
      %p455 = scmp.eq.s32.totalorder %s39, 1
      %p456 = scmp.ne.s32.totalorder %s451, %s453
      %p457 = scmp.eq.s32.totalorder %s39, 0
      %p458 = por %p456, %p457
      %p459 = scmp.ne.s32.totalorder %s451, %s453
      %p460 = scmp.eq.s32.totalorder %s44, 1
      %p461 = por %p459, %p460
      %p462 = scmp.ne.s32.totalorder %s453, %s454
      %p463 = scmp.eq.s32.totalorder %s44, 0
      %p464 = por %p462, %p463
      %p465 = scmp.ne.s32.totalorder %s453, %s454
      %p466 = scmp.eq.s32.totalorder %s45, 1
      %p467 = por %p465, %p466
      %p469 = scmp.ne.s32.totalorder %s454, %s468
      %p470 = scmp.eq.s32.totalorder %s45, 0
      %p471 = por %p469, %p470
      %s473 = sadd.s32 %s472, 1
      %p476 = scmp.eq.s32.totalorder %s39, 1
      %p477 = scmp.ne.s32.totalorder %s472, %s474
      %p478 = scmp.eq.s32.totalorder %s39, 0
      %p479 = por %p477, %p478
      %p480 = scmp.ne.s32.totalorder %s472, %s474
      %p481 = scmp.eq.s32.totalorder %s44, 1
      %p482 = por %p480, %p481
      %p483 = scmp.ne.s32.totalorder %s474, %s475
      %p484 = scmp.eq.s32.totalorder %s44, 0
      %p485 = por %p483, %p484
      %p486 = scmp.ne.s32.totalorder %s474, %s475
      %p487 = scmp.eq.s32.totalorder %s45, 1
      %p488 = por %p486, %p487
      %p490 = scmp.ne.s32.totalorder %s475, %s489
      %p491 = scmp.eq.s32.totalorder %s45, 0
      %p492 = por %p490, %p491
      %s494 = sadd.s32 %s493, 1
      %p497 = scmp.eq.s32.totalorder %s39, 1
      %p498 = scmp.ne.s32.totalorder %s493, %s495
      %p499 = scmp.eq.s32.totalorder %s39, 0
      %p500 = por %p498, %p499
      %p501 = scmp.ne.s32.totalorder %s493, %s495
      %p502 = scmp.eq.s32.totalorder %s44, 1
      %p503 = por %p501, %p502
      %p504 = scmp.ne.s32.totalorder %s495, %s496
      %p505 = scmp.eq.s32.totalorder %s44, 0
      %p506 = por %p504, %p505
      %p507 = scmp.ne.s32.totalorder %s495, %s496
      %p508 = scmp.eq.s32.totalorder %s45, 1
      %p509 = por %p507, %p508
      %p511 = scmp.ne.s32.totalorder %s496, %s510
      %p512 = scmp.eq.s32.totalorder %s45, 0
      %p513 = por %p511, %p512
      %s515 = sadd.s32 %s514, 1
      %p518 = scmp.eq.s32.totalorder %s39, 1
      %p519 = scmp.ne.s32.totalorder %s514, %s516
      %p520 = scmp.eq.s32.totalorder %s39, 0
      %p521 = por %p519, %p520
      %p522 = scmp.ne.s32.totalorder %s514, %s516
      %p523 = scmp.eq.s32.totalorder %s44, 1
      %p524 = por %p522, %p523
      %p525 = scmp.ne.s32.totalorder %s516, %s517
      %p526 = scmp.eq.s32.totalorder %s44, 0
      %p527 = por %p525, %p526
      %p528 = scmp.ne.s32.totalorder %s516, %s517
      %p529 = scmp.eq.s32.totalorder %s45, 1
      %p530 = por %p528, %p529
      %p532 = scmp.ne.s32.totalorder %s517, %s531
      %p533 = scmp.eq.s32.totalorder %s45, 0
      %p534 = por %p532, %p533
      %s535 = ssub.s32 %s39, %s46
      %p536 = scmp.eq.s32.totalorder %s535, 0
      %s538 = sadd.s32 %s537, 1
      %s539 = scalar_select %p536, %s537, %s538
      %p542 = pneg %p536
      %p543 = scmp.eq.s32.totalorder %s39, 1
      %p544 = por %p542, %p543
      %p545 = scmp.ne.s32.totalorder %s537, %s540
      %p546 = scmp.eq.s32.totalorder %s39, 0
      %p547 = por %p545, %p546
      %p548 = scmp.ne.s32.totalorder %s537, %s540
      %p549 = scmp.eq.s32.totalorder %s44, 1
      %p550 = por %p548, %p549
      %p551 = scmp.ne.s32.totalorder %s540, %s541
      %p552 = scmp.eq.s32.totalorder %s44, 0
      %p553 = por %p551, %p552
      %p554 = scmp.ne.s32.totalorder %s540, %s541
      %p555 = scmp.eq.s32.totalorder %s45, 1
      %p556 = por %p554, %p555
      %p558 = scmp.ne.s32.totalorder %s541, %s557
      %p559 = scmp.eq.s32.totalorder %s45, 0
      %p560 = por %p558, %p559
      %p561 = scmp.le.s32.totalorder 1, %s39
      %p562 = scmp.lt.s32.totalorder %s39, 3
      %p563 = pnand %p561, %p562
      %p564 = pneg %p563
      // Predicated region
      $region9: #{tpu_custom_call.1} parent=5 // pred_check
        _
      $region10: #{tpu_custom_call.1} parent=5 // pred_check_branch
        %566 = sbr.rel (%p563) target = $region12
      $region11: #{tpu_custom_call.1} parent=5 // pred_region
        %s567 = ssub.s32 %s39, 1
        // Predicated region
        $region13: #{tpu_custom_call.1} parent=11 // pred_check
          %p568 = pneg %p86
        $region14: #{tpu_custom_call.1} parent=11 // pred_check_branch
          %570 = sbr.rel (%p568) target = $region16
        $region15: #{tpu_custom_call.1} parent=11 // pred_region
          %s572 = ssub.s32 16, 16
          %573 = vsyncadd [#allocation4], %s572
          %s575 = sshll.u32 [#allocation3], 4
          %s576 = int_to_ptr.vmem [resolvable:$true] %s575
          %578 = dma.hbm_to_vmem [thread:$0]  %s1, 16, %s576, [#allocation4]
        $region16: #{tpu_custom_call.1} parent=11 // pred_fallthru
          _
        // Predicated region
        $region17: #{tpu_custom_call.1} parent=11 // pred_check
          %p579 = pneg %p107
        $region18: #{tpu_custom_call.1} parent=11 // pred_check_branch
          %581 = sbr.rel (%p579) target = $region20
        $region19: #{tpu_custom_call.1} parent=11 // pred_region
          %s583 = ssub.s32 16, 16
          %584 = vsyncadd [#allocation7], %s583
          %s586 = sshll.u32 [#allocation6], 4
          %s587 = int_to_ptr.vmem [resolvable:$true] %s586
          %589 = dma.hbm_to_vmem [thread:$0]  %s2, 16, %s587, [#allocation7]
        $region20: #{tpu_custom_call.1} parent=11 // pred_fallthru
          _
        // Predicated region
        $region21: #{tpu_custom_call.1} parent=11 // pred_check
          %p590 = pneg %p128
        $region22: #{tpu_custom_call.1} parent=11 // pred_check_branch
          %592 = sbr.rel (%p590) target = $region24
        $region23: #{tpu_custom_call.1} parent=11 // pred_region
          _
        $region24: #{tpu_custom_call.1} parent=11 // pred_fallthru
          _
        // Predicated region
        $region25: #{tpu_custom_call.1} parent=11 // pred_check
          %p593 = pneg %p149
        $region26: #{tpu_custom_call.1} parent=11 // pred_check_branch
          %595 = sbr.rel (%p593) target = $region28
        $region27: #{tpu_custom_call.1} parent=11 // pred_region
          _
        $region28: #{tpu_custom_call.1} parent=11 // pred_fallthru
          _
        // Predicated region
        $region29: #{tpu_custom_call.1} parent=11 // pred_check
          %p596 = pneg %p170
        $region30: #{tpu_custom_call.1} parent=11 // pred_check_branch
          %598 = sbr.rel (%p596) target = $region32
        $region31: #{tpu_custom_call.1} parent=11 // pred_region
          %s600 = ssub.s32 16, 16
          %601 = vsyncadd [#allocation7], %s600
          %s603 = sshll.u32 [#allocation8], 4
          %s604 = int_to_ptr.vmem [resolvable:$true] %s603
          %606 = dma.hbm_to_vmem [thread:$0]  %s5, 16, %s604, [#allocation7]
        $region32: #{tpu_custom_call.1} parent=11 // pred_fallthru
          _
        // Predicated region
        $region33: #{tpu_custom_call.1} parent=11 // pred_check
          %p607 = pneg %p191
        $region34: #{tpu_custom_call.1} parent=11 // pred_check_branch
          %609 = sbr.rel (%p607) target = $region36
        $region35: #{tpu_custom_call.1} parent=11 // pred_region
          %s611 = ssub.s32 16, 16
          %612 = vsyncadd [#allocation10], %s611
          %s614 = sshll.u32 [#allocation9], 4
          %s615 = int_to_ptr.vmem [resolvable:$true] %s614
          %617 = dma.hbm_to_vmem [thread:$0]  %s6, 16, %s615, [#allocation10]
        $region36: #{tpu_custom_call.1} parent=11 // pred_fallthru
          _
        // Predicated region
        $region37: #{tpu_custom_call.1} parent=11 // pred_check
          %p618 = pneg %p212
        $region38: #{tpu_custom_call.1} parent=11 // pred_check_branch
          %620 = sbr.rel (%p618) target = $region40
        $region39: #{tpu_custom_call.1} parent=11 // pred_region
          %s622 = ssub.s32 16, 16
          %623 = vsyncadd [#allocation10], %s622
          %s625 = sshll.u32 [#allocation11], 4
          %s626 = int_to_ptr.vmem [resolvable:$true] %s625
          %628 = dma.hbm_to_vmem [thread:$0]  %s7, 16, %s626, [#allocation10]
        $region40: #{tpu_custom_call.1} parent=11 // pred_fallthru
          _
        // Predicated region
        $region41: #{tpu_custom_call.1} parent=11 // pred_check
          %p629 = pneg %p233
        $region42: #{tpu_custom_call.1} parent=11 // pred_check_branch
          %631 = sbr.rel (%p629) target = $region44
        $region43: #{tpu_custom_call.1} parent=11 // pred_region
          _
        $region44: #{tpu_custom_call.1} parent=11 // pred_fallthru
          _
        // Predicated region
        $region45: #{tpu_custom_call.1} parent=11 // pred_check
          %p632 = pneg %p254
        $region46: #{tpu_custom_call.1} parent=11 // pred_check_branch
          %634 = sbr.rel (%p632) target = $region48
        $region47: #{tpu_custom_call.1} parent=11 // pred_region
          %s636 = ssub.s32 16, 16
          %637 = vsyncadd [#allocation13], %s636
          %s639 = sshll.u32 [#allocation12], 4
          %s640 = int_to_ptr.vmem [resolvable:$true] %s639
          %642 = dma.hbm_to_vmem [thread:$0]  %s9, 16, %s640, [#allocation13]
        $region48: #{tpu_custom_call.1} parent=11 // pred_fallthru
          _
        // Predicated region
        $region49: #{tpu_custom_call.1} parent=11 // pred_check
          %p643 = pneg %p275
        $region50: #{tpu_custom_call.1} parent=11 // pred_check_branch
          %645 = sbr.rel (%p643) target = $region52
        $region51: #{tpu_custom_call.1} parent=11 // pred_region
          _
        $region52: #{tpu_custom_call.1} parent=11 // pred_fallthru
          _
        // Predicated region
        $region53: #{tpu_custom_call.1} parent=11 // pred_check
          %p646 = pneg %p296
        $region54: #{tpu_custom_call.1} parent=11 // pred_check_branch
          %648 = sbr.rel (%p646) target = $region56
        $region55: #{tpu_custom_call.1} parent=11 // pred_region
          %s650 = ssub.s32 16, 16
          %651 = vsyncadd [#allocation13], %s650
          %s653 = sshll.u32 [#allocation14], 4
          %s654 = int_to_ptr.vmem [resolvable:$true] %s653
          %656 = dma.hbm_to_vmem [thread:$0]  %s11, 16, %s654, [#allocation13]
        $region56: #{tpu_custom_call.1} parent=11 // pred_fallthru
          _
        // Predicated region
        $region57: #{tpu_custom_call.1} parent=11 // pred_check
          %p657 = pneg %p317
        $region58: #{tpu_custom_call.1} parent=11 // pred_check_branch
          %659 = sbr.rel (%p657) target = $region60
        $region59: #{tpu_custom_call.1} parent=11 // pred_region
          %s661 = ssub.s32 16, 16
          %662 = vsyncadd [#allocation16], %s661
          %s664 = sshll.u32 [#allocation15], 4
          %s665 = int_to_ptr.vmem [resolvable:$true] %s664
          %667 = dma.hbm_to_vmem [thread:$0]  %s12, 16, %s665, [#allocation16]
        $region60: #{tpu_custom_call.1} parent=11 // pred_fallthru
          _
        // Predicated region
        $region61: #{tpu_custom_call.1} parent=11 // pred_check
          %p668 = pneg %p338
        $region62: #{tpu_custom_call.1} parent=11 // pred_check_branch
          %670 = sbr.rel (%p668) target = $region64
        $region63: #{tpu_custom_call.1} parent=11 // pred_region
          %s672 = ssub.s32 16, 16
          %673 = vsyncadd [#allocation16], %s672
          %s675 = sshll.u32 [#allocation17], 4
          %s676 = int_to_ptr.vmem [resolvable:$true] %s675
          %678 = dma.hbm_to_vmem [thread:$0]  %s13, 16, %s676, [#allocation16]
        $region64: #{tpu_custom_call.1} parent=11 // pred_fallthru
          _
        // Predicated region
        $region65: #{tpu_custom_call.1} parent=11 // pred_check
          %p679 = pneg %p359
        $region66: #{tpu_custom_call.1} parent=11 // pred_check_branch
          %681 = sbr.rel (%p679) target = $region68
        $region67: #{tpu_custom_call.1} parent=11 // pred_region
          %s683 = ssub.s32 512, 512
          %684 = vsyncadd [#allocation19], %s683
          %s685 = sshll.u32 [#allocation18], 4
          %s686 = int_to_ptr.vmem [resolvable:$true] %s685
          %691 = dma.hbm_to_vmem [thread:$0]  %s14, 512, %s686, [#allocation19], 128, 128, 8
        $region68: #{tpu_custom_call.1} parent=11 // pred_fallthru
          _
        // Predicated region
        $region69: #{tpu_custom_call.1} parent=11 // pred_check
          %p692 = pneg %p380
        $region70: #{tpu_custom_call.1} parent=11 // pred_check_branch
          %694 = sbr.rel (%p692) target = $region72
        $region71: #{tpu_custom_call.1} parent=11 // pred_region
          %s696 = ssub.s32 512, 512
          %697 = vsyncadd [#allocation19], %s696
          %s698 = sshll.u32 [#allocation20], 4
          %s699 = int_to_ptr.vmem [resolvable:$true] %s698
          %704 = dma.hbm_to_vmem [thread:$0]  %s15, 512, %s699, [#allocation19], 128, 128, 8
        $region72: #{tpu_custom_call.1} parent=11 // pred_fallthru
          _
        // Predicated region
        $region73: #{tpu_custom_call.1} parent=11 // pred_check
          %p705 = pneg %p401
        $region74: #{tpu_custom_call.1} parent=11 // pred_check_branch
          %707 = sbr.rel (%p705) target = $region76
        $region75: #{tpu_custom_call.1} parent=11 // pred_region
          %s709 = ssub.s32 16, 16
          %710 = vsyncadd [#allocation22], %s709
          %s712 = sshll.u32 [#allocation21], 4
          %s713 = int_to_ptr.vmem [resolvable:$true] %s712
          %715 = dma.hbm_to_vmem [thread:$0]  %s16, 16, %s713, [#allocation22]
        $region76: #{tpu_custom_call.1} parent=11 // pred_fallthru
          _
        // Predicated region
        $region77: #{tpu_custom_call.1} parent=11 // pred_check
          %p716 = pneg %p422
        $region78: #{tpu_custom_call.1} parent=11 // pred_check_branch
          %718 = sbr.rel (%p716) target = $region80
        $region79: #{tpu_custom_call.1} parent=11 // pred_region
          %s720 = ssub.s32 16, 16
          %721 = vsyncadd [#allocation22], %s720
          %s723 = sshll.u32 [#allocation23], 4
          %s724 = int_to_ptr.vmem [resolvable:$true] %s723
          %726 = dma.hbm_to_vmem [thread:$0]  %s17, 16, %s724, [#allocation22]
        $region80: #{tpu_custom_call.1} parent=11 // pred_fallthru
          _
        // Predicated region
        $region81: #{tpu_custom_call.1} parent=11 // pred_check
          %p727 = pneg %p443
        $region82: #{tpu_custom_call.1} parent=11 // pred_check_branch
          %729 = sbr.rel (%p727) target = $region84
        $region83: #{tpu_custom_call.1} parent=11 // pred_region
          _
        $region84: #{tpu_custom_call.1} parent=11 // pred_fallthru
          _
        // Predicated region
        $region85: #{tpu_custom_call.1} parent=11 // pred_check
          %p730 = pneg %p464
        $region86: #{tpu_custom_call.1} parent=11 // pred_check_branch
          %732 = sbr.rel (%p730) target = $region88
        $region87: #{tpu_custom_call.1} parent=11 // pred_region
          _
        $region88: #{tpu_custom_call.1} parent=11 // pred_fallthru
          _
        // Predicated region
        $region89: #{tpu_custom_call.1} parent=11 // pred_check
          %p733 = pneg %p485
        $region90: #{tpu_custom_call.1} parent=11 // pred_check_branch
          %735 = sbr.rel (%p733) target = $region92
        $region91: #{tpu_custom_call.1} parent=11 // pred_region
          _
        $region92: #{tpu_custom_call.1} parent=11 // pred_fallthru
          _
        // Predicated region
        $region93: #{tpu_custom_call.1} parent=11 // pred_check
          %p736 = pneg %p506
        $region94: #{tpu_custom_call.1} parent=11 // pred_check_branch
          %738 = sbr.rel (%p736) target = $region96
        $region95: #{tpu_custom_call.1} parent=11 // pred_region
          _
        $region96: #{tpu_custom_call.1} parent=11 // pred_fallthru
          _
        // Predicated region
        $region97: #{tpu_custom_call.1} parent=11 // pred_check
          %p739 = pneg %p527
        $region98: #{tpu_custom_call.1} parent=11 // pred_check_branch
          %741 = sbr.rel (%p739) target = $region100
        $region99: #{tpu_custom_call.1} parent=11 // pred_region
          _
        $region100: #{tpu_custom_call.1} parent=11 // pred_fallthru
          _
      $region12: #{tpu_custom_call.1} parent=5 // pred_fallthru
        _
      %p742 = scmp.lt.s32.totalorder %s39, 2
      // Predicated region
      $region101: #{tpu_custom_call.1} parent=5 // pred_check
        %p743 = pneg %p742
      $region102: #{tpu_custom_call.1} parent=5 // pred_check_branch
        %745 = sbr.rel (%p743) target = $region104
      $region103: #{tpu_custom_call.1} parent=5 // pred_region
        // Predicated region
        $region105: #{tpu_custom_call.1} parent=103 // pred_check
          %p746 = pneg %p59
        $region106: #{tpu_custom_call.1} parent=103 // pred_check_branch
          %748 = sbr.rel (%p746) target = $region108
        $region107: #{tpu_custom_call.1} parent=103 // pred_region
          %p749 = scmp.lt.s32.totalorder %s39, 1
          %s750 = scalar_select %p749, %s39, 1
          %s751 = smul.addr %s750, 4
          %s752 = smul.addr %s751, 8
          %s753 = scalar_lea.vmem %s0, %s752
        $region108: #{tpu_custom_call.1} parent=103 // pred_fallthru
          _
      $region104: #{tpu_custom_call.1} parent=5 // pred_fallthru
        _
      %p754 = scmp.le.s32.totalorder 1, %s39
      %p755 = scmp.lt.s32.totalorder %s39, 3
      %p756 = pnand %p754, %p755
      %p757 = pneg %p756
      // Predicated region
      $region109: #{tpu_custom_call.1} parent=5 // pred_check
        _
      $region110: #{tpu_custom_call.1} parent=5 // pred_check_branch
        %759 = sbr.rel (%p756) target = $region112
      $region111: #{tpu_custom_call.1} parent=5 // pred_region
        %s760 = ssub.s32 %s39, 1
        // Predicated region
        $region113: #{tpu_custom_call.1} parent=111 // pred_check
          %p761 = pneg %p86
        $region114: #{tpu_custom_call.1} parent=111 // pred_check_branch
          %763 = sbr.rel (%p761) target = $region116
        $region115: #{tpu_custom_call.1} parent=111 // pred_region
          %764 = dma.done [#allocation4], 16
        $region116: #{tpu_custom_call.1} parent=111 // pred_fallthru
          _
        // Predicated region
        $region117: #{tpu_custom_call.1} parent=111 // pred_check
          %p765 = pneg %p107
        $region118: #{tpu_custom_call.1} parent=111 // pred_check_branch
          %767 = sbr.rel (%p765) target = $region120
        $region119: #{tpu_custom_call.1} parent=111 // pred_region
          %768 = dma.done [#allocation7], 16
        $region120: #{tpu_custom_call.1} parent=111 // pred_fallthru
          _
        // Predicated region
        $region121: #{tpu_custom_call.1} parent=111 // pred_check
          %p769 = pneg %p170
        $region122: #{tpu_custom_call.1} parent=111 // pred_check_branch
          %771 = sbr.rel (%p769) target = $region124
        $region123: #{tpu_custom_call.1} parent=111 // pred_region
          %772 = dma.done [#allocation7], 16
        $region124: #{tpu_custom_call.1} parent=111 // pred_fallthru
          _
        // Predicated region
        $region125: #{tpu_custom_call.1} parent=111 // pred_check
          %p773 = pneg %p191
        $region126: #{tpu_custom_call.1} parent=111 // pred_check_branch
          %775 = sbr.rel (%p773) target = $region128
        $region127: #{tpu_custom_call.1} parent=111 // pred_region
          %776 = dma.done [#allocation10], 16
        $region128: #{tpu_custom_call.1} parent=111 // pred_fallthru
          _
        // Predicated region
        $region129: #{tpu_custom_call.1} parent=111 // pred_check
          %p777 = pneg %p212
        $region130: #{tpu_custom_call.1} parent=111 // pred_check_branch
          %779 = sbr.rel (%p777) target = $region132
        $region131: #{tpu_custom_call.1} parent=111 // pred_region
          %780 = dma.done [#allocation10], 16
        $region132: #{tpu_custom_call.1} parent=111 // pred_fallthru
          _
        // Predicated region
        $region133: #{tpu_custom_call.1} parent=111 // pred_check
          %p781 = pneg %p254
        $region134: #{tpu_custom_call.1} parent=111 // pred_check_branch
          %783 = sbr.rel (%p781) target = $region136
        $region135: #{tpu_custom_call.1} parent=111 // pred_region
          %784 = dma.done [#allocation13], 16
        $region136: #{tpu_custom_call.1} parent=111 // pred_fallthru
          _
        // Predicated region
        $region137: #{tpu_custom_call.1} parent=111 // pred_check
          %p785 = pneg %p296
        $region138: #{tpu_custom_call.1} parent=111 // pred_check_branch
          %787 = sbr.rel (%p785) target = $region140
        $region139: #{tpu_custom_call.1} parent=111 // pred_region
          %788 = dma.done [#allocation13], 16
        $region140: #{tpu_custom_call.1} parent=111 // pred_fallthru
          _
        // Predicated region
        $region141: #{tpu_custom_call.1} parent=111 // pred_check
          %p789 = pneg %p317
        $region142: #{tpu_custom_call.1} parent=111 // pred_check_branch
          %791 = sbr.rel (%p789) target = $region144
        $region143: #{tpu_custom_call.1} parent=111 // pred_region
          %792 = dma.done [#allocation16], 16
        $region144: #{tpu_custom_call.1} parent=111 // pred_fallthru
          _
        // Predicated region
        $region145: #{tpu_custom_call.1} parent=111 // pred_check
          %p793 = pneg %p338
        $region146: #{tpu_custom_call.1} parent=111 // pred_check_branch
          %795 = sbr.rel (%p793) target = $region148
        $region147: #{tpu_custom_call.1} parent=111 // pred_region
          %796 = dma.done [#allocation16], 16
        $region148: #{tpu_custom_call.1} parent=111 // pred_fallthru
          _
        // Predicated region
        $region149: #{tpu_custom_call.1} parent=111 // pred_check
          %p797 = pneg %p359
        $region150: #{tpu_custom_call.1} parent=111 // pred_check_branch
          %799 = sbr.rel (%p797) target = $region152
        $region151: #{tpu_custom_call.1} parent=111 // pred_region
          %800 = dma.done [#allocation19], 512
        $region152: #{tpu_custom_call.1} parent=111 // pred_fallthru
          _
        // Predicated region
        $region153: #{tpu_custom_call.1} parent=111 // pred_check
          %p801 = pneg %p380
        $region154: #{tpu_custom_call.1} parent=111 // pred_check_branch
          %803 = sbr.rel (%p801) target = $region156
        $region155: #{tpu_custom_call.1} parent=111 // pred_region
          %804 = dma.done [#allocation19], 512
        $region156: #{tpu_custom_call.1} parent=111 // pred_fallthru
          _
        // Predicated region
        $region157: #{tpu_custom_call.1} parent=111 // pred_check
          %p805 = pneg %p401
        $region158: #{tpu_custom_call.1} parent=111 // pred_check_branch
          %807 = sbr.rel (%p805) target = $region160
        $region159: #{tpu_custom_call.1} parent=111 // pred_region
          %808 = dma.done [#allocation22], 16
        $region160: #{tpu_custom_call.1} parent=111 // pred_fallthru
          _
        // Predicated region
        $region161: #{tpu_custom_call.1} parent=111 // pred_check
          %p809 = pneg %p422
        $region162: #{tpu_custom_call.1} parent=111 // pred_check_branch
          %811 = sbr.rel (%p809) target = $region164
        $region163: #{tpu_custom_call.1} parent=111 // pred_region
          %812 = dma.done [#allocation22], 16
        $region164: #{tpu_custom_call.1} parent=111 // pred_fallthru
          _
        %p813 = scmp.lt.s32.totalorder %s44, 1
        %s814 = scalar_select %p813, %s44, 1
        %s815 = smul.addr %s814, 4
        %s816 = smul.addr %s815, 8
        %s817 = scalar_lea.vmem %s0, %s816
        %p818 = pneg %p65
        %p819 = pneg %p62
        %p820 = pneg %p86
        %p821 = pneg %p83
        %p822 = pneg %p107
        %p823 = pneg %p104
        %p824 = pneg %p128
        %p825 = pneg %p125
        %p826 = pneg %p149
        %p827 = pneg %p146
        %p828 = pneg %p170
        %p829 = pneg %p167
        %p830 = pneg %p191
        %p831 = pneg %p188
        %p832 = pneg %p212
        %p833 = pneg %p209
        %p834 = pneg %p233
        %p835 = pneg %p230
        %p836 = pneg %p254
        %p837 = pneg %p251
        %p838 = pneg %p275
        %p839 = pneg %p272
        %p840 = pneg %p296
        %p841 = pneg %p293
        %p842 = pneg %p317
        %p843 = pneg %p314
        %p844 = pneg %p338
        %p845 = pneg %p335
        %p846 = pneg %p359
        %p847 = pneg %p356
        %p848 = pneg %p380
        %p849 = pneg %p377
        %p850 = pneg %p401
        %p851 = pneg %p398
        %p852 = pneg %p422
        %p853 = pneg %p419
        %p854 = pneg %p443
        %p855 = pneg %p440
        %p856 = pneg %p464
        %p857 = pneg %p461
        %p858 = pneg %p485
        %p859 = pneg %p482
        %p860 = pneg %p506
        %p861 = pneg %p503
        %p862 = pneg %p527
        %p863 = pneg %p524
        %p864 = pneg %p553
        %p865 = pneg %p550
        %s866 = sand.u32 %s540, 1
        %s867 = scalar_lea.sflag [#allocation5], %s866
        %s868 = sand.u32 %s540, 1
        %s869 = smul.addr %s868, 32
        %s870 = scalar_lea.vmem [#allocation24], %s869
        %p871 = scmp.lt.s32.totalorder %s44, 1
        %s872 = scalar_select %p871, %s44, 1
        %s873 = smul.addr %s872, 4
        %s874 = smul.addr %s873, 8
        %s875 = scalar_lea.vmem %s0, %s874
        %v876 = vld [vmem:[%s875] sm:$0xff]
        %v877 = vld [vmem:[%s875 + $0x8] sm:$0xff]
        %v878 = vld [vmem:[%s875 + $0x10] sm:$0xff]
        %v879 = vld [vmem:[%s875 + $0x18] sm:$0xff]
        %v880 = vld [vmem:[#allocation3] sm:$0x1]
        %v881 = vld [vmem:[#allocation6] sm:$0x1]
        %v882 = vld [vmem:[%s3] sm:$0xff]
        %v883 = vld [vmem:[%s3 + $0x8] sm:$0xff]
        %v884 = vld [vmem:[%s3 + $0x10] sm:$0xff]
        %v885 = vld [vmem:[%s3 + $0x18] sm:$0xff]
        %v886 = vld [vmem:[%s4] sm:$0xff]
        %v887 = vld [vmem:[%s4 + $0x8] sm:$0xff]
        %v888 = vld [vmem:[%s4 + $0x10] sm:$0xff]
        %v889 = vld [vmem:[%s4 + $0x18] sm:$0xff]
        %v890 = vld [vmem:[#allocation8] sm:$0x1]
        %vm891 = vcmask 261120
        %v892 = vsel %vm891, %v876, 0.0
        %893 = vadd.xlane.f32.xlu0 %v892
        %v894 = vpop.xlane.xlu0 %893
        %v895 = vsel %vm891, %v877, 0.0
        %896 = vadd.xlane.f32.xlu0 %v895
        %v897 = vpop.xlane.xlu0 %896
        %v898 = vsel %vm891, %v878, 0.0
        %899 = vadd.xlane.f32.xlu0 %v898
        %v900 = vpop.xlane.xlu0 %899
        %v901 = vsel %vm891, %v879, 0.0
        %902 = vadd.xlane.f32.xlu0 %v901
        %v903 = vpop.xlane.xlu0 %902
        %v904 = vrcp.pop 32.0
        %v905 = vmul.f32 %v894, %v904
        %v906 = vmul.f32 %v897, %v904
        %v907 = vmul.f32 %v900, %v904
        %v908 = vmul.f32 %v903, %v904
        %v909 = vsub.f32 %v876, %v905
        %v910 = vsub.f32 %v877, %v906
        %v911 = vsub.f32 %v878, %v907
        %v912 = vsub.f32 %v879, %v908
        %v913 = vmul.f32 %v909, %v909
        %v914 = vmul.f32 %v910, %v910
        %v915 = vmul.f32 %v911, %v911
        %v916 = vmul.f32 %v912, %v912
        %v917 = vsel %vm891, %v913, 0.0
        %918 = vadd.xlane.f32.xlu0 %v917
        %v919 = vpop.xlane.xlu0 %918
        %v920 = vsel %vm891, %v914, 0.0
        %921 = vadd.xlane.f32.xlu0 %v920
        %v922 = vpop.xlane.xlu0 %921
        %v923 = vsel %vm891, %v915, 0.0
        %924 = vadd.xlane.f32.xlu0 %v923
        %v925 = vpop.xlane.xlu0 %924
        %v926 = vsel %vm891, %v916, 0.0
        %927 = vadd.xlane.f32.xlu0 %v926
        %v928 = vpop.xlane.xlu0 %927
        %v929 = vmul.f32 %v919, %v904
        %v930 = vmul.f32 %v922, %v904
        %v931 = vmul.f32 %v925, %v904
        %v932 = vmul.f32 %v928, %v904
        %v933 = vadd.f32 %v929, 1e-05
        %v934 = vadd.f32 %v930, 1e-05
        %v935 = vadd.f32 %v931, 1e-05
        %v936 = vadd.f32 %v932, 1e-05
        %v937 = vrsqrt.pop %v933
        %v938 = vrsqrt.pop %v934
        %v939 = vrsqrt.pop %v935
        %v940 = vrsqrt.pop %v936
        %v941 = vmul.f32 %v909, %v937
        %v942 = vmul.f32 %v910, %v938
        %v943 = vmul.f32 %v911, %v939
        %v944 = vmul.f32 %v912, %v940
        %v946 = vlaneseq
        %v947 = vshrl.u32 %v946, 7
        %v948 = vsub.s32 0, %v947
        %v949 = vrot.slane %v880, %v948
        %v951 = vmul.f32 %v941, %v949
        %v952 = vmul.f32 %v942, %v949
        %v953 = vmul.f32 %v943, %v949
        %v954 = vmul.f32 %v944, %v949
        %v956 = vlaneseq
        %v957 = vshrl.u32 %v956, 7
        %v958 = vsub.s32 0, %v957
        %v959 = vrot.slane %v881, %v958
        %v961 = vadd.f32 %v951, %v959
        %v962 = vadd.f32 %v952, %v959
        %v963 = vadd.f32 %v953, %v959
        %v964 = vadd.f32 %v954, %v959
        %v966 = vsel %vm891, %v961, 0
        %v969 = vsel %vm891, %v962, 0
        %v972 = vsel %vm891, %v963, 0
        %v975 = vsel %vm891, %v964, 0
        %977 = vmatprep.subr.mxu0 0.0
        %978 = vmatpush1.msra.mxu0 %v882
        %979 = vmatprep.subr.mxu0 0.0
        %980 = vmatpush1.msra.mxu0 %v883
        %981 = vmatprep.subr.mxu0 0.0
        %982 = vmatpush1.msra.mxu0 %v884
        %983 = vmatprep.subr.mxu0 0.0
        %984 = vmatpush1.msra.mxu0 %v885
        %985 = vmatprep.subr.mxu0 0.0
        %986 = vmatpush1.msra.mxu0 0.0
        %987 = vmatprep.subr.mxu0 0.0
        %988 = vmatpush1.msra.mxu0 0.0
        %989 = vmatprep.subr.mxu0 0.0
        %990 = vmatpush1.msra.mxu0 0.0
        %991 = vmatprep.subr.mxu0 0.0
        %992 = vmatpush1.msra.mxu0 0.0
        %993 = vmatprep.subr.mxu0 0.0
        %994 = vmatpush1.msra.mxu0 0.0
        %995 = vmatprep.subr.mxu0 0.0
        %996 = vmatpush1.msra.mxu0 0.0
        %997 = vmatprep.subr.mxu0 0.0
        %998 = vmatpush1.msra.mxu0 0.0
        %999 = vmatprep.subr.mxu0 0.0
        %1000 = vmatpush1.msra.mxu0 0.0
        %1001 = vmatprep.subr.mxu0 0.0
        %1002 = vmatpush1.msra.mxu0 0.0
        %1003 = vmatprep.subr.mxu0 0.0
        %1004 = vmatpush1.msra.mxu0 0.0
        %1005 = vmatprep.subr.mxu0 0.0
        %1006 = vmatpush1.msra.mxu0 0.0
        %1007 = vmatprep.subr.mxu0 0.0
        %1008 = vmatpush1.msra.mxu0 0.0
        %1009 = vmatprep.subr.mxu0 0.0
        %1010 = vmatpush1.msra.mxu0 0.0
        %1011 = vmatprep.subr.mxu0 0.0
        %1012 = vmatpush1.msra.mxu0 0.0
        %1013 = vmatprep.subr.mxu0 0.0
        %1014 = vmatpush1.msra.mxu0 0.0
        %1015 = vmatprep.subr.mxu0 0.0
        %1016 = vmatpush1.msra.mxu0 0.0
        %1017 = vmatprep.subr.mxu0 0.0
        %1018 = vmatpush1.msra.mxu0 0.0
        %1019 = vmatprep.subr.mxu0 0.0
        %1020 = vmatpush1.msra.mxu0 0.0
        %1021 = vmatprep.subr.mxu0 0.0
        %1022 = vmatpush1.msra.mxu0 0.0
        %1023 = vmatprep.subr.mxu0 0.0
        %1024 = vmatpush1.msra.mxu0 0.0
        %1025 = vmatprep.subr.mxu0 0.0
        %1026 = vmatpush1.msra.mxu0 0.0
        %1027 = vmatprep.subr.mxu0 0.0
        %1028 = vmatpush1.msra.mxu0 0.0
        %1029 = vmatprep.subr.mxu0 0.0
        %1030 = vmatpush1.msra.mxu0 0.0
        %1031 = vmatprep.subr.mxu0 0.0
        %1032 = vmatpush1.msra.mxu0 0.0
        %1033 = vmatprep.subr.mxu0 0.0
        %1034 = vmatpush1.msra.mxu0 0.0
        %1035 = vmatprep.subr.mxu0 0.0
        %1036 = vmatpush1.msra.mxu0 0.0
        %1037 = vmatprep.subr.mxu0 0.0
        %1038 = vmatpush1.msra.mxu0 0.0
        %1039 = vmatprep.subr.mxu0 0.0
        %1040 = vmatpush1.msra.mxu0 0.0
        %1041 = vmatprep.mubr.f32.mxu0 0.0
        %1042 = vmatmul.mubr.f32.gmra.mrb[0].mxu0 %v966
        %v1043 = vpop.f32.mrb[0].mxu0
        %v1044 = vadd.f32 0.0, %v1043
        %v1045 = vpop.f32.mrb[0].mxu0
        %1046 = vmatprep.mubr.f32.mxu0 0.0
        %1047 = vmatmul.mubr.f32.gmra.mrb[0].mxu0 %v969
        %v1048 = vpop.f32.mrb[0].mxu0
        %v1049 = vadd.f32 0.0, %v1048
        %v1050 = vpop.f32.mrb[0].mxu0
        %1051 = vmatprep.mubr.f32.mxu0 0.0
        %1052 = vmatmul.mubr.f32.gmra.mrb[0].mxu0 %v972
        %v1053 = vpop.f32.mrb[0].mxu0
        %v1054 = vadd.f32 0.0, %v1053
        %v1055 = vpop.f32.mrb[0].mxu0
        %1056 = vmatprep.mubr.f32.mxu0 0.0
        %1057 = vmatmul.mubr.f32.gmra.mrb[0].mxu0 %v975
        %v1058 = vpop.f32.mrb[0].mxu0
        %v1059 = vadd.f32 0.0, %v1058
        %v1060 = vpop.f32.mrb[0].mxu0
        %1061 = vdwg.mxu0
        %1063 = vrot.lane.b32.xlu0 %v1044, 96
        %v1064 = vpop.permute.xlu0 %1063
        %vm1065 = vcmask 64512
        %v1066 = vsel %vm1065, %v1044, 0
        %v1068 = vsel %vm1065, %v1064, 0
        %1070 = vmatprep.subr.mxu0 0.0
        %1071 = vmatpush1.xpose.msra.mxu0 %v1068
        %1072 = vmatprep.subr.mxu0 0.0
        %1073 = vmatpush1.xpose.msra.mxu0 0.0
        %1074 = vmatprep.subr.mxu0 0.0
        %1075 = vmatpush1.xpose.msra.mxu0 0.0
        %1076 = vmatprep.subr.mxu0 0.0
        %1077 = vmatpush1.xpose.msra.mxu0 0.0
        %1078 = vmatprep.subr.mxu0 0.0
        %1079 = vmatpush1.xpose.msra.mxu0 0.0
        %1080 = vmatprep.subr.mxu0 0.0
        %1081 = vmatpush1.xpose.msra.mxu0 0.0
        %1082 = vmatprep.subr.mxu0 0.0
        %1083 = vmatpush1.xpose.msra.mxu0 0.0
        %1084 = vmatprep.subr.mxu0 0.0
        %1085 = vmatpush1.xpose.msra.mxu0 0.0
        %1086 = vmatprep.subr.mxu0 0.0
        %1087 = vmatpush1.xpose.msra.mxu0 0.0
        %1088 = vmatprep.subr.mxu0 0.0
        %1089 = vmatpush1.xpose.msra.mxu0 0.0
        %1090 = vmatprep.subr.mxu0 0.0
        %1091 = vmatpush1.xpose.msra.mxu0 0.0
        %1092 = vmatprep.subr.mxu0 0.0
        %1093 = vmatpush1.xpose.msra.mxu0 0.0
        %1094 = vmatprep.subr.mxu0 0.0
        %1095 = vmatpush1.xpose.msra.mxu0 0.0
        %1096 = vmatprep.subr.mxu0 0.0
        %1097 = vmatpush1.xpose.msra.mxu0 0.0
        %1098 = vmatprep.subr.mxu0 0.0
        %1099 = vmatpush1.xpose.msra.mxu0 0.0
        %1100 = vmatprep.subr.mxu0 0.0
        %1101 = vmatpush1.xpose.msra.mxu0 0.0
        %1102 = vmatprep.subr.mxu0 0.0
        %1103 = vmatpush1.xpose.msra.mxu0 0.0
        %1104 = vmatprep.subr.mxu0 0.0
        %1105 = vmatpush1.xpose.msra.mxu0 0.0
        %1106 = vmatprep.subr.mxu0 0.0
        %1107 = vmatpush1.xpose.msra.mxu0 0.0
        %1108 = vmatprep.subr.mxu0 0.0
        %1109 = vmatpush1.xpose.msra.mxu0 0.0
        %1110 = vmatprep.subr.mxu0 0.0
        %1111 = vmatpush1.xpose.msra.mxu0 0.0
        %1112 = vmatprep.subr.mxu0 0.0
        %1113 = vmatpush1.xpose.msra.mxu0 0.0
        %1114 = vmatprep.subr.mxu0 0.0
        %1115 = vmatpush1.xpose.msra.mxu0 0.0
        %1116 = vmatprep.subr.mxu0 0.0
        %1117 = vmatpush1.xpose.msra.mxu0 0.0
        %1118 = vmatprep.subr.mxu0 0.0
        %1119 = vmatpush1.xpose.msra.mxu0 0.0
        %1120 = vmatprep.subr.mxu0 0.0
        %1121 = vmatpush1.xpose.msra.mxu0 0.0
        %1122 = vmatprep.subr.mxu0 0.0
        %1123 = vmatpush1.xpose.msra.mxu0 0.0
        %1124 = vmatprep.subr.mxu0 0.0
        %1125 = vmatpush1.xpose.msra.mxu0 0.0
        %1126 = vmatprep.subr.mxu0 0.0
        %1127 = vmatpush1.xpose.msra.mxu0 0.0
        %1128 = vmatprep.subr.mxu0 0.0
        %1129 = vmatpush1.xpose.msra.mxu0 0.0
        %1130 = vmatprep.subr.mxu0 0.0
        %1131 = vmatpush1.xpose.msra.mxu0 0.0
        %1132 = vmatprep.subr.mxu0 0.0
        %1133 = vmatpush1.xpose.msra.mxu0 0.0
        %1134 = vmatprep.mubr.f32.mxu0 0.0
        %1135 = vmatmul.mubr.f32.gmra.mrb[0].mxu0 %v1066
        %v1136 = vpop.f32.mrb[0].mxu0
        %v1137 = vadd.f32 0.0, %v1136
        %v1138 = vpop.f32.mrb[0].mxu0
        %1139 = vdwg.mxu0
        %1141 = vrot.lane.b32.xlu0 %v1049, 96
        %v1142 = vpop.permute.xlu0 %1141
        %v1143 = vsel %vm1065, %v1049, 0
        %v1145 = vsel %vm1065, %v1142, 0
        %1147 = vmatprep.subr.mxu0 0.0
        %1148 = vmatpush1.xpose.msra.mxu0 %v1145
        %1149 = vmatprep.subr.mxu0 0.0
        %1150 = vmatpush1.xpose.msra.mxu0 0.0
        %1151 = vmatprep.subr.mxu0 0.0
        %1152 = vmatpush1.xpose.msra.mxu0 0.0
        %1153 = vmatprep.subr.mxu0 0.0
        %1154 = vmatpush1.xpose.msra.mxu0 0.0
        %1155 = vmatprep.subr.mxu0 0.0
        %1156 = vmatpush1.xpose.msra.mxu0 0.0
        %1157 = vmatprep.subr.mxu0 0.0
        %1158 = vmatpush1.xpose.msra.mxu0 0.0
        %1159 = vmatprep.subr.mxu0 0.0
        %1160 = vmatpush1.xpose.msra.mxu0 0.0
        %1161 = vmatprep.subr.mxu0 0.0
        %1162 = vmatpush1.xpose.msra.mxu0 0.0
        %1163 = vmatprep.subr.mxu0 0.0
        %1164 = vmatpush1.xpose.msra.mxu0 0.0
        %1165 = vmatprep.subr.mxu0 0.0
        %1166 = vmatpush1.xpose.msra.mxu0 0.0
        %1167 = vmatprep.subr.mxu0 0.0
        %1168 = vmatpush1.xpose.msra.mxu0 0.0
        %1169 = vmatprep.subr.mxu0 0.0
        %1170 = vmatpush1.xpose.msra.mxu0 0.0
        %1171 = vmatprep.subr.mxu0 0.0
        %1172 = vmatpush1.xpose.msra.mxu0 0.0
        %1173 = vmatprep.subr.mxu0 0.0
        %1174 = vmatpush1.xpose.msra.mxu0 0.0
        %1175 = vmatprep.subr.mxu0 0.0
        %1176 = vmatpush1.xpose.msra.mxu0 0.0
        %1177 = vmatprep.subr.mxu0 0.0
        %1178 = vmatpush1.xpose.msra.mxu0 0.0
        %1179 = vmatprep.subr.mxu0 0.0
        %1180 = vmatpush1.xpose.msra.mxu0 0.0
        %1181 = vmatprep.subr.mxu0 0.0
        %1182 = vmatpush1.xpose.msra.mxu0 0.0
        %1183 = vmatprep.subr.mxu0 0.0
        %1184 = vmatpush1.xpose.msra.mxu0 0.0
        %1185 = vmatprep.subr.mxu0 0.0
        %1186 = vmatpush1.xpose.msra.mxu0 0.0
        %1187 = vmatprep.subr.mxu0 0.0
        %1188 = vmatpush1.xpose.msra.mxu0 0.0
        %1189 = vmatprep.subr.mxu0 0.0
        %1190 = vmatpush1.xpose.msra.mxu0 0.0
        %1191 = vmatprep.subr.mxu0 0.0
        %1192 = vmatpush1.xpose.msra.mxu0 0.0
        %1193 = vmatprep.subr.mxu0 0.0
        %1194 = vmatpush1.xpose.msra.mxu0 0.0
        %1195 = vmatprep.subr.mxu0 0.0
        %1196 = vmatpush1.xpose.msra.mxu0 0.0
        %1197 = vmatprep.subr.mxu0 0.0
        %1198 = vmatpush1.xpose.msra.mxu0 0.0
        %1199 = vmatprep.subr.mxu0 0.0
        %1200 = vmatpush1.xpose.msra.mxu0 0.0
        %1201 = vmatprep.subr.mxu0 0.0
        %1202 = vmatpush1.xpose.msra.mxu0 0.0
        %1203 = vmatprep.subr.mxu0 0.0
        %1204 = vmatpush1.xpose.msra.mxu0 0.0
        %1205 = vmatprep.subr.mxu0 0.0
        %1206 = vmatpush1.xpose.msra.mxu0 0.0
        %1207 = vmatprep.subr.mxu0 0.0
        %1208 = vmatpush1.xpose.msra.mxu0 0.0
        %1209 = vmatprep.subr.mxu0 0.0
        %1210 = vmatpush1.xpose.msra.mxu0 0.0
        %1211 = vmatprep.mubr.f32.mxu0 0.0
        %1212 = vmatmul.mubr.f32.gmra.mrb[0].mxu0 %v1143
        %v1213 = vpop.f32.mrb[0].mxu0
        %v1214 = vadd.f32 0.0, %v1213
        %v1215 = vpop.f32.mrb[0].mxu0
        %1216 = vdwg.mxu0
        %1218 = vrot.lane.b32.xlu0 %v1054, 96
        %v1219 = vpop.permute.xlu0 %1218
        %v1220 = vsel %vm1065, %v1054, 0
        %v1222 = vsel %vm1065, %v1219, 0
        %1224 = vmatprep.subr.mxu0 0.0
        %1225 = vmatpush1.xpose.msra.mxu0 %v1222
        %1226 = vmatprep.subr.mxu0 0.0
        %1227 = vmatpush1.xpose.msra.mxu0 0.0
        %1228 = vmatprep.subr.mxu0 0.0
        %1229 = vmatpush1.xpose.msra.mxu0 0.0
        %1230 = vmatprep.subr.mxu0 0.0
        %1231 = vmatpush1.xpose.msra.mxu0 0.0
        %1232 = vmatprep.subr.mxu0 0.0
        %1233 = vmatpush1.xpose.msra.mxu0 0.0
        %1234 = vmatprep.subr.mxu0 0.0
        %1235 = vmatpush1.xpose.msra.mxu0 0.0
        %1236 = vmatprep.subr.mxu0 0.0
        %1237 = vmatpush1.xpose.msra.mxu0 0.0
        %1238 = vmatprep.subr.mxu0 0.0
        %1239 = vmatpush1.xpose.msra.mxu0 0.0
        %1240 = vmatprep.subr.mxu0 0.0
        %1241 = vmatpush1.xpose.msra.mxu0 0.0
        %1242 = vmatprep.subr.mxu0 0.0
        %1243 = vmatpush1.xpose.msra.mxu0 0.0
        %1244 = vmatprep.subr.mxu0 0.0
        %1245 = vmatpush1.xpose.msra.mxu0 0.0
        %1246 = vmatprep.subr.mxu0 0.0
        %1247 = vmatpush1.xpose.msra.mxu0 0.0
        %1248 = vmatprep.subr.mxu0 0.0
        %1249 = vmatpush1.xpose.msra.mxu0 0.0
        %1250 = vmatprep.subr.mxu0 0.0
        %1251 = vmatpush1.xpose.msra.mxu0 0.0
        %1252 = vmatprep.subr.mxu0 0.0
        %1253 = vmatpush1.xpose.msra.mxu0 0.0
        %1254 = vmatprep.subr.mxu0 0.0
        %1255 = vmatpush1.xpose.msra.mxu0 0.0
        %1256 = vmatprep.subr.mxu0 0.0
        %1257 = vmatpush1.xpose.msra.mxu0 0.0
        %1258 = vmatprep.subr.mxu0 0.0
        %1259 = vmatpush1.xpose.msra.mxu0 0.0
        %1260 = vmatprep.subr.mxu0 0.0
        %1261 = vmatpush1.xpose.msra.mxu0 0.0
        %1262 = vmatprep.subr.mxu0 0.0
        %1263 = vmatpush1.xpose.msra.mxu0 0.0
        %1264 = vmatprep.subr.mxu0 0.0
        %1265 = vmatpush1.xpose.msra.mxu0 0.0
        %1266 = vmatprep.subr.mxu0 0.0
        %1267 = vmatpush1.xpose.msra.mxu0 0.0
        %1268 = vmatprep.subr.mxu0 0.0
        %1269 = vmatpush1.xpose.msra.mxu0 0.0
        %1270 = vmatprep.subr.mxu0 0.0
        %1271 = vmatpush1.xpose.msra.mxu0 0.0
        %1272 = vmatprep.subr.mxu0 0.0
        %1273 = vmatpush1.xpose.msra.mxu0 0.0
        %1274 = vmatprep.subr.mxu0 0.0
        %1275 = vmatpush1.xpose.msra.mxu0 0.0
        %1276 = vmatprep.subr.mxu0 0.0
        %1277 = vmatpush1.xpose.msra.mxu0 0.0
        %1278 = vmatprep.subr.mxu0 0.0
        %1279 = vmatpush1.xpose.msra.mxu0 0.0
        %1280 = vmatprep.subr.mxu0 0.0
        %1281 = vmatpush1.xpose.msra.mxu0 0.0
        %1282 = vmatprep.subr.mxu0 0.0
        %1283 = vmatpush1.xpose.msra.mxu0 0.0
        %1284 = vmatprep.subr.mxu0 0.0
        %1285 = vmatpush1.xpose.msra.mxu0 0.0
        %1286 = vmatprep.subr.mxu0 0.0
        %1287 = vmatpush1.xpose.msra.mxu0 0.0
        %1288 = vmatprep.mubr.f32.mxu0 0.0
        %1289 = vmatmul.mubr.f32.gmra.mrb[0].mxu0 %v1220
        %v1290 = vpop.f32.mrb[0].mxu0
        %v1291 = vadd.f32 0.0, %v1290
        %v1292 = vpop.f32.mrb[0].mxu0
        %1293 = vdwg.mxu0
        %1295 = vrot.lane.b32.xlu0 %v1059, 96
        %v1296 = vpop.permute.xlu0 %1295
        %v1297 = vsel %vm1065, %v1059, 0
        %v1299 = vsel %vm1065, %v1296, 0
        %1301 = vmatprep.subr.mxu0 0.0
        %1302 = vmatpush1.xpose.msra.mxu0 %v1299
        %1303 = vmatprep.subr.mxu0 0.0
        %1304 = vmatpush1.xpose.msra.mxu0 0.0
        %1305 = vmatprep.subr.mxu0 0.0
        %1306 = vmatpush1.xpose.msra.mxu0 0.0
        %1307 = vmatprep.subr.mxu0 0.0
        %1308 = vmatpush1.xpose.msra.mxu0 0.0
        %1309 = vmatprep.subr.mxu0 0.0
        %1310 = vmatpush1.xpose.msra.mxu0 0.0
        %1311 = vmatprep.subr.mxu0 0.0
        %1312 = vmatpush1.xpose.msra.mxu0 0.0
        %1313 = vmatprep.subr.mxu0 0.0
        %1314 = vmatpush1.xpose.msra.mxu0 0.0
        %1315 = vmatprep.subr.mxu0 0.0
        %1316 = vmatpush1.xpose.msra.mxu0 0.0
        %1317 = vmatprep.subr.mxu0 0.0
        %1318 = vmatpush1.xpose.msra.mxu0 0.0
        %1319 = vmatprep.subr.mxu0 0.0
        %1320 = vmatpush1.xpose.msra.mxu0 0.0
        %1321 = vmatprep.subr.mxu0 0.0
        %1322 = vmatpush1.xpose.msra.mxu0 0.0
        %1323 = vmatprep.subr.mxu0 0.0
        %1324 = vmatpush1.xpose.msra.mxu0 0.0
        %1325 = vmatprep.subr.mxu0 0.0
        %1326 = vmatpush1.xpose.msra.mxu0 0.0
        %1327 = vmatprep.subr.mxu0 0.0
        %1328 = vmatpush1.xpose.msra.mxu0 0.0
        %1329 = vmatprep.subr.mxu0 0.0
        %1330 = vmatpush1.xpose.msra.mxu0 0.0
        %1331 = vmatprep.subr.mxu0 0.0
        %1332 = vmatpush1.xpose.msra.mxu0 0.0
        %1333 = vmatprep.subr.mxu0 0.0
        %1334 = vmatpush1.xpose.msra.mxu0 0.0
        %1335 = vmatprep.subr.mxu0 0.0
        %1336 = vmatpush1.xpose.msra.mxu0 0.0
        %1337 = vmatprep.subr.mxu0 0.0
        %1338 = vmatpush1.xpose.msra.mxu0 0.0
        %1339 = vmatprep.subr.mxu0 0.0
        %1340 = vmatpush1.xpose.msra.mxu0 0.0
        %1341 = vmatprep.subr.mxu0 0.0
        %1342 = vmatpush1.xpose.msra.mxu0 0.0
        %1343 = vmatprep.subr.mxu0 0.0
        %1344 = vmatpush1.xpose.msra.mxu0 0.0
        %1345 = vmatprep.subr.mxu0 0.0
        %1346 = vmatpush1.xpose.msra.mxu0 0.0
        %1347 = vmatprep.subr.mxu0 0.0
        %1348 = vmatpush1.xpose.msra.mxu0 0.0
        %1349 = vmatprep.subr.mxu0 0.0
        %1350 = vmatpush1.xpose.msra.mxu0 0.0
        %1351 = vmatprep.subr.mxu0 0.0
        %1352 = vmatpush1.xpose.msra.mxu0 0.0
        %1353 = vmatprep.subr.mxu0 0.0
        %1354 = vmatpush1.xpose.msra.mxu0 0.0
        %1355 = vmatprep.subr.mxu0 0.0
        %1356 = vmatpush1.xpose.msra.mxu0 0.0
        %1357 = vmatprep.subr.mxu0 0.0
        %1358 = vmatpush1.xpose.msra.mxu0 0.0
        %1359 = vmatprep.subr.mxu0 0.0
        %1360 = vmatpush1.xpose.msra.mxu0 0.0
        %1361 = vmatprep.subr.mxu0 0.0
        %1362 = vmatpush1.xpose.msra.mxu0 0.0
        %1363 = vmatprep.subr.mxu0 0.0
        %1364 = vmatpush1.xpose.msra.mxu0 0.0
        %1365 = vmatprep.mubr.f32.mxu0 0.0
        %1366 = vmatmul.mubr.f32.gmra.mrb[0].mxu0 %v1297
        %v1367 = vpop.f32.mrb[0].mxu0
        %v1368 = vadd.f32 0.0, %v1367
        %v1369 = vpop.f32.mrb[0].mxu0
        %1370 = vdwg.mxu0
        %v1371 = vmul.f32 %v1137, 0.35355338
        %v1372 = vmul.f32 %v1214, 0.35355338
        %v1373 = vmul.f32 %v1291, 0.35355338
        %v1374 = vmul.f32 %v1368, 0.35355338
        %v1375 = vsel %vm1065, %v1371, -inf
        %1376 = vmax.xlane.f32.xlu0 %v1375
        %v1377 = vpop.xlane.xlu0 %1376
        %v1378 = vsel %vm1065, %v1372, -inf
        %1379 = vmax.xlane.f32.xlu0 %v1378
        %v1380 = vpop.xlane.xlu0 %1379
        %v1381 = vsel %vm1065, %v1373, -inf
        %1382 = vmax.xlane.f32.xlu0 %v1381
        %v1383 = vpop.xlane.xlu0 %1382
        %v1384 = vsel %vm1065, %v1374, -inf
        %1385 = vmax.xlane.f32.xlu0 %v1384
        %v1386 = vpop.xlane.xlu0 %1385
        %v1387 = vsub.f32 %v1371, %v1377
        %v1388 = vsub.f32 %v1372, %v1380
        %v1389 = vsub.f32 %v1373, %v1383
        %v1390 = vsub.f32 %v1374, %v1386
        %v1391 = vmul.f32 %v1387, 1.442695
        %v1392 = vpow.pop %v1391
        %v1393 = vmul.f32 %v1388, 1.442695
        %v1394 = vpow.pop %v1393
        %v1395 = vmul.f32 %v1389, 1.442695
        %v1396 = vpow.pop %v1395
        %v1397 = vmul.f32 %v1390, 1.442695
        %v1398 = vpow.pop %v1397
        %v1399 = vsel %vm1065, %v1392, 0.0
        %1400 = vadd.xlane.f32.xlu0 %v1399
        %v1401 = vpop.xlane.xlu0 %1400
        %v1402 = vsel %vm1065, %v1394, 0.0
        %1403 = vadd.xlane.f32.xlu0 %v1402
        %v1404 = vpop.xlane.xlu0 %1403
        %v1405 = vsel %vm1065, %v1396, 0.0
        %1406 = vadd.xlane.f32.xlu0 %v1405
        %v1407 = vpop.xlane.xlu0 %1406
        %v1408 = vsel %vm1065, %v1398, 0.0
        %1409 = vadd.xlane.f32.xlu0 %v1408
        %v1410 = vpop.xlane.xlu0 %1409
        %v1411 = vrcp.pop %v1401
        %v1412 = vrcp.pop %v1404
        %v1413 = vrcp.pop %v1407
        %v1414 = vrcp.pop %v1410
        %v1415 = vmul.f32 %v1392, %v1411
        %v1416 = vmul.f32 %v1394, %v1412
        %v1417 = vmul.f32 %v1396, %v1413
        %v1418 = vmul.f32 %v1398, %v1414
        %1419 = vrot.lane.b32.xlu0 %v1044, 64
        %v1420 = vpop.permute.xlu0 %1419
        %v1423 = vsel %vm1065, %v1415, 0
        %1425 = vmatprep.subr.mxu0 0.0
        %1426 = vmatpush1.msra.mxu0 %v1420
        %1427 = vmatprep.subr.mxu0 0.0
        %1428 = vmatpush1.msra.mxu0 0.0
        %1429 = vmatprep.subr.mxu0 0.0
        %1430 = vmatpush1.msra.mxu0 0.0
        %1431 = vmatprep.subr.mxu0 0.0
        %1432 = vmatpush1.msra.mxu0 0.0
        %1433 = vmatprep.subr.mxu0 0.0
        %1434 = vmatpush1.msra.mxu0 0.0
        %1435 = vmatprep.subr.mxu0 0.0
        %1436 = vmatpush1.msra.mxu0 0.0
        %1437 = vmatprep.subr.mxu0 0.0
        %1438 = vmatpush1.msra.mxu0 0.0
        %1439 = vmatprep.subr.mxu0 0.0
        %1440 = vmatpush1.msra.mxu0 0.0
        %1441 = vmatprep.subr.mxu0 0.0
        %1442 = vmatpush1.msra.mxu0 0.0
        %1443 = vmatprep.subr.mxu0 0.0
        %1444 = vmatpush1.msra.mxu0 0.0
        %1445 = vmatprep.subr.mxu0 0.0
        %1446 = vmatpush1.msra.mxu0 0.0
        %1447 = vmatprep.subr.mxu0 0.0
        %1448 = vmatpush1.msra.mxu0 0.0
        %1449 = vmatprep.subr.mxu0 0.0
        %1450 = vmatpush1.msra.mxu0 0.0
        %1451 = vmatprep.subr.mxu0 0.0
        %1452 = vmatpush1.msra.mxu0 0.0
        %1453 = vmatprep.subr.mxu0 0.0
        %1454 = vmatpush1.msra.mxu0 0.0
        %1455 = vmatprep.subr.mxu0 0.0
        %1456 = vmatpush1.msra.mxu0 0.0
        %1457 = vmatprep.subr.mxu0 0.0
        %1458 = vmatpush1.msra.mxu0 0.0
        %1459 = vmatprep.subr.mxu0 0.0
        %1460 = vmatpush1.msra.mxu0 0.0
        %1461 = vmatprep.subr.mxu0 0.0
        %1462 = vmatpush1.msra.mxu0 0.0
        %1463 = vmatprep.subr.mxu0 0.0
        %1464 = vmatpush1.msra.mxu0 0.0
        %1465 = vmatprep.subr.mxu0 0.0
        %1466 = vmatpush1.msra.mxu0 0.0
        %1467 = vmatprep.subr.mxu0 0.0
        %1468 = vmatpush1.msra.mxu0 0.0
        %1469 = vmatprep.subr.mxu0 0.0
        %1470 = vmatpush1.msra.mxu0 0.0
        %1471 = vmatprep.subr.mxu0 0.0
        %1472 = vmatpush1.msra.mxu0 0.0
        %1473 = vmatprep.subr.mxu0 0.0
        %1474 = vmatpush1.msra.mxu0 0.0
        %1475 = vmatprep.subr.mxu0 0.0
        %1476 = vmatpush1.msra.mxu0 0.0
        %1477 = vmatprep.subr.mxu0 0.0
        %1478 = vmatpush1.msra.mxu0 0.0
        %1479 = vmatprep.subr.mxu0 0.0
        %1480 = vmatpush1.msra.mxu0 0.0
        %1481 = vmatprep.subr.mxu0 0.0
        %1482 = vmatpush1.msra.mxu0 0.0
        %1483 = vmatprep.subr.mxu0 0.0
        %1484 = vmatpush1.msra.mxu0 0.0
        %1485 = vmatprep.subr.mxu0 0.0
        %1486 = vmatpush1.msra.mxu0 0.0
        %1487 = vmatprep.subr.mxu0 0.0
        %1488 = vmatpush1.msra.mxu0 0.0
        %1489 = vmatprep.mubr.f32.mxu0 0.0
        %1490 = vmatmul.mubr.f32.gmra.mrb[0].mxu0 %v1423
        %v1491 = vpop.f32.mrb[0].mxu0
        %v1492 = vadd.f32 0.0, %v1491
        %v1493 = vpop.f32.mrb[0].mxu0
        %1494 = vdwg.mxu0
        %1495 = vrot.lane.b32.xlu0 %v1049, 64
        %v1496 = vpop.permute.xlu0 %1495
        %v1499 = vsel %vm1065, %v1416, 0
        %1501 = vmatprep.subr.mxu0 0.0
        %1502 = vmatpush1.msra.mxu0 %v1496
        %1503 = vmatprep.subr.mxu0 0.0
        %1504 = vmatpush1.msra.mxu0 0.0
        %1505 = vmatprep.subr.mxu0 0.0
        %1506 = vmatpush1.msra.mxu0 0.0
        %1507 = vmatprep.subr.mxu0 0.0
        %1508 = vmatpush1.msra.mxu0 0.0
        %1509 = vmatprep.subr.mxu0 0.0
        %1510 = vmatpush1.msra.mxu0 0.0
        %1511 = vmatprep.subr.mxu0 0.0
        %1512 = vmatpush1.msra.mxu0 0.0
        %1513 = vmatprep.subr.mxu0 0.0
        %1514 = vmatpush1.msra.mxu0 0.0
        %1515 = vmatprep.subr.mxu0 0.0
        %1516 = vmatpush1.msra.mxu0 0.0
        %1517 = vmatprep.subr.mxu0 0.0
        %1518 = vmatpush1.msra.mxu0 0.0
        %1519 = vmatprep.subr.mxu0 0.0
        %1520 = vmatpush1.msra.mxu0 0.0
        %1521 = vmatprep.subr.mxu0 0.0
        %1522 = vmatpush1.msra.mxu0 0.0
        %1523 = vmatprep.subr.mxu0 0.0
        %1524 = vmatpush1.msra.mxu0 0.0
        %1525 = vmatprep.subr.mxu0 0.0
        %1526 = vmatpush1.msra.mxu0 0.0
        %1527 = vmatprep.subr.mxu0 0.0
        %1528 = vmatpush1.msra.mxu0 0.0
        %1529 = vmatprep.subr.mxu0 0.0
        %1530 = vmatpush1.msra.mxu0 0.0
        %1531 = vmatprep.subr.mxu0 0.0
        %1532 = vmatpush1.msra.mxu0 0.0
        %1533 = vmatprep.subr.mxu0 0.0
        %1534 = vmatpush1.msra.mxu0 0.0
        %1535 = vmatprep.subr.mxu0 0.0
        %1536 = vmatpush1.msra.mxu0 0.0
        %1537 = vmatprep.subr.mxu0 0.0
        %1538 = vmatpush1.msra.mxu0 0.0
        %1539 = vmatprep.subr.mxu0 0.0
        %1540 = vmatpush1.msra.mxu0 0.0
        %1541 = vmatprep.subr.mxu0 0.0
        %1542 = vmatpush1.msra.mxu0 0.0
        %1543 = vmatprep.subr.mxu0 0.0
        %1544 = vmatpush1.msra.mxu0 0.0
        %1545 = vmatprep.subr.mxu0 0.0
        %1546 = vmatpush1.msra.mxu0 0.0
        %1547 = vmatprep.subr.mxu0 0.0
        %1548 = vmatpush1.msra.mxu0 0.0
        %1549 = vmatprep.subr.mxu0 0.0
        %1550 = vmatpush1.msra.mxu0 0.0
        %1551 = vmatprep.subr.mxu0 0.0
        %1552 = vmatpush1.msra.mxu0 0.0
        %1553 = vmatprep.subr.mxu0 0.0
        %1554 = vmatpush1.msra.mxu0 0.0
        %1555 = vmatprep.subr.mxu0 0.0
        %1556 = vmatpush1.msra.mxu0 0.0
        %1557 = vmatprep.subr.mxu0 0.0
        %1558 = vmatpush1.msra.mxu0 0.0
        %1559 = vmatprep.subr.mxu0 0.0
        %1560 = vmatpush1.msra.mxu0 0.0
        %1561 = vmatprep.subr.mxu0 0.0
        %1562 = vmatpush1.msra.mxu0 0.0
        %1563 = vmatprep.subr.mxu0 0.0
        %1564 = vmatpush1.msra.mxu0 0.0
        %1565 = vmatprep.mubr.f32.mxu0 0.0
        %1566 = vmatmul.mubr.f32.gmra.mrb[0].mxu0 %v1499
        %v1567 = vpop.f32.mrb[0].mxu0
        %v1568 = vadd.f32 0.0, %v1567
        %v1569 = vpop.f32.mrb[0].mxu0
        %1570 = vdwg.mxu0
        %1571 = vrot.lane.b32.xlu0 %v1054, 64
        %v1572 = vpop.permute.xlu0 %1571
        %v1575 = vsel %vm1065, %v1417, 0
        %1577 = vmatprep.subr.mxu0 0.0
        %1578 = vmatpush1.msra.mxu0 %v1572
        %1579 = vmatprep.subr.mxu0 0.0
        %1580 = vmatpush1.msra.mxu0 0.0
        %1581 = vmatprep.subr.mxu0 0.0
        %1582 = vmatpush1.msra.mxu0 0.0
        %1583 = vmatprep.subr.mxu0 0.0
        %1584 = vmatpush1.msra.mxu0 0.0
        %1585 = vmatprep.subr.mxu0 0.0
        %1586 = vmatpush1.msra.mxu0 0.0
        %1587 = vmatprep.subr.mxu0 0.0
        %1588 = vmatpush1.msra.mxu0 0.0
        %1589 = vmatprep.subr.mxu0 0.0
        %1590 = vmatpush1.msra.mxu0 0.0
        %1591 = vmatprep.subr.mxu0 0.0
        %1592 = vmatpush1.msra.mxu0 0.0
        %1593 = vmatprep.subr.mxu0 0.0
        %1594 = vmatpush1.msra.mxu0 0.0
        %1595 = vmatprep.subr.mxu0 0.0
        %1596 = vmatpush1.msra.mxu0 0.0
        %1597 = vmatprep.subr.mxu0 0.0
        %1598 = vmatpush1.msra.mxu0 0.0
        %1599 = vmatprep.subr.mxu0 0.0
        %1600 = vmatpush1.msra.mxu0 0.0
        %1601 = vmatprep.subr.mxu0 0.0
        %1602 = vmatpush1.msra.mxu0 0.0
        %1603 = vmatprep.subr.mxu0 0.0
        %1604 = vmatpush1.msra.mxu0 0.0
        %1605 = vmatprep.subr.mxu0 0.0
        %1606 = vmatpush1.msra.mxu0 0.0
        %1607 = vmatprep.subr.mxu0 0.0
        %1608 = vmatpush1.msra.mxu0 0.0
        %1609 = vmatprep.subr.mxu0 0.0
        %1610 = vmatpush1.msra.mxu0 0.0
        %1611 = vmatprep.subr.mxu0 0.0
        %1612 = vmatpush1.msra.mxu0 0.0
        %1613 = vmatprep.subr.mxu0 0.0
        %1614 = vmatpush1.msra.mxu0 0.0
        %1615 = vmatprep.subr.mxu0 0.0
        %1616 = vmatpush1.msra.mxu0 0.0
        %1617 = vmatprep.subr.mxu0 0.0
        %1618 = vmatpush1.msra.mxu0 0.0
        %1619 = vmatprep.subr.mxu0 0.0
        %1620 = vmatpush1.msra.mxu0 0.0
        %1621 = vmatprep.subr.mxu0 0.0
        %1622 = vmatpush1.msra.mxu0 0.0
        %1623 = vmatprep.subr.mxu0 0.0
        %1624 = vmatpush1.msra.mxu0 0.0
        %1625 = vmatprep.subr.mxu0 0.0
        %1626 = vmatpush1.msra.mxu0 0.0
        %1627 = vmatprep.subr.mxu0 0.0
        %1628 = vmatpush1.msra.mxu0 0.0
        %1629 = vmatprep.subr.mxu0 0.0
        %1630 = vmatpush1.msra.mxu0 0.0
        %1631 = vmatprep.subr.mxu0 0.0
        %1632 = vmatpush1.msra.mxu0 0.0
        %1633 = vmatprep.subr.mxu0 0.0
        %1634 = vmatpush1.msra.mxu0 0.0
        %1635 = vmatprep.subr.mxu0 0.0
        %1636 = vmatpush1.msra.mxu0 0.0
        %1637 = vmatprep.subr.mxu0 0.0
        %1638 = vmatpush1.msra.mxu0 0.0
        %1639 = vmatprep.subr.mxu0 0.0
        %1640 = vmatpush1.msra.mxu0 0.0
        %1641 = vmatprep.mubr.f32.mxu0 0.0
        %1642 = vmatmul.mubr.f32.gmra.mrb[0].mxu0 %v1575
        %v1643 = vpop.f32.mrb[0].mxu0
        %v1644 = vadd.f32 0.0, %v1643
        %v1645 = vpop.f32.mrb[0].mxu0
        %1646 = vdwg.mxu0
        %1647 = vrot.lane.b32.xlu0 %v1059, 64
        %v1648 = vpop.permute.xlu0 %1647
        %v1651 = vsel %vm1065, %v1418, 0
        %1653 = vmatprep.subr.mxu0 0.0
        %1654 = vmatpush1.msra.mxu0 %v1648
        %1655 = vmatprep.subr.mxu0 0.0
        %1656 = vmatpush1.msra.mxu0 0.0
        %1657 = vmatprep.subr.mxu0 0.0
        %1658 = vmatpush1.msra.mxu0 0.0
        %1659 = vmatprep.subr.mxu0 0.0
        %1660 = vmatpush1.msra.mxu0 0.0
        %1661 = vmatprep.subr.mxu0 0.0
        %1662 = vmatpush1.msra.mxu0 0.0
        %1663 = vmatprep.subr.mxu0 0.0
        %1664 = vmatpush1.msra.mxu0 0.0
        %1665 = vmatprep.subr.mxu0 0.0
        %1666 = vmatpush1.msra.mxu0 0.0
        %1667 = vmatprep.subr.mxu0 0.0
        %1668 = vmatpush1.msra.mxu0 0.0
        %1669 = vmatprep.subr.mxu0 0.0
        %1670 = vmatpush1.msra.mxu0 0.0
        %1671 = vmatprep.subr.mxu0 0.0
        %1672 = vmatpush1.msra.mxu0 0.0
        %1673 = vmatprep.subr.mxu0 0.0
        %1674 = vmatpush1.msra.mxu0 0.0
        %1675 = vmatprep.subr.mxu0 0.0
        %1676 = vmatpush1.msra.mxu0 0.0
        %1677 = vmatprep.subr.mxu0 0.0
        %1678 = vmatpush1.msra.mxu0 0.0
        %1679 = vmatprep.subr.mxu0 0.0
        %1680 = vmatpush1.msra.mxu0 0.0
        %1681 = vmatprep.subr.mxu0 0.0
        %1682 = vmatpush1.msra.mxu0 0.0
        %1683 = vmatprep.subr.mxu0 0.0
        %1684 = vmatpush1.msra.mxu0 0.0
        %1685 = vmatprep.subr.mxu0 0.0
        %1686 = vmatpush1.msra.mxu0 0.0
        %1687 = vmatprep.subr.mxu0 0.0
        %1688 = vmatpush1.msra.mxu0 0.0
        %1689 = vmatprep.subr.mxu0 0.0
        %1690 = vmatpush1.msra.mxu0 0.0
        %1691 = vmatprep.subr.mxu0 0.0
        %1692 = vmatpush1.msra.mxu0 0.0
        %1693 = vmatprep.subr.mxu0 0.0
        %1694 = vmatpush1.msra.mxu0 0.0
        %1695 = vmatprep.subr.mxu0 0.0
        %1696 = vmatpush1.msra.mxu0 0.0
        %1697 = vmatprep.subr.mxu0 0.0
        %1698 = vmatpush1.msra.mxu0 0.0
        %1699 = vmatprep.subr.mxu0 0.0
        %1700 = vmatpush1.msra.mxu0 0.0
        %1701 = vmatprep.subr.mxu0 0.0
        %1702 = vmatpush1.msra.mxu0 0.0
        %1703 = vmatprep.subr.mxu0 0.0
        %1704 = vmatpush1.msra.mxu0 0.0
        %1705 = vmatprep.subr.mxu0 0.0
        %1706 = vmatpush1.msra.mxu0 0.0
        %1707 = vmatprep.subr.mxu0 0.0
        %1708 = vmatpush1.msra.mxu0 0.0
        %1709 = vmatprep.subr.mxu0 0.0
        %1710 = vmatpush1.msra.mxu0 0.0
        %1711 = vmatprep.subr.mxu0 0.0
        %1712 = vmatpush1.msra.mxu0 0.0
        %1713 = vmatprep.subr.mxu0 0.0
        %1714 = vmatpush1.msra.mxu0 0.0
        %1715 = vmatprep.subr.mxu0 0.0
        %1716 = vmatpush1.msra.mxu0 0.0
        %1717 = vmatprep.mubr.f32.mxu0 0.0
        %1718 = vmatmul.mubr.f32.gmra.mrb[0].mxu0 %v1651
        %v1719 = vpop.f32.mrb[0].mxu0
        %v1720 = vadd.f32 0.0, %v1719
        %v1721 = vpop.f32.mrb[0].mxu0
        %1722 = vdwg.mxu0
        %1723 = vrot.lane.b32.xlu0 %v1044, 120
        %v1724 = vpop.permute.xlu0 %1723
        %1725 = vrot.lane.b32.xlu0 %v1044, 88
        %v1726 = vpop.permute.xlu0 %1725
        %v1727 = vsel %vm1065, %v1724, 0
        %v1729 = vsel %vm1065, %v1726, 0
        %1731 = vmatprep.subr.mxu0 0.0
        %1732 = vmatpush1.xpose.msra.mxu0 %v1729
        %1733 = vmatprep.subr.mxu0 0.0
        %1734 = vmatpush1.xpose.msra.mxu0 0.0
        %1735 = vmatprep.subr.mxu0 0.0
        %1736 = vmatpush1.xpose.msra.mxu0 0.0
        %1737 = vmatprep.subr.mxu0 0.0
        %1738 = vmatpush1.xpose.msra.mxu0 0.0
        %1739 = vmatprep.subr.mxu0 0.0
        %1740 = vmatpush1.xpose.msra.mxu0 0.0
        %1741 = vmatprep.subr.mxu0 0.0
        %1742 = vmatpush1.xpose.msra.mxu0 0.0
        %1743 = vmatprep.subr.mxu0 0.0
        %1744 = vmatpush1.xpose.msra.mxu0 0.0
        %1745 = vmatprep.subr.mxu0 0.0
        %1746 = vmatpush1.xpose.msra.mxu0 0.0
        %1747 = vmatprep.subr.mxu0 0.0
        %1748 = vmatpush1.xpose.msra.mxu0 0.0
        %1749 = vmatprep.subr.mxu0 0.0
        %1750 = vmatpush1.xpose.msra.mxu0 0.0
        %1751 = vmatprep.subr.mxu0 0.0
        %1752 = vmatpush1.xpose.msra.mxu0 0.0
        %1753 = vmatprep.subr.mxu0 0.0
        %1754 = vmatpush1.xpose.msra.mxu0 0.0
        %1755 = vmatprep.subr.mxu0 0.0
        %1756 = vmatpush1.xpose.msra.mxu0 0.0
        %1757 = vmatprep.subr.mxu0 0.0
        %1758 = vmatpush1.xpose.msra.mxu0 0.0
        %1759 = vmatprep.subr.mxu0 0.0
        %1760 = vmatpush1.xpose.msra.mxu0 0.0
        %1761 = vmatprep.subr.mxu0 0.0
        %1762 = vmatpush1.xpose.msra.mxu0 0.0
        %1763 = vmatprep.subr.mxu0 0.0
        %1764 = vmatpush1.xpose.msra.mxu0 0.0
        %1765 = vmatprep.subr.mxu0 0.0
        %1766 = vmatpush1.xpose.msra.mxu0 0.0
        %1767 = vmatprep.subr.mxu0 0.0
        %1768 = vmatpush1.xpose.msra.mxu0 0.0
        %1769 = vmatprep.subr.mxu0 0.0
        %1770 = vmatpush1.xpose.msra.mxu0 0.0
        %1771 = vmatprep.subr.mxu0 0.0
        %1772 = vmatpush1.xpose.msra.mxu0 0.0
        %1773 = vmatprep.subr.mxu0 0.0
        %1774 = vmatpush1.xpose.msra.mxu0 0.0
        %1775 = vmatprep.subr.mxu0 0.0
        %1776 = vmatpush1.xpose.msra.mxu0 0.0
        %1777 = vmatprep.subr.mxu0 0.0
        %1778 = vmatpush1.xpose.msra.mxu0 0.0
        %1779 = vmatprep.subr.mxu0 0.0
        %1780 = vmatpush1.xpose.msra.mxu0 0.0
        %1781 = vmatprep.subr.mxu0 0.0
        %1782 = vmatpush1.xpose.msra.mxu0 0.0
        %1783 = vmatprep.subr.mxu0 0.0
        %1784 = vmatpush1.xpose.msra.mxu0 0.0
        %1785 = vmatprep.subr.mxu0 0.0
        %1786 = vmatpush1.xpose.msra.mxu0 0.0
        %1787 = vmatprep.subr.mxu0 0.0
        %1788 = vmatpush1.xpose.msra.mxu0 0.0
        %1789 = vmatprep.subr.mxu0 0.0
        %1790 = vmatpush1.xpose.msra.mxu0 0.0
        %1791 = vmatprep.subr.mxu0 0.0
        %1792 = vmatpush1.xpose.msra.mxu0 0.0
        %1793 = vmatprep.subr.mxu0 0.0
        %1794 = vmatpush1.xpose.msra.mxu0 0.0
        %1795 = vmatprep.mubr.f32.mxu0 0.0
        %1796 = vmatmul.mubr.f32.gmra.mrb[0].mxu0 %v1727
        %v1797 = vpop.f32.mrb[0].mxu0
        %v1798 = vadd.f32 0.0, %v1797
        %v1799 = vpop.f32.mrb[0].mxu0
        %1800 = vdwg.mxu0
        %1801 = vrot.lane.b32.xlu0 %v1049, 120
        %v1802 = vpop.permute.xlu0 %1801
        %1803 = vrot.lane.b32.xlu0 %v1049, 88
        %v1804 = vpop.permute.xlu0 %1803
        %v1805 = vsel %vm1065, %v1802, 0
        %v1807 = vsel %vm1065, %v1804, 0
        %1809 = vmatprep.subr.mxu0 0.0
        %1810 = vmatpush1.xpose.msra.mxu0 %v1807
        %1811 = vmatprep.subr.mxu0 0.0
        %1812 = vmatpush1.xpose.msra.mxu0 0.0
        %1813 = vmatprep.subr.mxu0 0.0
        %1814 = vmatpush1.xpose.msra.mxu0 0.0
        %1815 = vmatprep.subr.mxu0 0.0
        %1816 = vmatpush1.xpose.msra.mxu0 0.0
        %1817 = vmatprep.subr.mxu0 0.0
        %1818 = vmatpush1.xpose.msra.mxu0 0.0
        %1819 = vmatprep.subr.mxu0 0.0
        %1820 = vmatpush1.xpose.msra.mxu0 0.0
        %1821 = vmatprep.subr.mxu0 0.0
        %1822 = vmatpush1.xpose.msra.mxu0 0.0
        %1823 = vmatprep.subr.mxu0 0.0
        %1824 = vmatpush1.xpose.msra.mxu0 0.0
        %1825 = vmatprep.subr.mxu0 0.0
        %1826 = vmatpush1.xpose.msra.mxu0 0.0
        %1827 = vmatprep.subr.mxu0 0.0
        %1828 = vmatpush1.xpose.msra.mxu0 0.0
        %1829 = vmatprep.subr.mxu0 0.0
        %1830 = vmatpush1.xpose.msra.mxu0 0.0
        %1831 = vmatprep.subr.mxu0 0.0
        %1832 = vmatpush1.xpose.msra.mxu0 0.0
        %1833 = vmatprep.subr.mxu0 0.0
        %1834 = vmatpush1.xpose.msra.mxu0 0.0
        %1835 = vmatprep.subr.mxu0 0.0
        %1836 = vmatpush1.xpose.msra.mxu0 0.0
        %1837 = vmatprep.subr.mxu0 0.0
        %1838 = vmatpush1.xpose.msra.mxu0 0.0
        %1839 = vmatprep.subr.mxu0 0.0
        %1840 = vmatpush1.xpose.msra.mxu0 0.0
        %1841 = vmatprep.subr.mxu0 0.0
        %1842 = vmatpush1.xpose.msra.mxu0 0.0
        %1843 = vmatprep.subr.mxu0 0.0
        %1844 = vmatpush1.xpose.msra.mxu0 0.0
        %1845 = vmatprep.subr.mxu0 0.0
        %1846 = vmatpush1.xpose.msra.mxu0 0.0
        %1847 = vmatprep.subr.mxu0 0.0
        %1848 = vmatpush1.xpose.msra.mxu0 0.0
        %1849 = vmatprep.subr.mxu0 0.0
        %1850 = vmatpush1.xpose.msra.mxu0 0.0
        %1851 = vmatprep.subr.mxu0 0.0
        %1852 = vmatpush1.xpose.msra.mxu0 0.0
        %1853 = vmatprep.subr.mxu0 0.0
        %1854 = vmatpush1.xpose.msra.mxu0 0.0
        %1855 = vmatprep.subr.mxu0 0.0
        %1856 = vmatpush1.xpose.msra.mxu0 0.0
        %1857 = vmatprep.subr.mxu0 0.0
        %1858 = vmatpush1.xpose.msra.mxu0 0.0
        %1859 = vmatprep.subr.mxu0 0.0
        %1860 = vmatpush1.xpose.msra.mxu0 0.0
        %1861 = vmatprep.subr.mxu0 0.0
        %1862 = vmatpush1.xpose.msra.mxu0 0.0
        %1863 = vmatprep.subr.mxu0 0.0
        %1864 = vmatpush1.xpose.msra.mxu0 0.0
        %1865 = vmatprep.subr.mxu0 0.0
        %1866 = vmatpush1.xpose.msra.mxu0 0.0
        %1867 = vmatprep.subr.mxu0 0.0
        %1868 = vmatpush1.xpose.msra.mxu0 0.0
        %1869 = vmatprep.subr.mxu0 0.0
        %1870 = vmatpush1.xpose.msra.mxu0 0.0
        %1871 = vmatprep.subr.mxu0 0.0
        %1872 = vmatpush1.xpose.msra.mxu0 0.0
        %1873 = vmatprep.mubr.f32.mxu0 0.0
        %1874 = vmatmul.mubr.f32.gmra.mrb[0].mxu0 %v1805
        %v1875 = vpop.f32.mrb[0].mxu0
        %v1876 = vadd.f32 0.0, %v1875
        %v1877 = vpop.f32.mrb[0].mxu0
        %1878 = vdwg.mxu0
        %1879 = vrot.lane.b32.xlu0 %v1054, 120
        %v1880 = vpop.permute.xlu0 %1879
        %1881 = vrot.lane.b32.xlu0 %v1054, 88
        %v1882 = vpop.permute.xlu0 %1881
        %v1883 = vsel %vm1065, %v1880, 0
        %v1885 = vsel %vm1065, %v1882, 0
        %1887 = vmatprep.subr.mxu0 0.0
        %1888 = vmatpush1.xpose.msra.mxu0 %v1885
        %1889 = vmatprep.subr.mxu0 0.0
        %1890 = vmatpush1.xpose.msra.mxu0 0.0
        %1891 = vmatprep.subr.mxu0 0.0
        %1892 = vmatpush1.xpose.msra.mxu0 0.0
        %1893 = vmatprep.subr.mxu0 0.0
        %1894 = vmatpush1.xpose.msra.mxu0 0.0
        %1895 = vmatprep.subr.mxu0 0.0
        %1896 = vmatpush1.xpose.msra.mxu0 0.0
        %1897 = vmatprep.subr.mxu0 0.0
        %1898 = vmatpush1.xpose.msra.mxu0 0.0
        %1899 = vmatprep.subr.mxu0 0.0
        %1900 = vmatpush1.xpose.msra.mxu0 0.0
        %1901 = vmatprep.subr.mxu0 0.0
        %1902 = vmatpush1.xpose.msra.mxu0 0.0
        %1903 = vmatprep.subr.mxu0 0.0
        %1904 = vmatpush1.xpose.msra.mxu0 0.0
        %1905 = vmatprep.subr.mxu0 0.0
        %1906 = vmatpush1.xpose.msra.mxu0 0.0
        %1907 = vmatprep.subr.mxu0 0.0
        %1908 = vmatpush1.xpose.msra.mxu0 0.0
        %1909 = vmatprep.subr.mxu0 0.0
        %1910 = vmatpush1.xpose.msra.mxu0 0.0
        %1911 = vmatprep.subr.mxu0 0.0
        %1912 = vmatpush1.xpose.msra.mxu0 0.0
        %1913 = vmatprep.subr.mxu0 0.0
        %1914 = vmatpush1.xpose.msra.mxu0 0.0
        %1915 = vmatprep.subr.mxu0 0.0
        %1916 = vmatpush1.xpose.msra.mxu0 0.0
        %1917 = vmatprep.subr.mxu0 0.0
        %1918 = vmatpush1.xpose.msra.mxu0 0.0
        %1919 = vmatprep.subr.mxu0 0.0
        %1920 = vmatpush1.xpose.msra.mxu0 0.0
        %1921 = vmatprep.subr.mxu0 0.0
        %1922 = vmatpush1.xpose.msra.mxu0 0.0
        %1923 = vmatprep.subr.mxu0 0.0
        %1924 = vmatpush1.xpose.msra.mxu0 0.0
        %1925 = vmatprep.subr.mxu0 0.0
        %1926 = vmatpush1.xpose.msra.mxu0 0.0
        %1927 = vmatprep.subr.mxu0 0.0
        %1928 = vmatpush1.xpose.msra.mxu0 0.0
        %1929 = vmatprep.subr.mxu0 0.0
        %1930 = vmatpush1.xpose.msra.mxu0 0.0
        %1931 = vmatprep.subr.mxu0 0.0
        %1932 = vmatpush1.xpose.msra.mxu0 0.0
        %1933 = vmatprep.subr.mxu0 0.0
        %1934 = vmatpush1.xpose.msra.mxu0 0.0
        %1935 = vmatprep.subr.mxu0 0.0
        %1936 = vmatpush1.xpose.msra.mxu0 0.0
        %1937 = vmatprep.subr.mxu0 0.0
        %1938 = vmatpush1.xpose.msra.mxu0 0.0
        %1939 = vmatprep.subr.mxu0 0.0
        %1940 = vmatpush1.xpose.msra.mxu0 0.0
        %1941 = vmatprep.subr.mxu0 0.0
        %1942 = vmatpush1.xpose.msra.mxu0 0.0
        %1943 = vmatprep.subr.mxu0 0.0
        %1944 = vmatpush1.xpose.msra.mxu0 0.0
        %1945 = vmatprep.subr.mxu0 0.0
        %1946 = vmatpush1.xpose.msra.mxu0 0.0
        %1947 = vmatprep.subr.mxu0 0.0
        %1948 = vmatpush1.xpose.msra.mxu0 0.0
        %1949 = vmatprep.subr.mxu0 0.0
        %1950 = vmatpush1.xpose.msra.mxu0 0.0
        %1951 = vmatprep.mubr.f32.mxu0 0.0
        %1952 = vmatmul.mubr.f32.gmra.mrb[0].mxu0 %v1883
        %v1953 = vpop.f32.mrb[0].mxu0
        %v1954 = vadd.f32 0.0, %v1953
        %v1955 = vpop.f32.mrb[0].mxu0
        %1956 = vdwg.mxu0
        %1957 = vrot.lane.b32.xlu0 %v1059, 120
        %v1958 = vpop.permute.xlu0 %1957
        %1959 = vrot.lane.b32.xlu0 %v1059, 88
        %v1960 = vpop.permute.xlu0 %1959
        %v1961 = vsel %vm1065, %v1958, 0
        %v1963 = vsel %vm1065, %v1960, 0
        %1965 = vmatprep.subr.mxu0 0.0
        %1966 = vmatpush1.xpose.msra.mxu0 %v1963
        %1967 = vmatprep.subr.mxu0 0.0
        %1968 = vmatpush1.xpose.msra.mxu0 0.0
        %1969 = vmatprep.subr.mxu0 0.0
        %1970 = vmatpush1.xpose.msra.mxu0 0.0
        %1971 = vmatprep.subr.mxu0 0.0
        %1972 = vmatpush1.xpose.msra.mxu0 0.0
        %1973 = vmatprep.subr.mxu0 0.0
        %1974 = vmatpush1.xpose.msra.mxu0 0.0
        %1975 = vmatprep.subr.mxu0 0.0
        %1976 = vmatpush1.xpose.msra.mxu0 0.0
        %1977 = vmatprep.subr.mxu0 0.0
        %1978 = vmatpush1.xpose.msra.mxu0 0.0
        %1979 = vmatprep.subr.mxu0 0.0
        %1980 = vmatpush1.xpose.msra.mxu0 0.0
        %1981 = vmatprep.subr.mxu0 0.0
        %1982 = vmatpush1.xpose.msra.mxu0 0.0
        %1983 = vmatprep.subr.mxu0 0.0
        %1984 = vmatpush1.xpose.msra.mxu0 0.0
        %1985 = vmatprep.subr.mxu0 0.0
        %1986 = vmatpush1.xpose.msra.mxu0 0.0
        %1987 = vmatprep.subr.mxu0 0.0
        %1988 = vmatpush1.xpose.msra.mxu0 0.0
        %1989 = vmatprep.subr.mxu0 0.0
        %1990 = vmatpush1.xpose.msra.mxu0 0.0
        %1991 = vmatprep.subr.mxu0 0.0
        %1992 = vmatpush1.xpose.msra.mxu0 0.0
        %1993 = vmatprep.subr.mxu0 0.0
        %1994 = vmatpush1.xpose.msra.mxu0 0.0
        %1995 = vmatprep.subr.mxu0 0.0
        %1996 = vmatpush1.xpose.msra.mxu0 0.0
        %1997 = vmatprep.subr.mxu0 0.0
        %1998 = vmatpush1.xpose.msra.mxu0 0.0
        %1999 = vmatprep.subr.mxu0 0.0
        %2000 = vmatpush1.xpose.msra.mxu0 0.0
        %2001 = vmatprep.subr.mxu0 0.0
        %2002 = vmatpush1.xpose.msra.mxu0 0.0
        %2003 = vmatprep.subr.mxu0 0.0
        %2004 = vmatpush1.xpose.msra.mxu0 0.0
        %2005 = vmatprep.subr.mxu0 0.0
        %2006 = vmatpush1.xpose.msra.mxu0 0.0
        %2007 = vmatprep.subr.mxu0 0.0
        %2008 = vmatpush1.xpose.msra.mxu0 0.0
        %2009 = vmatprep.subr.mxu0 0.0
        %2010 = vmatpush1.xpose.msra.mxu0 0.0
        %2011 = vmatprep.subr.mxu0 0.0
        %2012 = vmatpush1.xpose.msra.mxu0 0.0
        %2013 = vmatprep.subr.mxu0 0.0
        %2014 = vmatpush1.xpose.msra.mxu0 0.0
        %2015 = vmatprep.subr.mxu0 0.0
        %2016 = vmatpush1.xpose.msra.mxu0 0.0
        %2017 = vmatprep.subr.mxu0 0.0
        %2018 = vmatpush1.xpose.msra.mxu0 0.0
        %2019 = vmatprep.subr.mxu0 0.0
        %2020 = vmatpush1.xpose.msra.mxu0 0.0
        %2021 = vmatprep.subr.mxu0 0.0
        %2022 = vmatpush1.xpose.msra.mxu0 0.0
        %2023 = vmatprep.subr.mxu0 0.0
        %2024 = vmatpush1.xpose.msra.mxu0 0.0
        %2025 = vmatprep.subr.mxu0 0.0
        %2026 = vmatpush1.xpose.msra.mxu0 0.0
        %2027 = vmatprep.subr.mxu0 0.0
        %2028 = vmatpush1.xpose.msra.mxu0 0.0
        %2029 = vmatprep.mubr.f32.mxu0 0.0
        %2030 = vmatmul.mubr.f32.gmra.mrb[0].mxu0 %v1961
        %v2031 = vpop.f32.mrb[0].mxu0
        %v2032 = vadd.f32 0.0, %v2031
        %v2033 = vpop.f32.mrb[0].mxu0
        %2034 = vdwg.mxu0
        %v2035 = vmul.f32 %v1798, 0.35355338
        %v2036 = vmul.f32 %v1876, 0.35355338
        %v2037 = vmul.f32 %v1954, 0.35355338
        %v2038 = vmul.f32 %v2032, 0.35355338
        %v2039 = vsel %vm1065, %v2035, -inf
        %2040 = vmax.xlane.f32.xlu0 %v2039
        %v2041 = vpop.xlane.xlu0 %2040
        %v2042 = vsel %vm1065, %v2036, -inf
        %2043 = vmax.xlane.f32.xlu0 %v2042
        %v2044 = vpop.xlane.xlu0 %2043
        %v2045 = vsel %vm1065, %v2037, -inf
        %2046 = vmax.xlane.f32.xlu0 %v2045
        %v2047 = vpop.xlane.xlu0 %2046
        %v2048 = vsel %vm1065, %v2038, -inf
        %2049 = vmax.xlane.f32.xlu0 %v2048
        %v2050 = vpop.xlane.xlu0 %2049
        %v2051 = vsub.f32 %v2035, %v2041
        %v2052 = vsub.f32 %v2036, %v2044
        %v2053 = vsub.f32 %v2037, %v2047
        %v2054 = vsub.f32 %v2038, %v2050
        %v2055 = vmul.f32 %v2051, 1.442695
        %v2056 = vpow.pop %v2055
        %v2057 = vmul.f32 %v2052, 1.442695
        %v2058 = vpow.pop %v2057
        %v2059 = vmul.f32 %v2053, 1.442695
        %v2060 = vpow.pop %v2059
        %v2061 = vmul.f32 %v2054, 1.442695
        %v2062 = vpow.pop %v2061
        %v2063 = vsel %vm1065, %v2056, 0.0
        %2064 = vadd.xlane.f32.xlu0 %v2063
        %v2065 = vpop.xlane.xlu0 %2064
        %v2066 = vsel %vm1065, %v2058, 0.0
        %2067 = vadd.xlane.f32.xlu0 %v2066
        %v2068 = vpop.xlane.xlu0 %2067
        %v2069 = vsel %vm1065, %v2060, 0.0
        %2070 = vadd.xlane.f32.xlu0 %v2069
        %v2071 = vpop.xlane.xlu0 %2070
        %v2072 = vsel %vm1065, %v2062, 0.0
        %2073 = vadd.xlane.f32.xlu0 %v2072
        %v2074 = vpop.xlane.xlu0 %2073
        %v2075 = vrcp.pop %v2065
        %v2076 = vrcp.pop %v2068
        %v2077 = vrcp.pop %v2071
        %v2078 = vrcp.pop %v2074
        %v2079 = vmul.f32 %v2056, %v2075
        %v2080 = vmul.f32 %v2058, %v2076
        %v2081 = vmul.f32 %v2060, %v2077
        %v2082 = vmul.f32 %v2062, %v2078
        %2083 = vrot.lane.b32.xlu0 %v1044, 56
        %v2084 = vpop.permute.xlu0 %2083
        %v2087 = vsel %vm1065, %v2079, 0
        %2089 = vmatprep.subr.mxu0 0.0
        %2090 = vmatpush1.msra.mxu0 %v2084
        %2091 = vmatprep.subr.mxu0 0.0
        %2092 = vmatpush1.msra.mxu0 0.0
        %2093 = vmatprep.subr.mxu0 0.0
        %2094 = vmatpush1.msra.mxu0 0.0
        %2095 = vmatprep.subr.mxu0 0.0
        %2096 = vmatpush1.msra.mxu0 0.0
        %2097 = vmatprep.subr.mxu0 0.0
        %2098 = vmatpush1.msra.mxu0 0.0
        %2099 = vmatprep.subr.mxu0 0.0
        %2100 = vmatpush1.msra.mxu0 0.0
        %2101 = vmatprep.subr.mxu0 0.0
        %2102 = vmatpush1.msra.mxu0 0.0
        %2103 = vmatprep.subr.mxu0 0.0
        %2104 = vmatpush1.msra.mxu0 0.0
        %2105 = vmatprep.subr.mxu0 0.0
        %2106 = vmatpush1.msra.mxu0 0.0
        %2107 = vmatprep.subr.mxu0 0.0
        %2108 = vmatpush1.msra.mxu0 0.0
        %2109 = vmatprep.subr.mxu0 0.0
        %2110 = vmatpush1.msra.mxu0 0.0
        %2111 = vmatprep.subr.mxu0 0.0
        %2112 = vmatpush1.msra.mxu0 0.0
        %2113 = vmatprep.subr.mxu0 0.0
        %2114 = vmatpush1.msra.mxu0 0.0
        %2115 = vmatprep.subr.mxu0 0.0
        %2116 = vmatpush1.msra.mxu0 0.0
        %2117 = vmatprep.subr.mxu0 0.0
        %2118 = vmatpush1.msra.mxu0 0.0
        %2119 = vmatprep.subr.mxu0 0.0
        %2120 = vmatpush1.msra.mxu0 0.0
        %2121 = vmatprep.subr.mxu0 0.0
        %2122 = vmatpush1.msra.mxu0 0.0
        %2123 = vmatprep.subr.mxu0 0.0
        %2124 = vmatpush1.msra.mxu0 0.0
        %2125 = vmatprep.subr.mxu0 0.0
        %2126 = vmatpush1.msra.mxu0 0.0
        %2127 = vmatprep.subr.mxu0 0.0
        %2128 = vmatpush1.msra.mxu0 0.0
        %2129 = vmatprep.subr.mxu0 0.0
        %2130 = vmatpush1.msra.mxu0 0.0
        %2131 = vmatprep.subr.mxu0 0.0
        %2132 = vmatpush1.msra.mxu0 0.0
        %2133 = vmatprep.subr.mxu0 0.0
        %2134 = vmatpush1.msra.mxu0 0.0
        %2135 = vmatprep.subr.mxu0 0.0
        %2136 = vmatpush1.msra.mxu0 0.0
        %2137 = vmatprep.subr.mxu0 0.0
        %2138 = vmatpush1.msra.mxu0 0.0
        %2139 = vmatprep.subr.mxu0 0.0
        %2140 = vmatpush1.msra.mxu0 0.0
        %2141 = vmatprep.subr.mxu0 0.0
        %2142 = vmatpush1.msra.mxu0 0.0
        %2143 = vmatprep.subr.mxu0 0.0
        %2144 = vmatpush1.msra.mxu0 0.0
        %2145 = vmatprep.subr.mxu0 0.0
        %2146 = vmatpush1.msra.mxu0 0.0
        %2147 = vmatprep.subr.mxu0 0.0
        %2148 = vmatpush1.msra.mxu0 0.0
        %2149 = vmatprep.subr.mxu0 0.0
        %2150 = vmatpush1.msra.mxu0 0.0
        %2151 = vmatprep.subr.mxu0 0.0
        %2152 = vmatpush1.msra.mxu0 0.0
        %2153 = vmatprep.mubr.f32.mxu0 0.0
        %2154 = vmatmul.mubr.f32.gmra.mrb[0].mxu0 %v2087
        %v2155 = vpop.f32.mrb[0].mxu0
        %v2156 = vadd.f32 0.0, %v2155
        %v2157 = vpop.f32.mrb[0].mxu0
        %2158 = vdwg.mxu0
        %2159 = vrot.lane.b32.xlu0 %v1049, 56
        %v2160 = vpop.permute.xlu0 %2159
        %v2163 = vsel %vm1065, %v2080, 0
        %2165 = vmatprep.subr.mxu0 0.0
        %2166 = vmatpush1.msra.mxu0 %v2160
        %2167 = vmatprep.subr.mxu0 0.0
        %2168 = vmatpush1.msra.mxu0 0.0
        %2169 = vmatprep.subr.mxu0 0.0
        %2170 = vmatpush1.msra.mxu0 0.0
        %2171 = vmatprep.subr.mxu0 0.0
        %2172 = vmatpush1.msra.mxu0 0.0
        %2173 = vmatprep.subr.mxu0 0.0
        %2174 = vmatpush1.msra.mxu0 0.0
        %2175 = vmatprep.subr.mxu0 0.0
        %2176 = vmatpush1.msra.mxu0 0.0
        %2177 = vmatprep.subr.mxu0 0.0
        %2178 = vmatpush1.msra.mxu0 0.0
        %2179 = vmatprep.subr.mxu0 0.0
        %2180 = vmatpush1.msra.mxu0 0.0
        %2181 = vmatprep.subr.mxu0 0.0
        %2182 = vmatpush1.msra.mxu0 0.0
        %2183 = vmatprep.subr.mxu0 0.0
        %2184 = vmatpush1.msra.mxu0 0.0
        %2185 = vmatprep.subr.mxu0 0.0
        %2186 = vmatpush1.msra.mxu0 0.0
        %2187 = vmatprep.subr.mxu0 0.0
        %2188 = vmatpush1.msra.mxu0 0.0
        %2189 = vmatprep.subr.mxu0 0.0
        %2190 = vmatpush1.msra.mxu0 0.0
        %2191 = vmatprep.subr.mxu0 0.0
        %2192 = vmatpush1.msra.mxu0 0.0
        %2193 = vmatprep.subr.mxu0 0.0
        %2194 = vmatpush1.msra.mxu0 0.0
        %2195 = vmatprep.subr.mxu0 0.0
        %2196 = vmatpush1.msra.mxu0 0.0
        %2197 = vmatprep.subr.mxu0 0.0
        %2198 = vmatpush1.msra.mxu0 0.0
        %2199 = vmatprep.subr.mxu0 0.0
        %2200 = vmatpush1.msra.mxu0 0.0
        %2201 = vmatprep.subr.mxu0 0.0
        %2202 = vmatpush1.msra.mxu0 0.0
        %2203 = vmatprep.subr.mxu0 0.0
        %2204 = vmatpush1.msra.mxu0 0.0
        %2205 = vmatprep.subr.mxu0 0.0
        %2206 = vmatpush1.msra.mxu0 0.0
        %2207 = vmatprep.subr.mxu0 0.0
        %2208 = vmatpush1.msra.mxu0 0.0
        %2209 = vmatprep.subr.mxu0 0.0
        %2210 = vmatpush1.msra.mxu0 0.0
        %2211 = vmatprep.subr.mxu0 0.0
        %2212 = vmatpush1.msra.mxu0 0.0
        %2213 = vmatprep.subr.mxu0 0.0
        %2214 = vmatpush1.msra.mxu0 0.0
        %2215 = vmatprep.subr.mxu0 0.0
        %2216 = vmatpush1.msra.mxu0 0.0
        %2217 = vmatprep.subr.mxu0 0.0
        %2218 = vmatpush1.msra.mxu0 0.0
        %2219 = vmatprep.subr.mxu0 0.0
        %2220 = vmatpush1.msra.mxu0 0.0
        %2221 = vmatprep.subr.mxu0 0.0
        %2222 = vmatpush1.msra.mxu0 0.0
        %2223 = vmatprep.subr.mxu0 0.0
        %2224 = vmatpush1.msra.mxu0 0.0
        %2225 = vmatprep.subr.mxu0 0.0
        %2226 = vmatpush1.msra.mxu0 0.0
        %2227 = vmatprep.subr.mxu0 0.0
        %2228 = vmatpush1.msra.mxu0 0.0
        %2229 = vmatprep.mubr.f32.mxu0 0.0
        %2230 = vmatmul.mubr.f32.gmra.mrb[0].mxu0 %v2163
        %v2231 = vpop.f32.mrb[0].mxu0
        %v2232 = vadd.f32 0.0, %v2231
        %v2233 = vpop.f32.mrb[0].mxu0
        %2234 = vdwg.mxu0
        %2235 = vrot.lane.b32.xlu0 %v1054, 56
        %v2236 = vpop.permute.xlu0 %2235
        %v2239 = vsel %vm1065, %v2081, 0
        %2241 = vmatprep.subr.mxu0 0.0
        %2242 = vmatpush1.msra.mxu0 %v2236
        %2243 = vmatprep.subr.mxu0 0.0
        %2244 = vmatpush1.msra.mxu0 0.0
        %2245 = vmatprep.subr.mxu0 0.0
        %2246 = vmatpush1.msra.mxu0 0.0
        %2247 = vmatprep.subr.mxu0 0.0
        %2248 = vmatpush1.msra.mxu0 0.0
        %2249 = vmatprep.subr.mxu0 0.0
        %2250 = vmatpush1.msra.mxu0 0.0
        %2251 = vmatprep.subr.mxu0 0.0
        %2252 = vmatpush1.msra.mxu0 0.0
        %2253 = vmatprep.subr.mxu0 0.0
        %2254 = vmatpush1.msra.mxu0 0.0
        %2255 = vmatprep.subr.mxu0 0.0
        %2256 = vmatpush1.msra.mxu0 0.0
        %2257 = vmatprep.subr.mxu0 0.0
        %2258 = vmatpush1.msra.mxu0 0.0
        %2259 = vmatprep.subr.mxu0 0.0
        %2260 = vmatpush1.msra.mxu0 0.0
        %2261 = vmatprep.subr.mxu0 0.0
        %2262 = vmatpush1.msra.mxu0 0.0
        %2263 = vmatprep.subr.mxu0 0.0
        %2264 = vmatpush1.msra.mxu0 0.0
        %2265 = vmatprep.subr.mxu0 0.0
        %2266 = vmatpush1.msra.mxu0 0.0
        %2267 = vmatprep.subr.mxu0 0.0
        %2268 = vmatpush1.msra.mxu0 0.0
        %2269 = vmatprep.subr.mxu0 0.0
        %2270 = vmatpush1.msra.mxu0 0.0
        %2271 = vmatprep.subr.mxu0 0.0
        %2272 = vmatpush1.msra.mxu0 0.0
        %2273 = vmatprep.subr.mxu0 0.0
        %2274 = vmatpush1.msra.mxu0 0.0
        %2275 = vmatprep.subr.mxu0 0.0
        %2276 = vmatpush1.msra.mxu0 0.0
        %2277 = vmatprep.subr.mxu0 0.0
        %2278 = vmatpush1.msra.mxu0 0.0
        %2279 = vmatprep.subr.mxu0 0.0
        %2280 = vmatpush1.msra.mxu0 0.0
        %2281 = vmatprep.subr.mxu0 0.0
        %2282 = vmatpush1.msra.mxu0 0.0
        %2283 = vmatprep.subr.mxu0 0.0
        %2284 = vmatpush1.msra.mxu0 0.0
        %2285 = vmatprep.subr.mxu0 0.0
        %2286 = vmatpush1.msra.mxu0 0.0
        %2287 = vmatprep.subr.mxu0 0.0
        %2288 = vmatpush1.msra.mxu0 0.0
        %2289 = vmatprep.subr.mxu0 0.0
        %2290 = vmatpush1.msra.mxu0 0.0
        %2291 = vmatprep.subr.mxu0 0.0
        %2292 = vmatpush1.msra.mxu0 0.0
        %2293 = vmatprep.subr.mxu0 0.0
        %2294 = vmatpush1.msra.mxu0 0.0
        %2295 = vmatprep.subr.mxu0 0.0
        %2296 = vmatpush1.msra.mxu0 0.0
        %2297 = vmatprep.subr.mxu0 0.0
        %2298 = vmatpush1.msra.mxu0 0.0
        %2299 = vmatprep.subr.mxu0 0.0
        %2300 = vmatpush1.msra.mxu0 0.0
        %2301 = vmatprep.subr.mxu0 0.0
        %2302 = vmatpush1.msra.mxu0 0.0
        %2303 = vmatprep.subr.mxu0 0.0
        %2304 = vmatpush1.msra.mxu0 0.0
        %2305 = vmatprep.mubr.f32.mxu0 0.0
        %2306 = vmatmul.mubr.f32.gmra.mrb[0].mxu0 %v2239
        %v2307 = vpop.f32.mrb[0].mxu0
        %v2308 = vadd.f32 0.0, %v2307
        %v2309 = vpop.f32.mrb[0].mxu0
        %2310 = vdwg.mxu0
        %2311 = vrot.lane.b32.xlu0 %v1059, 56
        %v2312 = vpop.permute.xlu0 %2311
        %v2315 = vsel %vm1065, %v2082, 0
        %2317 = vmatprep.subr.mxu0 0.0
        %2318 = vmatpush1.msra.mxu0 %v2312
        %2319 = vmatprep.subr.mxu0 0.0
        %2320 = vmatpush1.msra.mxu0 0.0
        %2321 = vmatprep.subr.mxu0 0.0
        %2322 = vmatpush1.msra.mxu0 0.0
        %2323 = vmatprep.subr.mxu0 0.0
        %2324 = vmatpush1.msra.mxu0 0.0
        %2325 = vmatprep.subr.mxu0 0.0
        %2326 = vmatpush1.msra.mxu0 0.0
        %2327 = vmatprep.subr.mxu0 0.0
        %2328 = vmatpush1.msra.mxu0 0.0
        %2329 = vmatprep.subr.mxu0 0.0
        %2330 = vmatpush1.msra.mxu0 0.0
        %2331 = vmatprep.subr.mxu0 0.0
        %2332 = vmatpush1.msra.mxu0 0.0
        %2333 = vmatprep.subr.mxu0 0.0
        %2334 = vmatpush1.msra.mxu0 0.0
        %2335 = vmatprep.subr.mxu0 0.0
        %2336 = vmatpush1.msra.mxu0 0.0
        %2337 = vmatprep.subr.mxu0 0.0
        %2338 = vmatpush1.msra.mxu0 0.0
        %2339 = vmatprep.subr.mxu0 0.0
        %2340 = vmatpush1.msra.mxu0 0.0
        %2341 = vmatprep.subr.mxu0 0.0
        %2342 = vmatpush1.msra.mxu0 0.0
        %2343 = vmatprep.subr.mxu0 0.0
        %2344 = vmatpush1.msra.mxu0 0.0
        %2345 = vmatprep.subr.mxu0 0.0
        %2346 = vmatpush1.msra.mxu0 0.0
        %2347 = vmatprep.subr.mxu0 0.0
        %2348 = vmatpush1.msra.mxu0 0.0
        %2349 = vmatprep.subr.mxu0 0.0
        %2350 = vmatpush1.msra.mxu0 0.0
        %2351 = vmatprep.subr.mxu0 0.0
        %2352 = vmatpush1.msra.mxu0 0.0
        %2353 = vmatprep.subr.mxu0 0.0
        %2354 = vmatpush1.msra.mxu0 0.0
        %2355 = vmatprep.subr.mxu0 0.0
        %2356 = vmatpush1.msra.mxu0 0.0
        %2357 = vmatprep.subr.mxu0 0.0
        %2358 = vmatpush1.msra.mxu0 0.0
        %2359 = vmatprep.subr.mxu0 0.0
        %2360 = vmatpush1.msra.mxu0 0.0
        %2361 = vmatprep.subr.mxu0 0.0
        %2362 = vmatpush1.msra.mxu0 0.0
        %2363 = vmatprep.subr.mxu0 0.0
        %2364 = vmatpush1.msra.mxu0 0.0
        %2365 = vmatprep.subr.mxu0 0.0
        %2366 = vmatpush1.msra.mxu0 0.0
        %2367 = vmatprep.subr.mxu0 0.0
        %2368 = vmatpush1.msra.mxu0 0.0
        %2369 = vmatprep.subr.mxu0 0.0
        %2370 = vmatpush1.msra.mxu0 0.0
        %2371 = vmatprep.subr.mxu0 0.0
        %2372 = vmatpush1.msra.mxu0 0.0
        %2373 = vmatprep.subr.mxu0 0.0
        %2374 = vmatpush1.msra.mxu0 0.0
        %2375 = vmatprep.subr.mxu0 0.0
        %2376 = vmatpush1.msra.mxu0 0.0
        %2377 = vmatprep.subr.mxu0 0.0
        %2378 = vmatpush1.msra.mxu0 0.0
        %2379 = vmatprep.subr.mxu0 0.0
        %2380 = vmatpush1.msra.mxu0 0.0
        %2381 = vmatprep.mubr.f32.mxu0 0.0
        %2382 = vmatmul.mubr.f32.gmra.mrb[0].mxu0 %v2315
        %v2383 = vpop.f32.mrb[0].mxu0
        %v2384 = vadd.f32 0.0, %v2383
        %v2385 = vpop.f32.mrb[0].mxu0
        %2386 = vdwg.mxu0
        %v2388 = vsel %vm1065, %v2156, 0
        %v2391 = vsel %vm1065, %v2232, 0
        %v2394 = vsel %vm1065, %v2308, 0
        %v2397 = vsel %vm1065, %v2384, 0
        %2399 = vmatprep.subr.mxu0 0.0
        %2400 = vmatpush1.msra.mxu0 %v887
        %2401 = vmatprep.subr.mxu0 0.0
        %2402 = vmatpush1.msra.mxu0 0.0
        %2403 = vmatprep.subr.mxu0 0.0
        %2404 = vmatpush1.msra.mxu0 0.0
        %2405 = vmatprep.subr.mxu0 0.0
        %2406 = vmatpush1.msra.mxu0 0.0
        %2407 = vmatprep.subr.mxu0 0.0
        %2408 = vmatpush1.msra.mxu0 0.0
        %2409 = vmatprep.subr.mxu0 0.0
        %2410 = vmatpush1.msra.mxu0 0.0
        %2411 = vmatprep.subr.mxu0 0.0
        %2412 = vmatpush1.msra.mxu0 0.0
        %2413 = vmatprep.subr.mxu0 0.0
        %2414 = vmatpush1.msra.mxu0 0.0
        %2415 = vmatprep.subr.mxu0 0.0
        %2416 = vmatpush1.msra.mxu0 0.0
        %2417 = vmatprep.subr.mxu0 0.0
        %2418 = vmatpush1.msra.mxu0 0.0
        %2419 = vmatprep.subr.mxu0 0.0
        %2420 = vmatpush1.msra.mxu0 0.0
        %2421 = vmatprep.subr.mxu0 0.0
        %2422 = vmatpush1.msra.mxu0 0.0
        %2423 = vmatprep.subr.mxu0 0.0
        %2424 = vmatpush1.msra.mxu0 0.0
        %2425 = vmatprep.subr.mxu0 0.0
        %2426 = vmatpush1.msra.mxu0 0.0
        %2427 = vmatprep.subr.mxu0 0.0
        %2428 = vmatpush1.msra.mxu0 0.0
        %2429 = vmatprep.subr.mxu0 0.0
        %2430 = vmatpush1.msra.mxu0 0.0
        %2431 = vmatprep.subr.mxu0 0.0
        %2432 = vmatpush1.msra.mxu0 0.0
        %2433 = vmatprep.subr.mxu0 0.0
        %2434 = vmatpush1.msra.mxu0 0.0
        %2435 = vmatprep.subr.mxu0 0.0
        %2436 = vmatpush1.msra.mxu0 0.0
        %2437 = vmatprep.subr.mxu0 0.0
        %2438 = vmatpush1.msra.mxu0 0.0
        %2439 = vmatprep.subr.mxu0 0.0
        %2440 = vmatpush1.msra.mxu0 0.0
        %2441 = vmatprep.subr.mxu0 0.0
        %2442 = vmatpush1.msra.mxu0 0.0
        %2443 = vmatprep.subr.mxu0 0.0
        %2444 = vmatpush1.msra.mxu0 0.0
        %2445 = vmatprep.subr.mxu0 0.0
        %2446 = vmatpush1.msra.mxu0 0.0
        %2447 = vmatprep.subr.mxu0 0.0
        %2448 = vmatpush1.msra.mxu0 0.0
        %2449 = vmatprep.subr.mxu0 0.0
        %2450 = vmatpush1.msra.mxu0 0.0
        %2451 = vmatprep.subr.mxu0 0.0
        %2452 = vmatpush1.msra.mxu0 0.0
        %2453 = vmatprep.subr.mxu0 0.0
        %2454 = vmatpush1.msra.mxu0 0.0
        %2455 = vmatprep.subr.mxu0 0.0
        %2456 = vmatpush1.msra.mxu0 0.0
        %2457 = vmatprep.subr.mxu0 0.0
        %2458 = vmatpush1.msra.mxu0 0.0
        %2459 = vmatprep.subr.mxu0 0.0
        %2460 = vmatpush1.msra.mxu0 0.0
        %2461 = vmatprep.subr.mxu0 0.0
        %2462 = vmatpush1.msra.mxu0 0.0
        %2463 = vmatprep.mubr.f32.mxu0 0.0
        %2464 = vmatmul.mubr.f32.gmra.mrb[0].mxu0 %v2388
        %v2465 = vpop.f32.mrb[0].mxu0
        %v2466 = vadd.f32 0.0, %v2465
        %v2467 = vpop.f32.mrb[0].mxu0
        %2468 = vmatprep.mubr.f32.mxu0 0.0
        %2469 = vmatmul.mubr.f32.gmra.mrb[0].mxu0 %v2391
        %v2470 = vpop.f32.mrb[0].mxu0
        %v2471 = vadd.f32 0.0, %v2470
        %v2472 = vpop.f32.mrb[0].mxu0
        %2473 = vmatprep.mubr.f32.mxu0 0.0
        %2474 = vmatmul.mubr.f32.gmra.mrb[0].mxu0 %v2394
        %v2475 = vpop.f32.mrb[0].mxu0
        %v2476 = vadd.f32 0.0, %v2475
        %v2477 = vpop.f32.mrb[0].mxu0
        %2478 = vmatprep.mubr.f32.mxu0 0.0
        %2479 = vmatmul.mubr.f32.gmra.mrb[0].mxu0 %v2397
        %v2480 = vpop.f32.mrb[0].mxu0
        %v2481 = vadd.f32 0.0, %v2480
        %v2482 = vpop.f32.mrb[0].mxu0
        %2483 = vdwg.mxu0
        %v2485 = vsel %vm1065, %v1492, 0
        %v2488 = vsel %vm1065, %v1568, 0
        %v2491 = vsel %vm1065, %v1644, 0
        %v2494 = vsel %vm1065, %v1720, 0
        %2496 = vmatprep.subr.mxu0 0.0
        %2497 = vmatpush1.msra.mxu0 %v886
        %2498 = vmatprep.subr.mxu0 0.0
        %2499 = vmatpush1.msra.mxu0 0.0
        %2500 = vmatprep.subr.mxu0 0.0
        %2501 = vmatpush1.msra.mxu0 0.0
        %2502 = vmatprep.subr.mxu0 0.0
        %2503 = vmatpush1.msra.mxu0 0.0
        %2504 = vmatprep.subr.mxu0 0.0
        %2505 = vmatpush1.msra.mxu0 0.0
        %2506 = vmatprep.subr.mxu0 0.0
        %2507 = vmatpush1.msra.mxu0 0.0
        %2508 = vmatprep.subr.mxu0 0.0
        %2509 = vmatpush1.msra.mxu0 0.0
        %2510 = vmatprep.subr.mxu0 0.0
        %2511 = vmatpush1.msra.mxu0 0.0
        %2512 = vmatprep.subr.mxu0 0.0
        %2513 = vmatpush1.msra.mxu0 0.0
        %2514 = vmatprep.subr.mxu0 0.0
        %2515 = vmatpush1.msra.mxu0 0.0
        %2516 = vmatprep.subr.mxu0 0.0
        %2517 = vmatpush1.msra.mxu0 0.0
        %2518 = vmatprep.subr.mxu0 0.0
        %2519 = vmatpush1.msra.mxu0 0.0
        %2520 = vmatprep.subr.mxu0 0.0
        %2521 = vmatpush1.msra.mxu0 0.0
        %2522 = vmatprep.subr.mxu0 0.0
        %2523 = vmatpush1.msra.mxu0 0.0
        %2524 = vmatprep.subr.mxu0 0.0
        %2525 = vmatpush1.msra.mxu0 0.0
        %2526 = vmatprep.subr.mxu0 0.0
        %2527 = vmatpush1.msra.mxu0 0.0
        %2528 = vmatprep.subr.mxu0 0.0
        %2529 = vmatpush1.msra.mxu0 0.0
        %2530 = vmatprep.subr.mxu0 0.0
        %2531 = vmatpush1.msra.mxu0 0.0
        %2532 = vmatprep.subr.mxu0 0.0
        %2533 = vmatpush1.msra.mxu0 0.0
        %2534 = vmatprep.subr.mxu0 0.0
        %2535 = vmatpush1.msra.mxu0 0.0
        %2536 = vmatprep.subr.mxu0 0.0
        %2537 = vmatpush1.msra.mxu0 0.0
        %2538 = vmatprep.subr.mxu0 0.0
        %2539 = vmatpush1.msra.mxu0 0.0
        %2540 = vmatprep.subr.mxu0 0.0
        %2541 = vmatpush1.msra.mxu0 0.0
        %2542 = vmatprep.subr.mxu0 0.0
        %2543 = vmatpush1.msra.mxu0 0.0
        %2544 = vmatprep.subr.mxu0 0.0
        %2545 = vmatpush1.msra.mxu0 0.0
        %2546 = vmatprep.subr.mxu0 0.0
        %2547 = vmatpush1.msra.mxu0 0.0
        %2548 = vmatprep.subr.mxu0 0.0
        %2549 = vmatpush1.msra.mxu0 0.0
        %2550 = vmatprep.subr.mxu0 0.0
        %2551 = vmatpush1.msra.mxu0 0.0
        %2552 = vmatprep.subr.mxu0 0.0
        %2553 = vmatpush1.msra.mxu0 0.0
        %2554 = vmatprep.subr.mxu0 0.0
        %2555 = vmatpush1.msra.mxu0 0.0
        %2556 = vmatprep.subr.mxu0 0.0
        %2557 = vmatpush1.msra.mxu0 0.0
        %2558 = vmatprep.subr.mxu0 0.0
        %2559 = vmatpush1.msra.mxu0 0.0
        %2560 = vmatprep.mubr.f32.mxu0 0.0
        %2561 = vmatmul.mubr.f32.gmra.mrb[0].mxu0 %v2485
        %v2562 = vpop.f32.mrb[0].mxu0
        %v2563 = vadd.f32 %v2466, %v2562
        %v2564 = vpop.f32.mrb[0].mxu0
        %2565 = vmatprep.mubr.f32.mxu0 0.0
        %2566 = vmatmul.mubr.f32.gmra.mrb[0].mxu0 %v2488
        %v2567 = vpop.f32.mrb[0].mxu0
        %v2568 = vadd.f32 %v2471, %v2567
        %v2569 = vpop.f32.mrb[0].mxu0
        %2570 = vmatprep.mubr.f32.mxu0 0.0
        %2571 = vmatmul.mubr.f32.gmra.mrb[0].mxu0 %v2491
        %v2572 = vpop.f32.mrb[0].mxu0
        %v2573 = vadd.f32 %v2476, %v2572
        %v2574 = vpop.f32.mrb[0].mxu0
        %2575 = vmatprep.mubr.f32.mxu0 0.0
        %2576 = vmatmul.mubr.f32.gmra.mrb[0].mxu0 %v2494
        %v2577 = vpop.f32.mrb[0].mxu0
        %v2578 = vadd.f32 %v2481, %v2577
        %v2579 = vpop.f32.mrb[0].mxu0
        %2580 = vdwg.mxu0
        %2581 = vrot.lane.b32.xlu0 %v1044, 112
        %v2582 = vpop.permute.xlu0 %2581
        %2583 = vrot.lane.b32.xlu0 %v1044, 80
        %v2584 = vpop.permute.xlu0 %2583
        %v2585 = vsel %vm1065, %v2582, 0
        %v2587 = vsel %vm1065, %v2584, 0
        %2589 = vmatprep.subr.mxu0 0.0
        %2590 = vmatpush1.xpose.msra.mxu0 %v2587
        %2591 = vmatprep.subr.mxu0 0.0
        %2592 = vmatpush1.xpose.msra.mxu0 0.0
        %2593 = vmatprep.subr.mxu0 0.0
        %2594 = vmatpush1.xpose.msra.mxu0 0.0
        %2595 = vmatprep.subr.mxu0 0.0
        %2596 = vmatpush1.xpose.msra.mxu0 0.0
        %2597 = vmatprep.subr.mxu0 0.0
        %2598 = vmatpush1.xpose.msra.mxu0 0.0
        %2599 = vmatprep.subr.mxu0 0.0
        %2600 = vmatpush1.xpose.msra.mxu0 0.0
        %2601 = vmatprep.subr.mxu0 0.0
        %2602 = vmatpush1.xpose.msra.mxu0 0.0
        %2603 = vmatprep.subr.mxu0 0.0
        %2604 = vmatpush1.xpose.msra.mxu0 0.0
        %2605 = vmatprep.subr.mxu0 0.0
        %2606 = vmatpush1.xpose.msra.mxu0 0.0
        %2607 = vmatprep.subr.mxu0 0.0
        %2608 = vmatpush1.xpose.msra.mxu0 0.0
        %2609 = vmatprep.subr.mxu0 0.0
        %2610 = vmatpush1.xpose.msra.mxu0 0.0
        %2611 = vmatprep.subr.mxu0 0.0
        %2612 = vmatpush1.xpose.msra.mxu0 0.0
        %2613 = vmatprep.subr.mxu0 0.0
        %2614 = vmatpush1.xpose.msra.mxu0 0.0
        %2615 = vmatprep.subr.mxu0 0.0
        %2616 = vmatpush1.xpose.msra.mxu0 0.0
        %2617 = vmatprep.subr.mxu0 0.0
        %2618 = vmatpush1.xpose.msra.mxu0 0.0
        %2619 = vmatprep.subr.mxu0 0.0
        %2620 = vmatpush1.xpose.msra.mxu0 0.0
        %2621 = vmatprep.subr.mxu0 0.0
        %2622 = vmatpush1.xpose.msra.mxu0 0.0
        %2623 = vmatprep.subr.mxu0 0.0
        %2624 = vmatpush1.xpose.msra.mxu0 0.0
        %2625 = vmatprep.subr.mxu0 0.0
        %2626 = vmatpush1.xpose.msra.mxu0 0.0
        %2627 = vmatprep.subr.mxu0 0.0
        %2628 = vmatpush1.xpose.msra.mxu0 0.0
        %2629 = vmatprep.subr.mxu0 0.0
        %2630 = vmatpush1.xpose.msra.mxu0 0.0
        %2631 = vmatprep.subr.mxu0 0.0
        %2632 = vmatpush1.xpose.msra.mxu0 0.0
        %2633 = vmatprep.subr.mxu0 0.0
        %2634 = vmatpush1.xpose.msra.mxu0 0.0
        %2635 = vmatprep.subr.mxu0 0.0
        %2636 = vmatpush1.xpose.msra.mxu0 0.0
        %2637 = vmatprep.subr.mxu0 0.0
        %2638 = vmatpush1.xpose.msra.mxu0 0.0
        %2639 = vmatprep.subr.mxu0 0.0
        %2640 = vmatpush1.xpose.msra.mxu0 0.0
        %2641 = vmatprep.subr.mxu0 0.0
        %2642 = vmatpush1.xpose.msra.mxu0 0.0
        %2643 = vmatprep.subr.mxu0 0.0
        %2644 = vmatpush1.xpose.msra.mxu0 0.0
        %2645 = vmatprep.subr.mxu0 0.0
        %2646 = vmatpush1.xpose.msra.mxu0 0.0
        %2647 = vmatprep.subr.mxu0 0.0
        %2648 = vmatpush1.xpose.msra.mxu0 0.0
        %2649 = vmatprep.subr.mxu0 0.0
        %2650 = vmatpush1.xpose.msra.mxu0 0.0
        %2651 = vmatprep.subr.mxu0 0.0
        %2652 = vmatpush1.xpose.msra.mxu0 0.0
        %2653 = vmatprep.mubr.f32.mxu0 0.0
        %2654 = vmatmul.mubr.f32.gmra.mrb[0].mxu0 %v2585
        %v2655 = vpop.f32.mrb[0].mxu0
        %v2656 = vadd.f32 0.0, %v2655
        %v2657 = vpop.f32.mrb[0].mxu0
        %2658 = vdwg.mxu0
        %2659 = vrot.lane.b32.xlu0 %v1049, 112
        %v2660 = vpop.permute.xlu0 %2659
        %2661 = vrot.lane.b32.xlu0 %v1049, 80
        %v2662 = vpop.permute.xlu0 %2661
        %v2663 = vsel %vm1065, %v2660, 0
        %v2665 = vsel %vm1065, %v2662, 0
        %2667 = vmatprep.subr.mxu0 0.0
        %2668 = vmatpush1.xpose.msra.mxu0 %v2665
        %2669 = vmatprep.subr.mxu0 0.0
        %2670 = vmatpush1.xpose.msra.mxu0 0.0
        %2671 = vmatprep.subr.mxu0 0.0
        %2672 = vmatpush1.xpose.msra.mxu0 0.0
        %2673 = vmatprep.subr.mxu0 0.0
        %2674 = vmatpush1.xpose.msra.mxu0 0.0
        %2675 = vmatprep.subr.mxu0 0.0
        %2676 = vmatpush1.xpose.msra.mxu0 0.0
        %2677 = vmatprep.subr.mxu0 0.0
        %2678 = vmatpush1.xpose.msra.mxu0 0.0
        %2679 = vmatprep.subr.mxu0 0.0
        %2680 = vmatpush1.xpose.msra.mxu0 0.0
        %2681 = vmatprep.subr.mxu0 0.0
        %2682 = vmatpush1.xpose.msra.mxu0 0.0
        %2683 = vmatprep.subr.mxu0 0.0
        %2684 = vmatpush1.xpose.msra.mxu0 0.0
        %2685 = vmatprep.subr.mxu0 0.0
        %2686 = vmatpush1.xpose.msra.mxu0 0.0
        %2687 = vmatprep.subr.mxu0 0.0
        %2688 = vmatpush1.xpose.msra.mxu0 0.0
        %2689 = vmatprep.subr.mxu0 0.0
        %2690 = vmatpush1.xpose.msra.mxu0 0.0
        %2691 = vmatprep.subr.mxu0 0.0
        %2692 = vmatpush1.xpose.msra.mxu0 0.0
        %2693 = vmatprep.subr.mxu0 0.0
        %2694 = vmatpush1.xpose.msra.mxu0 0.0
        %2695 = vmatprep.subr.mxu0 0.0
        %2696 = vmatpush1.xpose.msra.mxu0 0.0
        %2697 = vmatprep.subr.mxu0 0.0
        %2698 = vmatpush1.xpose.msra.mxu0 0.0
        %2699 = vmatprep.subr.mxu0 0.0
        %2700 = vmatpush1.xpose.msra.mxu0 0.0
        %2701 = vmatprep.subr.mxu0 0.0
        %2702 = vmatpush1.xpose.msra.mxu0 0.0
        %2703 = vmatprep.subr.mxu0 0.0
        %2704 = vmatpush1.xpose.msra.mxu0 0.0
        %2705 = vmatprep.subr.mxu0 0.0
        %2706 = vmatpush1.xpose.msra.mxu0 0.0
        %2707 = vmatprep.subr.mxu0 0.0
        %2708 = vmatpush1.xpose.msra.mxu0 0.0
        %2709 = vmatprep.subr.mxu0 0.0
        %2710 = vmatpush1.xpose.msra.mxu0 0.0
        %2711 = vmatprep.subr.mxu0 0.0
        %2712 = vmatpush1.xpose.msra.mxu0 0.0
        %2713 = vmatprep.subr.mxu0 0.0
        %2714 = vmatpush1.xpose.msra.mxu0 0.0
        %2715 = vmatprep.subr.mxu0 0.0
        %2716 = vmatpush1.xpose.msra.mxu0 0.0
        %2717 = vmatprep.subr.mxu0 0.0
        %2718 = vmatpush1.xpose.msra.mxu0 0.0
        %2719 = vmatprep.subr.mxu0 0.0
        %2720 = vmatpush1.xpose.msra.mxu0 0.0
        %2721 = vmatprep.subr.mxu0 0.0
        %2722 = vmatpush1.xpose.msra.mxu0 0.0
        %2723 = vmatprep.subr.mxu0 0.0
        %2724 = vmatpush1.xpose.msra.mxu0 0.0
        %2725 = vmatprep.subr.mxu0 0.0
        %2726 = vmatpush1.xpose.msra.mxu0 0.0
        %2727 = vmatprep.subr.mxu0 0.0
        %2728 = vmatpush1.xpose.msra.mxu0 0.0
        %2729 = vmatprep.subr.mxu0 0.0
        %2730 = vmatpush1.xpose.msra.mxu0 0.0
        %2731 = vmatprep.mubr.f32.mxu0 0.0
        %2732 = vmatmul.mubr.f32.gmra.mrb[0].mxu0 %v2663
        %v2733 = vpop.f32.mrb[0].mxu0
        %v2734 = vadd.f32 0.0, %v2733
        %v2735 = vpop.f32.mrb[0].mxu0
        %2736 = vdwg.mxu0
        %2737 = vrot.lane.b32.xlu0 %v1054, 112
        %v2738 = vpop.permute.xlu0 %2737
        %2739 = vrot.lane.b32.xlu0 %v1054, 80
        %v2740 = vpop.permute.xlu0 %2739
        %v2741 = vsel %vm1065, %v2738, 0
        %v2743 = vsel %vm1065, %v2740, 0
        %2745 = vmatprep.subr.mxu0 0.0
        %2746 = vmatpush1.xpose.msra.mxu0 %v2743
        %2747 = vmatprep.subr.mxu0 0.0
        %2748 = vmatpush1.xpose.msra.mxu0 0.0
        %2749 = vmatprep.subr.mxu0 0.0
        %2750 = vmatpush1.xpose.msra.mxu0 0.0
        %2751 = vmatprep.subr.mxu0 0.0
        %2752 = vmatpush1.xpose.msra.mxu0 0.0
        %2753 = vmatprep.subr.mxu0 0.0
        %2754 = vmatpush1.xpose.msra.mxu0 0.0
        %2755 = vmatprep.subr.mxu0 0.0
        %2756 = vmatpush1.xpose.msra.mxu0 0.0
        %2757 = vmatprep.subr.mxu0 0.0
        %2758 = vmatpush1.xpose.msra.mxu0 0.0
        %2759 = vmatprep.subr.mxu0 0.0
        %2760 = vmatpush1.xpose.msra.mxu0 0.0
        %2761 = vmatprep.subr.mxu0 0.0
        %2762 = vmatpush1.xpose.msra.mxu0 0.0
        %2763 = vmatprep.subr.mxu0 0.0
        %2764 = vmatpush1.xpose.msra.mxu0 0.0
        %2765 = vmatprep.subr.mxu0 0.0
        %2766 = vmatpush1.xpose.msra.mxu0 0.0
        %2767 = vmatprep.subr.mxu0 0.0
        %2768 = vmatpush1.xpose.msra.mxu0 0.0
        %2769 = vmatprep.subr.mxu0 0.0
        %2770 = vmatpush1.xpose.msra.mxu0 0.0
        %2771 = vmatprep.subr.mxu0 0.0
        %2772 = vmatpush1.xpose.msra.mxu0 0.0
        %2773 = vmatprep.subr.mxu0 0.0
        %2774 = vmatpush1.xpose.msra.mxu0 0.0
        %2775 = vmatprep.subr.mxu0 0.0
        %2776 = vmatpush1.xpose.msra.mxu0 0.0
        %2777 = vmatprep.subr.mxu0 0.0
        %2778 = vmatpush1.xpose.msra.mxu0 0.0
        %2779 = vmatprep.subr.mxu0 0.0
        %2780 = vmatpush1.xpose.msra.mxu0 0.0
        %2781 = vmatprep.subr.mxu0 0.0
        %2782 = vmatpush1.xpose.msra.mxu0 0.0
        %2783 = vmatprep.subr.mxu0 0.0
        %2784 = vmatpush1.xpose.msra.mxu0 0.0
        %2785 = vmatprep.subr.mxu0 0.0
        %2786 = vmatpush1.xpose.msra.mxu0 0.0
        %2787 = vmatprep.subr.mxu0 0.0
        %2788 = vmatpush1.xpose.msra.mxu0 0.0
        %2789 = vmatprep.subr.mxu0 0.0
        %2790 = vmatpush1.xpose.msra.mxu0 0.0
        %2791 = vmatprep.subr.mxu0 0.0
        %2792 = vmatpush1.xpose.msra.mxu0 0.0
        %2793 = vmatprep.subr.mxu0 0.0
        %2794 = vmatpush1.xpose.msra.mxu0 0.0
        %2795 = vmatprep.subr.mxu0 0.0
        %2796 = vmatpush1.xpose.msra.mxu0 0.0
        %2797 = vmatprep.subr.mxu0 0.0
        %2798 = vmatpush1.xpose.msra.mxu0 0.0
        %2799 = vmatprep.subr.mxu0 0.0
        %2800 = vmatpush1.xpose.msra.mxu0 0.0
        %2801 = vmatprep.subr.mxu0 0.0
        %2802 = vmatpush1.xpose.msra.mxu0 0.0
        %2803 = vmatprep.subr.mxu0 0.0
        %2804 = vmatpush1.xpose.msra.mxu0 0.0
        %2805 = vmatprep.subr.mxu0 0.0
        %2806 = vmatpush1.xpose.msra.mxu0 0.0
        %2807 = vmatprep.subr.mxu0 0.0
        %2808 = vmatpush1.xpose.msra.mxu0 0.0
        %2809 = vmatprep.mubr.f32.mxu0 0.0
        %2810 = vmatmul.mubr.f32.gmra.mrb[0].mxu0 %v2741
        %v2811 = vpop.f32.mrb[0].mxu0
        %v2812 = vadd.f32 0.0, %v2811
        %v2813 = vpop.f32.mrb[0].mxu0
        %2814 = vdwg.mxu0
        %2815 = vrot.lane.b32.xlu0 %v1059, 112
        %v2816 = vpop.permute.xlu0 %2815
        %2817 = vrot.lane.b32.xlu0 %v1059, 80
        %v2818 = vpop.permute.xlu0 %2817
        %v2819 = vsel %vm1065, %v2816, 0
        %v2821 = vsel %vm1065, %v2818, 0
        %2823 = vmatprep.subr.mxu0 0.0
        %2824 = vmatpush1.xpose.msra.mxu0 %v2821
        %2825 = vmatprep.subr.mxu0 0.0
        %2826 = vmatpush1.xpose.msra.mxu0 0.0
        %2827 = vmatprep.subr.mxu0 0.0
        %2828 = vmatpush1.xpose.msra.mxu0 0.0
        %2829 = vmatprep.subr.mxu0 0.0
        %2830 = vmatpush1.xpose.msra.mxu0 0.0
        %2831 = vmatprep.subr.mxu0 0.0
        %2832 = vmatpush1.xpose.msra.mxu0 0.0
        %2833 = vmatprep.subr.mxu0 0.0
        %2834 = vmatpush1.xpose.msra.mxu0 0.0
        %2835 = vmatprep.subr.mxu0 0.0
        %2836 = vmatpush1.xpose.msra.mxu0 0.0
        %2837 = vmatprep.subr.mxu0 0.0
        %2838 = vmatpush1.xpose.msra.mxu0 0.0
        %2839 = vmatprep.subr.mxu0 0.0
        %2840 = vmatpush1.xpose.msra.mxu0 0.0
        %2841 = vmatprep.subr.mxu0 0.0
        %2842 = vmatpush1.xpose.msra.mxu0 0.0
        %2843 = vmatprep.subr.mxu0 0.0
        %2844 = vmatpush1.xpose.msra.mxu0 0.0
        %2845 = vmatprep.subr.mxu0 0.0
        %2846 = vmatpush1.xpose.msra.mxu0 0.0
        %2847 = vmatprep.subr.mxu0 0.0
        %2848 = vmatpush1.xpose.msra.mxu0 0.0
        %2849 = vmatprep.subr.mxu0 0.0
        %2850 = vmatpush1.xpose.msra.mxu0 0.0
        %2851 = vmatprep.subr.mxu0 0.0
        %2852 = vmatpush1.xpose.msra.mxu0 0.0
        %2853 = vmatprep.subr.mxu0 0.0
        %2854 = vmatpush1.xpose.msra.mxu0 0.0
        %2855 = vmatprep.subr.mxu0 0.0
        %2856 = vmatpush1.xpose.msra.mxu0 0.0
        %2857 = vmatprep.subr.mxu0 0.0
        %2858 = vmatpush1.xpose.msra.mxu0 0.0
        %2859 = vmatprep.subr.mxu0 0.0
        %2860 = vmatpush1.xpose.msra.mxu0 0.0
        %2861 = vmatprep.subr.mxu0 0.0
        %2862 = vmatpush1.xpose.msra.mxu0 0.0
        %2863 = vmatprep.subr.mxu0 0.0
        %2864 = vmatpush1.xpose.msra.mxu0 0.0
        %2865 = vmatprep.subr.mxu0 0.0
        %2866 = vmatpush1.xpose.msra.mxu0 0.0
        %2867 = vmatprep.subr.mxu0 0.0
        %2868 = vmatpush1.xpose.msra.mxu0 0.0
        %2869 = vmatprep.subr.mxu0 0.0
        %2870 = vmatpush1.xpose.msra.mxu0 0.0
        %2871 = vmatprep.subr.mxu0 0.0
        %2872 = vmatpush1.xpose.msra.mxu0 0.0
        %2873 = vmatprep.subr.mxu0 0.0
        %2874 = vmatpush1.xpose.msra.mxu0 0.0
        %2875 = vmatprep.subr.mxu0 0.0
        %2876 = vmatpush1.xpose.msra.mxu0 0.0
        %2877 = vmatprep.subr.mxu0 0.0
        %2878 = vmatpush1.xpose.msra.mxu0 0.0
        %2879 = vmatprep.subr.mxu0 0.0
        %2880 = vmatpush1.xpose.msra.mxu0 0.0
        %2881 = vmatprep.subr.mxu0 0.0
        %2882 = vmatpush1.xpose.msra.mxu0 0.0
        %2883 = vmatprep.subr.mxu0 0.0
        %2884 = vmatpush1.xpose.msra.mxu0 0.0
        %2885 = vmatprep.subr.mxu0 0.0
        %2886 = vmatpush1.xpose.msra.mxu0 0.0
        %2887 = vmatprep.mubr.f32.mxu0 0.0
        %2888 = vmatmul.mubr.f32.gmra.mrb[0].mxu0 %v2819
        %v2889 = vpop.f32.mrb[0].mxu0
        %v2890 = vadd.f32 0.0, %v2889
        %v2891 = vpop.f32.mrb[0].mxu0
        %2892 = vdwg.mxu0
        %v2893 = vmul.f32 %v2656, 0.35355338
        %v2894 = vmul.f32 %v2734, 0.35355338
        %v2895 = vmul.f32 %v2812, 0.35355338
        %v2896 = vmul.f32 %v2890, 0.35355338
        %v2897 = vsel %vm1065, %v2893, -inf
        %2898 = vmax.xlane.f32.xlu0 %v2897
        %v2899 = vpop.xlane.xlu0 %2898
        %v2900 = vsel %vm1065, %v2894, -inf
        %2901 = vmax.xlane.f32.xlu0 %v2900
        %v2902 = vpop.xlane.xlu0 %2901
        %v2903 = vsel %vm1065, %v2895, -inf
        %2904 = vmax.xlane.f32.xlu0 %v2903
        %v2905 = vpop.xlane.xlu0 %2904
        %v2906 = vsel %vm1065, %v2896, -inf
        %2907 = vmax.xlane.f32.xlu0 %v2906
        %v2908 = vpop.xlane.xlu0 %2907
        %v2909 = vsub.f32 %v2893, %v2899
        %v2910 = vsub.f32 %v2894, %v2902
        %v2911 = vsub.f32 %v2895, %v2905
        %v2912 = vsub.f32 %v2896, %v2908
        %v2913 = vmul.f32 %v2909, 1.442695
        %v2914 = vpow.pop %v2913
        %v2915 = vmul.f32 %v2910, 1.442695
        %v2916 = vpow.pop %v2915
        %v2917 = vmul.f32 %v2911, 1.442695
        %v2918 = vpow.pop %v2917
        %v2919 = vmul.f32 %v2912, 1.442695
        %v2920 = vpow.pop %v2919
        %v2921 = vsel %vm1065, %v2914, 0.0
        %2922 = vadd.xlane.f32.xlu0 %v2921
        %v2923 = vpop.xlane.xlu0 %2922
        %v2924 = vsel %vm1065, %v2916, 0.0
        %2925 = vadd.xlane.f32.xlu0 %v2924
        %v2926 = vpop.xlane.xlu0 %2925
        %v2927 = vsel %vm1065, %v2918, 0.0
        %2928 = vadd.xlane.f32.xlu0 %v2927
        %v2929 = vpop.xlane.xlu0 %2928
        %v2930 = vsel %vm1065, %v2920, 0.0
        %2931 = vadd.xlane.f32.xlu0 %v2930
        %v2932 = vpop.xlane.xlu0 %2931
        %v2933 = vrcp.pop %v2923
        %v2934 = vrcp.pop %v2926
        %v2935 = vrcp.pop %v2929
        %v2936 = vrcp.pop %v2932
        %v2937 = vmul.f32 %v2914, %v2933
        %v2938 = vmul.f32 %v2916, %v2934
        %v2939 = vmul.f32 %v2918, %v2935
        %v2940 = vmul.f32 %v2920, %v2936
        %2941 = vrot.lane.b32.xlu0 %v1044, 48
        %v2942 = vpop.permute.xlu0 %2941
        %v2945 = vsel %vm1065, %v2937, 0
        %2947 = vmatprep.subr.mxu0 0.0
        %2948 = vmatpush1.msra.mxu0 %v2942
        %2949 = vmatprep.subr.mxu0 0.0
        %2950 = vmatpush1.msra.mxu0 0.0
        %2951 = vmatprep.subr.mxu0 0.0
        %2952 = vmatpush1.msra.mxu0 0.0
        %2953 = vmatprep.subr.mxu0 0.0
        %2954 = vmatpush1.msra.mxu0 0.0
        %2955 = vmatprep.subr.mxu0 0.0
        %2956 = vmatpush1.msra.mxu0 0.0
        %2957 = vmatprep.subr.mxu0 0.0
        %2958 = vmatpush1.msra.mxu0 0.0
        %2959 = vmatprep.subr.mxu0 0.0
        %2960 = vmatpush1.msra.mxu0 0.0
        %2961 = vmatprep.subr.mxu0 0.0
        %2962 = vmatpush1.msra.mxu0 0.0
        %2963 = vmatprep.subr.mxu0 0.0
        %2964 = vmatpush1.msra.mxu0 0.0
        %2965 = vmatprep.subr.mxu0 0.0
        %2966 = vmatpush1.msra.mxu0 0.0
        %2967 = vmatprep.subr.mxu0 0.0
        %2968 = vmatpush1.msra.mxu0 0.0
        %2969 = vmatprep.subr.mxu0 0.0
        %2970 = vmatpush1.msra.mxu0 0.0
        %2971 = vmatprep.subr.mxu0 0.0
        %2972 = vmatpush1.msra.mxu0 0.0
        %2973 = vmatprep.subr.mxu0 0.0
        %2974 = vmatpush1.msra.mxu0 0.0
        %2975 = vmatprep.subr.mxu0 0.0
        %2976 = vmatpush1.msra.mxu0 0.0
        %2977 = vmatprep.subr.mxu0 0.0
        %2978 = vmatpush1.msra.mxu0 0.0
        %2979 = vmatprep.subr.mxu0 0.0
        %2980 = vmatpush1.msra.mxu0 0.0
        %2981 = vmatprep.subr.mxu0 0.0
        %2982 = vmatpush1.msra.mxu0 0.0
        %2983 = vmatprep.subr.mxu0 0.0
        %2984 = vmatpush1.msra.mxu0 0.0
        %2985 = vmatprep.subr.mxu0 0.0
        %2986 = vmatpush1.msra.mxu0 0.0
        %2987 = vmatprep.subr.mxu0 0.0
        %2988 = vmatpush1.msra.mxu0 0.0
        %2989 = vmatprep.subr.mxu0 0.0
        %2990 = vmatpush1.msra.mxu0 0.0
        %2991 = vmatprep.subr.mxu0 0.0
        %2992 = vmatpush1.msra.mxu0 0.0
        %2993 = vmatprep.subr.mxu0 0.0
        %2994 = vmatpush1.msra.mxu0 0.0
        %2995 = vmatprep.subr.mxu0 0.0
        %2996 = vmatpush1.msra.mxu0 0.0
        %2997 = vmatprep.subr.mxu0 0.0
        %2998 = vmatpush1.msra.mxu0 0.0
        %2999 = vmatprep.subr.mxu0 0.0
        %3000 = vmatpush1.msra.mxu0 0.0
        %3001 = vmatprep.subr.mxu0 0.0
        %3002 = vmatpush1.msra.mxu0 0.0
        %3003 = vmatprep.subr.mxu0 0.0
        %3004 = vmatpush1.msra.mxu0 0.0
        %3005 = vmatprep.subr.mxu0 0.0
        %3006 = vmatpush1.msra.mxu0 0.0
        %3007 = vmatprep.subr.mxu0 0.0
        %3008 = vmatpush1.msra.mxu0 0.0
        %3009 = vmatprep.subr.mxu0 0.0
        %3010 = vmatpush1.msra.mxu0 0.0
        %3011 = vmatprep.mubr.f32.mxu0 0.0
        %3012 = vmatmul.mubr.f32.gmra.mrb[0].mxu0 %v2945
        %v3013 = vpop.f32.mrb[0].mxu0
        %v3014 = vadd.f32 0.0, %v3013
        %v3015 = vpop.f32.mrb[0].mxu0
        %3016 = vdwg.mxu0
        %3017 = vrot.lane.b32.xlu0 %v1049, 48
        %v3018 = vpop.permute.xlu0 %3017
        %v3021 = vsel %vm1065, %v2938, 0
        %3023 = vmatprep.subr.mxu0 0.0
        %3024 = vmatpush1.msra.mxu0 %v3018
        %3025 = vmatprep.subr.mxu0 0.0
        %3026 = vmatpush1.msra.mxu0 0.0
        %3027 = vmatprep.subr.mxu0 0.0
        %3028 = vmatpush1.msra.mxu0 0.0
        %3029 = vmatprep.subr.mxu0 0.0
        %3030 = vmatpush1.msra.mxu0 0.0
        %3031 = vmatprep.subr.mxu0 0.0
        %3032 = vmatpush1.msra.mxu0 0.0
        %3033 = vmatprep.subr.mxu0 0.0
        %3034 = vmatpush1.msra.mxu0 0.0
        %3035 = vmatprep.subr.mxu0 0.0
        %3036 = vmatpush1.msra.mxu0 0.0
        %3037 = vmatprep.subr.mxu0 0.0
        %3038 = vmatpush1.msra.mxu0 0.0
        %3039 = vmatprep.subr.mxu0 0.0
        %3040 = vmatpush1.msra.mxu0 0.0
        %3041 = vmatprep.subr.mxu0 0.0
        %3042 = vmatpush1.msra.mxu0 0.0
        %3043 = vmatprep.subr.mxu0 0.0
        %3044 = vmatpush1.msra.mxu0 0.0
        %3045 = vmatprep.subr.mxu0 0.0
        %3046 = vmatpush1.msra.mxu0 0.0
        %3047 = vmatprep.subr.mxu0 0.0
        %3048 = vmatpush1.msra.mxu0 0.0
        %3049 = vmatprep.subr.mxu0 0.0
        %3050 = vmatpush1.msra.mxu0 0.0
        %3051 = vmatprep.subr.mxu0 0.0
        %3052 = vmatpush1.msra.mxu0 0.0
        %3053 = vmatprep.subr.mxu0 0.0
        %3054 = vmatpush1.msra.mxu0 0.0
        %3055 = vmatprep.subr.mxu0 0.0
        %3056 = vmatpush1.msra.mxu0 0.0
        %3057 = vmatprep.subr.mxu0 0.0
        %3058 = vmatpush1.msra.mxu0 0.0
        %3059 = vmatprep.subr.mxu0 0.0
        %3060 = vmatpush1.msra.mxu0 0.0
        %3061 = vmatprep.subr.mxu0 0.0
        %3062 = vmatpush1.msra.mxu0 0.0
        %3063 = vmatprep.subr.mxu0 0.0
        %3064 = vmatpush1.msra.mxu0 0.0
        %3065 = vmatprep.subr.mxu0 0.0
        %3066 = vmatpush1.msra.mxu0 0.0
        %3067 = vmatprep.subr.mxu0 0.0
        %3068 = vmatpush1.msra.mxu0 0.0
        %3069 = vmatprep.subr.mxu0 0.0
        %3070 = vmatpush1.msra.mxu0 0.0
        %3071 = vmatprep.subr.mxu0 0.0
        %3072 = vmatpush1.msra.mxu0 0.0
        %3073 = vmatprep.subr.mxu0 0.0
        %3074 = vmatpush1.msra.mxu0 0.0
        %3075 = vmatprep.subr.mxu0 0.0
        %3076 = vmatpush1.msra.mxu0 0.0
        %3077 = vmatprep.subr.mxu0 0.0
        %3078 = vmatpush1.msra.mxu0 0.0
        %3079 = vmatprep.subr.mxu0 0.0
        %3080 = vmatpush1.msra.mxu0 0.0
        %3081 = vmatprep.subr.mxu0 0.0
        %3082 = vmatpush1.msra.mxu0 0.0
        %3083 = vmatprep.subr.mxu0 0.0
        %3084 = vmatpush1.msra.mxu0 0.0
        %3085 = vmatprep.subr.mxu0 0.0
        %3086 = vmatpush1.msra.mxu0 0.0
        %3087 = vmatprep.mubr.f32.mxu0 0.0
        %3088 = vmatmul.mubr.f32.gmra.mrb[0].mxu0 %v3021
        %v3089 = vpop.f32.mrb[0].mxu0
        %v3090 = vadd.f32 0.0, %v3089
        %v3091 = vpop.f32.mrb[0].mxu0
        %3092 = vdwg.mxu0
        %3093 = vrot.lane.b32.xlu0 %v1054, 48
        %v3094 = vpop.permute.xlu0 %3093
        %v3097 = vsel %vm1065, %v2939, 0
        %3099 = vmatprep.subr.mxu0 0.0
        %3100 = vmatpush1.msra.mxu0 %v3094
        %3101 = vmatprep.subr.mxu0 0.0
        %3102 = vmatpush1.msra.mxu0 0.0
        %3103 = vmatprep.subr.mxu0 0.0
        %3104 = vmatpush1.msra.mxu0 0.0
        %3105 = vmatprep.subr.mxu0 0.0
        %3106 = vmatpush1.msra.mxu0 0.0
        %3107 = vmatprep.subr.mxu0 0.0
        %3108 = vmatpush1.msra.mxu0 0.0
        %3109 = vmatprep.subr.mxu0 0.0
        %3110 = vmatpush1.msra.mxu0 0.0
        %3111 = vmatprep.subr.mxu0 0.0
        %3112 = vmatpush1.msra.mxu0 0.0
        %3113 = vmatprep.subr.mxu0 0.0
        %3114 = vmatpush1.msra.mxu0 0.0
        %3115 = vmatprep.subr.mxu0 0.0
        %3116 = vmatpush1.msra.mxu0 0.0
        %3117 = vmatprep.subr.mxu0 0.0
        %3118 = vmatpush1.msra.mxu0 0.0
        %3119 = vmatprep.subr.mxu0 0.0
        %3120 = vmatpush1.msra.mxu0 0.0
        %3121 = vmatprep.subr.mxu0 0.0
        %3122 = vmatpush1.msra.mxu0 0.0
        %3123 = vmatprep.subr.mxu0 0.0
        %3124 = vmatpush1.msra.mxu0 0.0
        %3125 = vmatprep.subr.mxu0 0.0
        %3126 = vmatpush1.msra.mxu0 0.0
        %3127 = vmatprep.subr.mxu0 0.0
        %3128 = vmatpush1.msra.mxu0 0.0
        %3129 = vmatprep.subr.mxu0 0.0
        %3130 = vmatpush1.msra.mxu0 0.0
        %3131 = vmatprep.subr.mxu0 0.0
        %3132 = vmatpush1.msra.mxu0 0.0
        %3133 = vmatprep.subr.mxu0 0.0
        %3134 = vmatpush1.msra.mxu0 0.0
        %3135 = vmatprep.subr.mxu0 0.0
        %3136 = vmatpush1.msra.mxu0 0.0
        %3137 = vmatprep.subr.mxu0 0.0
        %3138 = vmatpush1.msra.mxu0 0.0
        %3139 = vmatprep.subr.mxu0 0.0
        %3140 = vmatpush1.msra.mxu0 0.0
        %3141 = vmatprep.subr.mxu0 0.0
        %3142 = vmatpush1.msra.mxu0 0.0
        %3143 = vmatprep.subr.mxu0 0.0
        %3144 = vmatpush1.msra.mxu0 0.0
        %3145 = vmatprep.subr.mxu0 0.0
        %3146 = vmatpush1.msra.mxu0 0.0
        %3147 = vmatprep.subr.mxu0 0.0
        %3148 = vmatpush1.msra.mxu0 0.0
        %3149 = vmatprep.subr.mxu0 0.0
        %3150 = vmatpush1.msra.mxu0 0.0
        %3151 = vmatprep.subr.mxu0 0.0
        %3152 = vmatpush1.msra.mxu0 0.0
        %3153 = vmatprep.subr.mxu0 0.0
        %3154 = vmatpush1.msra.mxu0 0.0
        %3155 = vmatprep.subr.mxu0 0.0
        %3156 = vmatpush1.msra.mxu0 0.0
        %3157 = vmatprep.subr.mxu0 0.0
        %3158 = vmatpush1.msra.mxu0 0.0
        %3159 = vmatprep.subr.mxu0 0.0
        %3160 = vmatpush1.msra.mxu0 0.0
        %3161 = vmatprep.subr.mxu0 0.0
        %3162 = vmatpush1.msra.mxu0 0.0
        %3163 = vmatprep.mubr.f32.mxu0 0.0
        %3164 = vmatmul.mubr.f32.gmra.mrb[0].mxu0 %v3097
        %v3165 = vpop.f32.mrb[0].mxu0
        %v3166 = vadd.f32 0.0, %v3165
        %v3167 = vpop.f32.mrb[0].mxu0
        %3168 = vdwg.mxu0
        %3169 = vrot.lane.b32.xlu0 %v1059, 48
        %v3170 = vpop.permute.xlu0 %3169
        %v3173 = vsel %vm1065, %v2940, 0
        %3175 = vmatprep.subr.mxu0 0.0
        %3176 = vmatpush1.msra.mxu0 %v3170
        %3177 = vmatprep.subr.mxu0 0.0
        %3178 = vmatpush1.msra.mxu0 0.0
        %3179 = vmatprep.subr.mxu0 0.0
        %3180 = vmatpush1.msra.mxu0 0.0
        %3181 = vmatprep.subr.mxu0 0.0
        %3182 = vmatpush1.msra.mxu0 0.0
        %3183 = vmatprep.subr.mxu0 0.0
        %3184 = vmatpush1.msra.mxu0 0.0
        %3185 = vmatprep.subr.mxu0 0.0
        %3186 = vmatpush1.msra.mxu0 0.0
        %3187 = vmatprep.subr.mxu0 0.0
        %3188 = vmatpush1.msra.mxu0 0.0
        %3189 = vmatprep.subr.mxu0 0.0
        %3190 = vmatpush1.msra.mxu0 0.0
        %3191 = vmatprep.subr.mxu0 0.0
        %3192 = vmatpush1.msra.mxu0 0.0
        %3193 = vmatprep.subr.mxu0 0.0
        %3194 = vmatpush1.msra.mxu0 0.0
        %3195 = vmatprep.subr.mxu0 0.0
        %3196 = vmatpush1.msra.mxu0 0.0
        %3197 = vmatprep.subr.mxu0 0.0
        %3198 = vmatpush1.msra.mxu0 0.0
        %3199 = vmatprep.subr.mxu0 0.0
        %3200 = vmatpush1.msra.mxu0 0.0
        %3201 = vmatprep.subr.mxu0 0.0
        %3202 = vmatpush1.msra.mxu0 0.0
        %3203 = vmatprep.subr.mxu0 0.0
        %3204 = vmatpush1.msra.mxu0 0.0
        %3205 = vmatprep.subr.mxu0 0.0
        %3206 = vmatpush1.msra.mxu0 0.0
        %3207 = vmatprep.subr.mxu0 0.0
        %3208 = vmatpush1.msra.mxu0 0.0
        %3209 = vmatprep.subr.mxu0 0.0
        %3210 = vmatpush1.msra.mxu0 0.0
        %3211 = vmatprep.subr.mxu0 0.0
        %3212 = vmatpush1.msra.mxu0 0.0
        %3213 = vmatprep.subr.mxu0 0.0
        %3214 = vmatpush1.msra.mxu0 0.0
        %3215 = vmatprep.subr.mxu0 0.0
        %3216 = vmatpush1.msra.mxu0 0.0
        %3217 = vmatprep.subr.mxu0 0.0
        %3218 = vmatpush1.msra.mxu0 0.0
        %3219 = vmatprep.subr.mxu0 0.0
        %3220 = vmatpush1.msra.mxu0 0.0
        %3221 = vmatprep.subr.mxu0 0.0
        %3222 = vmatpush1.msra.mxu0 0.0
        %3223 = vmatprep.subr.mxu0 0.0
        %3224 = vmatpush1.msra.mxu0 0.0
        %3225 = vmatprep.subr.mxu0 0.0
        %3226 = vmatpush1.msra.mxu0 0.0
        %3227 = vmatprep.subr.mxu0 0.0
        %3228 = vmatpush1.msra.mxu0 0.0
        %3229 = vmatprep.subr.mxu0 0.0
        %3230 = vmatpush1.msra.mxu0 0.0
        %3231 = vmatprep.subr.mxu0 0.0
        %3232 = vmatpush1.msra.mxu0 0.0
        %3233 = vmatprep.subr.mxu0 0.0
        %3234 = vmatpush1.msra.mxu0 0.0
        %3235 = vmatprep.subr.mxu0 0.0
        %3236 = vmatpush1.msra.mxu0 0.0
        %3237 = vmatprep.subr.mxu0 0.0
        %3238 = vmatpush1.msra.mxu0 0.0
        %3239 = vmatprep.mubr.f32.mxu0 0.0
        %3240 = vmatmul.mubr.f32.gmra.mrb[0].mxu0 %v3173
        %v3241 = vpop.f32.mrb[0].mxu0
        %v3242 = vadd.f32 0.0, %v3241
        %v3243 = vpop.f32.mrb[0].mxu0
        %3244 = vdwg.mxu0
        %v3246 = vsel %vm1065, %v3014, 0
        %v3249 = vsel %vm1065, %v3090, 0
        %v3252 = vsel %vm1065, %v3166, 0
        %v3255 = vsel %vm1065, %v3242, 0
        %3257 = vmatprep.subr.mxu0 0.0
        %3258 = vmatpush1.msra.mxu0 %v888
        %3259 = vmatprep.subr.mxu0 0.0
        %3260 = vmatpush1.msra.mxu0 0.0
        %3261 = vmatprep.subr.mxu0 0.0
        %3262 = vmatpush1.msra.mxu0 0.0
        %3263 = vmatprep.subr.mxu0 0.0
        %3264 = vmatpush1.msra.mxu0 0.0
        %3265 = vmatprep.subr.mxu0 0.0
        %3266 = vmatpush1.msra.mxu0 0.0
        %3267 = vmatprep.subr.mxu0 0.0
        %3268 = vmatpush1.msra.mxu0 0.0
        %3269 = vmatprep.subr.mxu0 0.0
        %3270 = vmatpush1.msra.mxu0 0.0
        %3271 = vmatprep.subr.mxu0 0.0
        %3272 = vmatpush1.msra.mxu0 0.0
        %3273 = vmatprep.subr.mxu0 0.0
        %3274 = vmatpush1.msra.mxu0 0.0
        %3275 = vmatprep.subr.mxu0 0.0
        %3276 = vmatpush1.msra.mxu0 0.0
        %3277 = vmatprep.subr.mxu0 0.0
        %3278 = vmatpush1.msra.mxu0 0.0
        %3279 = vmatprep.subr.mxu0 0.0
        %3280 = vmatpush1.msra.mxu0 0.0
        %3281 = vmatprep.subr.mxu0 0.0
        %3282 = vmatpush1.msra.mxu0 0.0
        %3283 = vmatprep.subr.mxu0 0.0
        %3284 = vmatpush1.msra.mxu0 0.0
        %3285 = vmatprep.subr.mxu0 0.0
        %3286 = vmatpush1.msra.mxu0 0.0
        %3287 = vmatprep.subr.mxu0 0.0
        %3288 = vmatpush1.msra.mxu0 0.0
        %3289 = vmatprep.subr.mxu0 0.0
        %3290 = vmatpush1.msra.mxu0 0.0
        %3291 = vmatprep.subr.mxu0 0.0
        %3292 = vmatpush1.msra.mxu0 0.0
        %3293 = vmatprep.subr.mxu0 0.0
        %3294 = vmatpush1.msra.mxu0 0.0
        %3295 = vmatprep.subr.mxu0 0.0
        %3296 = vmatpush1.msra.mxu0 0.0
        %3297 = vmatprep.subr.mxu0 0.0
        %3298 = vmatpush1.msra.mxu0 0.0
        %3299 = vmatprep.subr.mxu0 0.0
        %3300 = vmatpush1.msra.mxu0 0.0
        %3301 = vmatprep.subr.mxu0 0.0
        %3302 = vmatpush1.msra.mxu0 0.0
        %3303 = vmatprep.subr.mxu0 0.0
        %3304 = vmatpush1.msra.mxu0 0.0
        %3305 = vmatprep.subr.mxu0 0.0
        %3306 = vmatpush1.msra.mxu0 0.0
        %3307 = vmatprep.subr.mxu0 0.0
        %3308 = vmatpush1.msra.mxu0 0.0
        %3309 = vmatprep.subr.mxu0 0.0
        %3310 = vmatpush1.msra.mxu0 0.0
        %3311 = vmatprep.subr.mxu0 0.0
        %3312 = vmatpush1.msra.mxu0 0.0
        %3313 = vmatprep.subr.mxu0 0.0
        %3314 = vmatpush1.msra.mxu0 0.0
        %3315 = vmatprep.subr.mxu0 0.0
        %3316 = vmatpush1.msra.mxu0 0.0
        %3317 = vmatprep.subr.mxu0 0.0
        %3318 = vmatpush1.msra.mxu0 0.0
        %3319 = vmatprep.subr.mxu0 0.0
        %3320 = vmatpush1.msra.mxu0 0.0
        %3321 = vmatprep.mubr.f32.mxu0 0.0
        %3322 = vmatmul.mubr.f32.gmra.mrb[0].mxu0 %v3246
        %v3323 = vpop.f32.mrb[0].mxu0
        %v3324 = vadd.f32 0.0, %v3323
        %v3325 = vpop.f32.mrb[0].mxu0
        %3326 = vmatprep.mubr.f32.mxu0 0.0
        %3327 = vmatmul.mubr.f32.gmra.mrb[0].mxu0 %v3249
        %v3328 = vpop.f32.mrb[0].mxu0
        %v3329 = vadd.f32 0.0, %v3328
        %v3330 = vpop.f32.mrb[0].mxu0
        %3331 = vmatprep.mubr.f32.mxu0 0.0
        %3332 = vmatmul.mubr.f32.gmra.mrb[0].mxu0 %v3252
        %v3333 = vpop.f32.mrb[0].mxu0
        %v3334 = vadd.f32 0.0, %v3333
        %v3335 = vpop.f32.mrb[0].mxu0
        %3336 = vmatprep.mubr.f32.mxu0 0.0
        %3337 = vmatmul.mubr.f32.gmra.mrb[0].mxu0 %v3255
        %v3338 = vpop.f32.mrb[0].mxu0
        %v3339 = vadd.f32 0.0, %v3338
        %v3340 = vpop.f32.mrb[0].mxu0
        %3341 = vdwg.mxu0
        %v3342 = vadd.f32 %v2563, %v3324
        %v3343 = vadd.f32 %v2568, %v3329
        %v3344 = vadd.f32 %v2573, %v3334
        %v3345 = vadd.f32 %v2578, %v3339
        %3346 = vrot.lane.b32.xlu0 %v1044, 104
        %v3347 = vpop.permute.xlu0 %3346
        %3348 = vrot.lane.b32.xlu0 %v1044, 72
        %v3349 = vpop.permute.xlu0 %3348
        %v3350 = vsel %vm1065, %v3347, 0
        %v3352 = vsel %vm1065, %v3349, 0
        %3354 = vmatprep.subr.mxu0 0.0
        %3355 = vmatpush1.xpose.msra.mxu0 %v3352
        %3356 = vmatprep.subr.mxu0 0.0
        %3357 = vmatpush1.xpose.msra.mxu0 0.0
        %3358 = vmatprep.subr.mxu0 0.0
        %3359 = vmatpush1.xpose.msra.mxu0 0.0
        %3360 = vmatprep.subr.mxu0 0.0
        %3361 = vmatpush1.xpose.msra.mxu0 0.0
        %3362 = vmatprep.subr.mxu0 0.0
        %3363 = vmatpush1.xpose.msra.mxu0 0.0
        %3364 = vmatprep.subr.mxu0 0.0
        %3365 = vmatpush1.xpose.msra.mxu0 0.0
        %3366 = vmatprep.subr.mxu0 0.0
        %3367 = vmatpush1.xpose.msra.mxu0 0.0
        %3368 = vmatprep.subr.mxu0 0.0
        %3369 = vmatpush1.xpose.msra.mxu0 0.0
        %3370 = vmatprep.subr.mxu0 0.0
        %3371 = vmatpush1.xpose.msra.mxu0 0.0
        %3372 = vmatprep.subr.mxu0 0.0
        %3373 = vmatpush1.xpose.msra.mxu0 0.0
        %3374 = vmatprep.subr.mxu0 0.0
        %3375 = vmatpush1.xpose.msra.mxu0 0.0
        %3376 = vmatprep.subr.mxu0 0.0
        %3377 = vmatpush1.xpose.msra.mxu0 0.0
        %3378 = vmatprep.subr.mxu0 0.0
        %3379 = vmatpush1.xpose.msra.mxu0 0.0
        %3380 = vmatprep.subr.mxu0 0.0
        %3381 = vmatpush1.xpose.msra.mxu0 0.0
        %3382 = vmatprep.subr.mxu0 0.0
        %3383 = vmatpush1.xpose.msra.mxu0 0.0
        %3384 = vmatprep.subr.mxu0 0.0
        %3385 = vmatpush1.xpose.msra.mxu0 0.0
        %3386 = vmatprep.subr.mxu0 0.0
        %3387 = vmatpush1.xpose.msra.mxu0 0.0
        %3388 = vmatprep.subr.mxu0 0.0
        %3389 = vmatpush1.xpose.msra.mxu0 0.0
        %3390 = vmatprep.subr.mxu0 0.0
        %3391 = vmatpush1.xpose.msra.mxu0 0.0
        %3392 = vmatprep.subr.mxu0 0.0
        %3393 = vmatpush1.xpose.msra.mxu0 0.0
        %3394 = vmatprep.subr.mxu0 0.0
        %3395 = vmatpush1.xpose.msra.mxu0 0.0
        %3396 = vmatprep.subr.mxu0 0.0
        %3397 = vmatpush1.xpose.msra.mxu0 0.0
        %3398 = vmatprep.subr.mxu0 0.0
        %3399 = vmatpush1.xpose.msra.mxu0 0.0
        %3400 = vmatprep.subr.mxu0 0.0
        %3401 = vmatpush1.xpose.msra.mxu0 0.0
        %3402 = vmatprep.subr.mxu0 0.0
        %3403 = vmatpush1.xpose.msra.mxu0 0.0
        %3404 = vmatprep.subr.mxu0 0.0
        %3405 = vmatpush1.xpose.msra.mxu0 0.0
        %3406 = vmatprep.subr.mxu0 0.0
        %3407 = vmatpush1.xpose.msra.mxu0 0.0
        %3408 = vmatprep.subr.mxu0 0.0
        %3409 = vmatpush1.xpose.msra.mxu0 0.0
        %3410 = vmatprep.subr.mxu0 0.0
        %3411 = vmatpush1.xpose.msra.mxu0 0.0
        %3412 = vmatprep.subr.mxu0 0.0
        %3413 = vmatpush1.xpose.msra.mxu0 0.0
        %3414 = vmatprep.subr.mxu0 0.0
        %3415 = vmatpush1.xpose.msra.mxu0 0.0
        %3416 = vmatprep.subr.mxu0 0.0
        %3417 = vmatpush1.xpose.msra.mxu0 0.0
        %3418 = vmatprep.mubr.f32.mxu0 0.0
        %3419 = vmatmul.mubr.f32.gmra.mrb[0].mxu0 %v3350
        %v3420 = vpop.f32.mrb[0].mxu0
        %v3421 = vadd.f32 0.0, %v3420
        %v3422 = vpop.f32.mrb[0].mxu0
        %3423 = vdwg.mxu0
        %3424 = vrot.lane.b32.xlu0 %v1049, 104
        %v3425 = vpop.permute.xlu0 %3424
        %3426 = vrot.lane.b32.xlu0 %v1049, 72
        %v3427 = vpop.permute.xlu0 %3426
        %v3428 = vsel %vm1065, %v3425, 0
        %v3430 = vsel %vm1065, %v3427, 0
        %3432 = vmatprep.subr.mxu0 0.0
        %3433 = vmatpush1.xpose.msra.mxu0 %v3430
        %3434 = vmatprep.subr.mxu0 0.0
        %3435 = vmatpush1.xpose.msra.mxu0 0.0
        %3436 = vmatprep.subr.mxu0 0.0
        %3437 = vmatpush1.xpose.msra.mxu0 0.0
        %3438 = vmatprep.subr.mxu0 0.0
        %3439 = vmatpush1.xpose.msra.mxu0 0.0
        %3440 = vmatprep.subr.mxu0 0.0
        %3441 = vmatpush1.xpose.msra.mxu0 0.0
        %3442 = vmatprep.subr.mxu0 0.0
        %3443 = vmatpush1.xpose.msra.mxu0 0.0
        %3444 = vmatprep.subr.mxu0 0.0
        %3445 = vmatpush1.xpose.msra.mxu0 0.0
        %3446 = vmatprep.subr.mxu0 0.0
        %3447 = vmatpush1.xpose.msra.mxu0 0.0
        %3448 = vmatprep.subr.mxu0 0.0
        %3449 = vmatpush1.xpose.msra.mxu0 0.0
        %3450 = vmatprep.subr.mxu0 0.0
        %3451 = vmatpush1.xpose.msra.mxu0 0.0
        %3452 = vmatprep.subr.mxu0 0.0
        %3453 = vmatpush1.xpose.msra.mxu0 0.0
        %3454 = vmatprep.subr.mxu0 0.0
        %3455 = vmatpush1.xpose.msra.mxu0 0.0
        %3456 = vmatprep.subr.mxu0 0.0
        %3457 = vmatpush1.xpose.msra.mxu0 0.0
        %3458 = vmatprep.subr.mxu0 0.0
        %3459 = vmatpush1.xpose.msra.mxu0 0.0
        %3460 = vmatprep.subr.mxu0 0.0
        %3461 = vmatpush1.xpose.msra.mxu0 0.0
        %3462 = vmatprep.subr.mxu0 0.0
        %3463 = vmatpush1.xpose.msra.mxu0 0.0
        %3464 = vmatprep.subr.mxu0 0.0
        %3465 = vmatpush1.xpose.msra.mxu0 0.0
        %3466 = vmatprep.subr.mxu0 0.0
        %3467 = vmatpush1.xpose.msra.mxu0 0.0
        %3468 = vmatprep.subr.mxu0 0.0
        %3469 = vmatpush1.xpose.msra.mxu0 0.0
        %3470 = vmatprep.subr.mxu0 0.0
        %3471 = vmatpush1.xpose.msra.mxu0 0.0
        %3472 = vmatprep.subr.mxu0 0.0
        %3473 = vmatpush1.xpose.msra.mxu0 0.0
        %3474 = vmatprep.subr.mxu0 0.0
        %3475 = vmatpush1.xpose.msra.mxu0 0.0
        %3476 = vmatprep.subr.mxu0 0.0
        %3477 = vmatpush1.xpose.msra.mxu0 0.0
        %3478 = vmatprep.subr.mxu0 0.0
        %3479 = vmatpush1.xpose.msra.mxu0 0.0
        %3480 = vmatprep.subr.mxu0 0.0
        %3481 = vmatpush1.xpose.msra.mxu0 0.0
        %3482 = vmatprep.subr.mxu0 0.0
        %3483 = vmatpush1.xpose.msra.mxu0 0.0
        %3484 = vmatprep.subr.mxu0 0.0
        %3485 = vmatpush1.xpose.msra.mxu0 0.0
        %3486 = vmatprep.subr.mxu0 0.0
        %3487 = vmatpush1.xpose.msra.mxu0 0.0
        %3488 = vmatprep.subr.mxu0 0.0
        %3489 = vmatpush1.xpose.msra.mxu0 0.0
        %3490 = vmatprep.subr.mxu0 0.0
        %3491 = vmatpush1.xpose.msra.mxu0 0.0
        %3492 = vmatprep.subr.mxu0 0.0
        %3493 = vmatpush1.xpose.msra.mxu0 0.0
        %3494 = vmatprep.subr.mxu0 0.0
        %3495 = vmatpush1.xpose.msra.mxu0 0.0
        %3496 = vmatprep.mubr.f32.mxu0 0.0
        %3497 = vmatmul.mubr.f32.gmra.mrb[0].mxu0 %v3428
        %v3498 = vpop.f32.mrb[0].mxu0
        %v3499 = vadd.f32 0.0, %v3498
        %v3500 = vpop.f32.mrb[0].mxu0
        %3501 = vdwg.mxu0
        %3502 = vrot.lane.b32.xlu0 %v1054, 104
        %v3503 = vpop.permute.xlu0 %3502
        %3504 = vrot.lane.b32.xlu0 %v1054, 72
        %v3505 = vpop.permute.xlu0 %3504
        %v3506 = vsel %vm1065, %v3503, 0
        %v3508 = vsel %vm1065, %v3505, 0
        %3510 = vmatprep.subr.mxu0 0.0
        %3511 = vmatpush1.xpose.msra.mxu0 %v3508
        %3512 = vmatprep.subr.mxu0 0.0
        %3513 = vmatpush1.xpose.msra.mxu0 0.0
        %3514 = vmatprep.subr.mxu0 0.0
        %3515 = vmatpush1.xpose.msra.mxu0 0.0
        %3516 = vmatprep.subr.mxu0 0.0
        %3517 = vmatpush1.xpose.msra.mxu0 0.0
        %3518 = vmatprep.subr.mxu0 0.0
        %3519 = vmatpush1.xpose.msra.mxu0 0.0
        %3520 = vmatprep.subr.mxu0 0.0
        %3521 = vmatpush1.xpose.msra.mxu0 0.0
        %3522 = vmatprep.subr.mxu0 0.0
        %3523 = vmatpush1.xpose.msra.mxu0 0.0
        %3524 = vmatprep.subr.mxu0 0.0
        %3525 = vmatpush1.xpose.msra.mxu0 0.0
        %3526 = vmatprep.subr.mxu0 0.0
        %3527 = vmatpush1.xpose.msra.mxu0 0.0
        %3528 = vmatprep.subr.mxu0 0.0
        %3529 = vmatpush1.xpose.msra.mxu0 0.0
        %3530 = vmatprep.subr.mxu0 0.0
        %3531 = vmatpush1.xpose.msra.mxu0 0.0
        %3532 = vmatprep.subr.mxu0 0.0
        %3533 = vmatpush1.xpose.msra.mxu0 0.0
        %3534 = vmatprep.subr.mxu0 0.0
        %3535 = vmatpush1.xpose.msra.mxu0 0.0
        %3536 = vmatprep.subr.mxu0 0.0
        %3537 = vmatpush1.xpose.msra.mxu0 0.0
        %3538 = vmatprep.subr.mxu0 0.0
        %3539 = vmatpush1.xpose.msra.mxu0 0.0
        %3540 = vmatprep.subr.mxu0 0.0
        %3541 = vmatpush1.xpose.msra.mxu0 0.0
        %3542 = vmatprep.subr.mxu0 0.0
        %3543 = vmatpush1.xpose.msra.mxu0 0.0
        %3544 = vmatprep.subr.mxu0 0.0
        %3545 = vmatpush1.xpose.msra.mxu0 0.0
        %3546 = vmatprep.subr.mxu0 0.0
        %3547 = vmatpush1.xpose.msra.mxu0 0.0
        %3548 = vmatprep.subr.mxu0 0.0
        %3549 = vmatpush1.xpose.msra.mxu0 0.0
        %3550 = vmatprep.subr.mxu0 0.0
        %3551 = vmatpush1.xpose.msra.mxu0 0.0
        %3552 = vmatprep.subr.mxu0 0.0
        %3553 = vmatpush1.xpose.msra.mxu0 0.0
        %3554 = vmatprep.subr.mxu0 0.0
        %3555 = vmatpush1.xpose.msra.mxu0 0.0
        %3556 = vmatprep.subr.mxu0 0.0
        %3557 = vmatpush1.xpose.msra.mxu0 0.0
        %3558 = vmatprep.subr.mxu0 0.0
        %3559 = vmatpush1.xpose.msra.mxu0 0.0
        %3560 = vmatprep.subr.mxu0 0.0
        %3561 = vmatpush1.xpose.msra.mxu0 0.0
        %3562 = vmatprep.subr.mxu0 0.0
        %3563 = vmatpush1.xpose.msra.mxu0 0.0
        %3564 = vmatprep.subr.mxu0 0.0
        %3565 = vmatpush1.xpose.msra.mxu0 0.0
        %3566 = vmatprep.subr.mxu0 0.0
        %3567 = vmatpush1.xpose.msra.mxu0 0.0
        %3568 = vmatprep.subr.mxu0 0.0
        %3569 = vmatpush1.xpose.msra.mxu0 0.0
        %3570 = vmatprep.subr.mxu0 0.0
        %3571 = vmatpush1.xpose.msra.mxu0 0.0
        %3572 = vmatprep.subr.mxu0 0.0
        %3573 = vmatpush1.xpose.msra.mxu0 0.0
        %3574 = vmatprep.mubr.f32.mxu0 0.0
        %3575 = vmatmul.mubr.f32.gmra.mrb[0].mxu0 %v3506
        %v3576 = vpop.f32.mrb[0].mxu0
        %v3577 = vadd.f32 0.0, %v3576
        %v3578 = vpop.f32.mrb[0].mxu0
        %3579 = vdwg.mxu0
        %3580 = vrot.lane.b32.xlu0 %v1059, 104
        %v3581 = vpop.permute.xlu0 %3580
        %3582 = vrot.lane.b32.xlu0 %v1059, 72
        %v3583 = vpop.permute.xlu0 %3582
        %v3584 = vsel %vm1065, %v3581, 0
        %v3586 = vsel %vm1065, %v3583, 0
        %3588 = vmatprep.subr.mxu0 0.0
        %3589 = vmatpush1.xpose.msra.mxu0 %v3586
        %3590 = vmatprep.subr.mxu0 0.0
        %3591 = vmatpush1.xpose.msra.mxu0 0.0
        %3592 = vmatprep.subr.mxu0 0.0
        %3593 = vmatpush1.xpose.msra.mxu0 0.0
        %3594 = vmatprep.subr.mxu0 0.0
        %3595 = vmatpush1.xpose.msra.mxu0 0.0
        %3596 = vmatprep.subr.mxu0 0.0
        %3597 = vmatpush1.xpose.msra.mxu0 0.0
        %3598 = vmatprep.subr.mxu0 0.0
        %3599 = vmatpush1.xpose.msra.mxu0 0.0
        %3600 = vmatprep.subr.mxu0 0.0
        %3601 = vmatpush1.xpose.msra.mxu0 0.0
        %3602 = vmatprep.subr.mxu0 0.0
        %3603 = vmatpush1.xpose.msra.mxu0 0.0
        %3604 = vmatprep.subr.mxu0 0.0
        %3605 = vmatpush1.xpose.msra.mxu0 0.0
        %3606 = vmatprep.subr.mxu0 0.0
        %3607 = vmatpush1.xpose.msra.mxu0 0.0
        %3608 = vmatprep.subr.mxu0 0.0
        %3609 = vmatpush1.xpose.msra.mxu0 0.0
        %3610 = vmatprep.subr.mxu0 0.0
        %3611 = vmatpush1.xpose.msra.mxu0 0.0
        %3612 = vmatprep.subr.mxu0 0.0
        %3613 = vmatpush1.xpose.msra.mxu0 0.0
        %3614 = vmatprep.subr.mxu0 0.0
        %3615 = vmatpush1.xpose.msra.mxu0 0.0
        %3616 = vmatprep.subr.mxu0 0.0
        %3617 = vmatpush1.xpose.msra.mxu0 0.0
        %3618 = vmatprep.subr.mxu0 0.0
        %3619 = vmatpush1.xpose.msra.mxu0 0.0
        %3620 = vmatprep.subr.mxu0 0.0
        %3621 = vmatpush1.xpose.msra.mxu0 0.0
        %3622 = vmatprep.subr.mxu0 0.0
        %3623 = vmatpush1.xpose.msra.mxu0 0.0
        %3624 = vmatprep.subr.mxu0 0.0
        %3625 = vmatpush1.xpose.msra.mxu0 0.0
        %3626 = vmatprep.subr.mxu0 0.0
        %3627 = vmatpush1.xpose.msra.mxu0 0.0
        %3628 = vmatprep.subr.mxu0 0.0
        %3629 = vmatpush1.xpose.msra.mxu0 0.0
        %3630 = vmatprep.subr.mxu0 0.0
        %3631 = vmatpush1.xpose.msra.mxu0 0.0
        %3632 = vmatprep.subr.mxu0 0.0
        %3633 = vmatpush1.xpose.msra.mxu0 0.0
        %3634 = vmatprep.subr.mxu0 0.0
        %3635 = vmatpush1.xpose.msra.mxu0 0.0
        %3636 = vmatprep.subr.mxu0 0.0
        %3637 = vmatpush1.xpose.msra.mxu0 0.0
        %3638 = vmatprep.subr.mxu0 0.0
        %3639 = vmatpush1.xpose.msra.mxu0 0.0
        %3640 = vmatprep.subr.mxu0 0.0
        %3641 = vmatpush1.xpose.msra.mxu0 0.0
        %3642 = vmatprep.subr.mxu0 0.0
        %3643 = vmatpush1.xpose.msra.mxu0 0.0
        %3644 = vmatprep.subr.mxu0 0.0
        %3645 = vmatpush1.xpose.msra.mxu0 0.0
        %3646 = vmatprep.subr.mxu0 0.0
        %3647 = vmatpush1.xpose.msra.mxu0 0.0
        %3648 = vmatprep.subr.mxu0 0.0
        %3649 = vmatpush1.xpose.msra.mxu0 0.0
        %3650 = vmatprep.subr.mxu0 0.0
        %3651 = vmatpush1.xpose.msra.mxu0 0.0
        %3652 = vmatprep.mubr.f32.mxu0 0.0
        %3653 = vmatmul.mubr.f32.gmra.mrb[0].mxu0 %v3584
        %v3654 = vpop.f32.mrb[0].mxu0
        %v3655 = vadd.f32 0.0, %v3654
        %v3656 = vpop.f32.mrb[0].mxu0
        %3657 = vdwg.mxu0
        %v3658 = vmul.f32 %v3421, 0.35355338
        %v3659 = vmul.f32 %v3499, 0.35355338
        %v3660 = vmul.f32 %v3577, 0.35355338
        %v3661 = vmul.f32 %v3655, 0.35355338
        %v3662 = vsel %vm1065, %v3658, -inf
        %3663 = vmax.xlane.f32.xlu0 %v3662
        %v3664 = vpop.xlane.xlu0 %3663
        %v3665 = vsel %vm1065, %v3659, -inf
        %3666 = vmax.xlane.f32.xlu0 %v3665
        %v3667 = vpop.xlane.xlu0 %3666
        %v3668 = vsel %vm1065, %v3660, -inf
        %3669 = vmax.xlane.f32.xlu0 %v3668
        %v3670 = vpop.xlane.xlu0 %3669
        %v3671 = vsel %vm1065, %v3661, -inf
        %3672 = vmax.xlane.f32.xlu0 %v3671
        %v3673 = vpop.xlane.xlu0 %3672
        %v3674 = vsub.f32 %v3658, %v3664
        %v3675 = vsub.f32 %v3659, %v3667
        %v3676 = vsub.f32 %v3660, %v3670
        %v3677 = vsub.f32 %v3661, %v3673
        %v3678 = vmul.f32 %v3674, 1.442695
        %v3679 = vpow.pop %v3678
        %v3680 = vmul.f32 %v3675, 1.442695
        %v3681 = vpow.pop %v3680
        %v3682 = vmul.f32 %v3676, 1.442695
        %v3683 = vpow.pop %v3682
        %v3684 = vmul.f32 %v3677, 1.442695
        %v3685 = vpow.pop %v3684
        %v3686 = vsel %vm1065, %v3679, 0.0
        %3687 = vadd.xlane.f32.xlu0 %v3686
        %v3688 = vpop.xlane.xlu0 %3687
        %v3689 = vsel %vm1065, %v3681, 0.0
        %3690 = vadd.xlane.f32.xlu0 %v3689
        %v3691 = vpop.xlane.xlu0 %3690
        %v3692 = vsel %vm1065, %v3683, 0.0
        %3693 = vadd.xlane.f32.xlu0 %v3692
        %v3694 = vpop.xlane.xlu0 %3693
        %v3695 = vsel %vm1065, %v3685, 0.0
        %3696 = vadd.xlane.f32.xlu0 %v3695
        %v3697 = vpop.xlane.xlu0 %3696
        %v3698 = vrcp.pop %v3688
        %v3699 = vrcp.pop %v3691
        %v3700 = vrcp.pop %v3694
        %v3701 = vrcp.pop %v3697
        %v3702 = vmul.f32 %v3679, %v3698
        %v3703 = vmul.f32 %v3681, %v3699
        %v3704 = vmul.f32 %v3683, %v3700
        %v3705 = vmul.f32 %v3685, %v3701
        %3706 = vrot.lane.b32.xlu0 %v1044, 40
        %v3707 = vpop.permute.xlu0 %3706
        %v3710 = vsel %vm1065, %v3702, 0
        %3712 = vmatprep.subr.mxu0 0.0
        %3713 = vmatpush1.msra.mxu0 %v3707
        %3714 = vmatprep.subr.mxu0 0.0
        %3715 = vmatpush1.msra.mxu0 0.0
        %3716 = vmatprep.subr.mxu0 0.0
        %3717 = vmatpush1.msra.mxu0 0.0
        %3718 = vmatprep.subr.mxu0 0.0
        %3719 = vmatpush1.msra.mxu0 0.0
        %3720 = vmatprep.subr.mxu0 0.0
        %3721 = vmatpush1.msra.mxu0 0.0
        %3722 = vmatprep.subr.mxu0 0.0
        %3723 = vmatpush1.msra.mxu0 0.0
        %3724 = vmatprep.subr.mxu0 0.0
        %3725 = vmatpush1.msra.mxu0 0.0
        %3726 = vmatprep.subr.mxu0 0.0
        %3727 = vmatpush1.msra.mxu0 0.0
        %3728 = vmatprep.subr.mxu0 0.0
        %3729 = vmatpush1.msra.mxu0 0.0
        %3730 = vmatprep.subr.mxu0 0.0
        %3731 = vmatpush1.msra.mxu0 0.0
        %3732 = vmatprep.subr.mxu0 0.0
        %3733 = vmatpush1.msra.mxu0 0.0
        %3734 = vmatprep.subr.mxu0 0.0
        %3735 = vmatpush1.msra.mxu0 0.0
        %3736 = vmatprep.subr.mxu0 0.0
        %3737 = vmatpush1.msra.mxu0 0.0
        %3738 = vmatprep.subr.mxu0 0.0
        %3739 = vmatpush1.msra.mxu0 0.0
        %3740 = vmatprep.subr.mxu0 0.0
        %3741 = vmatpush1.msra.mxu0 0.0
        %3742 = vmatprep.subr.mxu0 0.0
        %3743 = vmatpush1.msra.mxu0 0.0
        %3744 = vmatprep.subr.mxu0 0.0
        %3745 = vmatpush1.msra.mxu0 0.0
        %3746 = vmatprep.subr.mxu0 0.0
        %3747 = vmatpush1.msra.mxu0 0.0
        %3748 = vmatprep.subr.mxu0 0.0
        %3749 = vmatpush1.msra.mxu0 0.0
        %3750 = vmatprep.subr.mxu0 0.0
        %3751 = vmatpush1.msra.mxu0 0.0
        %3752 = vmatprep.subr.mxu0 0.0
        %3753 = vmatpush1.msra.mxu0 0.0
        %3754 = vmatprep.subr.mxu0 0.0
        %3755 = vmatpush1.msra.mxu0 0.0
        %3756 = vmatprep.subr.mxu0 0.0
        %3757 = vmatpush1.msra.mxu0 0.0
        %3758 = vmatprep.subr.mxu0 0.0
        %3759 = vmatpush1.msra.mxu0 0.0
        %3760 = vmatprep.subr.mxu0 0.0
        %3761 = vmatpush1.msra.mxu0 0.0
        %3762 = vmatprep.subr.mxu0 0.0
        %3763 = vmatpush1.msra.mxu0 0.0
        %3764 = vmatprep.subr.mxu0 0.0
        %3765 = vmatpush1.msra.mxu0 0.0
        %3766 = vmatprep.subr.mxu0 0.0
        %3767 = vmatpush1.msra.mxu0 0.0
        %3768 = vmatprep.subr.mxu0 0.0
        %3769 = vmatpush1.msra.mxu0 0.0
        %3770 = vmatprep.subr.mxu0 0.0
        %3771 = vmatpush1.msra.mxu0 0.0
        %3772 = vmatprep.subr.mxu0 0.0
        %3773 = vmatpush1.msra.mxu0 0.0
        %3774 = vmatprep.subr.mxu0 0.0
        %3775 = vmatpush1.msra.mxu0 0.0
        %3776 = vmatprep.mubr.f32.mxu0 0.0
        %3777 = vmatmul.mubr.f32.gmra.mrb[0].mxu0 %v3710
        %v3778 = vpop.f32.mrb[0].mxu0
        %v3779 = vadd.f32 0.0, %v3778
        %v3780 = vpop.f32.mrb[0].mxu0
        %3781 = vdwg.mxu0
        %3782 = vrot.lane.b32.xlu0 %v1049, 40
        %v3783 = vpop.permute.xlu0 %3782
        %v3786 = vsel %vm1065, %v3703, 0
        %3788 = vmatprep.subr.mxu0 0.0
        %3789 = vmatpush1.msra.mxu0 %v3783
        %3790 = vmatprep.subr.mxu0 0.0
        %3791 = vmatpush1.msra.mxu0 0.0
        %3792 = vmatprep.subr.mxu0 0.0
        %3793 = vmatpush1.msra.mxu0 0.0
        %3794 = vmatprep.subr.mxu0 0.0
        %3795 = vmatpush1.msra.mxu0 0.0
        %3796 = vmatprep.subr.mxu0 0.0
        %3797 = vmatpush1.msra.mxu0 0.0
        %3798 = vmatprep.subr.mxu0 0.0
        %3799 = vmatpush1.msra.mxu0 0.0
        %3800 = vmatprep.subr.mxu0 0.0
        %3801 = vmatpush1.msra.mxu0 0.0
        %3802 = vmatprep.subr.mxu0 0.0
        %3803 = vmatpush1.msra.mxu0 0.0
        %3804 = vmatprep.subr.mxu0 0.0
        %3805 = vmatpush1.msra.mxu0 0.0
        %3806 = vmatprep.subr.mxu0 0.0
        %3807 = vmatpush1.msra.mxu0 0.0
        %3808 = vmatprep.subr.mxu0 0.0
        %3809 = vmatpush1.msra.mxu0 0.0
        %3810 = vmatprep.subr.mxu0 0.0
        %3811 = vmatpush1.msra.mxu0 0.0
        %3812 = vmatprep.subr.mxu0 0.0
        %3813 = vmatpush1.msra.mxu0 0.0
        %3814 = vmatprep.subr.mxu0 0.0
        %3815 = vmatpush1.msra.mxu0 0.0
        %3816 = vmatprep.subr.mxu0 0.0
        %3817 = vmatpush1.msra.mxu0 0.0
        %3818 = vmatprep.subr.mxu0 0.0
        %3819 = vmatpush1.msra.mxu0 0.0
        %3820 = vmatprep.subr.mxu0 0.0
        %3821 = vmatpush1.msra.mxu0 0.0
        %3822 = vmatprep.subr.mxu0 0.0
        %3823 = vmatpush1.msra.mxu0 0.0
        %3824 = vmatprep.subr.mxu0 0.0
        %3825 = vmatpush1.msra.mxu0 0.0
        %3826 = vmatprep.subr.mxu0 0.0
        %3827 = vmatpush1.msra.mxu0 0.0
        %3828 = vmatprep.subr.mxu0 0.0
        %3829 = vmatpush1.msra.mxu0 0.0
        %3830 = vmatprep.subr.mxu0 0.0
        %3831 = vmatpush1.msra.mxu0 0.0
        %3832 = vmatprep.subr.mxu0 0.0
        %3833 = vmatpush1.msra.mxu0 0.0
        %3834 = vmatprep.subr.mxu0 0.0
        %3835 = vmatpush1.msra.mxu0 0.0
        %3836 = vmatprep.subr.mxu0 0.0
        %3837 = vmatpush1.msra.mxu0 0.0
        %3838 = vmatprep.subr.mxu0 0.0
        %3839 = vmatpush1.msra.mxu0 0.0
        %3840 = vmatprep.subr.mxu0 0.0
        %3841 = vmatpush1.msra.mxu0 0.0
        %3842 = vmatprep.subr.mxu0 0.0
        %3843 = vmatpush1.msra.mxu0 0.0
        %3844 = vmatprep.subr.mxu0 0.0
        %3845 = vmatpush1.msra.mxu0 0.0
        %3846 = vmatprep.subr.mxu0 0.0
        %3847 = vmatpush1.msra.mxu0 0.0
        %3848 = vmatprep.subr.mxu0 0.0
        %3849 = vmatpush1.msra.mxu0 0.0
        %3850 = vmatprep.subr.mxu0 0.0
        %3851 = vmatpush1.msra.mxu0 0.0
        %3852 = vmatprep.mubr.f32.mxu0 0.0
        %3853 = vmatmul.mubr.f32.gmra.mrb[0].mxu0 %v3786
        %v3854 = vpop.f32.mrb[0].mxu0
        %v3855 = vadd.f32 0.0, %v3854
        %v3856 = vpop.f32.mrb[0].mxu0
        %3857 = vdwg.mxu0
        %3858 = vrot.lane.b32.xlu0 %v1054, 40
        %v3859 = vpop.permute.xlu0 %3858
        %v3862 = vsel %vm1065, %v3704, 0
        %3864 = vmatprep.subr.mxu0 0.0
        %3865 = vmatpush1.msra.mxu0 %v3859
        %3866 = vmatprep.subr.mxu0 0.0
        %3867 = vmatpush1.msra.mxu0 0.0
        %3868 = vmatprep.subr.mxu0 0.0
        %3869 = vmatpush1.msra.mxu0 0.0
        %3870 = vmatprep.subr.mxu0 0.0
        %3871 = vmatpush1.msra.mxu0 0.0
        %3872 = vmatprep.subr.mxu0 0.0
        %3873 = vmatpush1.msra.mxu0 0.0
        %3874 = vmatprep.subr.mxu0 0.0
        %3875 = vmatpush1.msra.mxu0 0.0
        %3876 = vmatprep.subr.mxu0 0.0
        %3877 = vmatpush1.msra.mxu0 0.0
        %3878 = vmatprep.subr.mxu0 0.0
        %3879 = vmatpush1.msra.mxu0 0.0
        %3880 = vmatprep.subr.mxu0 0.0
        %3881 = vmatpush1.msra.mxu0 0.0
        %3882 = vmatprep.subr.mxu0 0.0
        %3883 = vmatpush1.msra.mxu0 0.0
        %3884 = vmatprep.subr.mxu0 0.0
        %3885 = vmatpush1.msra.mxu0 0.0
        %3886 = vmatprep.subr.mxu0 0.0
        %3887 = vmatpush1.msra.mxu0 0.0
        %3888 = vmatprep.subr.mxu0 0.0
        %3889 = vmatpush1.msra.mxu0 0.0
        %3890 = vmatprep.subr.mxu0 0.0
        %3891 = vmatpush1.msra.mxu0 0.0
        %3892 = vmatprep.subr.mxu0 0.0
        %3893 = vmatpush1.msra.mxu0 0.0
        %3894 = vmatprep.subr.mxu0 0.0
        %3895 = vmatpush1.msra.mxu0 0.0
        %3896 = vmatprep.subr.mxu0 0.0
        %3897 = vmatpush1.msra.mxu0 0.0
        %3898 = vmatprep.subr.mxu0 0.0
        %3899 = vmatpush1.msra.mxu0 0.0
        %3900 = vmatprep.subr.mxu0 0.0
        %3901 = vmatpush1.msra.mxu0 0.0
        %3902 = vmatprep.subr.mxu0 0.0
        %3903 = vmatpush1.msra.mxu0 0.0
        %3904 = vmatprep.subr.mxu0 0.0
        %3905 = vmatpush1.msra.mxu0 0.0
        %3906 = vmatprep.subr.mxu0 0.0
        %3907 = vmatpush1.msra.mxu0 0.0
        %3908 = vmatprep.subr.mxu0 0.0
        %3909 = vmatpush1.msra.mxu0 0.0
        %3910 = vmatprep.subr.mxu0 0.0
        %3911 = vmatpush1.msra.mxu0 0.0
        %3912 = vmatprep.subr.mxu0 0.0
        %3913 = vmatpush1.msra.mxu0 0.0
        %3914 = vmatprep.subr.mxu0 0.0
        %3915 = vmatpush1.msra.mxu0 0.0
        %3916 = vmatprep.subr.mxu0 0.0
        %3917 = vmatpush1.msra.mxu0 0.0
        %3918 = vmatprep.subr.mxu0 0.0
        %3919 = vmatpush1.msra.mxu0 0.0
        %3920 = vmatprep.subr.mxu0 0.0
        %3921 = vmatpush1.msra.mxu0 0.0
        %3922 = vmatprep.subr.mxu0 0.0
        %3923 = vmatpush1.msra.mxu0 0.0
        %3924 = vmatprep.subr.mxu0 0.0
        %3925 = vmatpush1.msra.mxu0 0.0
        %3926 = vmatprep.subr.mxu0 0.0
        %3927 = vmatpush1.msra.mxu0 0.0
        %3928 = vmatprep.mubr.f32.mxu0 0.0
        %3929 = vmatmul.mubr.f32.gmra.mrb[0].mxu0 %v3862
        %v3930 = vpop.f32.mrb[0].mxu0
        %v3931 = vadd.f32 0.0, %v3930
        %v3932 = vpop.f32.mrb[0].mxu0
        %3933 = vdwg.mxu0
        %3934 = vrot.lane.b32.xlu0 %v1059, 40
        %v3935 = vpop.permute.xlu0 %3934
        %v3938 = vsel %vm1065, %v3705, 0
        %3940 = vmatprep.subr.mxu0 0.0
        %3941 = vmatpush1.msra.mxu0 %v3935
        %3942 = vmatprep.subr.mxu0 0.0
        %3943 = vmatpush1.msra.mxu0 0.0
        %3944 = vmatprep.subr.mxu0 0.0
        %3945 = vmatpush1.msra.mxu0 0.0
        %3946 = vmatprep.subr.mxu0 0.0
        %3947 = vmatpush1.msra.mxu0 0.0
        %3948 = vmatprep.subr.mxu0 0.0
        %3949 = vmatpush1.msra.mxu0 0.0
        %3950 = vmatprep.subr.mxu0 0.0
        %3951 = vmatpush1.msra.mxu0 0.0
        %3952 = vmatprep.subr.mxu0 0.0
        %3953 = vmatpush1.msra.mxu0 0.0
        %3954 = vmatprep.subr.mxu0 0.0
        %3955 = vmatpush1.msra.mxu0 0.0
        %3956 = vmatprep.subr.mxu0 0.0
        %3957 = vmatpush1.msra.mxu0 0.0
        %3958 = vmatprep.subr.mxu0 0.0
        %3959 = vmatpush1.msra.mxu0 0.0
        %3960 = vmatprep.subr.mxu0 0.0
        %3961 = vmatpush1.msra.mxu0 0.0
        %3962 = vmatprep.subr.mxu0 0.0
        %3963 = vmatpush1.msra.mxu0 0.0
        %3964 = vmatprep.subr.mxu0 0.0
        %3965 = vmatpush1.msra.mxu0 0.0
        %3966 = vmatprep.subr.mxu0 0.0
        %3967 = vmatpush1.msra.mxu0 0.0
        %3968 = vmatprep.subr.mxu0 0.0
        %3969 = vmatpush1.msra.mxu0 0.0
        %3970 = vmatprep.subr.mxu0 0.0
        %3971 = vmatpush1.msra.mxu0 0.0
        %3972 = vmatprep.subr.mxu0 0.0
        %3973 = vmatpush1.msra.mxu0 0.0
        %3974 = vmatprep.subr.mxu0 0.0
        %3975 = vmatpush1.msra.mxu0 0.0
        %3976 = vmatprep.subr.mxu0 0.0
        %3977 = vmatpush1.msra.mxu0 0.0
        %3978 = vmatprep.subr.mxu0 0.0
        %3979 = vmatpush1.msra.mxu0 0.0
        %3980 = vmatprep.subr.mxu0 0.0
        %3981 = vmatpush1.msra.mxu0 0.0
        %3982 = vmatprep.subr.mxu0 0.0
        %3983 = vmatpush1.msra.mxu0 0.0
        %3984 = vmatprep.subr.mxu0 0.0
        %3985 = vmatpush1.msra.mxu0 0.0
        %3986 = vmatprep.subr.mxu0 0.0
        %3987 = vmatpush1.msra.mxu0 0.0
        %3988 = vmatprep.subr.mxu0 0.0
        %3989 = vmatpush1.msra.mxu0 0.0
        %3990 = vmatprep.subr.mxu0 0.0
        %3991 = vmatpush1.msra.mxu0 0.0
        %3992 = vmatprep.subr.mxu0 0.0
        %3993 = vmatpush1.msra.mxu0 0.0
        %3994 = vmatprep.subr.mxu0 0.0
        %3995 = vmatpush1.msra.mxu0 0.0
        %3996 = vmatprep.subr.mxu0 0.0
        %3997 = vmatpush1.msra.mxu0 0.0
        %3998 = vmatprep.subr.mxu0 0.0
        %3999 = vmatpush1.msra.mxu0 0.0
        %4000 = vmatprep.subr.mxu0 0.0
        %4001 = vmatpush1.msra.mxu0 0.0
        %4002 = vmatprep.subr.mxu0 0.0
        %4003 = vmatpush1.msra.mxu0 0.0
        %4004 = vmatprep.mubr.f32.mxu0 0.0
        %4005 = vmatmul.mubr.f32.gmra.mrb[0].mxu0 %v3938
        %v4006 = vpop.f32.mrb[0].mxu0
        %v4007 = vadd.f32 0.0, %v4006
        %v4008 = vpop.f32.mrb[0].mxu0
        %4009 = vdwg.mxu0
        %v4011 = vsel %vm1065, %v3779, 0
        %v4014 = vsel %vm1065, %v3855, 0
        %v4017 = vsel %vm1065, %v3931, 0
        %v4020 = vsel %vm1065, %v4007, 0
        %4022 = vmatprep.subr.mxu0 0.0
        %4023 = vmatpush1.msra.mxu0 %v889
        %4024 = vmatprep.subr.mxu0 0.0
        %4025 = vmatpush1.msra.mxu0 0.0
        %4026 = vmatprep.subr.mxu0 0.0
        %4027 = vmatpush1.msra.mxu0 0.0
        %4028 = vmatprep.subr.mxu0 0.0
        %4029 = vmatpush1.msra.mxu0 0.0
        %4030 = vmatprep.subr.mxu0 0.0
        %4031 = vmatpush1.msra.mxu0 0.0
        %4032 = vmatprep.subr.mxu0 0.0
        %4033 = vmatpush1.msra.mxu0 0.0
        %4034 = vmatprep.subr.mxu0 0.0
        %4035 = vmatpush1.msra.mxu0 0.0
        %4036 = vmatprep.subr.mxu0 0.0
        %4037 = vmatpush1.msra.mxu0 0.0
        %4038 = vmatprep.subr.mxu0 0.0
        %4039 = vmatpush1.msra.mxu0 0.0
        %4040 = vmatprep.subr.mxu0 0.0
        %4041 = vmatpush1.msra.mxu0 0.0
        %4042 = vmatprep.subr.mxu0 0.0
        %4043 = vmatpush1.msra.mxu0 0.0
        %4044 = vmatprep.subr.mxu0 0.0
        %4045 = vmatpush1.msra.mxu0 0.0
        %4046 = vmatprep.subr.mxu0 0.0
        %4047 = vmatpush1.msra.mxu0 0.0
        %4048 = vmatprep.subr.mxu0 0.0
        %4049 = vmatpush1.msra.mxu0 0.0
        %4050 = vmatprep.subr.mxu0 0.0
        %4051 = vmatpush1.msra.mxu0 0.0
        %4052 = vmatprep.subr.mxu0 0.0
        %4053 = vmatpush1.msra.mxu0 0.0
        %4054 = vmatprep.subr.mxu0 0.0
        %4055 = vmatpush1.msra.mxu0 0.0
        %4056 = vmatprep.subr.mxu0 0.0
        %4057 = vmatpush1.msra.mxu0 0.0
        %4058 = vmatprep.subr.mxu0 0.0
        %4059 = vmatpush1.msra.mxu0 0.0
        %4060 = vmatprep.subr.mxu0 0.0
        %4061 = vmatpush1.msra.mxu0 0.0
        %4062 = vmatprep.subr.mxu0 0.0
        %4063 = vmatpush1.msra.mxu0 0.0
        %4064 = vmatprep.subr.mxu0 0.0
        %4065 = vmatpush1.msra.mxu0 0.0
        %4066 = vmatprep.subr.mxu0 0.0
        %4067 = vmatpush1.msra.mxu0 0.0
        %4068 = vmatprep.subr.mxu0 0.0
        %4069 = vmatpush1.msra.mxu0 0.0
        %4070 = vmatprep.subr.mxu0 0.0
        %4071 = vmatpush1.msra.mxu0 0.0
        %4072 = vmatprep.subr.mxu0 0.0
        %4073 = vmatpush1.msra.mxu0 0.0
        %4074 = vmatprep.subr.mxu0 0.0
        %4075 = vmatpush1.msra.mxu0 0.0
        %4076 = vmatprep.subr.mxu0 0.0
        %4077 = vmatpush1.msra.mxu0 0.0
        %4078 = vmatprep.subr.mxu0 0.0
        %4079 = vmatpush1.msra.mxu0 0.0
        %4080 = vmatprep.subr.mxu0 0.0
        %4081 = vmatpush1.msra.mxu0 0.0
        %4082 = vmatprep.subr.mxu0 0.0
        %4083 = vmatpush1.msra.mxu0 0.0
        %4084 = vmatprep.subr.mxu0 0.0
        %4085 = vmatpush1.msra.mxu0 0.0
        %4086 = vmatprep.mubr.f32.mxu0 0.0
        %4087 = vmatmul.mubr.f32.gmra.mrb[0].mxu0 %v4011
        %v4088 = vpop.f32.mrb[0].mxu0
        %v4089 = vadd.f32 0.0, %v4088
        %v4090 = vpop.f32.mrb[0].mxu0
        %4091 = vmatprep.mubr.f32.mxu0 0.0
        %4092 = vmatmul.mubr.f32.gmra.mrb[0].mxu0 %v4014
        %v4093 = vpop.f32.mrb[0].mxu0
        %v4094 = vadd.f32 0.0, %v4093
        %v4095 = vpop.f32.mrb[0].mxu0
        %4096 = vmatprep.mubr.f32.mxu0 0.0
        %4097 = vmatmul.mubr.f32.gmra.mrb[0].mxu0 %v4017
        %v4098 = vpop.f32.mrb[0].mxu0
        %v4099 = vadd.f32 0.0, %v4098
        %v4100 = vpop.f32.mrb[0].mxu0
        %4101 = vmatprep.mubr.f32.mxu0 0.0
        %4102 = vmatmul.mubr.f32.gmra.mrb[0].mxu0 %v4020
        %v4103 = vpop.f32.mrb[0].mxu0
        %v4104 = vadd.f32 0.0, %v4103
        %v4105 = vpop.f32.mrb[0].mxu0
        %4106 = vdwg.mxu0
        %v4107 = vadd.f32 %v3342, %v4089
        %v4108 = vadd.f32 %v3343, %v4094
        %v4109 = vadd.f32 %v3344, %v4099
        %v4110 = vadd.f32 %v3345, %v4104
        %v4111 = vadd.f32 %v876, %v4107
        %v4112 = vadd.f32 %v877, %v4108
        %v4113 = vadd.f32 %v878, %v4109
        %v4114 = vadd.f32 %v879, %v4110
        %v4116 = vlaneseq
        %v4117 = vshrl.u32 %v4116, 7
        %v4118 = vsub.s32 0, %v4117
        %v4119 = vrot.slane %v890, %v4118
        %v4121 = vadd.f32 %v4111, %v4119
        %v4122 = vadd.f32 %v4112, %v4119
        %v4123 = vadd.f32 %v4113, %v4119
        %v4124 = vadd.f32 %v4114, %v4119
        %v4125 = vld [vmem:[#allocation9] sm:$0x1]
        %v4126 = vld [vmem:[#allocation11] sm:$0x1]
        %v4127 = vld [vmem:[%s8] sm:$0xff]
        %v4128 = vld [vmem:[%s8 + $0x8] sm:$0xff]
        %v4129 = vld [vmem:[%s8 + $0x10] sm:$0xff]
        %v4130 = vld [vmem:[%s8 + $0x18] sm:$0xff]
        %v4131 = vld [vmem:[#allocation12] sm:$0x1]
        %v4132 = vld [vmem:[%s10] sm:$0xff]
        %v4133 = vld [vmem:[%s10 + $0x8] sm:$0xff]
        %v4134 = vld [vmem:[%s10 + $0x10] sm:$0xff]
        %v4135 = vld [vmem:[%s10 + $0x18] sm:$0xff]
        %v4136 = vld [vmem:[%s10 + $0x20] sm:$0xff]
        %v4137 = vld [vmem:[%s10 + $0x28] sm:$0xff]
        %v4138 = vld [vmem:[%s10 + $0x30] sm:$0xff]
        %v4139 = vld [vmem:[%s10 + $0x38] sm:$0xff]
        %v4140 = vld [vmem:[#allocation14] sm:$0x1]
        %v4141 = vsel %vm891, %v4121, 0.0
        %4142 = vadd.xlane.f32.xlu0 %v4141
        %v4143 = vpop.xlane.xlu0 %4142
        %v4144 = vsel %vm891, %v4122, 0.0
        %4145 = vadd.xlane.f32.xlu0 %v4144
        %v4146 = vpop.xlane.xlu0 %4145
        %v4147 = vsel %vm891, %v4123, 0.0
        %4148 = vadd.xlane.f32.xlu0 %v4147
        %v4149 = vpop.xlane.xlu0 %4148
        %v4150 = vsel %vm891, %v4124, 0.0
        %4151 = vadd.xlane.f32.xlu0 %v4150
        %v4152 = vpop.xlane.xlu0 %4151
        %v4153 = vmul.f32 %v4143, %v904
        %v4154 = vmul.f32 %v4146, %v904
        %v4155 = vmul.f32 %v4149, %v904
        %v4156 = vmul.f32 %v4152, %v904
        %v4157 = vsub.f32 %v4121, %v4153
        %v4158 = vsub.f32 %v4122, %v4154
        %v4159 = vsub.f32 %v4123, %v4155
        %v4160 = vsub.f32 %v4124, %v4156
        %v4161 = vmul.f32 %v4157, %v4157
        %v4162 = vmul.f32 %v4158, %v4158
        %v4163 = vmul.f32 %v4159, %v4159
        %v4164 = vmul.f32 %v4160, %v4160
        %v4165 = vsel %vm891, %v4161, 0.0
        %4166 = vadd.xlane.f32.xlu0 %v4165
        %v4167 = vpop.xlane.xlu0 %4166
        %v4168 = vsel %vm891, %v4162, 0.0
        %4169 = vadd.xlane.f32.xlu0 %v4168
        %v4170 = vpop.xlane.xlu0 %4169
        %v4171 = vsel %vm891, %v4163, 0.0
        %4172 = vadd.xlane.f32.xlu0 %v4171
        %v4173 = vpop.xlane.xlu0 %4172
        %v4174 = vsel %vm891, %v4164, 0.0
        %4175 = vadd.xlane.f32.xlu0 %v4174
        %v4176 = vpop.xlane.xlu0 %4175
        %v4177 = vmul.f32 %v4167, %v904
        %v4178 = vmul.f32 %v4170, %v904
        %v4179 = vmul.f32 %v4173, %v904
        %v4180 = vmul.f32 %v4176, %v904
        %v4181 = vadd.f32 %v4177, 1e-05
        %v4182 = vadd.f32 %v4178, 1e-05
        %v4183 = vadd.f32 %v4179, 1e-05
        %v4184 = vadd.f32 %v4180, 1e-05
        %v4185 = vrsqrt.pop %v4181
        %v4186 = vrsqrt.pop %v4182
        %v4187 = vrsqrt.pop %v4183
        %v4188 = vrsqrt.pop %v4184
        %v4189 = vmul.f32 %v4157, %v4185
        %v4190 = vmul.f32 %v4158, %v4186
        %v4191 = vmul.f32 %v4159, %v4187
        %v4192 = vmul.f32 %v4160, %v4188
        %v4194 = vlaneseq
        %v4195 = vshrl.u32 %v4194, 7
        %v4196 = vsub.s32 0, %v4195
        %v4197 = vrot.slane %v4125, %v4196
        %v4199 = vmul.f32 %v4189, %v4197
        %v4200 = vmul.f32 %v4190, %v4197
        %v4201 = vmul.f32 %v4191, %v4197
        %v4202 = vmul.f32 %v4192, %v4197
        %v4204 = vlaneseq
        %v4205 = vshrl.u32 %v4204, 7
        %v4206 = vsub.s32 0, %v4205
        %v4207 = vrot.slane %v4126, %v4206
        %v4209 = vadd.f32 %v4199, %v4207
        %v4210 = vadd.f32 %v4200, %v4207
        %v4211 = vadd.f32 %v4201, %v4207
        %v4212 = vadd.f32 %v4202, %v4207
        %v4214 = vlaneseq
        %v4215 = vshrl.u32 %v4214, 7
        %v4216 = vsub.s32 0, %v4215
        %v4217 = vrot.slane %v4131, %v4216
        %v4220 = vsel %vm891, %v4209, 0
        %v4223 = vsel %vm891, %v4210, 0
        %v4226 = vsel %vm891, %v4211, 0
        %v4229 = vsel %vm891, %v4212, 0
        %4231 = vmatprep.subr.mxu0 0.0
        %4232 = vmatpush1.msra.mxu0 %v4127
        %4233 = vmatprep.subr.mxu0 0.0
        %4234 = vmatpush1.msra.mxu0 %v4128
        %4235 = vmatprep.subr.mxu0 0.0
        %4236 = vmatpush1.msra.mxu0 %v4129
        %4237 = vmatprep.subr.mxu0 0.0
        %4238 = vmatpush1.msra.mxu0 %v4130
        %4239 = vmatprep.subr.mxu0 0.0
        %4240 = vmatpush1.msra.mxu0 0.0
        %4241 = vmatprep.subr.mxu0 0.0
        %4242 = vmatpush1.msra.mxu0 0.0
        %4243 = vmatprep.subr.mxu0 0.0
        %4244 = vmatpush1.msra.mxu0 0.0
        %4245 = vmatprep.subr.mxu0 0.0
        %4246 = vmatpush1.msra.mxu0 0.0
        %4247 = vmatprep.subr.mxu0 0.0
        %4248 = vmatpush1.msra.mxu0 0.0
        %4249 = vmatprep.subr.mxu0 0.0
        %4250 = vmatpush1.msra.mxu0 0.0
        %4251 = vmatprep.subr.mxu0 0.0
        %4252 = vmatpush1.msra.mxu0 0.0
        %4253 = vmatprep.subr.mxu0 0.0
        %4254 = vmatpush1.msra.mxu0 0.0
        %4255 = vmatprep.subr.mxu0 0.0
        %4256 = vmatpush1.msra.mxu0 0.0
        %4257 = vmatprep.subr.mxu0 0.0
        %4258 = vmatpush1.msra.mxu0 0.0
        %4259 = vmatprep.subr.mxu0 0.0
        %4260 = vmatpush1.msra.mxu0 0.0
        %4261 = vmatprep.subr.mxu0 0.0
        %4262 = vmatpush1.msra.mxu0 0.0
        %4263 = vmatprep.subr.mxu0 0.0
        %4264 = vmatpush1.msra.mxu0 0.0
        %4265 = vmatprep.subr.mxu0 0.0
        %4266 = vmatpush1.msra.mxu0 0.0
        %4267 = vmatprep.subr.mxu0 0.0
        %4268 = vmatpush1.msra.mxu0 0.0
        %4269 = vmatprep.subr.mxu0 0.0
        %4270 = vmatpush1.msra.mxu0 0.0
        %4271 = vmatprep.subr.mxu0 0.0
        %4272 = vmatpush1.msra.mxu0 0.0
        %4273 = vmatprep.subr.mxu0 0.0
        %4274 = vmatpush1.msra.mxu0 0.0
        %4275 = vmatprep.subr.mxu0 0.0
        %4276 = vmatpush1.msra.mxu0 0.0
        %4277 = vmatprep.subr.mxu0 0.0
        %4278 = vmatpush1.msra.mxu0 0.0
        %4279 = vmatprep.subr.mxu0 0.0
        %4280 = vmatpush1.msra.mxu0 0.0
        %4281 = vmatprep.subr.mxu0 0.0
        %4282 = vmatpush1.msra.mxu0 0.0
        %4283 = vmatprep.subr.mxu0 0.0
        %4284 = vmatpush1.msra.mxu0 0.0
        %4285 = vmatprep.subr.mxu0 0.0
        %4286 = vmatpush1.msra.mxu0 0.0
        %4287 = vmatprep.subr.mxu0 0.0
        %4288 = vmatpush1.msra.mxu0 0.0
        %4289 = vmatprep.subr.mxu0 0.0
        %4290 = vmatpush1.msra.mxu0 0.0
        %4291 = vmatprep.subr.mxu0 0.0
        %4292 = vmatpush1.msra.mxu0 0.0
        %4293 = vmatprep.subr.mxu0 0.0
        %4294 = vmatpush1.msra.mxu0 0.0
        %4295 = vmatprep.mubr.f32.mxu0 0.0
        %4296 = vmatmul.mubr.f32.gmra.mrb[0].mxu0 %v4220
        %v4297 = vpop.f32.mrb[0].mxu0
        %v4298 = vadd.f32 %v4217, %v4297
        %v4299 = vpop.f32.mrb[0].mxu0
        %4300 = vmatprep.mubr.f32.mxu0 0.0
        %4301 = vmatmul.mubr.f32.gmra.mrb[0].mxu0 %v4223
        %v4302 = vpop.f32.mrb[0].mxu0
        %v4303 = vadd.f32 %v4217, %v4302
        %v4304 = vpop.f32.mrb[0].mxu0
        %4305 = vmatprep.mubr.f32.mxu0 0.0
        %4306 = vmatmul.mubr.f32.gmra.mrb[0].mxu0 %v4226
        %v4307 = vpop.f32.mrb[0].mxu0
        %v4308 = vadd.f32 %v4217, %v4307
        %v4309 = vpop.f32.mrb[0].mxu0
        %4310 = vmatprep.mubr.f32.mxu0 0.0
        %4311 = vmatmul.mubr.f32.gmra.mrb[0].mxu0 %v4229
        %v4312 = vpop.f32.mrb[0].mxu0
        %v4313 = vadd.f32 %v4217, %v4312
        %v4314 = vpop.f32.mrb[0].mxu0
        %4315 = vdwg.mxu0
        %v4316 = vmul.f32 %v4298, 0.5
        %v4317 = vmul.f32 %v4303, 0.5
        %v4318 = vmul.f32 %v4308, 0.5
        %v4319 = vmul.f32 %v4313, 0.5
        %v4320 = vmul.f32 %v4298, 0.044715
        %v4321 = vmul.f32 %v4303, 0.044715
        %v4322 = vmul.f32 %v4308, 0.044715
        %v4323 = vmul.f32 %v4313, 0.044715
        %v4324 = vmul.f32 %v4320, %v4298
        %v4325 = vmul.f32 %v4321, %v4303
        %v4326 = vmul.f32 %v4322, %v4308
        %v4327 = vmul.f32 %v4323, %v4313
        %v4328 = vmul.f32 %v4324, %v4298
        %v4329 = vmul.f32 %v4325, %v4303
        %v4330 = vmul.f32 %v4326, %v4308
        %v4331 = vmul.f32 %v4327, %v4313
        %v4332 = vadd.f32 %v4298, %v4328
        %v4333 = vadd.f32 %v4303, %v4329
        %v4334 = vadd.f32 %v4308, %v4330
        %v4335 = vadd.f32 %v4313, %v4331
        %v4336 = vmul.f32 %v4332, 0.7978846
        %v4337 = vmul.f32 %v4333, 0.7978846
        %v4338 = vmul.f32 %v4334, 0.7978846
        %v4339 = vmul.f32 %v4335, 0.7978846
        %v4340 = vtanh.pop %v4336
        %v4341 = vtanh.pop %v4337
        %v4342 = vtanh.pop %v4338
        %v4343 = vtanh.pop %v4339
        %v4344 = vadd.f32 %v4340, 1.0
        %v4345 = vadd.f32 %v4341, 1.0
        %v4346 = vadd.f32 %v4342, 1.0
        %v4347 = vadd.f32 %v4343, 1.0
        %v4348 = vmul.f32 %v4316, %v4344
        %v4349 = vmul.f32 %v4317, %v4345
        %v4350 = vmul.f32 %v4318, %v4346
        %v4351 = vmul.f32 %v4319, %v4347
        %vm4352 = vcmask 523264
        %v4354 = vsel %vm4352, %v4348, 0
        %v4357 = vsel %vm4352, %v4349, 0
        %v4360 = vsel %vm4352, %v4350, 0
        %v4363 = vsel %vm4352, %v4351, 0
        %4365 = vmatprep.subr.mxu0 0.0
        %4366 = vmatpush1.msra.mxu0 %v4132
        %4367 = vmatprep.subr.mxu0 0.0
        %4368 = vmatpush1.msra.mxu0 %v4133
        %4369 = vmatprep.subr.mxu0 0.0
        %4370 = vmatpush1.msra.mxu0 %v4134
        %4371 = vmatprep.subr.mxu0 0.0
        %4372 = vmatpush1.msra.mxu0 %v4135
        %4373 = vmatprep.subr.mxu0 0.0
        %4374 = vmatpush1.msra.mxu0 %v4136
        %4375 = vmatprep.subr.mxu0 0.0
        %4376 = vmatpush1.msra.mxu0 %v4137
        %4377 = vmatprep.subr.mxu0 0.0
        %4378 = vmatpush1.msra.mxu0 %v4138
        %4379 = vmatprep.subr.mxu0 0.0
        %4380 = vmatpush1.msra.mxu0 %v4139
        %4381 = vmatprep.subr.mxu0 0.0
        %4382 = vmatpush1.msra.mxu0 0.0
        %4383 = vmatprep.subr.mxu0 0.0
        %4384 = vmatpush1.msra.mxu0 0.0
        %4385 = vmatprep.subr.mxu0 0.0
        %4386 = vmatpush1.msra.mxu0 0.0
        %4387 = vmatprep.subr.mxu0 0.0
        %4388 = vmatpush1.msra.mxu0 0.0
        %4389 = vmatprep.subr.mxu0 0.0
        %4390 = vmatpush1.msra.mxu0 0.0
        %4391 = vmatprep.subr.mxu0 0.0
        %4392 = vmatpush1.msra.mxu0 0.0
        %4393 = vmatprep.subr.mxu0 0.0
        %4394 = vmatpush1.msra.mxu0 0.0
        %4395 = vmatprep.subr.mxu0 0.0
        %4396 = vmatpush1.msra.mxu0 0.0
        %4397 = vmatprep.subr.mxu0 0.0
        %4398 = vmatpush1.msra.mxu0 0.0
        %4399 = vmatprep.subr.mxu0 0.0
        %4400 = vmatpush1.msra.mxu0 0.0
        %4401 = vmatprep.subr.mxu0 0.0
        %4402 = vmatpush1.msra.mxu0 0.0
        %4403 = vmatprep.subr.mxu0 0.0
        %4404 = vmatpush1.msra.mxu0 0.0
        %4405 = vmatprep.subr.mxu0 0.0
        %4406 = vmatpush1.msra.mxu0 0.0
        %4407 = vmatprep.subr.mxu0 0.0
        %4408 = vmatpush1.msra.mxu0 0.0
        %4409 = vmatprep.subr.mxu0 0.0
        %4410 = vmatpush1.msra.mxu0 0.0
        %4411 = vmatprep.subr.mxu0 0.0
        %4412 = vmatpush1.msra.mxu0 0.0
        %4413 = vmatprep.subr.mxu0 0.0
        %4414 = vmatpush1.msra.mxu0 0.0
        %4415 = vmatprep.subr.mxu0 0.0
        %4416 = vmatpush1.msra.mxu0 0.0
        %4417 = vmatprep.subr.mxu0 0.0
        %4418 = vmatpush1.msra.mxu0 0.0
        %4419 = vmatprep.subr.mxu0 0.0
        %4420 = vmatpush1.msra.mxu0 0.0
        %4421 = vmatprep.subr.mxu0 0.0
        %4422 = vmatpush1.msra.mxu0 0.0
        %4423 = vmatprep.subr.mxu0 0.0
        %4424 = vmatpush1.msra.mxu0 0.0
        %4425 = vmatprep.subr.mxu0 0.0
        %4426 = vmatpush1.msra.mxu0 0.0
        %4427 = vmatprep.subr.mxu0 0.0
        %4428 = vmatpush1.msra.mxu0 0.0
        %4429 = vmatprep.mubr.f32.mxu0 0.0
        %4430 = vmatmul.mubr.f32.gmra.mrb[0].mxu0 %v4354
        %v4431 = vpop.f32.mrb[0].mxu0
        %v4432 = vadd.f32 0.0, %v4431
        %v4433 = vpop.f32.mrb[0].mxu0
        %4434 = vmatprep.mubr.f32.mxu0 0.0
        %4435 = vmatmul.mubr.f32.gmra.mrb[0].mxu0 %v4357
        %v4436 = vpop.f32.mrb[0].mxu0
        %v4437 = vadd.f32 0.0, %v4436
        %v4438 = vpop.f32.mrb[0].mxu0
        %4439 = vmatprep.mubr.f32.mxu0 0.0
        %4440 = vmatmul.mubr.f32.gmra.mrb[0].mxu0 %v4360
        %v4441 = vpop.f32.mrb[0].mxu0
        %v4442 = vadd.f32 0.0, %v4441
        %v4443 = vpop.f32.mrb[0].mxu0
        %4444 = vmatprep.mubr.f32.mxu0 0.0
        %4445 = vmatmul.mubr.f32.gmra.mrb[0].mxu0 %v4363
        %v4446 = vpop.f32.mrb[0].mxu0
        %v4447 = vadd.f32 0.0, %v4446
        %v4448 = vpop.f32.mrb[0].mxu0
        %4449 = vdwg.mxu0
        %v4450 = vadd.f32 %v4121, %v4432
        %v4451 = vadd.f32 %v4122, %v4437
        %v4452 = vadd.f32 %v4123, %v4442
        %v4453 = vadd.f32 %v4124, %v4447
        %v4455 = vlaneseq
        %v4456 = vshrl.u32 %v4455, 7
        %v4457 = vsub.s32 0, %v4456
        %v4458 = vrot.slane %v4140, %v4457
        %v4460 = vadd.f32 %v4450, %v4458
        %v4461 = vadd.f32 %v4451, %v4458
        %v4462 = vadd.f32 %v4452, %v4458
        %v4463 = vadd.f32 %v4453, %v4458
        %v4464 = vld [vmem:[#allocation15] sm:$0x1]
        %v4465 = vld [vmem:[#allocation17] sm:$0x1]
        %v4466 = vld [vmem:[#allocation18] sm:$0xff]
        %v4467 = vld [vmem:[#allocation18 + $0x8] sm:$0xff]
        %v4468 = vld [vmem:[#allocation18 + $0x10] sm:$0xff]
        %v4469 = vld [vmem:[#allocation18 + $0x18] sm:$0xff]
        %v4470 = vld [vmem:[#allocation20] sm:$0xff]
        %v4471 = vld [vmem:[#allocation20 + $0x8] sm:$0xff]
        %v4472 = vld [vmem:[#allocation20 + $0x10] sm:$0xff]
        %v4473 = vld [vmem:[#allocation20 + $0x18] sm:$0xff]
        %v4474 = vsel %vm891, %v4460, 0.0
        %4475 = vadd.xlane.f32.xlu0 %v4474
        %v4476 = vpop.xlane.xlu0 %4475
        %v4477 = vsel %vm891, %v4461, 0.0
        %4478 = vadd.xlane.f32.xlu0 %v4477
        %v4479 = vpop.xlane.xlu0 %4478
        %v4480 = vsel %vm891, %v4462, 0.0
        %4481 = vadd.xlane.f32.xlu0 %v4480
        %v4482 = vpop.xlane.xlu0 %4481
        %v4483 = vsel %vm891, %v4463, 0.0
        %4484 = vadd.xlane.f32.xlu0 %v4483
        %v4485 = vpop.xlane.xlu0 %4484
        %v4486 = vmul.f32 %v4476, %v904
        %v4487 = vmul.f32 %v4479, %v904
        %v4488 = vmul.f32 %v4482, %v904
        %v4489 = vmul.f32 %v4485, %v904
        %v4490 = vsub.f32 %v4460, %v4486
        %v4491 = vsub.f32 %v4461, %v4487
        %v4492 = vsub.f32 %v4462, %v4488
        %v4493 = vsub.f32 %v4463, %v4489
        %v4494 = vmul.f32 %v4490, %v4490
        %v4495 = vmul.f32 %v4491, %v4491
        %v4496 = vmul.f32 %v4492, %v4492
        %v4497 = vmul.f32 %v4493, %v4493
        %v4498 = vsel %vm891, %v4494, 0.0
        %4499 = vadd.xlane.f32.xlu0 %v4498
        %v4500 = vpop.xlane.xlu0 %4499
        %v4501 = vsel %vm891, %v4495, 0.0
        %4502 = vadd.xlane.f32.xlu0 %v4501
        %v4503 = vpop.xlane.xlu0 %4502
        %v4504 = vsel %vm891, %v4496, 0.0
        %4505 = vadd.xlane.f32.xlu0 %v4504
        %v4506 = vpop.xlane.xlu0 %4505
        %v4507 = vsel %vm891, %v4497, 0.0
        %4508 = vadd.xlane.f32.xlu0 %v4507
        %v4509 = vpop.xlane.xlu0 %4508
        %v4510 = vmul.f32 %v4500, %v904
        %v4511 = vmul.f32 %v4503, %v904
        %v4512 = vmul.f32 %v4506, %v904
        %v4513 = vmul.f32 %v4509, %v904
        %v4514 = vadd.f32 %v4510, 1e-05
        %v4515 = vadd.f32 %v4511, 1e-05
        %v4516 = vadd.f32 %v4512, 1e-05
        %v4517 = vadd.f32 %v4513, 1e-05
        %v4518 = vrsqrt.pop %v4514
        %v4519 = vrsqrt.pop %v4515
        %v4520 = vrsqrt.pop %v4516
        %v4521 = vrsqrt.pop %v4517
        %v4522 = vmul.f32 %v4490, %v4518
        %v4523 = vmul.f32 %v4491, %v4519
        %v4524 = vmul.f32 %v4492, %v4520
        %v4525 = vmul.f32 %v4493, %v4521
        %v4527 = vlaneseq
        %v4528 = vshrl.u32 %v4527, 7
        %v4529 = vsub.s32 0, %v4528
        %v4530 = vrot.slane %v4464, %v4529
        %v4532 = vmul.f32 %v4522, %v4530
        %v4533 = vmul.f32 %v4523, %v4530
        %v4534 = vmul.f32 %v4524, %v4530
        %v4535 = vmul.f32 %v4525, %v4530
        %v4537 = vlaneseq
        %v4538 = vshrl.u32 %v4537, 7
        %v4539 = vsub.s32 0, %v4538
        %v4540 = vrot.slane %v4465, %v4539
        %v4542 = vadd.f32 %v4532, %v4540
        %v4543 = vadd.f32 %v4533, %v4540
        %v4544 = vadd.f32 %v4534, %v4540
        %v4545 = vadd.f32 %v4535, %v4540
        %v4547 = vsel %vm891, %v4542, 0
        %v4550 = vsel %vm891, %v4543, 0
        %v4553 = vsel %vm891, %v4544, 0
        %v4556 = vsel %vm891, %v4545, 0
        %4558 = vmatprep.subr.mxu0 0.0
        %4559 = vmatpush1.msra.mxu0 %v4466
        %4560 = vmatprep.subr.mxu0 0.0
        %4561 = vmatpush1.msra.mxu0 %v4467
        %4562 = vmatprep.subr.mxu0 0.0
        %4563 = vmatpush1.msra.mxu0 %v4468
        %4564 = vmatprep.subr.mxu0 0.0
        %4565 = vmatpush1.msra.mxu0 %v4469
        %4566 = vmatprep.subr.mxu0 0.0
        %4567 = vmatpush1.msra.mxu0 0.0
        %4568 = vmatprep.subr.mxu0 0.0
        %4569 = vmatpush1.msra.mxu0 0.0
        %4570 = vmatprep.subr.mxu0 0.0
        %4571 = vmatpush1.msra.mxu0 0.0
        %4572 = vmatprep.subr.mxu0 0.0
        %4573 = vmatpush1.msra.mxu0 0.0
        %4574 = vmatprep.subr.mxu0 0.0
        %4575 = vmatpush1.msra.mxu0 0.0
        %4576 = vmatprep.subr.mxu0 0.0
        %4577 = vmatpush1.msra.mxu0 0.0
        %4578 = vmatprep.subr.mxu0 0.0
        %4579 = vmatpush1.msra.mxu0 0.0
        %4580 = vmatprep.subr.mxu0 0.0
        %4581 = vmatpush1.msra.mxu0 0.0
        %4582 = vmatprep.subr.mxu0 0.0
        %4583 = vmatpush1.msra.mxu0 0.0
        %4584 = vmatprep.subr.mxu0 0.0
        %4585 = vmatpush1.msra.mxu0 0.0
        %4586 = vmatprep.subr.mxu0 0.0
        %4587 = vmatpush1.msra.mxu0 0.0
        %4588 = vmatprep.subr.mxu0 0.0
        %4589 = vmatpush1.msra.mxu0 0.0
        %4590 = vmatprep.subr.mxu0 0.0
        %4591 = vmatpush1.msra.mxu0 0.0
        %4592 = vmatprep.subr.mxu0 0.0
        %4593 = vmatpush1.msra.mxu0 0.0
        %4594 = vmatprep.subr.mxu0 0.0
        %4595 = vmatpush1.msra.mxu0 0.0
        %4596 = vmatprep.subr.mxu0 0.0
        %4597 = vmatpush1.msra.mxu0 0.0
        %4598 = vmatprep.subr.mxu0 0.0
        %4599 = vmatpush1.msra.mxu0 0.0
        %4600 = vmatprep.subr.mxu0 0.0
        %4601 = vmatpush1.msra.mxu0 0.0
        %4602 = vmatprep.subr.mxu0 0.0
        %4603 = vmatpush1.msra.mxu0 0.0
        %4604 = vmatprep.subr.mxu0 0.0
        %4605 = vmatpush1.msra.mxu0 0.0
        %4606 = vmatprep.subr.mxu0 0.0
        %4607 = vmatpush1.msra.mxu0 0.0
        %4608 = vmatprep.subr.mxu0 0.0
        %4609 = vmatpush1.msra.mxu0 0.0
        %4610 = vmatprep.subr.mxu0 0.0
        %4611 = vmatpush1.msra.mxu0 0.0
        %4612 = vmatprep.subr.mxu0 0.0
        %4613 = vmatpush1.msra.mxu0 0.0
        %4614 = vmatprep.subr.mxu0 0.0
        %4615 = vmatpush1.msra.mxu0 0.0
        %4616 = vmatprep.subr.mxu0 0.0
        %4617 = vmatpush1.msra.mxu0 0.0
        %4618 = vmatprep.subr.mxu0 0.0
        %4619 = vmatpush1.msra.mxu0 0.0
        %4620 = vmatprep.subr.mxu0 0.0
        %4621 = vmatpush1.msra.mxu0 0.0
        %4622 = vmatprep.mubr.f32.mxu0 0.0
        %4623 = vmatmul.mubr.f32.gmra.mrb[0].mxu0 %v4547
        %v4624 = vpop.f32.mrb[0].mxu0
        %v4625 = vadd.f32 0.0, %v4624
        %v4626 = vpop.f32.mrb[0].mxu0
        %4627 = vmatprep.mubr.f32.mxu0 0.0
        %4628 = vmatmul.mubr.f32.gmra.mrb[0].mxu0 %v4550
        %v4629 = vpop.f32.mrb[0].mxu0
        %v4630 = vadd.f32 0.0, %v4629
        %v4631 = vpop.f32.mrb[0].mxu0
        %4632 = vmatprep.mubr.f32.mxu0 0.0
        %4633 = vmatmul.mubr.f32.gmra.mrb[0].mxu0 %v4553
        %v4634 = vpop.f32.mrb[0].mxu0
        %v4635 = vadd.f32 0.0, %v4634
        %v4636 = vpop.f32.mrb[0].mxu0
        %4637 = vmatprep.mubr.f32.mxu0 0.0
        %4638 = vmatmul.mubr.f32.gmra.mrb[0].mxu0 %v4556
        %v4639 = vpop.f32.mrb[0].mxu0
        %v4640 = vadd.f32 0.0, %v4639
        %v4641 = vpop.f32.mrb[0].mxu0
        %4642 = vdwg.mxu0
        %4644 = vrot.lane.b32.xlu0 %v4625, 96
        %v4645 = vpop.permute.xlu0 %4644
        %v4647 = vmul.f32 %v4625, %v4645
        %v4648 = vsel %vm1065, %v4647, 0.0
        %4649 = vadd.xlane.f32.xlu0 %v4648
        %v4650 = vpop.xlane.xlu0 %4649
        %v4651 = vmul.f32 %v4650, 0.35355338
        %4653 = vrot.lane.b32.xlu0 %v4630, 96
        %v4654 = vpop.permute.xlu0 %4653
        %v4656 = vmul.f32 %v4625, %v4654
        %v4657 = vsel %vm1065, %v4656, 0.0
        %4658 = vadd.xlane.f32.xlu0 %v4657
        %v4659 = vpop.xlane.xlu0 %4658
        %v4660 = vmul.f32 %v4659, 0.35355338
        %4662 = vrot.lane.b32.xlu0 %v4635, 96
        %v4663 = vpop.permute.xlu0 %4662
        %v4665 = vmul.f32 %v4625, %v4663
        %v4666 = vsel %vm1065, %v4665, 0.0
        %4667 = vadd.xlane.f32.xlu0 %v4666
        %v4668 = vpop.xlane.xlu0 %4667
        %v4669 = vmul.f32 %v4668, 0.35355338
        %4671 = vrot.lane.b32.xlu0 %v4640, 96
        %v4672 = vpop.permute.xlu0 %4671
        %v4674 = vmul.f32 %v4625, %v4672
        %v4675 = vsel %vm1065, %v4674, 0.0
        %4676 = vadd.xlane.f32.xlu0 %v4675
        %v4677 = vpop.xlane.xlu0 %4676
        %v4678 = vmul.f32 %v4677, 0.35355338
        %v4679 = vmax.f32 %v4651, %v4660
        %v4680 = vmax.f32 %v4679, %v4669
        %v4681 = vmax.f32 %v4680, %v4678
        %v4682 = vsub.f32 %v4651, %v4681
        %v4683 = vmul.f32 %v4682, 1.442695
        %v4684 = vpow.pop %v4683
        %v4685 = vsub.f32 %v4660, %v4681
        %v4686 = vmul.f32 %v4685, 1.442695
        %v4687 = vpow.pop %v4686
        %v4688 = vsub.f32 %v4669, %v4681
        %v4689 = vmul.f32 %v4688, 1.442695
        %v4690 = vpow.pop %v4689
        %v4691 = vsub.f32 %v4678, %v4681
        %v4692 = vmul.f32 %v4691, 1.442695
        %v4693 = vpow.pop %v4692
        %v4694 = vadd.f32 %v4684, %v4687
        %v4695 = vadd.f32 %v4694, %v4690
        %v4696 = vadd.f32 %v4695, %v4693
        %v4697 = vrcp.pop %v4696
        %v4698 = vmul.f32 %v4684, %v4697
        %v4699 = vmul.f32 %v4698, %v4625
        %v4700 = vmul.f32 %v4687, %v4697
        %v4701 = vmul.f32 %v4700, %v4630
        %v4702 = vadd.f32 %v4699, %v4701
        %v4703 = vmul.f32 %v4690, %v4697
        %v4704 = vmul.f32 %v4703, %v4635
        %v4705 = vadd.f32 %v4702, %v4704
        %v4706 = vmul.f32 %v4693, %v4697
        %v4707 = vmul.f32 %v4706, %v4640
        %v4708 = vadd.f32 %v4705, %v4707
        %4710 = vrot.lane.b32.xlu0 %v4708, 64
        %v4711 = vpop.permute.xlu0 %4710
        %v4712 = vsel %vm1065, %v4711, 0
        %4714 = vmatprep.subr.mxu0 0.0
        %4715 = vmatpush1.msra.mxu0 %v4470
        %4716 = vmatprep.subr.mxu0 0.0
        %4717 = vmatpush1.msra.mxu0 0.0
        %4718 = vmatprep.subr.mxu0 0.0
        %4719 = vmatpush1.msra.mxu0 0.0
        %4720 = vmatprep.subr.mxu0 0.0
        %4721 = vmatpush1.msra.mxu0 0.0
        %4722 = vmatprep.subr.mxu0 0.0
        %4723 = vmatpush1.msra.mxu0 0.0
        %4724 = vmatprep.subr.mxu0 0.0
        %4725 = vmatpush1.msra.mxu0 0.0
        %4726 = vmatprep.subr.mxu0 0.0
        %4727 = vmatpush1.msra.mxu0 0.0
        %4728 = vmatprep.subr.mxu0 0.0
        %4729 = vmatpush1.msra.mxu0 0.0
        %4730 = vmatprep.subr.mxu0 0.0
        %4731 = vmatpush1.msra.mxu0 0.0
        %4732 = vmatprep.subr.mxu0 0.0
        %4733 = vmatpush1.msra.mxu0 0.0
        %4734 = vmatprep.subr.mxu0 0.0
        %4735 = vmatpush1.msra.mxu0 0.0
        %4736 = vmatprep.subr.mxu0 0.0
        %4737 = vmatpush1.msra.mxu0 0.0
        %4738 = vmatprep.subr.mxu0 0.0
        %4739 = vmatpush1.msra.mxu0 0.0
        %4740 = vmatprep.subr.mxu0 0.0
        %4741 = vmatpush1.msra.mxu0 0.0
        %4742 = vmatprep.subr.mxu0 0.0
        %4743 = vmatpush1.msra.mxu0 0.0
        %4744 = vmatprep.subr.mxu0 0.0
        %4745 = vmatpush1.msra.mxu0 0.0
        %4746 = vmatprep.subr.mxu0 0.0
        %4747 = vmatpush1.msra.mxu0 0.0
        %4748 = vmatprep.subr.mxu0 0.0
        %4749 = vmatpush1.msra.mxu0 0.0
        %4750 = vmatprep.subr.mxu0 0.0
        %4751 = vmatpush1.msra.mxu0 0.0
        %4752 = vmatprep.subr.mxu0 0.0
        %4753 = vmatpush1.msra.mxu0 0.0
        %4754 = vmatprep.subr.mxu0 0.0
        %4755 = vmatpush1.msra.mxu0 0.0
        %4756 = vmatprep.subr.mxu0 0.0
        %4757 = vmatpush1.msra.mxu0 0.0
        %4758 = vmatprep.subr.mxu0 0.0
        %4759 = vmatpush1.msra.mxu0 0.0
        %4760 = vmatprep.subr.mxu0 0.0
        %4761 = vmatpush1.msra.mxu0 0.0
        %4762 = vmatprep.subr.mxu0 0.0
        %4763 = vmatpush1.msra.mxu0 0.0
        %4764 = vmatprep.subr.mxu0 0.0
        %4765 = vmatpush1.msra.mxu0 0.0
        %4766 = vmatprep.subr.mxu0 0.0
        %4767 = vmatpush1.msra.mxu0 0.0
        %4768 = vmatprep.subr.mxu0 0.0
        %4769 = vmatpush1.msra.mxu0 0.0
        %4770 = vmatprep.subr.mxu0 0.0
        %4771 = vmatpush1.msra.mxu0 0.0
        %4772 = vmatprep.subr.mxu0 0.0
        %4773 = vmatpush1.msra.mxu0 0.0
        %4774 = vmatprep.subr.mxu0 0.0
        %4775 = vmatpush1.msra.mxu0 0.0
        %4776 = vmatprep.subr.mxu0 0.0
        %4777 = vmatpush1.msra.mxu0 0.0
        %4778 = vmatprep.mubr.f32.mxu0 0.0
        %4779 = vmatmul.mubr.f32.gmra.mrb[0].mxu0 %v4712
        %v4780 = vpop.f32.mrb[0].mxu0
        %v4781 = vadd.f32 0.0, %v4780
        %v4782 = vpop.f32.mrb[0].mxu0
        %4783 = vdwg.mxu0
        %v4784 = vmul.f32 %v4630, %v4645
        %v4785 = vsel %vm1065, %v4784, 0.0
        %4786 = vadd.xlane.f32.xlu0 %v4785
        %v4787 = vpop.xlane.xlu0 %4786
        %v4788 = vmul.f32 %v4787, 0.35355338
        %v4789 = vmul.f32 %v4630, %v4654
        %v4790 = vsel %vm1065, %v4789, 0.0
        %4791 = vadd.xlane.f32.xlu0 %v4790
        %v4792 = vpop.xlane.xlu0 %4791
        %v4793 = vmul.f32 %v4792, 0.35355338
        %v4794 = vmul.f32 %v4630, %v4663
        %v4795 = vsel %vm1065, %v4794, 0.0
        %4796 = vadd.xlane.f32.xlu0 %v4795
        %v4797 = vpop.xlane.xlu0 %4796
        %v4798 = vmul.f32 %v4797, 0.35355338
        %v4799 = vmul.f32 %v4630, %v4672
        %v4800 = vsel %vm1065, %v4799, 0.0
        %4801 = vadd.xlane.f32.xlu0 %v4800
        %v4802 = vpop.xlane.xlu0 %4801
        %v4803 = vmul.f32 %v4802, 0.35355338
        %v4804 = vmax.f32 %v4788, %v4793
        %v4805 = vmax.f32 %v4804, %v4798
        %v4806 = vmax.f32 %v4805, %v4803
        %v4807 = vsub.f32 %v4788, %v4806
        %v4808 = vmul.f32 %v4807, 1.442695
        %v4809 = vpow.pop %v4808
        %v4810 = vsub.f32 %v4793, %v4806
        %v4811 = vmul.f32 %v4810, 1.442695
        %v4812 = vpow.pop %v4811
        %v4813 = vsub.f32 %v4798, %v4806
        %v4814 = vmul.f32 %v4813, 1.442695
        %v4815 = vpow.pop %v4814
        %v4816 = vsub.f32 %v4803, %v4806
        %v4817 = vmul.f32 %v4816, 1.442695
        %v4818 = vpow.pop %v4817
        %v4819 = vadd.f32 %v4809, %v4812
        %v4820 = vadd.f32 %v4819, %v4815
        %v4821 = vadd.f32 %v4820, %v4818
        %v4822 = vrcp.pop %v4821
        %v4823 = vmul.f32 %v4809, %v4822
        %v4824 = vmul.f32 %v4823, %v4625
        %v4825 = vmul.f32 %v4812, %v4822
        %v4826 = vmul.f32 %v4825, %v4630
        %v4827 = vadd.f32 %v4824, %v4826
        %v4828 = vmul.f32 %v4815, %v4822
        %v4829 = vmul.f32 %v4828, %v4635
        %v4830 = vadd.f32 %v4827, %v4829
        %v4831 = vmul.f32 %v4818, %v4822
        %v4832 = vmul.f32 %v4831, %v4640
        %v4833 = vadd.f32 %v4830, %v4832
        %4835 = vrot.lane.b32.xlu0 %v4833, 64
        %v4836 = vpop.permute.xlu0 %4835
        %v4837 = vsel %vm1065, %v4836, 0
        %4839 = vmatprep.subr.mxu0 0.0
        %4840 = vmatpush1.msra.mxu0 %v4470
        %4841 = vmatprep.subr.mxu0 0.0
        %4842 = vmatpush1.msra.mxu0 0.0
        %4843 = vmatprep.subr.mxu0 0.0
        %4844 = vmatpush1.msra.mxu0 0.0
        %4845 = vmatprep.subr.mxu0 0.0
        %4846 = vmatpush1.msra.mxu0 0.0
        %4847 = vmatprep.subr.mxu0 0.0
        %4848 = vmatpush1.msra.mxu0 0.0
        %4849 = vmatprep.subr.mxu0 0.0
        %4850 = vmatpush1.msra.mxu0 0.0
        %4851 = vmatprep.subr.mxu0 0.0
        %4852 = vmatpush1.msra.mxu0 0.0
        %4853 = vmatprep.subr.mxu0 0.0
        %4854 = vmatpush1.msra.mxu0 0.0
        %4855 = vmatprep.subr.mxu0 0.0
        %4856 = vmatpush1.msra.mxu0 0.0
        %4857 = vmatprep.subr.mxu0 0.0
        %4858 = vmatpush1.msra.mxu0 0.0
        %4859 = vmatprep.subr.mxu0 0.0
        %4860 = vmatpush1.msra.mxu0 0.0
        %4861 = vmatprep.subr.mxu0 0.0
        %4862 = vmatpush1.msra.mxu0 0.0
        %4863 = vmatprep.subr.mxu0 0.0
        %4864 = vmatpush1.msra.mxu0 0.0
        %4865 = vmatprep.subr.mxu0 0.0
        %4866 = vmatpush1.msra.mxu0 0.0
        %4867 = vmatprep.subr.mxu0 0.0
        %4868 = vmatpush1.msra.mxu0 0.0
        %4869 = vmatprep.subr.mxu0 0.0
        %4870 = vmatpush1.msra.mxu0 0.0
        %4871 = vmatprep.subr.mxu0 0.0
        %4872 = vmatpush1.msra.mxu0 0.0
        %4873 = vmatprep.subr.mxu0 0.0
        %4874 = vmatpush1.msra.mxu0 0.0
        %4875 = vmatprep.subr.mxu0 0.0
        %4876 = vmatpush1.msra.mxu0 0.0
        %4877 = vmatprep.subr.mxu0 0.0
        %4878 = vmatpush1.msra.mxu0 0.0
        %4879 = vmatprep.subr.mxu0 0.0
        %4880 = vmatpush1.msra.mxu0 0.0
        %4881 = vmatprep.subr.mxu0 0.0
        %4882 = vmatpush1.msra.mxu0 0.0
        %4883 = vmatprep.subr.mxu0 0.0
        %4884 = vmatpush1.msra.mxu0 0.0
        %4885 = vmatprep.subr.mxu0 0.0
        %4886 = vmatpush1.msra.mxu0 0.0
        %4887 = vmatprep.subr.mxu0 0.0
        %4888 = vmatpush1.msra.mxu0 0.0
        %4889 = vmatprep.subr.mxu0 0.0
        %4890 = vmatpush1.msra.mxu0 0.0
        %4891 = vmatprep.subr.mxu0 0.0
        %4892 = vmatpush1.msra.mxu0 0.0
        %4893 = vmatprep.subr.mxu0 0.0
        %4894 = vmatpush1.msra.mxu0 0.0
        %4895 = vmatprep.subr.mxu0 0.0
        %4896 = vmatpush1.msra.mxu0 0.0
        %4897 = vmatprep.subr.mxu0 0.0
        %4898 = vmatpush1.msra.mxu0 0.0
        %4899 = vmatprep.subr.mxu0 0.0
        %4900 = vmatpush1.msra.mxu0 0.0
        %4901 = vmatprep.subr.mxu0 0.0
        %4902 = vmatpush1.msra.mxu0 0.0
        %4903 = vmatprep.mubr.f32.mxu0 0.0
        %4904 = vmatmul.mubr.f32.gmra.mrb[0].mxu0 %v4837
        %v4905 = vpop.f32.mrb[0].mxu0
        %v4906 = vadd.f32 0.0, %v4905
        %v4907 = vpop.f32.mrb[0].mxu0
        %4908 = vdwg.mxu0
        %v4909 = vmul.f32 %v4635, %v4645
        %v4910 = vsel %vm1065, %v4909, 0.0
        %4911 = vadd.xlane.f32.xlu0 %v4910
        %v4912 = vpop.xlane.xlu0 %4911
        %v4913 = vmul.f32 %v4912, 0.35355338
        %v4914 = vmul.f32 %v4635, %v4654
        %v4915 = vsel %vm1065, %v4914, 0.0
        %4916 = vadd.xlane.f32.xlu0 %v4915
        %v4917 = vpop.xlane.xlu0 %4916
        %v4918 = vmul.f32 %v4917, 0.35355338
        %v4919 = vmul.f32 %v4635, %v4663
        %v4920 = vsel %vm1065, %v4919, 0.0
        %4921 = vadd.xlane.f32.xlu0 %v4920
        %v4922 = vpop.xlane.xlu0 %4921
        %v4923 = vmul.f32 %v4922, 0.35355338
        %v4924 = vmul.f32 %v4635, %v4672
        %v4925 = vsel %vm1065, %v4924, 0.0
        %4926 = vadd.xlane.f32.xlu0 %v4925
        %v4927 = vpop.xlane.xlu0 %4926
        %v4928 = vmul.f32 %v4927, 0.35355338
        %v4929 = vmax.f32 %v4913, %v4918
        %v4930 = vmax.f32 %v4929, %v4923
        %v4931 = vmax.f32 %v4930, %v4928
        %v4932 = vsub.f32 %v4913, %v4931
        %v4933 = vmul.f32 %v4932, 1.442695
        %v4934 = vpow.pop %v4933
        %v4935 = vsub.f32 %v4918, %v4931
        %v4936 = vmul.f32 %v4935, 1.442695
        %v4937 = vpow.pop %v4936
        %v4938 = vsub.f32 %v4923, %v4931
        %v4939 = vmul.f32 %v4938, 1.442695
        %v4940 = vpow.pop %v4939
        %v4941 = vsub.f32 %v4928, %v4931
        %v4942 = vmul.f32 %v4941, 1.442695
        %v4943 = vpow.pop %v4942
        %v4944 = vadd.f32 %v4934, %v4937
        %v4945 = vadd.f32 %v4944, %v4940
        %v4946 = vadd.f32 %v4945, %v4943
        %v4947 = vrcp.pop %v4946
        %v4948 = vmul.f32 %v4934, %v4947
        %v4949 = vmul.f32 %v4948, %v4625
        %v4950 = vmul.f32 %v4937, %v4947
        %v4951 = vmul.f32 %v4950, %v4630
        %v4952 = vadd.f32 %v4949, %v4951
        %v4953 = vmul.f32 %v4940, %v4947
        %v4954 = vmul.f32 %v4953, %v4635
        %v4955 = vadd.f32 %v4952, %v4954
        %v4956 = vmul.f32 %v4943, %v4947
        %v4957 = vmul.f32 %v4956, %v4640
        %v4958 = vadd.f32 %v4955, %v4957
        %4960 = vrot.lane.b32.xlu0 %v4958, 64
        %v4961 = vpop.permute.xlu0 %4960
        %v4962 = vsel %vm1065, %v4961, 0
        %4964 = vmatprep.subr.mxu0 0.0
        %4965 = vmatpush1.msra.mxu0 %v4470
        %4966 = vmatprep.subr.mxu0 0.0
        %4967 = vmatpush1.msra.mxu0 0.0
        %4968 = vmatprep.subr.mxu0 0.0
        %4969 = vmatpush1.msra.mxu0 0.0
        %4970 = vmatprep.subr.mxu0 0.0
        %4971 = vmatpush1.msra.mxu0 0.0
        %4972 = vmatprep.subr.mxu0 0.0
        %4973 = vmatpush1.msra.mxu0 0.0
        %4974 = vmatprep.subr.mxu0 0.0
        %4975 = vmatpush1.msra.mxu0 0.0
        %4976 = vmatprep.subr.mxu0 0.0
        %4977 = vmatpush1.msra.mxu0 0.0
        %4978 = vmatprep.subr.mxu0 0.0
        %4979 = vmatpush1.msra.mxu0 0.0
        %4980 = vmatprep.subr.mxu0 0.0
        %4981 = vmatpush1.msra.mxu0 0.0
        %4982 = vmatprep.subr.mxu0 0.0
        %4983 = vmatpush1.msra.mxu0 0.0
        %4984 = vmatprep.subr.mxu0 0.0
        %4985 = vmatpush1.msra.mxu0 0.0
        %4986 = vmatprep.subr.mxu0 0.0
        %4987 = vmatpush1.msra.mxu0 0.0
        %4988 = vmatprep.subr.mxu0 0.0
        %4989 = vmatpush1.msra.mxu0 0.0
        %4990 = vmatprep.subr.mxu0 0.0
        %4991 = vmatpush1.msra.mxu0 0.0
        %4992 = vmatprep.subr.mxu0 0.0
        %4993 = vmatpush1.msra.mxu0 0.0
        %4994 = vmatprep.subr.mxu0 0.0
        %4995 = vmatpush1.msra.mxu0 0.0
        %4996 = vmatprep.subr.mxu0 0.0
        %4997 = vmatpush1.msra.mxu0 0.0
        %4998 = vmatprep.subr.mxu0 0.0
        %4999 = vmatpush1.msra.mxu0 0.0
        %5000 = vmatprep.subr.mxu0 0.0
        %5001 = vmatpush1.msra.mxu0 0.0
        %5002 = vmatprep.subr.mxu0 0.0
        %5003 = vmatpush1.msra.mxu0 0.0
        %5004 = vmatprep.subr.mxu0 0.0
        %5005 = vmatpush1.msra.mxu0 0.0
        %5006 = vmatprep.subr.mxu0 0.0
        %5007 = vmatpush1.msra.mxu0 0.0
        %5008 = vmatprep.subr.mxu0 0.0
        %5009 = vmatpush1.msra.mxu0 0.0
        %5010 = vmatprep.subr.mxu0 0.0
        %5011 = vmatpush1.msra.mxu0 0.0
        %5012 = vmatprep.subr.mxu0 0.0
        %5013 = vmatpush1.msra.mxu0 0.0
        %5014 = vmatprep.subr.mxu0 0.0
        %5015 = vmatpush1.msra.mxu0 0.0
        %5016 = vmatprep.subr.mxu0 0.0
        %5017 = vmatpush1.msra.mxu0 0.0
        %5018 = vmatprep.subr.mxu0 0.0
        %5019 = vmatpush1.msra.mxu0 0.0
        %5020 = vmatprep.subr.mxu0 0.0
        %5021 = vmatpush1.msra.mxu0 0.0
        %5022 = vmatprep.subr.mxu0 0.0
        %5023 = vmatpush1.msra.mxu0 0.0
        %5024 = vmatprep.subr.mxu0 0.0
        %5025 = vmatpush1.msra.mxu0 0.0
        %5026 = vmatprep.subr.mxu0 0.0
        %5027 = vmatpush1.msra.mxu0 0.0
        %5028 = vmatprep.mubr.f32.mxu0 0.0
        %5029 = vmatmul.mubr.f32.gmra.mrb[0].mxu0 %v4962
        %v5030 = vpop.f32.mrb[0].mxu0
        %v5031 = vadd.f32 0.0, %v5030
        %v5032 = vpop.f32.mrb[0].mxu0
        %5033 = vdwg.mxu0
        %v5034 = vmul.f32 %v4640, %v4645
        %v5035 = vsel %vm1065, %v5034, 0.0
        %5036 = vadd.xlane.f32.xlu0 %v5035
        %v5037 = vpop.xlane.xlu0 %5036
        %v5038 = vmul.f32 %v5037, 0.35355338
        %v5039 = vmul.f32 %v4640, %v4654
        %v5040 = vsel %vm1065, %v5039, 0.0
        %5041 = vadd.xlane.f32.xlu0 %v5040
        %v5042 = vpop.xlane.xlu0 %5041
        %v5043 = vmul.f32 %v5042, 0.35355338
        %v5044 = vmul.f32 %v4640, %v4663
        %v5045 = vsel %vm1065, %v5044, 0.0
        %5046 = vadd.xlane.f32.xlu0 %v5045
        %v5047 = vpop.xlane.xlu0 %5046
        %v5048 = vmul.f32 %v5047, 0.35355338
        %v5049 = vmul.f32 %v4640, %v4672
        %v5050 = vsel %vm1065, %v5049, 0.0
        %5051 = vadd.xlane.f32.xlu0 %v5050
        %v5052 = vpop.xlane.xlu0 %5051
        %v5053 = vmul.f32 %v5052, 0.35355338
        %v5054 = vmax.f32 %v5038, %v5043
        %v5055 = vmax.f32 %v5054, %v5048
        %v5056 = vmax.f32 %v5055, %v5053
        %v5057 = vsub.f32 %v5038, %v5056
        %v5058 = vmul.f32 %v5057, 1.442695
        %v5059 = vpow.pop %v5058
        %v5060 = vsub.f32 %v5043, %v5056
        %v5061 = vmul.f32 %v5060, 1.442695
        %v5062 = vpow.pop %v5061
        %v5063 = vsub.f32 %v5048, %v5056
        %v5064 = vmul.f32 %v5063, 1.442695
        %v5065 = vpow.pop %v5064
        %v5066 = vsub.f32 %v5053, %v5056
        %v5067 = vmul.f32 %v5066, 1.442695
        %v5068 = vpow.pop %v5067
        %v5069 = vadd.f32 %v5059, %v5062
        %v5070 = vadd.f32 %v5069, %v5065
        %v5071 = vadd.f32 %v5070, %v5068
        %v5072 = vrcp.pop %v5071
        %v5073 = vmul.f32 %v5059, %v5072
        %v5074 = vmul.f32 %v5073, %v4625
        %v5075 = vmul.f32 %v5062, %v5072
        %v5076 = vmul.f32 %v5075, %v4630
        %v5077 = vadd.f32 %v5074, %v5076
        %v5078 = vmul.f32 %v5065, %v5072
        %v5079 = vmul.f32 %v5078, %v4635
        %v5080 = vadd.f32 %v5077, %v5079
        %v5081 = vmul.f32 %v5068, %v5072
        %v5082 = vmul.f32 %v5081, %v4640
        %v5083 = vadd.f32 %v5080, %v5082
        %5085 = vrot.lane.b32.xlu0 %v5083, 64
        %v5086 = vpop.permute.xlu0 %5085
        %v5087 = vsel %vm1065, %v5086, 0
        %5089 = vmatprep.subr.mxu0 0.0
        %5090 = vmatpush1.msra.mxu0 %v4470
        %5091 = vmatprep.subr.mxu0 0.0
        %5092 = vmatpush1.msra.mxu0 0.0
        %5093 = vmatprep.subr.mxu0 0.0
        %5094 = vmatpush1.msra.mxu0 0.0
        %5095 = vmatprep.subr.mxu0 0.0
        %5096 = vmatpush1.msra.mxu0 0.0
        %5097 = vmatprep.subr.mxu0 0.0
        %5098 = vmatpush1.msra.mxu0 0.0
        %5099 = vmatprep.subr.mxu0 0.0
        %5100 = vmatpush1.msra.mxu0 0.0
        %5101 = vmatprep.subr.mxu0 0.0
        %5102 = vmatpush1.msra.mxu0 0.0
        %5103 = vmatprep.subr.mxu0 0.0
        %5104 = vmatpush1.msra.mxu0 0.0
        %5105 = vmatprep.subr.mxu0 0.0
        %5106 = vmatpush1.msra.mxu0 0.0
        %5107 = vmatprep.subr.mxu0 0.0
        %5108 = vmatpush1.msra.mxu0 0.0
        %5109 = vmatprep.subr.mxu0 0.0
        %5110 = vmatpush1.msra.mxu0 0.0
        %5111 = vmatprep.subr.mxu0 0.0
        %5112 = vmatpush1.msra.mxu0 0.0
        %5113 = vmatprep.subr.mxu0 0.0
        %5114 = vmatpush1.msra.mxu0 0.0
        %5115 = vmatprep.subr.mxu0 0.0
        %5116 = vmatpush1.msra.mxu0 0.0
        %5117 = vmatprep.subr.mxu0 0.0
        %5118 = vmatpush1.msra.mxu0 0.0
        %5119 = vmatprep.subr.mxu0 0.0
        %5120 = vmatpush1.msra.mxu0 0.0
        %5121 = vmatprep.subr.mxu0 0.0
        %5122 = vmatpush1.msra.mxu0 0.0
        %5123 = vmatprep.subr.mxu0 0.0
        %5124 = vmatpush1.msra.mxu0 0.0
        %5125 = vmatprep.subr.mxu0 0.0
        %5126 = vmatpush1.msra.mxu0 0.0
        %5127 = vmatprep.subr.mxu0 0.0
        %5128 = vmatpush1.msra.mxu0 0.0
        %5129 = vmatprep.subr.mxu0 0.0
        %5130 = vmatpush1.msra.mxu0 0.0
        %5131 = vmatprep.subr.mxu0 0.0
        %5132 = vmatpush1.msra.mxu0 0.0
        %5133 = vmatprep.subr.mxu0 0.0
        %5134 = vmatpush1.msra.mxu0 0.0
        %5135 = vmatprep.subr.mxu0 0.0
        %5136 = vmatpush1.msra.mxu0 0.0
        %5137 = vmatprep.subr.mxu0 0.0
        %5138 = vmatpush1.msra.mxu0 0.0
        %5139 = vmatprep.subr.mxu0 0.0
        %5140 = vmatpush1.msra.mxu0 0.0
        %5141 = vmatprep.subr.mxu0 0.0
        %5142 = vmatpush1.msra.mxu0 0.0
        %5143 = vmatprep.subr.mxu0 0.0
        %5144 = vmatpush1.msra.mxu0 0.0
        %5145 = vmatprep.subr.mxu0 0.0
        %5146 = vmatpush1.msra.mxu0 0.0
        %5147 = vmatprep.subr.mxu0 0.0
        %5148 = vmatpush1.msra.mxu0 0.0
        %5149 = vmatprep.subr.mxu0 0.0
        %5150 = vmatpush1.msra.mxu0 0.0
        %5151 = vmatprep.subr.mxu0 0.0
        %5152 = vmatpush1.msra.mxu0 0.0
        %5153 = vmatprep.mubr.f32.mxu0 0.0
        %5154 = vmatmul.mubr.f32.gmra.mrb[0].mxu0 %v5087
        %v5155 = vpop.f32.mrb[0].mxu0
        %v5156 = vadd.f32 0.0, %v5155
        %v5157 = vpop.f32.mrb[0].mxu0
        %5158 = vdwg.mxu0
        %5160 = vrot.lane.b32.xlu0 %v4647, 120
        %v5161 = vpop.permute.xlu0 %5160
        %v5163 = vsel %vm1065, %v5161, 0.0
        %5164 = vadd.xlane.f32.xlu0 %v5163
        %v5165 = vpop.xlane.xlu0 %5164
        %v5166 = vmul.f32 %v5165, 0.35355338
        %5168 = vrot.lane.b32.xlu0 %v4656, 120
        %v5169 = vpop.permute.xlu0 %5168
        %v5171 = vsel %vm1065, %v5169, 0.0
        %5172 = vadd.xlane.f32.xlu0 %v5171
        %v5173 = vpop.xlane.xlu0 %5172
        %v5174 = vmul.f32 %v5173, 0.35355338
        %5176 = vrot.lane.b32.xlu0 %v4665, 120
        %v5177 = vpop.permute.xlu0 %5176
        %v5179 = vsel %vm1065, %v5177, 0.0
        %5180 = vadd.xlane.f32.xlu0 %v5179
        %v5181 = vpop.xlane.xlu0 %5180
        %v5182 = vmul.f32 %v5181, 0.35355338
        %5184 = vrot.lane.b32.xlu0 %v4674, 120
        %v5185 = vpop.permute.xlu0 %5184
        %v5187 = vsel %vm1065, %v5185, 0.0
        %5188 = vadd.xlane.f32.xlu0 %v5187
        %v5189 = vpop.xlane.xlu0 %5188
        %v5190 = vmul.f32 %v5189, 0.35355338
        %v5191 = vmax.f32 %v5166, %v5174
        %v5192 = vmax.f32 %v5191, %v5182
        %v5193 = vmax.f32 %v5192, %v5190
        %v5194 = vsub.f32 %v5166, %v5193
        %v5195 = vmul.f32 %v5194, 1.442695
        %v5196 = vpow.pop %v5195
        %v5197 = vsub.f32 %v5174, %v5193
        %v5198 = vmul.f32 %v5197, 1.442695
        %v5199 = vpow.pop %v5198
        %v5200 = vsub.f32 %v5182, %v5193
        %v5201 = vmul.f32 %v5200, 1.442695
        %v5202 = vpow.pop %v5201
        %v5203 = vsub.f32 %v5190, %v5193
        %v5204 = vmul.f32 %v5203, 1.442695
        %v5205 = vpow.pop %v5204
        %v5206 = vadd.f32 %v5196, %v5199
        %v5207 = vadd.f32 %v5206, %v5202
        %v5208 = vadd.f32 %v5207, %v5205
        %v5209 = vrcp.pop %v5208
        %v5210 = vmul.f32 %v5196, %v5209
        %v5211 = vmul.f32 %v5210, %v4625
        %v5212 = vmul.f32 %v5199, %v5209
        %v5213 = vmul.f32 %v5212, %v4630
        %v5214 = vadd.f32 %v5211, %v5213
        %v5215 = vmul.f32 %v5202, %v5209
        %v5216 = vmul.f32 %v5215, %v4635
        %v5217 = vadd.f32 %v5214, %v5216
        %v5218 = vmul.f32 %v5205, %v5209
        %v5219 = vmul.f32 %v5218, %v4640
        %v5220 = vadd.f32 %v5217, %v5219
        %5222 = vrot.lane.b32.xlu0 %v5220, 56
        %v5223 = vpop.permute.xlu0 %5222
        %v5224 = vsel %vm1065, %v5223, 0
        %5226 = vmatprep.subr.mxu0 0.0
        %5227 = vmatpush1.msra.mxu0 %v4471
        %5228 = vmatprep.subr.mxu0 0.0
        %5229 = vmatpush1.msra.mxu0 0.0
        %5230 = vmatprep.subr.mxu0 0.0
        %5231 = vmatpush1.msra.mxu0 0.0
        %5232 = vmatprep.subr.mxu0 0.0
        %5233 = vmatpush1.msra.mxu0 0.0
        %5234 = vmatprep.subr.mxu0 0.0
        %5235 = vmatpush1.msra.mxu0 0.0
        %5236 = vmatprep.subr.mxu0 0.0
        %5237 = vmatpush1.msra.mxu0 0.0
        %5238 = vmatprep.subr.mxu0 0.0
        %5239 = vmatpush1.msra.mxu0 0.0
        %5240 = vmatprep.subr.mxu0 0.0
        %5241 = vmatpush1.msra.mxu0 0.0
        %5242 = vmatprep.subr.mxu0 0.0
        %5243 = vmatpush1.msra.mxu0 0.0
        %5244 = vmatprep.subr.mxu0 0.0
        %5245 = vmatpush1.msra.mxu0 0.0
        %5246 = vmatprep.subr.mxu0 0.0
        %5247 = vmatpush1.msra.mxu0 0.0
        %5248 = vmatprep.subr.mxu0 0.0
        %5249 = vmatpush1.msra.mxu0 0.0
        %5250 = vmatprep.subr.mxu0 0.0
        %5251 = vmatpush1.msra.mxu0 0.0
        %5252 = vmatprep.subr.mxu0 0.0
        %5253 = vmatpush1.msra.mxu0 0.0
        %5254 = vmatprep.subr.mxu0 0.0
        %5255 = vmatpush1.msra.mxu0 0.0
        %5256 = vmatprep.subr.mxu0 0.0
        %5257 = vmatpush1.msra.mxu0 0.0
        %5258 = vmatprep.subr.mxu0 0.0
        %5259 = vmatpush1.msra.mxu0 0.0
        %5260 = vmatprep.subr.mxu0 0.0
        %5261 = vmatpush1.msra.mxu0 0.0
        %5262 = vmatprep.subr.mxu0 0.0
        %5263 = vmatpush1.msra.mxu0 0.0
        %5264 = vmatprep.subr.mxu0 0.0
        %5265 = vmatpush1.msra.mxu0 0.0
        %5266 = vmatprep.subr.mxu0 0.0
        %5267 = vmatpush1.msra.mxu0 0.0
        %5268 = vmatprep.subr.mxu0 0.0
        %5269 = vmatpush1.msra.mxu0 0.0
        %5270 = vmatprep.subr.mxu0 0.0
        %5271 = vmatpush1.msra.mxu0 0.0
        %5272 = vmatprep.subr.mxu0 0.0
        %5273 = vmatpush1.msra.mxu0 0.0
        %5274 = vmatprep.subr.mxu0 0.0
        %5275 = vmatpush1.msra.mxu0 0.0
        %5276 = vmatprep.subr.mxu0 0.0
        %5277 = vmatpush1.msra.mxu0 0.0
        %5278 = vmatprep.subr.mxu0 0.0
        %5279 = vmatpush1.msra.mxu0 0.0
        %5280 = vmatprep.subr.mxu0 0.0
        %5281 = vmatpush1.msra.mxu0 0.0
        %5282 = vmatprep.subr.mxu0 0.0
        %5283 = vmatpush1.msra.mxu0 0.0
        %5284 = vmatprep.subr.mxu0 0.0
        %5285 = vmatpush1.msra.mxu0 0.0
        %5286 = vmatprep.subr.mxu0 0.0
        %5287 = vmatpush1.msra.mxu0 0.0
        %5288 = vmatprep.subr.mxu0 0.0
        %5289 = vmatpush1.msra.mxu0 0.0
        %5290 = vmatprep.mubr.f32.mxu0 0.0
        %5291 = vmatmul.mubr.f32.gmra.mrb[0].mxu0 %v5224
        %v5292 = vpop.f32.mrb[0].mxu0
        %v5293 = vadd.f32 0.0, %v5292
        %v5294 = vpop.f32.mrb[0].mxu0
        %5295 = vdwg.mxu0
        %v5296 = vadd.f32 %v4781, %v5293
        %5298 = vrot.lane.b32.xlu0 %v4784, 120
        %v5299 = vpop.permute.xlu0 %5298
        %v5301 = vsel %vm1065, %v5299, 0.0
        %5302 = vadd.xlane.f32.xlu0 %v5301
        %v5303 = vpop.xlane.xlu0 %5302
        %v5304 = vmul.f32 %v5303, 0.35355338
        %5306 = vrot.lane.b32.xlu0 %v4789, 120
        %v5307 = vpop.permute.xlu0 %5306
        %v5309 = vsel %vm1065, %v5307, 0.0
        %5310 = vadd.xlane.f32.xlu0 %v5309
        %v5311 = vpop.xlane.xlu0 %5310
        %v5312 = vmul.f32 %v5311, 0.35355338
        %5314 = vrot.lane.b32.xlu0 %v4794, 120
        %v5315 = vpop.permute.xlu0 %5314
        %v5317 = vsel %vm1065, %v5315, 0.0
        %5318 = vadd.xlane.f32.xlu0 %v5317
        %v5319 = vpop.xlane.xlu0 %5318
        %v5320 = vmul.f32 %v5319, 0.35355338
        %5322 = vrot.lane.b32.xlu0 %v4799, 120
        %v5323 = vpop.permute.xlu0 %5322
        %v5325 = vsel %vm1065, %v5323, 0.0
        %5326 = vadd.xlane.f32.xlu0 %v5325
        %v5327 = vpop.xlane.xlu0 %5326
        %v5328 = vmul.f32 %v5327, 0.35355338
        %v5329 = vmax.f32 %v5304, %v5312
        %v5330 = vmax.f32 %v5329, %v5320
        %v5331 = vmax.f32 %v5330, %v5328
        %v5332 = vsub.f32 %v5304, %v5331
        %v5333 = vmul.f32 %v5332, 1.442695
        %v5334 = vpow.pop %v5333
        %v5335 = vsub.f32 %v5312, %v5331
        %v5336 = vmul.f32 %v5335, 1.442695
        %v5337 = vpow.pop %v5336
        %v5338 = vsub.f32 %v5320, %v5331
        %v5339 = vmul.f32 %v5338, 1.442695
        %v5340 = vpow.pop %v5339
        %v5341 = vsub.f32 %v5328, %v5331
        %v5342 = vmul.f32 %v5341, 1.442695
        %v5343 = vpow.pop %v5342
        %v5344 = vadd.f32 %v5334, %v5337
        %v5345 = vadd.f32 %v5344, %v5340
        %v5346 = vadd.f32 %v5345, %v5343
        %v5347 = vrcp.pop %v5346
        %v5348 = vmul.f32 %v5334, %v5347
        %v5349 = vmul.f32 %v5348, %v4625
        %v5350 = vmul.f32 %v5337, %v5347
        %v5351 = vmul.f32 %v5350, %v4630
        %v5352 = vadd.f32 %v5349, %v5351
        %v5353 = vmul.f32 %v5340, %v5347
        %v5354 = vmul.f32 %v5353, %v4635
        %v5355 = vadd.f32 %v5352, %v5354
        %v5356 = vmul.f32 %v5343, %v5347
        %v5357 = vmul.f32 %v5356, %v4640
        %v5358 = vadd.f32 %v5355, %v5357
        %5360 = vrot.lane.b32.xlu0 %v5358, 56
        %v5361 = vpop.permute.xlu0 %5360
        %v5362 = vsel %vm1065, %v5361, 0
        %5364 = vmatprep.subr.mxu0 0.0
        %5365 = vmatpush1.msra.mxu0 %v4471
        %5366 = vmatprep.subr.mxu0 0.0
        %5367 = vmatpush1.msra.mxu0 0.0
        %5368 = vmatprep.subr.mxu0 0.0
        %5369 = vmatpush1.msra.mxu0 0.0
        %5370 = vmatprep.subr.mxu0 0.0
        %5371 = vmatpush1.msra.mxu0 0.0
        %5372 = vmatprep.subr.mxu0 0.0
        %5373 = vmatpush1.msra.mxu0 0.0
        %5374 = vmatprep.subr.mxu0 0.0
        %5375 = vmatpush1.msra.mxu0 0.0
        %5376 = vmatprep.subr.mxu0 0.0
        %5377 = vmatpush1.msra.mxu0 0.0
        %5378 = vmatprep.subr.mxu0 0.0
        %5379 = vmatpush1.msra.mxu0 0.0
        %5380 = vmatprep.subr.mxu0 0.0
        %5381 = vmatpush1.msra.mxu0 0.0
        %5382 = vmatprep.subr.mxu0 0.0
        %5383 = vmatpush1.msra.mxu0 0.0
        %5384 = vmatprep.subr.mxu0 0.0
        %5385 = vmatpush1.msra.mxu0 0.0
        %5386 = vmatprep.subr.mxu0 0.0
        %5387 = vmatpush1.msra.mxu0 0.0
        %5388 = vmatprep.subr.mxu0 0.0
        %5389 = vmatpush1.msra.mxu0 0.0
        %5390 = vmatprep.subr.mxu0 0.0
        %5391 = vmatpush1.msra.mxu0 0.0
        %5392 = vmatprep.subr.mxu0 0.0
        %5393 = vmatpush1.msra.mxu0 0.0
        %5394 = vmatprep.subr.mxu0 0.0
        %5395 = vmatpush1.msra.mxu0 0.0
        %5396 = vmatprep.subr.mxu0 0.0
        %5397 = vmatpush1.msra.mxu0 0.0
        %5398 = vmatprep.subr.mxu0 0.0
        %5399 = vmatpush1.msra.mxu0 0.0
        %5400 = vmatprep.subr.mxu0 0.0
        %5401 = vmatpush1.msra.mxu0 0.0
        %5402 = vmatprep.subr.mxu0 0.0
        %5403 = vmatpush1.msra.mxu0 0.0
        %5404 = vmatprep.subr.mxu0 0.0
        %5405 = vmatpush1.msra.mxu0 0.0
        %5406 = vmatprep.subr.mxu0 0.0
        %5407 = vmatpush1.msra.mxu0 0.0
        %5408 = vmatprep.subr.mxu0 0.0
        %5409 = vmatpush1.msra.mxu0 0.0
        %5410 = vmatprep.subr.mxu0 0.0
        %5411 = vmatpush1.msra.mxu0 0.0
        %5412 = vmatprep.subr.mxu0 0.0
        %5413 = vmatpush1.msra.mxu0 0.0
        %5414 = vmatprep.subr.mxu0 0.0
        %5415 = vmatpush1.msra.mxu0 0.0
        %5416 = vmatprep.subr.mxu0 0.0
        %5417 = vmatpush1.msra.mxu0 0.0
        %5418 = vmatprep.subr.mxu0 0.0
        %5419 = vmatpush1.msra.mxu0 0.0
        %5420 = vmatprep.subr.mxu0 0.0
        %5421 = vmatpush1.msra.mxu0 0.0
        %5422 = vmatprep.subr.mxu0 0.0
        %5423 = vmatpush1.msra.mxu0 0.0
        %5424 = vmatprep.subr.mxu0 0.0
        %5425 = vmatpush1.msra.mxu0 0.0
        %5426 = vmatprep.subr.mxu0 0.0
        %5427 = vmatpush1.msra.mxu0 0.0
        %5428 = vmatprep.mubr.f32.mxu0 0.0
        %5429 = vmatmul.mubr.f32.gmra.mrb[0].mxu0 %v5362
        %v5430 = vpop.f32.mrb[0].mxu0
        %v5431 = vadd.f32 0.0, %v5430
        %v5432 = vpop.f32.mrb[0].mxu0
        %5433 = vdwg.mxu0
        %v5434 = vadd.f32 %v4906, %v5431
        %5436 = vrot.lane.b32.xlu0 %v4909, 120
        %v5437 = vpop.permute.xlu0 %5436
        %v5439 = vsel %vm1065, %v5437, 0.0
        %5440 = vadd.xlane.f32.xlu0 %v5439
        %v5441 = vpop.xlane.xlu0 %5440
        %v5442 = vmul.f32 %v5441, 0.35355338
        %5444 = vrot.lane.b32.xlu0 %v4914, 120
        %v5445 = vpop.permute.xlu0 %5444
        %v5447 = vsel %vm1065, %v5445, 0.0
        %5448 = vadd.xlane.f32.xlu0 %v5447
        %v5449 = vpop.xlane.xlu0 %5448
        %v5450 = vmul.f32 %v5449, 0.35355338
        %5452 = vrot.lane.b32.xlu0 %v4919, 120
        %v5453 = vpop.permute.xlu0 %5452
        %v5455 = vsel %vm1065, %v5453, 0.0
        %5456 = vadd.xlane.f32.xlu0 %v5455
        %v5457 = vpop.xlane.xlu0 %5456
        %v5458 = vmul.f32 %v5457, 0.35355338
        %5460 = vrot.lane.b32.xlu0 %v4924, 120
        %v5461 = vpop.permute.xlu0 %5460
        %v5463 = vsel %vm1065, %v5461, 0.0
        %5464 = vadd.xlane.f32.xlu0 %v5463
        %v5465 = vpop.xlane.xlu0 %5464
        %v5466 = vmul.f32 %v5465, 0.35355338
        %v5467 = vmax.f32 %v5442, %v5450
        %v5468 = vmax.f32 %v5467, %v5458
        %v5469 = vmax.f32 %v5468, %v5466
        %v5470 = vsub.f32 %v5442, %v5469
        %v5471 = vmul.f32 %v5470, 1.442695
        %v5472 = vpow.pop %v5471
        %v5473 = vsub.f32 %v5450, %v5469
        %v5474 = vmul.f32 %v5473, 1.442695
        %v5475 = vpow.pop %v5474
        %v5476 = vsub.f32 %v5458, %v5469
        %v5477 = vmul.f32 %v5476, 1.442695
        %v5478 = vpow.pop %v5477
        %v5479 = vsub.f32 %v5466, %v5469
        %v5480 = vmul.f32 %v5479, 1.442695
        %v5481 = vpow.pop %v5480
        %v5482 = vadd.f32 %v5472, %v5475
        %v5483 = vadd.f32 %v5482, %v5478
        %v5484 = vadd.f32 %v5483, %v5481
        %v5485 = vrcp.pop %v5484
        %v5486 = vmul.f32 %v5472, %v5485
        %v5487 = vmul.f32 %v5486, %v4625
        %v5488 = vmul.f32 %v5475, %v5485
        %v5489 = vmul.f32 %v5488, %v4630
        %v5490 = vadd.f32 %v5487, %v5489
        %v5491 = vmul.f32 %v5478, %v5485
        %v5492 = vmul.f32 %v5491, %v4635
        %v5493 = vadd.f32 %v5490, %v5492
        %v5494 = vmul.f32 %v5481, %v5485
        %v5495 = vmul.f32 %v5494, %v4640
        %v5496 = vadd.f32 %v5493, %v5495
        %5498 = vrot.lane.b32.xlu0 %v5496, 56
        %v5499 = vpop.permute.xlu0 %5498
        %v5500 = vsel %vm1065, %v5499, 0
        %5502 = vmatprep.subr.mxu0 0.0
        %5503 = vmatpush1.msra.mxu0 %v4471
        %5504 = vmatprep.subr.mxu0 0.0
        %5505 = vmatpush1.msra.mxu0 0.0
        %5506 = vmatprep.subr.mxu0 0.0
        %5507 = vmatpush1.msra.mxu0 0.0
        %5508 = vmatprep.subr.mxu0 0.0
        %5509 = vmatpush1.msra.mxu0 0.0
        %5510 = vmatprep.subr.mxu0 0.0
        %5511 = vmatpush1.msra.mxu0 0.0
        %5512 = vmatprep.subr.mxu0 0.0
        %5513 = vmatpush1.msra.mxu0 0.0
        %5514 = vmatprep.subr.mxu0 0.0
        %5515 = vmatpush1.msra.mxu0 0.0
        %5516 = vmatprep.subr.mxu0 0.0
        %5517 = vmatpush1.msra.mxu0 0.0
        %5518 = vmatprep.subr.mxu0 0.0
        %5519 = vmatpush1.msra.mxu0 0.0
        %5520 = vmatprep.subr.mxu0 0.0
        %5521 = vmatpush1.msra.mxu0 0.0
        %5522 = vmatprep.subr.mxu0 0.0
        %5523 = vmatpush1.msra.mxu0 0.0
        %5524 = vmatprep.subr.mxu0 0.0
        %5525 = vmatpush1.msra.mxu0 0.0
        %5526 = vmatprep.subr.mxu0 0.0
        %5527 = vmatpush1.msra.mxu0 0.0
        %5528 = vmatprep.subr.mxu0 0.0
        %5529 = vmatpush1.msra.mxu0 0.0
        %5530 = vmatprep.subr.mxu0 0.0
        %5531 = vmatpush1.msra.mxu0 0.0
        %5532 = vmatprep.subr.mxu0 0.0
        %5533 = vmatpush1.msra.mxu0 0.0
        %5534 = vmatprep.subr.mxu0 0.0
        %5535 = vmatpush1.msra.mxu0 0.0
        %5536 = vmatprep.subr.mxu0 0.0
        %5537 = vmatpush1.msra.mxu0 0.0
        %5538 = vmatprep.subr.mxu0 0.0
        %5539 = vmatpush1.msra.mxu0 0.0
        %5540 = vmatprep.subr.mxu0 0.0
        %5541 = vmatpush1.msra.mxu0 0.0
        %5542 = vmatprep.subr.mxu0 0.0
        %5543 = vmatpush1.msra.mxu0 0.0
        %5544 = vmatprep.subr.mxu0 0.0
        %5545 = vmatpush1.msra.mxu0 0.0
        %5546 = vmatprep.subr.mxu0 0.0
        %5547 = vmatpush1.msra.mxu0 0.0
        %5548 = vmatprep.subr.mxu0 0.0
        %5549 = vmatpush1.msra.mxu0 0.0
        %5550 = vmatprep.subr.mxu0 0.0
        %5551 = vmatpush1.msra.mxu0 0.0
        %5552 = vmatprep.subr.mxu0 0.0
        %5553 = vmatpush1.msra.mxu0 0.0
        %5554 = vmatprep.subr.mxu0 0.0
        %5555 = vmatpush1.msra.mxu0 0.0
        %5556 = vmatprep.subr.mxu0 0.0
        %5557 = vmatpush1.msra.mxu0 0.0
        %5558 = vmatprep.subr.mxu0 0.0
        %5559 = vmatpush1.msra.mxu0 0.0
        %5560 = vmatprep.subr.mxu0 0.0
        %5561 = vmatpush1.msra.mxu0 0.0
        %5562 = vmatprep.subr.mxu0 0.0
        %5563 = vmatpush1.msra.mxu0 0.0
        %5564 = vmatprep.subr.mxu0 0.0
        %5565 = vmatpush1.msra.mxu0 0.0
        %5566 = vmatprep.mubr.f32.mxu0 0.0
        %5567 = vmatmul.mubr.f32.gmra.mrb[0].mxu0 %v5500
        %v5568 = vpop.f32.mrb[0].mxu0
        %v5569 = vadd.f32 0.0, %v5568
        %v5570 = vpop.f32.mrb[0].mxu0
        %5571 = vdwg.mxu0
        %v5572 = vadd.f32 %v5031, %v5569
        %5574 = vrot.lane.b32.xlu0 %v5034, 120
        %v5575 = vpop.permute.xlu0 %5574
        %v5577 = vsel %vm1065, %v5575, 0.0
        %5578 = vadd.xlane.f32.xlu0 %v5577
        %v5579 = vpop.xlane.xlu0 %5578
        %v5580 = vmul.f32 %v5579, 0.35355338
        %5582 = vrot.lane.b32.xlu0 %v5039, 120
        %v5583 = vpop.permute.xlu0 %5582
        %v5585 = vsel %vm1065, %v5583, 0.0
        %5586 = vadd.xlane.f32.xlu0 %v5585
        %v5587 = vpop.xlane.xlu0 %5586
        %v5588 = vmul.f32 %v5587, 0.35355338
        %5590 = vrot.lane.b32.xlu0 %v5044, 120
        %v5591 = vpop.permute.xlu0 %5590
        %v5593 = vsel %vm1065, %v5591, 0.0
        %5594 = vadd.xlane.f32.xlu0 %v5593
        %v5595 = vpop.xlane.xlu0 %5594
        %v5596 = vmul.f32 %v5595, 0.35355338
        %5598 = vrot.lane.b32.xlu0 %v5049, 120
        %v5599 = vpop.permute.xlu0 %5598
        %v5601 = vsel %vm1065, %v5599, 0.0
        %5602 = vadd.xlane.f32.xlu0 %v5601
        %v5603 = vpop.xlane.xlu0 %5602
        %v5604 = vmul.f32 %v5603, 0.35355338
        %v5605 = vmax.f32 %v5580, %v5588
        %v5606 = vmax.f32 %v5605, %v5596
        %v5607 = vmax.f32 %v5606, %v5604
        %v5608 = vsub.f32 %v5580, %v5607
        %v5609 = vmul.f32 %v5608, 1.442695
        %v5610 = vpow.pop %v5609
        %v5611 = vsub.f32 %v5588, %v5607
        %v5612 = vmul.f32 %v5611, 1.442695
        %v5613 = vpow.pop %v5612
        %v5614 = vsub.f32 %v5596, %v5607
        %v5615 = vmul.f32 %v5614, 1.442695
        %v5616 = vpow.pop %v5615
        %v5617 = vsub.f32 %v5604, %v5607
        %v5618 = vmul.f32 %v5617, 1.442695
        %v5619 = vpow.pop %v5618
        %v5620 = vadd.f32 %v5610, %v5613
        %v5621 = vadd.f32 %v5620, %v5616
        %v5622 = vadd.f32 %v5621, %v5619
        %v5623 = vrcp.pop %v5622
        %v5624 = vmul.f32 %v5610, %v5623
        %v5625 = vmul.f32 %v5624, %v4625
        %v5626 = vmul.f32 %v5613, %v5623
        %v5627 = vmul.f32 %v5626, %v4630
        %v5628 = vadd.f32 %v5625, %v5627
        %v5629 = vmul.f32 %v5616, %v5623
        %v5630 = vmul.f32 %v5629, %v4635
        %v5631 = vadd.f32 %v5628, %v5630
        %v5632 = vmul.f32 %v5619, %v5623
        %v5633 = vmul.f32 %v5632, %v4640
        %v5634 = vadd.f32 %v5631, %v5633
        %5636 = vrot.lane.b32.xlu0 %v5634, 56
        %v5637 = vpop.permute.xlu0 %5636
        %v5638 = vsel %vm1065, %v5637, 0
        %5640 = vmatprep.subr.mxu0 0.0
        %5641 = vmatpush1.msra.mxu0 %v4471
        %5642 = vmatprep.subr.mxu0 0.0
        %5643 = vmatpush1.msra.mxu0 0.0
        %5644 = vmatprep.subr.mxu0 0.0
        %5645 = vmatpush1.msra.mxu0 0.0
        %5646 = vmatprep.subr.mxu0 0.0
        %5647 = vmatpush1.msra.mxu0 0.0
        %5648 = vmatprep.subr.mxu0 0.0
        %5649 = vmatpush1.msra.mxu0 0.0
        %5650 = vmatprep.subr.mxu0 0.0
        %5651 = vmatpush1.msra.mxu0 0.0
        %5652 = vmatprep.subr.mxu0 0.0
        %5653 = vmatpush1.msra.mxu0 0.0
        %5654 = vmatprep.subr.mxu0 0.0
        %5655 = vmatpush1.msra.mxu0 0.0
        %5656 = vmatprep.subr.mxu0 0.0
        %5657 = vmatpush1.msra.mxu0 0.0
        %5658 = vmatprep.subr.mxu0 0.0
        %5659 = vmatpush1.msra.mxu0 0.0
        %5660 = vmatprep.subr.mxu0 0.0
        %5661 = vmatpush1.msra.mxu0 0.0
        %5662 = vmatprep.subr.mxu0 0.0
        %5663 = vmatpush1.msra.mxu0 0.0
        %5664 = vmatprep.subr.mxu0 0.0
        %5665 = vmatpush1.msra.mxu0 0.0
        %5666 = vmatprep.subr.mxu0 0.0
        %5667 = vmatpush1.msra.mxu0 0.0
        %5668 = vmatprep.subr.mxu0 0.0
        %5669 = vmatpush1.msra.mxu0 0.0
        %5670 = vmatprep.subr.mxu0 0.0
        %5671 = vmatpush1.msra.mxu0 0.0
        %5672 = vmatprep.subr.mxu0 0.0
        %5673 = vmatpush1.msra.mxu0 0.0
        %5674 = vmatprep.subr.mxu0 0.0
        %5675 = vmatpush1.msra.mxu0 0.0
        %5676 = vmatprep.subr.mxu0 0.0
        %5677 = vmatpush1.msra.mxu0 0.0
        %5678 = vmatprep.subr.mxu0 0.0
        %5679 = vmatpush1.msra.mxu0 0.0
        %5680 = vmatprep.subr.mxu0 0.0
        %5681 = vmatpush1.msra.mxu0 0.0
        %5682 = vmatprep.subr.mxu0 0.0
        %5683 = vmatpush1.msra.mxu0 0.0
        %5684 = vmatprep.subr.mxu0 0.0
        %5685 = vmatpush1.msra.mxu0 0.0
        %5686 = vmatprep.subr.mxu0 0.0
        %5687 = vmatpush1.msra.mxu0 0.0
        %5688 = vmatprep.subr.mxu0 0.0
        %5689 = vmatpush1.msra.mxu0 0.0
        %5690 = vmatprep.subr.mxu0 0.0
        %5691 = vmatpush1.msra.mxu0 0.0
        %5692 = vmatprep.subr.mxu0 0.0
        %5693 = vmatpush1.msra.mxu0 0.0
        %5694 = vmatprep.subr.mxu0 0.0
        %5695 = vmatpush1.msra.mxu0 0.0
        %5696 = vmatprep.subr.mxu0 0.0
        %5697 = vmatpush1.msra.mxu0 0.0
        %5698 = vmatprep.subr.mxu0 0.0
        %5699 = vmatpush1.msra.mxu0 0.0
        %5700 = vmatprep.subr.mxu0 0.0
        %5701 = vmatpush1.msra.mxu0 0.0
        %5702 = vmatprep.subr.mxu0 0.0
        %5703 = vmatpush1.msra.mxu0 0.0
        %5704 = vmatprep.mubr.f32.mxu0 0.0
        %5705 = vmatmul.mubr.f32.gmra.mrb[0].mxu0 %v5638
        %v5706 = vpop.f32.mrb[0].mxu0
        %v5707 = vadd.f32 0.0, %v5706
        %v5708 = vpop.f32.mrb[0].mxu0
        %5709 = vdwg.mxu0
        %v5710 = vadd.f32 %v5156, %v5707
        %5711 = vrot.lane.b32.xlu0 %v4647, 112
        %v5712 = vpop.permute.xlu0 %5711
        %v5714 = vsel %vm1065, %v5712, 0.0
        %5715 = vadd.xlane.f32.xlu0 %v5714
        %v5716 = vpop.xlane.xlu0 %5715
        %v5717 = vmul.f32 %v5716, 0.35355338
        %5718 = vrot.lane.b32.xlu0 %v4656, 112
        %v5719 = vpop.permute.xlu0 %5718
        %v5721 = vsel %vm1065, %v5719, 0.0
        %5722 = vadd.xlane.f32.xlu0 %v5721
        %v5723 = vpop.xlane.xlu0 %5722
        %v5724 = vmul.f32 %v5723, 0.35355338
        %5725 = vrot.lane.b32.xlu0 %v4665, 112
        %v5726 = vpop.permute.xlu0 %5725
        %v5728 = vsel %vm1065, %v5726, 0.0
        %5729 = vadd.xlane.f32.xlu0 %v5728
        %v5730 = vpop.xlane.xlu0 %5729
        %v5731 = vmul.f32 %v5730, 0.35355338
        %5732 = vrot.lane.b32.xlu0 %v4674, 112
        %v5733 = vpop.permute.xlu0 %5732
        %v5735 = vsel %vm1065, %v5733, 0.0
        %5736 = vadd.xlane.f32.xlu0 %v5735
        %v5737 = vpop.xlane.xlu0 %5736
        %v5738 = vmul.f32 %v5737, 0.35355338
        %v5739 = vmax.f32 %v5717, %v5724
        %v5740 = vmax.f32 %v5739, %v5731
        %v5741 = vmax.f32 %v5740, %v5738
        %v5742 = vsub.f32 %v5717, %v5741
        %v5743 = vmul.f32 %v5742, 1.442695
        %v5744 = vpow.pop %v5743
        %v5745 = vsub.f32 %v5724, %v5741
        %v5746 = vmul.f32 %v5745, 1.442695
        %v5747 = vpow.pop %v5746
        %v5748 = vsub.f32 %v5731, %v5741
        %v5749 = vmul.f32 %v5748, 1.442695
        %v5750 = vpow.pop %v5749
        %v5751 = vsub.f32 %v5738, %v5741
        %v5752 = vmul.f32 %v5751, 1.442695
        %v5753 = vpow.pop %v5752
        %v5754 = vadd.f32 %v5744, %v5747
        %v5755 = vadd.f32 %v5754, %v5750
        %v5756 = vadd.f32 %v5755, %v5753
        %v5757 = vrcp.pop %v5756
        %v5758 = vmul.f32 %v5744, %v5757
        %v5759 = vmul.f32 %v5758, %v4625
        %v5760 = vmul.f32 %v5747, %v5757
        %v5761 = vmul.f32 %v5760, %v4630
        %v5762 = vadd.f32 %v5759, %v5761
        %v5763 = vmul.f32 %v5750, %v5757
        %v5764 = vmul.f32 %v5763, %v4635
        %v5765 = vadd.f32 %v5762, %v5764
        %v5766 = vmul.f32 %v5753, %v5757
        %v5767 = vmul.f32 %v5766, %v4640
        %v5768 = vadd.f32 %v5765, %v5767
        %5770 = vrot.lane.b32.xlu0 %v5768, 48
        %v5771 = vpop.permute.xlu0 %5770
        %v5772 = vsel %vm1065, %v5771, 0
        %5774 = vmatprep.subr.mxu0 0.0
        %5775 = vmatpush1.msra.mxu0 %v4472
        %5776 = vmatprep.subr.mxu0 0.0
        %5777 = vmatpush1.msra.mxu0 0.0
        %5778 = vmatprep.subr.mxu0 0.0
        %5779 = vmatpush1.msra.mxu0 0.0
        %5780 = vmatprep.subr.mxu0 0.0
        %5781 = vmatpush1.msra.mxu0 0.0
        %5782 = vmatprep.subr.mxu0 0.0
        %5783 = vmatpush1.msra.mxu0 0.0
        %5784 = vmatprep.subr.mxu0 0.0
        %5785 = vmatpush1.msra.mxu0 0.0
        %5786 = vmatprep.subr.mxu0 0.0
        %5787 = vmatpush1.msra.mxu0 0.0
        %5788 = vmatprep.subr.mxu0 0.0
        %5789 = vmatpush1.msra.mxu0 0.0
        %5790 = vmatprep.subr.mxu0 0.0
        %5791 = vmatpush1.msra.mxu0 0.0
        %5792 = vmatprep.subr.mxu0 0.0
        %5793 = vmatpush1.msra.mxu0 0.0
        %5794 = vmatprep.subr.mxu0 0.0
        %5795 = vmatpush1.msra.mxu0 0.0
        %5796 = vmatprep.subr.mxu0 0.0
        %5797 = vmatpush1.msra.mxu0 0.0
        %5798 = vmatprep.subr.mxu0 0.0
        %5799 = vmatpush1.msra.mxu0 0.0
        %5800 = vmatprep.subr.mxu0 0.0
        %5801 = vmatpush1.msra.mxu0 0.0
        %5802 = vmatprep.subr.mxu0 0.0
        %5803 = vmatpush1.msra.mxu0 0.0
        %5804 = vmatprep.subr.mxu0 0.0
        %5805 = vmatpush1.msra.mxu0 0.0
        %5806 = vmatprep.subr.mxu0 0.0
        %5807 = vmatpush1.msra.mxu0 0.0
        %5808 = vmatprep.subr.mxu0 0.0
        %5809 = vmatpush1.msra.mxu0 0.0
        %5810 = vmatprep.subr.mxu0 0.0
        %5811 = vmatpush1.msra.mxu0 0.0
        %5812 = vmatprep.subr.mxu0 0.0
        %5813 = vmatpush1.msra.mxu0 0.0
        %5814 = vmatprep.subr.mxu0 0.0
        %5815 = vmatpush1.msra.mxu0 0.0
        %5816 = vmatprep.subr.mxu0 0.0
        %5817 = vmatpush1.msra.mxu0 0.0
        %5818 = vmatprep.subr.mxu0 0.0
        %5819 = vmatpush1.msra.mxu0 0.0
        %5820 = vmatprep.subr.mxu0 0.0
        %5821 = vmatpush1.msra.mxu0 0.0
        %5822 = vmatprep.subr.mxu0 0.0
        %5823 = vmatpush1.msra.mxu0 0.0
        %5824 = vmatprep.subr.mxu0 0.0
        %5825 = vmatpush1.msra.mxu0 0.0
        %5826 = vmatprep.subr.mxu0 0.0
        %5827 = vmatpush1.msra.mxu0 0.0
        %5828 = vmatprep.subr.mxu0 0.0
        %5829 = vmatpush1.msra.mxu0 0.0
        %5830 = vmatprep.subr.mxu0 0.0
        %5831 = vmatpush1.msra.mxu0 0.0
        %5832 = vmatprep.subr.mxu0 0.0
        %5833 = vmatpush1.msra.mxu0 0.0
        %5834 = vmatprep.subr.mxu0 0.0
        %5835 = vmatpush1.msra.mxu0 0.0
        %5836 = vmatprep.subr.mxu0 0.0
        %5837 = vmatpush1.msra.mxu0 0.0
        %5838 = vmatprep.mubr.f32.mxu0 0.0
        %5839 = vmatmul.mubr.f32.gmra.mrb[0].mxu0 %v5772
        %v5840 = vpop.f32.mrb[0].mxu0
        %v5841 = vadd.f32 0.0, %v5840
        %v5842 = vpop.f32.mrb[0].mxu0
        %5843 = vdwg.mxu0
        %v5844 = vadd.f32 %v5296, %v5841
        %5845 = vrot.lane.b32.xlu0 %v4784, 112
        %v5846 = vpop.permute.xlu0 %5845
        %v5848 = vsel %vm1065, %v5846, 0.0
        %5849 = vadd.xlane.f32.xlu0 %v5848
        %v5850 = vpop.xlane.xlu0 %5849
        %v5851 = vmul.f32 %v5850, 0.35355338
        %5852 = vrot.lane.b32.xlu0 %v4789, 112
        %v5853 = vpop.permute.xlu0 %5852
        %v5855 = vsel %vm1065, %v5853, 0.0
        %5856 = vadd.xlane.f32.xlu0 %v5855
        %v5857 = vpop.xlane.xlu0 %5856
        %v5858 = vmul.f32 %v5857, 0.35355338
        %5859 = vrot.lane.b32.xlu0 %v4794, 112
        %v5860 = vpop.permute.xlu0 %5859
        %v5862 = vsel %vm1065, %v5860, 0.0
        %5863 = vadd.xlane.f32.xlu0 %v5862
        %v5864 = vpop.xlane.xlu0 %5863
        %v5865 = vmul.f32 %v5864, 0.35355338
        %5866 = vrot.lane.b32.xlu0 %v4799, 112
        %v5867 = vpop.permute.xlu0 %5866
        %v5869 = vsel %vm1065, %v5867, 0.0
        %5870 = vadd.xlane.f32.xlu0 %v5869
        %v5871 = vpop.xlane.xlu0 %5870
        %v5872 = vmul.f32 %v5871, 0.35355338
        %v5873 = vmax.f32 %v5851, %v5858
        %v5874 = vmax.f32 %v5873, %v5865
        %v5875 = vmax.f32 %v5874, %v5872
        %v5876 = vsub.f32 %v5851, %v5875
        %v5877 = vmul.f32 %v5876, 1.442695
        %v5878 = vpow.pop %v5877
        %v5879 = vsub.f32 %v5858, %v5875
        %v5880 = vmul.f32 %v5879, 1.442695
        %v5881 = vpow.pop %v5880
        %v5882 = vsub.f32 %v5865, %v5875
        %v5883 = vmul.f32 %v5882, 1.442695
        %v5884 = vpow.pop %v5883
        %v5885 = vsub.f32 %v5872, %v5875
        %v5886 = vmul.f32 %v5885, 1.442695
        %v5887 = vpow.pop %v5886
        %v5888 = vadd.f32 %v5878, %v5881
        %v5889 = vadd.f32 %v5888, %v5884
        %v5890 = vadd.f32 %v5889, %v5887
        %v5891 = vrcp.pop %v5890
        %v5892 = vmul.f32 %v5878, %v5891
        %v5893 = vmul.f32 %v5892, %v4625
        %v5894 = vmul.f32 %v5881, %v5891
        %v5895 = vmul.f32 %v5894, %v4630
        %v5896 = vadd.f32 %v5893, %v5895
        %v5897 = vmul.f32 %v5884, %v5891
        %v5898 = vmul.f32 %v5897, %v4635
        %v5899 = vadd.f32 %v5896, %v5898
        %v5900 = vmul.f32 %v5887, %v5891
        %v5901 = vmul.f32 %v5900, %v4640
        %v5902 = vadd.f32 %v5899, %v5901
        %5904 = vrot.lane.b32.xlu0 %v5902, 48
        %v5905 = vpop.permute.xlu0 %5904
        %v5906 = vsel %vm1065, %v5905, 0
        %5908 = vmatprep.subr.mxu0 0.0
        %5909 = vmatpush1.msra.mxu0 %v4472
        %5910 = vmatprep.subr.mxu0 0.0
        %5911 = vmatpush1.msra.mxu0 0.0
        %5912 = vmatprep.subr.mxu0 0.0
        %5913 = vmatpush1.msra.mxu0 0.0
        %5914 = vmatprep.subr.mxu0 0.0
        %5915 = vmatpush1.msra.mxu0 0.0
        %5916 = vmatprep.subr.mxu0 0.0
        %5917 = vmatpush1.msra.mxu0 0.0
        %5918 = vmatprep.subr.mxu0 0.0
        %5919 = vmatpush1.msra.mxu0 0.0
        %5920 = vmatprep.subr.mxu0 0.0
        %5921 = vmatpush1.msra.mxu0 0.0
        %5922 = vmatprep.subr.mxu0 0.0
        %5923 = vmatpush1.msra.mxu0 0.0
        %5924 = vmatprep.subr.mxu0 0.0
        %5925 = vmatpush1.msra.mxu0 0.0
        %5926 = vmatprep.subr.mxu0 0.0
        %5927 = vmatpush1.msra.mxu0 0.0
        %5928 = vmatprep.subr.mxu0 0.0
        %5929 = vmatpush1.msra.mxu0 0.0
        %5930 = vmatprep.subr.mxu0 0.0
        %5931 = vmatpush1.msra.mxu0 0.0
        %5932 = vmatprep.subr.mxu0 0.0
        %5933 = vmatpush1.msra.mxu0 0.0
        %5934 = vmatprep.subr.mxu0 0.0
        %5935 = vmatpush1.msra.mxu0 0.0
        %5936 = vmatprep.subr.mxu0 0.0
        %5937 = vmatpush1.msra.mxu0 0.0
        %5938 = vmatprep.subr.mxu0 0.0
        %5939 = vmatpush1.msra.mxu0 0.0
        %5940 = vmatprep.subr.mxu0 0.0
        %5941 = vmatpush1.msra.mxu0 0.0
        %5942 = vmatprep.subr.mxu0 0.0
        %5943 = vmatpush1.msra.mxu0 0.0
        %5944 = vmatprep.subr.mxu0 0.0
        %5945 = vmatpush1.msra.mxu0 0.0
        %5946 = vmatprep.subr.mxu0 0.0
        %5947 = vmatpush1.msra.mxu0 0.0
        %5948 = vmatprep.subr.mxu0 0.0
        %5949 = vmatpush1.msra.mxu0 0.0
        %5950 = vmatprep.subr.mxu0 0.0
        %5951 = vmatpush1.msra.mxu0 0.0
        %5952 = vmatprep.subr.mxu0 0.0
        %5953 = vmatpush1.msra.mxu0 0.0
        %5954 = vmatprep.subr.mxu0 0.0
        %5955 = vmatpush1.msra.mxu0 0.0
        %5956 = vmatprep.subr.mxu0 0.0
        %5957 = vmatpush1.msra.mxu0 0.0
        %5958 = vmatprep.subr.mxu0 0.0
        %5959 = vmatpush1.msra.mxu0 0.0
        %5960 = vmatprep.subr.mxu0 0.0
        %5961 = vmatpush1.msra.mxu0 0.0
        %5962 = vmatprep.subr.mxu0 0.0
        %5963 = vmatpush1.msra.mxu0 0.0
        %5964 = vmatprep.subr.mxu0 0.0
        %5965 = vmatpush1.msra.mxu0 0.0
        %5966 = vmatprep.subr.mxu0 0.0
        %5967 = vmatpush1.msra.mxu0 0.0
        %5968 = vmatprep.subr.mxu0 0.0
        %5969 = vmatpush1.msra.mxu0 0.0
        %5970 = vmatprep.subr.mxu0 0.0
        %5971 = vmatpush1.msra.mxu0 0.0
        %5972 = vmatprep.mubr.f32.mxu0 0.0
        %5973 = vmatmul.mubr.f32.gmra.mrb[0].mxu0 %v5906
        %v5974 = vpop.f32.mrb[0].mxu0
        %v5975 = vadd.f32 0.0, %v5974
        %v5976 = vpop.f32.mrb[0].mxu0
        %5977 = vdwg.mxu0
        %v5978 = vadd.f32 %v5434, %v5975
        %5979 = vrot.lane.b32.xlu0 %v4909, 112
        %v5980 = vpop.permute.xlu0 %5979
        %v5982 = vsel %vm1065, %v5980, 0.0
        %5983 = vadd.xlane.f32.xlu0 %v5982
        %v5984 = vpop.xlane.xlu0 %5983
        %v5985 = vmul.f32 %v5984, 0.35355338
        %5986 = vrot.lane.b32.xlu0 %v4914, 112
        %v5987 = vpop.permute.xlu0 %5986
        %v5989 = vsel %vm1065, %v5987, 0.0
        %5990 = vadd.xlane.f32.xlu0 %v5989
        %v5991 = vpop.xlane.xlu0 %5990
        %v5992 = vmul.f32 %v5991, 0.35355338
        %5993 = vrot.lane.b32.xlu0 %v4919, 112
        %v5994 = vpop.permute.xlu0 %5993
        %v5996 = vsel %vm1065, %v5994, 0.0
        %5997 = vadd.xlane.f32.xlu0 %v5996
        %v5998 = vpop.xlane.xlu0 %5997
        %v5999 = vmul.f32 %v5998, 0.35355338
        %6000 = vrot.lane.b32.xlu0 %v4924, 112
        %v6001 = vpop.permute.xlu0 %6000
        %v6003 = vsel %vm1065, %v6001, 0.0
        %6004 = vadd.xlane.f32.xlu0 %v6003
        %v6005 = vpop.xlane.xlu0 %6004
        %v6006 = vmul.f32 %v6005, 0.35355338
        %v6007 = vmax.f32 %v5985, %v5992
        %v6008 = vmax.f32 %v6007, %v5999
        %v6009 = vmax.f32 %v6008, %v6006
        %v6010 = vsub.f32 %v5985, %v6009
        %v6011 = vmul.f32 %v6010, 1.442695
        %v6012 = vpow.pop %v6011
        %v6013 = vsub.f32 %v5992, %v6009
        %v6014 = vmul.f32 %v6013, 1.442695
        %v6015 = vpow.pop %v6014
        %v6016 = vsub.f32 %v5999, %v6009
        %v6017 = vmul.f32 %v6016, 1.442695
        %v6018 = vpow.pop %v6017
        %v6019 = vsub.f32 %v6006, %v6009
        %v6020 = vmul.f32 %v6019, 1.442695
        %v6021 = vpow.pop %v6020
        %v6022 = vadd.f32 %v6012, %v6015
        %v6023 = vadd.f32 %v6022, %v6018
        %v6024 = vadd.f32 %v6023, %v6021
        %v6025 = vrcp.pop %v6024
        %v6026 = vmul.f32 %v6012, %v6025
        %v6027 = vmul.f32 %v6026, %v4625
        %v6028 = vmul.f32 %v6015, %v6025
        %v6029 = vmul.f32 %v6028, %v4630
        %v6030 = vadd.f32 %v6027, %v6029
        %v6031 = vmul.f32 %v6018, %v6025
        %v6032 = vmul.f32 %v6031, %v4635
        %v6033 = vadd.f32 %v6030, %v6032
        %v6034 = vmul.f32 %v6021, %v6025
        %v6035 = vmul.f32 %v6034, %v4640
        %v6036 = vadd.f32 %v6033, %v6035
        %6038 = vrot.lane.b32.xlu0 %v6036, 48
        %v6039 = vpop.permute.xlu0 %6038
        %v6040 = vsel %vm1065, %v6039, 0
        %6042 = vmatprep.subr.mxu0 0.0
        %6043 = vmatpush1.msra.mxu0 %v4472
        %6044 = vmatprep.subr.mxu0 0.0
        %6045 = vmatpush1.msra.mxu0 0.0
        %6046 = vmatprep.subr.mxu0 0.0
        %6047 = vmatpush1.msra.mxu0 0.0
        %6048 = vmatprep.subr.mxu0 0.0
        %6049 = vmatpush1.msra.mxu0 0.0
        %6050 = vmatprep.subr.mxu0 0.0
        %6051 = vmatpush1.msra.mxu0 0.0
        %6052 = vmatprep.subr.mxu0 0.0
        %6053 = vmatpush1.msra.mxu0 0.0
        %6054 = vmatprep.subr.mxu0 0.0
        %6055 = vmatpush1.msra.mxu0 0.0
        %6056 = vmatprep.subr.mxu0 0.0
        %6057 = vmatpush1.msra.mxu0 0.0
        %6058 = vmatprep.subr.mxu0 0.0
        %6059 = vmatpush1.msra.mxu0 0.0
        %6060 = vmatprep.subr.mxu0 0.0
        %6061 = vmatpush1.msra.mxu0 0.0
        %6062 = vmatprep.subr.mxu0 0.0
        %6063 = vmatpush1.msra.mxu0 0.0
        %6064 = vmatprep.subr.mxu0 0.0
        %6065 = vmatpush1.msra.mxu0 0.0
        %6066 = vmatprep.subr.mxu0 0.0
        %6067 = vmatpush1.msra.mxu0 0.0
        %6068 = vmatprep.subr.mxu0 0.0
        %6069 = vmatpush1.msra.mxu0 0.0
        %6070 = vmatprep.subr.mxu0 0.0
        %6071 = vmatpush1.msra.mxu0 0.0
        %6072 = vmatprep.subr.mxu0 0.0
        %6073 = vmatpush1.msra.mxu0 0.0
        %6074 = vmatprep.subr.mxu0 0.0
        %6075 = vmatpush1.msra.mxu0 0.0
        %6076 = vmatprep.subr.mxu0 0.0
        %6077 = vmatpush1.msra.mxu0 0.0
        %6078 = vmatprep.subr.mxu0 0.0
        %6079 = vmatpush1.msra.mxu0 0.0
        %6080 = vmatprep.subr.mxu0 0.0
        %6081 = vmatpush1.msra.mxu0 0.0
        %6082 = vmatprep.subr.mxu0 0.0
        %6083 = vmatpush1.msra.mxu0 0.0
        %6084 = vmatprep.subr.mxu0 0.0
        %6085 = vmatpush1.msra.mxu0 0.0
        %6086 = vmatprep.subr.mxu0 0.0
        %6087 = vmatpush1.msra.mxu0 0.0
        %6088 = vmatprep.subr.mxu0 0.0
        %6089 = vmatpush1.msra.mxu0 0.0
        %6090 = vmatprep.subr.mxu0 0.0
        %6091 = vmatpush1.msra.mxu0 0.0
        %6092 = vmatprep.subr.mxu0 0.0
        %6093 = vmatpush1.msra.mxu0 0.0
        %6094 = vmatprep.subr.mxu0 0.0
        %6095 = vmatpush1.msra.mxu0 0.0
        %6096 = vmatprep.subr.mxu0 0.0
        %6097 = vmatpush1.msra.mxu0 0.0
        %6098 = vmatprep.subr.mxu0 0.0
        %6099 = vmatpush1.msra.mxu0 0.0
        %6100 = vmatprep.subr.mxu0 0.0
        %6101 = vmatpush1.msra.mxu0 0.0
        %6102 = vmatprep.subr.mxu0 0.0
        %6103 = vmatpush1.msra.mxu0 0.0
        %6104 = vmatprep.subr.mxu0 0.0
        %6105 = vmatpush1.msra.mxu0 0.0
        %6106 = vmatprep.mubr.f32.mxu0 0.0
        %6107 = vmatmul.mubr.f32.gmra.mrb[0].mxu0 %v6040
        %v6108 = vpop.f32.mrb[0].mxu0
        %v6109 = vadd.f32 0.0, %v6108
        %v6110 = vpop.f32.mrb[0].mxu0
        %6111 = vdwg.mxu0
        %v6112 = vadd.f32 %v5572, %v6109
        %6113 = vrot.lane.b32.xlu0 %v5034, 112
        %v6114 = vpop.permute.xlu0 %6113
        %v6116 = vsel %vm1065, %v6114, 0.0
        %6117 = vadd.xlane.f32.xlu0 %v6116
        %v6118 = vpop.xlane.xlu0 %6117
        %v6119 = vmul.f32 %v6118, 0.35355338
        %6120 = vrot.lane.b32.xlu0 %v5039, 112
        %v6121 = vpop.permute.xlu0 %6120
        %v6123 = vsel %vm1065, %v6121, 0.0
        %6124 = vadd.xlane.f32.xlu0 %v6123
        %v6125 = vpop.xlane.xlu0 %6124
        %v6126 = vmul.f32 %v6125, 0.35355338
        %6127 = vrot.lane.b32.xlu0 %v5044, 112
        %v6128 = vpop.permute.xlu0 %6127
        %v6130 = vsel %vm1065, %v6128, 0.0
        %6131 = vadd.xlane.f32.xlu0 %v6130
        %v6132 = vpop.xlane.xlu0 %6131
        %v6133 = vmul.f32 %v6132, 0.35355338
        %6134 = vrot.lane.b32.xlu0 %v5049, 112
        %v6135 = vpop.permute.xlu0 %6134
        %v6137 = vsel %vm1065, %v6135, 0.0
        %6138 = vadd.xlane.f32.xlu0 %v6137
        %v6139 = vpop.xlane.xlu0 %6138
        %v6140 = vmul.f32 %v6139, 0.35355338
        %v6141 = vmax.f32 %v6119, %v6126
        %v6142 = vmax.f32 %v6141, %v6133
        %v6143 = vmax.f32 %v6142, %v6140
        %v6144 = vsub.f32 %v6119, %v6143
        %v6145 = vmul.f32 %v6144, 1.442695
        %v6146 = vpow.pop %v6145
        %v6147 = vsub.f32 %v6126, %v6143
        %v6148 = vmul.f32 %v6147, 1.442695
        %v6149 = vpow.pop %v6148
        %v6150 = vsub.f32 %v6133, %v6143
        %v6151 = vmul.f32 %v6150, 1.442695
        %v6152 = vpow.pop %v6151
        %v6153 = vsub.f32 %v6140, %v6143
        %v6154 = vmul.f32 %v6153, 1.442695
        %v6155 = vpow.pop %v6154
        %v6156 = vadd.f32 %v6146, %v6149
        %v6157 = vadd.f32 %v6156, %v6152
        %v6158 = vadd.f32 %v6157, %v6155
        %v6159 = vrcp.pop %v6158
        %v6160 = vmul.f32 %v6146, %v6159
        %v6161 = vmul.f32 %v6160, %v4625
        %v6162 = vmul.f32 %v6149, %v6159
        %v6163 = vmul.f32 %v6162, %v4630
        %v6164 = vadd.f32 %v6161, %v6163
        %v6165 = vmul.f32 %v6152, %v6159
        %v6166 = vmul.f32 %v6165, %v4635
        %v6167 = vadd.f32 %v6164, %v6166
        %v6168 = vmul.f32 %v6155, %v6159
        %v6169 = vmul.f32 %v6168, %v4640
        %v6170 = vadd.f32 %v6167, %v6169
        %6172 = vrot.lane.b32.xlu0 %v6170, 48
        %v6173 = vpop.permute.xlu0 %6172
        %v6174 = vsel %vm1065, %v6173, 0
        %6176 = vmatprep.subr.mxu0 0.0
        %6177 = vmatpush1.msra.mxu0 %v4472
        %6178 = vmatprep.subr.mxu0 0.0
        %6179 = vmatpush1.msra.mxu0 0.0
        %6180 = vmatprep.subr.mxu0 0.0
        %6181 = vmatpush1.msra.mxu0 0.0
        %6182 = vmatprep.subr.mxu0 0.0
        %6183 = vmatpush1.msra.mxu0 0.0
        %6184 = vmatprep.subr.mxu0 0.0
        %6185 = vmatpush1.msra.mxu0 0.0
        %6186 = vmatprep.subr.mxu0 0.0
        %6187 = vmatpush1.msra.mxu0 0.0
        %6188 = vmatprep.subr.mxu0 0.0
        %6189 = vmatpush1.msra.mxu0 0.0
        %6190 = vmatprep.subr.mxu0 0.0
        %6191 = vmatpush1.msra.mxu0 0.0
        %6192 = vmatprep.subr.mxu0 0.0
        %6193 = vmatpush1.msra.mxu0 0.0
        %6194 = vmatprep.subr.mxu0 0.0
        %6195 = vmatpush1.msra.mxu0 0.0
        %6196 = vmatprep.subr.mxu0 0.0
        %6197 = vmatpush1.msra.mxu0 0.0
        %6198 = vmatprep.subr.mxu0 0.0
        %6199 = vmatpush1.msra.mxu0 0.0
        %6200 = vmatprep.subr.mxu0 0.0
        %6201 = vmatpush1.msra.mxu0 0.0
        %6202 = vmatprep.subr.mxu0 0.0
        %6203 = vmatpush1.msra.mxu0 0.0
        %6204 = vmatprep.subr.mxu0 0.0
        %6205 = vmatpush1.msra.mxu0 0.0
        %6206 = vmatprep.subr.mxu0 0.0
        %6207 = vmatpush1.msra.mxu0 0.0
        %6208 = vmatprep.subr.mxu0 0.0
        %6209 = vmatpush1.msra.mxu0 0.0
        %6210 = vmatprep.subr.mxu0 0.0
        %6211 = vmatpush1.msra.mxu0 0.0
        %6212 = vmatprep.subr.mxu0 0.0
        %6213 = vmatpush1.msra.mxu0 0.0
        %6214 = vmatprep.subr.mxu0 0.0
        %6215 = vmatpush1.msra.mxu0 0.0
        %6216 = vmatprep.subr.mxu0 0.0
        %6217 = vmatpush1.msra.mxu0 0.0
        %6218 = vmatprep.subr.mxu0 0.0
        %6219 = vmatpush1.msra.mxu0 0.0
        %6220 = vmatprep.subr.mxu0 0.0
        %6221 = vmatpush1.msra.mxu0 0.0
        %6222 = vmatprep.subr.mxu0 0.0
        %6223 = vmatpush1.msra.mxu0 0.0
        %6224 = vmatprep.subr.mxu0 0.0
        %6225 = vmatpush1.msra.mxu0 0.0
        %6226 = vmatprep.subr.mxu0 0.0
        %6227 = vmatpush1.msra.mxu0 0.0
        %6228 = vmatprep.subr.mxu0 0.0
        %6229 = vmatpush1.msra.mxu0 0.0
        %6230 = vmatprep.subr.mxu0 0.0
        %6231 = vmatpush1.msra.mxu0 0.0
        %6232 = vmatprep.subr.mxu0 0.0
        %6233 = vmatpush1.msra.mxu0 0.0
        %6234 = vmatprep.subr.mxu0 0.0
        %6235 = vmatpush1.msra.mxu0 0.0
        %6236 = vmatprep.subr.mxu0 0.0
        %6237 = vmatpush1.msra.mxu0 0.0
        %6238 = vmatprep.subr.mxu0 0.0
        %6239 = vmatpush1.msra.mxu0 0.0
        %6240 = vmatprep.mubr.f32.mxu0 0.0
        %6241 = vmatmul.mubr.f32.gmra.mrb[0].mxu0 %v6174
        %v6242 = vpop.f32.mrb[0].mxu0
        %v6243 = vadd.f32 0.0, %v6242
        %v6244 = vpop.f32.mrb[0].mxu0
        %6245 = vdwg.mxu0
        %v6246 = vadd.f32 %v5710, %v6243
        %6247 = vrot.lane.b32.xlu0 %v4647, 104
        %v6248 = vpop.permute.xlu0 %6247
        %v6250 = vsel %vm1065, %v6248, 0.0
        %6251 = vadd.xlane.f32.xlu0 %v6250
        %v6252 = vpop.xlane.xlu0 %6251
        %v6253 = vmul.f32 %v6252, 0.35355338
        %6254 = vrot.lane.b32.xlu0 %v4656, 104
        %v6255 = vpop.permute.xlu0 %6254
        %v6257 = vsel %vm1065, %v6255, 0.0
        %6258 = vadd.xlane.f32.xlu0 %v6257
        %v6259 = vpop.xlane.xlu0 %6258
        %v6260 = vmul.f32 %v6259, 0.35355338
        %6261 = vrot.lane.b32.xlu0 %v4665, 104
        %v6262 = vpop.permute.xlu0 %6261
        %v6264 = vsel %vm1065, %v6262, 0.0
        %6265 = vadd.xlane.f32.xlu0 %v6264
        %v6266 = vpop.xlane.xlu0 %6265
        %v6267 = vmul.f32 %v6266, 0.35355338
        %6268 = vrot.lane.b32.xlu0 %v4674, 104
        %v6269 = vpop.permute.xlu0 %6268
        %v6271 = vsel %vm1065, %v6269, 0.0
        %6272 = vadd.xlane.f32.xlu0 %v6271
        %v6273 = vpop.xlane.xlu0 %6272
        %v6274 = vmul.f32 %v6273, 0.35355338
        %v6275 = vmax.f32 %v6253, %v6260
        %v6276 = vmax.f32 %v6275, %v6267
        %v6277 = vmax.f32 %v6276, %v6274
        %v6278 = vsub.f32 %v6253, %v6277
        %v6279 = vmul.f32 %v6278, 1.442695
        %v6280 = vpow.pop %v6279
        %v6281 = vsub.f32 %v6260, %v6277
        %v6282 = vmul.f32 %v6281, 1.442695
        %v6283 = vpow.pop %v6282
        %v6284 = vsub.f32 %v6267, %v6277
        %v6285 = vmul.f32 %v6284, 1.442695
        %v6286 = vpow.pop %v6285
        %v6287 = vsub.f32 %v6274, %v6277
        %v6288 = vmul.f32 %v6287, 1.442695
        %v6289 = vpow.pop %v6288
        %v6290 = vadd.f32 %v6280, %v6283
        %v6291 = vadd.f32 %v6290, %v6286
        %v6292 = vadd.f32 %v6291, %v6289
        %v6293 = vrcp.pop %v6292
        %v6294 = vmul.f32 %v6280, %v6293
        %v6295 = vmul.f32 %v6294, %v4625
        %v6296 = vmul.f32 %v6283, %v6293
        %v6297 = vmul.f32 %v6296, %v4630
        %v6298 = vadd.f32 %v6295, %v6297
        %v6299 = vmul.f32 %v6286, %v6293
        %v6300 = vmul.f32 %v6299, %v4635
        %v6301 = vadd.f32 %v6298, %v6300
        %v6302 = vmul.f32 %v6289, %v6293
        %v6303 = vmul.f32 %v6302, %v4640
        %v6304 = vadd.f32 %v6301, %v6303
        %6306 = vrot.lane.b32.xlu0 %v6304, 40
        %v6307 = vpop.permute.xlu0 %6306
        %v6308 = vsel %vm1065, %v6307, 0
        %6310 = vmatprep.subr.mxu0 0.0
        %6311 = vmatpush1.msra.mxu0 %v4473
        %6312 = vmatprep.subr.mxu0 0.0
        %6313 = vmatpush1.msra.mxu0 0.0
        %6314 = vmatprep.subr.mxu0 0.0
        %6315 = vmatpush1.msra.mxu0 0.0
        %6316 = vmatprep.subr.mxu0 0.0
        %6317 = vmatpush1.msra.mxu0 0.0
        %6318 = vmatprep.subr.mxu0 0.0
        %6319 = vmatpush1.msra.mxu0 0.0
        %6320 = vmatprep.subr.mxu0 0.0
        %6321 = vmatpush1.msra.mxu0 0.0
        %6322 = vmatprep.subr.mxu0 0.0
        %6323 = vmatpush1.msra.mxu0 0.0
        %6324 = vmatprep.subr.mxu0 0.0
        %6325 = vmatpush1.msra.mxu0 0.0
        %6326 = vmatprep.subr.mxu0 0.0
        %6327 = vmatpush1.msra.mxu0 0.0
        %6328 = vmatprep.subr.mxu0 0.0
        %6329 = vmatpush1.msra.mxu0 0.0
        %6330 = vmatprep.subr.mxu0 0.0
        %6331 = vmatpush1.msra.mxu0 0.0
        %6332 = vmatprep.subr.mxu0 0.0
        %6333 = vmatpush1.msra.mxu0 0.0
        %6334 = vmatprep.subr.mxu0 0.0
        %6335 = vmatpush1.msra.mxu0 0.0
        %6336 = vmatprep.subr.mxu0 0.0
        %6337 = vmatpush1.msra.mxu0 0.0
        %6338 = vmatprep.subr.mxu0 0.0
        %6339 = vmatpush1.msra.mxu0 0.0
        %6340 = vmatprep.subr.mxu0 0.0
        %6341 = vmatpush1.msra.mxu0 0.0
        %6342 = vmatprep.subr.mxu0 0.0
        %6343 = vmatpush1.msra.mxu0 0.0
        %6344 = vmatprep.subr.mxu0 0.0
        %6345 = vmatpush1.msra.mxu0 0.0
        %6346 = vmatprep.subr.mxu0 0.0
        %6347 = vmatpush1.msra.mxu0 0.0
        %6348 = vmatprep.subr.mxu0 0.0
        %6349 = vmatpush1.msra.mxu0 0.0
        %6350 = vmatprep.subr.mxu0 0.0
        %6351 = vmatpush1.msra.mxu0 0.0
        %6352 = vmatprep.subr.mxu0 0.0
        %6353 = vmatpush1.msra.mxu0 0.0
        %6354 = vmatprep.subr.mxu0 0.0
        %6355 = vmatpush1.msra.mxu0 0.0
        %6356 = vmatprep.subr.mxu0 0.0
        %6357 = vmatpush1.msra.mxu0 0.0
        %6358 = vmatprep.subr.mxu0 0.0
        %6359 = vmatpush1.msra.mxu0 0.0
        %6360 = vmatprep.subr.mxu0 0.0
        %6361 = vmatpush1.msra.mxu0 0.0
        %6362 = vmatprep.subr.mxu0 0.0
        %6363 = vmatpush1.msra.mxu0 0.0
        %6364 = vmatprep.subr.mxu0 0.0
        %6365 = vmatpush1.msra.mxu0 0.0
        %6366 = vmatprep.subr.mxu0 0.0
        %6367 = vmatpush1.msra.mxu0 0.0
        %6368 = vmatprep.subr.mxu0 0.0
        %6369 = vmatpush1.msra.mxu0 0.0
        %6370 = vmatprep.subr.mxu0 0.0
        %6371 = vmatpush1.msra.mxu0 0.0
        %6372 = vmatprep.subr.mxu0 0.0
        %6373 = vmatpush1.msra.mxu0 0.0
        %6374 = vmatprep.mubr.f32.mxu0 0.0
        %6375 = vmatmul.mubr.f32.gmra.mrb[0].mxu0 %v6308
        %v6376 = vpop.f32.mrb[0].mxu0
        %v6377 = vadd.f32 0.0, %v6376
        %v6378 = vpop.f32.mrb[0].mxu0
        %6379 = vdwg.mxu0
        %v6380 = vadd.f32 %v5844, %v6377
        %6381 = vrot.lane.b32.xlu0 %v4784, 104
        %v6382 = vpop.permute.xlu0 %6381
        %v6384 = vsel %vm1065, %v6382, 0.0
        %6385 = vadd.xlane.f32.xlu0 %v6384
        %v6386 = vpop.xlane.xlu0 %6385
        %v6387 = vmul.f32 %v6386, 0.35355338
        %6388 = vrot.lane.b32.xlu0 %v4789, 104
        %v6389 = vpop.permute.xlu0 %6388
        %v6391 = vsel %vm1065, %v6389, 0.0
        %6392 = vadd.xlane.f32.xlu0 %v6391
        %v6393 = vpop.xlane.xlu0 %6392
        %v6394 = vmul.f32 %v6393, 0.35355338
        %6395 = vrot.lane.b32.xlu0 %v4794, 104
        %v6396 = vpop.permute.xlu0 %6395
        %v6398 = vsel %vm1065, %v6396, 0.0
        %6399 = vadd.xlane.f32.xlu0 %v6398
        %v6400 = vpop.xlane.xlu0 %6399
        %v6401 = vmul.f32 %v6400, 0.35355338
        %6402 = vrot.lane.b32.xlu0 %v4799, 104
        %v6403 = vpop.permute.xlu0 %6402
        %v6405 = vsel %vm1065, %v6403, 0.0
        %6406 = vadd.xlane.f32.xlu0 %v6405
        %v6407 = vpop.xlane.xlu0 %6406
        %v6408 = vmul.f32 %v6407, 0.35355338
        %v6409 = vmax.f32 %v6387, %v6394
        %v6410 = vmax.f32 %v6409, %v6401
        %v6411 = vmax.f32 %v6410, %v6408
        %v6412 = vsub.f32 %v6387, %v6411
        %v6413 = vmul.f32 %v6412, 1.442695
        %v6414 = vpow.pop %v6413
        %v6415 = vsub.f32 %v6394, %v6411
        %v6416 = vmul.f32 %v6415, 1.442695
        %v6417 = vpow.pop %v6416
        %v6418 = vsub.f32 %v6401, %v6411
        %v6419 = vmul.f32 %v6418, 1.442695
        %v6420 = vpow.pop %v6419
        %v6421 = vsub.f32 %v6408, %v6411
        %v6422 = vmul.f32 %v6421, 1.442695
        %v6423 = vpow.pop %v6422
        %v6424 = vadd.f32 %v6414, %v6417
        %v6425 = vadd.f32 %v6424, %v6420
        %v6426 = vadd.f32 %v6425, %v6423
        %v6427 = vrcp.pop %v6426
        %v6428 = vmul.f32 %v6414, %v6427
        %v6429 = vmul.f32 %v6428, %v4625
        %v6430 = vmul.f32 %v6417, %v6427
        %v6431 = vmul.f32 %v6430, %v4630
        %v6432 = vadd.f32 %v6429, %v6431
        %v6433 = vmul.f32 %v6420, %v6427
        %v6434 = vmul.f32 %v6433, %v4635
        %v6435 = vadd.f32 %v6432, %v6434
        %v6436 = vmul.f32 %v6423, %v6427
        %v6437 = vmul.f32 %v6436, %v4640
        %v6438 = vadd.f32 %v6435, %v6437
        %6440 = vrot.lane.b32.xlu0 %v6438, 40
        %v6441 = vpop.permute.xlu0 %6440
        %v6442 = vsel %vm1065, %v6441, 0
        %6444 = vmatprep.subr.mxu0 0.0
        %6445 = vmatpush1.msra.mxu0 %v4473
        %6446 = vmatprep.subr.mxu0 0.0
        %6447 = vmatpush1.msra.mxu0 0.0
        %6448 = vmatprep.subr.mxu0 0.0
        %6449 = vmatpush1.msra.mxu0 0.0
        %6450 = vmatprep.subr.mxu0 0.0
        %6451 = vmatpush1.msra.mxu0 0.0
        %6452 = vmatprep.subr.mxu0 0.0
        %6453 = vmatpush1.msra.mxu0 0.0
        %6454 = vmatprep.subr.mxu0 0.0
        %6455 = vmatpush1.msra.mxu0 0.0
        %6456 = vmatprep.subr.mxu0 0.0
        %6457 = vmatpush1.msra.mxu0 0.0
        %6458 = vmatprep.subr.mxu0 0.0
        %6459 = vmatpush1.msra.mxu0 0.0
        %6460 = vmatprep.subr.mxu0 0.0
        %6461 = vmatpush1.msra.mxu0 0.0
        %6462 = vmatprep.subr.mxu0 0.0
        %6463 = vmatpush1.msra.mxu0 0.0
        %6464 = vmatprep.subr.mxu0 0.0
        %6465 = vmatpush1.msra.mxu0 0.0
        %6466 = vmatprep.subr.mxu0 0.0
        %6467 = vmatpush1.msra.mxu0 0.0
        %6468 = vmatprep.subr.mxu0 0.0
        %6469 = vmatpush1.msra.mxu0 0.0
        %6470 = vmatprep.subr.mxu0 0.0
        %6471 = vmatpush1.msra.mxu0 0.0
        %6472 = vmatprep.subr.mxu0 0.0
        %6473 = vmatpush1.msra.mxu0 0.0
        %6474 = vmatprep.subr.mxu0 0.0
        %6475 = vmatpush1.msra.mxu0 0.0
        %6476 = vmatprep.subr.mxu0 0.0
        %6477 = vmatpush1.msra.mxu0 0.0
        %6478 = vmatprep.subr.mxu0 0.0
        %6479 = vmatpush1.msra.mxu0 0.0
        %6480 = vmatprep.subr.mxu0 0.0
        %6481 = vmatpush1.msra.mxu0 0.0
        %6482 = vmatprep.subr.mxu0 0.0
        %6483 = vmatpush1.msra.mxu0 0.0
        %6484 = vmatprep.subr.mxu0 0.0
        %6485 = vmatpush1.msra.mxu0 0.0
        %6486 = vmatprep.subr.mxu0 0.0
        %6487 = vmatpush1.msra.mxu0 0.0
        %6488 = vmatprep.subr.mxu0 0.0
        %6489 = vmatpush1.msra.mxu0 0.0
        %6490 = vmatprep.subr.mxu0 0.0
        %6491 = vmatpush1.msra.mxu0 0.0
        %6492 = vmatprep.subr.mxu0 0.0
        %6493 = vmatpush1.msra.mxu0 0.0
        %6494 = vmatprep.subr.mxu0 0.0
        %6495 = vmatpush1.msra.mxu0 0.0
        %6496 = vmatprep.subr.mxu0 0.0
        %6497 = vmatpush1.msra.mxu0 0.0
        %6498 = vmatprep.subr.mxu0 0.0
        %6499 = vmatpush1.msra.mxu0 0.0
        %6500 = vmatprep.subr.mxu0 0.0
        %6501 = vmatpush1.msra.mxu0 0.0
        %6502 = vmatprep.subr.mxu0 0.0
        %6503 = vmatpush1.msra.mxu0 0.0
        %6504 = vmatprep.subr.mxu0 0.0
        %6505 = vmatpush1.msra.mxu0 0.0
        %6506 = vmatprep.subr.mxu0 0.0
        %6507 = vmatpush1.msra.mxu0 0.0
        %6508 = vmatprep.mubr.f32.mxu0 0.0
        %6509 = vmatmul.mubr.f32.gmra.mrb[0].mxu0 %v6442
        %v6510 = vpop.f32.mrb[0].mxu0
        %v6511 = vadd.f32 0.0, %v6510
        %v6512 = vpop.f32.mrb[0].mxu0
        %6513 = vdwg.mxu0
        %v6514 = vadd.f32 %v5978, %v6511
        %6515 = vrot.lane.b32.xlu0 %v4909, 104
        %v6516 = vpop.permute.xlu0 %6515
        %v6518 = vsel %vm1065, %v6516, 0.0
        %6519 = vadd.xlane.f32.xlu0 %v6518
        %v6520 = vpop.xlane.xlu0 %6519
        %v6521 = vmul.f32 %v6520, 0.35355338
        %6522 = vrot.lane.b32.xlu0 %v4914, 104
        %v6523 = vpop.permute.xlu0 %6522
        %v6525 = vsel %vm1065, %v6523, 0.0
        %6526 = vadd.xlane.f32.xlu0 %v6525
        %v6527 = vpop.xlane.xlu0 %6526
        %v6528 = vmul.f32 %v6527, 0.35355338
        %6529 = vrot.lane.b32.xlu0 %v4919, 104
        %v6530 = vpop.permute.xlu0 %6529
        %v6532 = vsel %vm1065, %v6530, 0.0
        %6533 = vadd.xlane.f32.xlu0 %v6532
        %v6534 = vpop.xlane.xlu0 %6533
        %v6535 = vmul.f32 %v6534, 0.35355338
        %6536 = vrot.lane.b32.xlu0 %v4924, 104
        %v6537 = vpop.permute.xlu0 %6536
        %v6539 = vsel %vm1065, %v6537, 0.0
        %6540 = vadd.xlane.f32.xlu0 %v6539
        %v6541 = vpop.xlane.xlu0 %6540
        %v6542 = vmul.f32 %v6541, 0.35355338
        %v6543 = vmax.f32 %v6521, %v6528
        %v6544 = vmax.f32 %v6543, %v6535
        %v6545 = vmax.f32 %v6544, %v6542
        %v6546 = vsub.f32 %v6521, %v6545
        %v6547 = vmul.f32 %v6546, 1.442695
        %v6548 = vpow.pop %v6547
        %v6549 = vsub.f32 %v6528, %v6545
        %v6550 = vmul.f32 %v6549, 1.442695
        %v6551 = vpow.pop %v6550
        %v6552 = vsub.f32 %v6535, %v6545
        %v6553 = vmul.f32 %v6552, 1.442695
        %v6554 = vpow.pop %v6553
        %v6555 = vsub.f32 %v6542, %v6545
        %v6556 = vmul.f32 %v6555, 1.442695
        %v6557 = vpow.pop %v6556
        %v6558 = vadd.f32 %v6548, %v6551
        %v6559 = vadd.f32 %v6558, %v6554
        %v6560 = vadd.f32 %v6559, %v6557
        %v6561 = vrcp.pop %v6560
        %v6562 = vmul.f32 %v6548, %v6561
        %v6563 = vmul.f32 %v6562, %v4625
        %v6564 = vmul.f32 %v6551, %v6561
        %v6565 = vmul.f32 %v6564, %v4630
        %v6566 = vadd.f32 %v6563, %v6565
        %v6567 = vmul.f32 %v6554, %v6561
        %v6568 = vmul.f32 %v6567, %v4635
        %v6569 = vadd.f32 %v6566, %v6568
        %v6570 = vmul.f32 %v6557, %v6561
        %v6571 = vmul.f32 %v6570, %v4640
        %v6572 = vadd.f32 %v6569, %v6571
        %6574 = vrot.lane.b32.xlu0 %v6572, 40
        %v6575 = vpop.permute.xlu0 %6574
        %v6576 = vsel %vm1065, %v6575, 0
        %6578 = vmatprep.subr.mxu0 0.0
        %6579 = vmatpush1.msra.mxu0 %v4473
        %6580 = vmatprep.subr.mxu0 0.0
        %6581 = vmatpush1.msra.mxu0 0.0
        %6582 = vmatprep.subr.mxu0 0.0
        %6583 = vmatpush1.msra.mxu0 0.0
        %6584 = vmatprep.subr.mxu0 0.0
        %6585 = vmatpush1.msra.mxu0 0.0
        %6586 = vmatprep.subr.mxu0 0.0
        %6587 = vmatpush1.msra.mxu0 0.0
        %6588 = vmatprep.subr.mxu0 0.0
        %6589 = vmatpush1.msra.mxu0 0.0
        %6590 = vmatprep.subr.mxu0 0.0
        %6591 = vmatpush1.msra.mxu0 0.0
        %6592 = vmatprep.subr.mxu0 0.0
        %6593 = vmatpush1.msra.mxu0 0.0
        %6594 = vmatprep.subr.mxu0 0.0
        %6595 = vmatpush1.msra.mxu0 0.0
        %6596 = vmatprep.subr.mxu0 0.0
        %6597 = vmatpush1.msra.mxu0 0.0
        %6598 = vmatprep.subr.mxu0 0.0
        %6599 = vmatpush1.msra.mxu0 0.0
        %6600 = vmatprep.subr.mxu0 0.0
        %6601 = vmatpush1.msra.mxu0 0.0
        %6602 = vmatprep.subr.mxu0 0.0
        %6603 = vmatpush1.msra.mxu0 0.0
        %6604 = vmatprep.subr.mxu0 0.0
        %6605 = vmatpush1.msra.mxu0 0.0
        %6606 = vmatprep.subr.mxu0 0.0
        %6607 = vmatpush1.msra.mxu0 0.0
        %6608 = vmatprep.subr.mxu0 0.0
        %6609 = vmatpush1.msra.mxu0 0.0
        %6610 = vmatprep.subr.mxu0 0.0
        %6611 = vmatpush1.msra.mxu0 0.0
        %6612 = vmatprep.subr.mxu0 0.0
        %6613 = vmatpush1.msra.mxu0 0.0
        %6614 = vmatprep.subr.mxu0 0.0
        %6615 = vmatpush1.msra.mxu0 0.0
        %6616 = vmatprep.subr.mxu0 0.0
        %6617 = vmatpush1.msra.mxu0 0.0
        %6618 = vmatprep.subr.mxu0 0.0
        %6619 = vmatpush1.msra.mxu0 0.0
        %6620 = vmatprep.subr.mxu0 0.0
        %6621 = vmatpush1.msra.mxu0 0.0
        %6622 = vmatprep.subr.mxu0 0.0
        %6623 = vmatpush1.msra.mxu0 0.0
        %6624 = vmatprep.subr.mxu0 0.0
        %6625 = vmatpush1.msra.mxu0 0.0
        %6626 = vmatprep.subr.mxu0 0.0
        %6627 = vmatpush1.msra.mxu0 0.0
        %6628 = vmatprep.subr.mxu0 0.0
        %6629 = vmatpush1.msra.mxu0 0.0
        %6630 = vmatprep.subr.mxu0 0.0
        %6631 = vmatpush1.msra.mxu0 0.0
        %6632 = vmatprep.subr.mxu0 0.0
        %6633 = vmatpush1.msra.mxu0 0.0
        %6634 = vmatprep.subr.mxu0 0.0
        %6635 = vmatpush1.msra.mxu0 0.0
        %6636 = vmatprep.subr.mxu0 0.0
        %6637 = vmatpush1.msra.mxu0 0.0
        %6638 = vmatprep.subr.mxu0 0.0
        %6639 = vmatpush1.msra.mxu0 0.0
        %6640 = vmatprep.subr.mxu0 0.0
        %6641 = vmatpush1.msra.mxu0 0.0
        %6642 = vmatprep.mubr.f32.mxu0 0.0
        %6643 = vmatmul.mubr.f32.gmra.mrb[0].mxu0 %v6576
        %v6644 = vpop.f32.mrb[0].mxu0
        %v6645 = vadd.f32 0.0, %v6644
        %v6646 = vpop.f32.mrb[0].mxu0
        %6647 = vdwg.mxu0
        %v6648 = vadd.f32 %v6112, %v6645
        %6649 = vrot.lane.b32.xlu0 %v5034, 104
        %v6650 = vpop.permute.xlu0 %6649
        %v6652 = vsel %vm1065, %v6650, 0.0
        %6653 = vadd.xlane.f32.xlu0 %v6652
        %v6654 = vpop.xlane.xlu0 %6653
        %v6655 = vmul.f32 %v6654, 0.35355338
        %6656 = vrot.lane.b32.xlu0 %v5039, 104
        %v6657 = vpop.permute.xlu0 %6656
        %v6659 = vsel %vm1065, %v6657, 0.0
        %6660 = vadd.xlane.f32.xlu0 %v6659
        %v6661 = vpop.xlane.xlu0 %6660
        %v6662 = vmul.f32 %v6661, 0.35355338
        %6663 = vrot.lane.b32.xlu0 %v5044, 104
        %v6664 = vpop.permute.xlu0 %6663
        %v6666 = vsel %vm1065, %v6664, 0.0
        %6667 = vadd.xlane.f32.xlu0 %v6666
        %v6668 = vpop.xlane.xlu0 %6667
        %v6669 = vmul.f32 %v6668, 0.35355338
        %6670 = vrot.lane.b32.xlu0 %v5049, 104
        %v6671 = vpop.permute.xlu0 %6670
        %v6673 = vsel %vm1065, %v6671, 0.0
        %6674 = vadd.xlane.f32.xlu0 %v6673
        %v6675 = vpop.xlane.xlu0 %6674
        %v6676 = vmul.f32 %v6675, 0.35355338
        %v6677 = vmax.f32 %v6655, %v6662
        %v6678 = vmax.f32 %v6677, %v6669
        %v6679 = vmax.f32 %v6678, %v6676
        %v6680 = vsub.f32 %v6655, %v6679
        %v6681 = vmul.f32 %v6680, 1.442695
        %v6682 = vpow.pop %v6681
        %v6683 = vsub.f32 %v6662, %v6679
        %v6684 = vmul.f32 %v6683, 1.442695
        %v6685 = vpow.pop %v6684
        %v6686 = vsub.f32 %v6669, %v6679
        %v6687 = vmul.f32 %v6686, 1.442695
        %v6688 = vpow.pop %v6687
        %v6689 = vsub.f32 %v6676, %v6679
        %v6690 = vmul.f32 %v6689, 1.442695
        %v6691 = vpow.pop %v6690
        %v6692 = vadd.f32 %v6682, %v6685
        %v6693 = vadd.f32 %v6692, %v6688
        %v6694 = vadd.f32 %v6693, %v6691
        %v6695 = vrcp.pop %v6694
        %v6696 = vmul.f32 %v6682, %v6695
        %v6697 = vmul.f32 %v6696, %v4625
        %v6698 = vmul.f32 %v6685, %v6695
        %v6699 = vmul.f32 %v6698, %v4630
        %v6700 = vadd.f32 %v6697, %v6699
        %v6701 = vmul.f32 %v6688, %v6695
        %v6702 = vmul.f32 %v6701, %v4635
        %v6703 = vadd.f32 %v6700, %v6702
        %v6704 = vmul.f32 %v6691, %v6695
        %v6705 = vmul.f32 %v6704, %v4640
        %v6706 = vadd.f32 %v6703, %v6705
        %6708 = vrot.lane.b32.xlu0 %v6706, 40
        %v6709 = vpop.permute.xlu0 %6708
        %v6710 = vsel %vm1065, %v6709, 0
        %6712 = vmatprep.subr.mxu0 0.0
        %6713 = vmatpush1.msra.mxu0 %v4473
        %6714 = vmatprep.subr.mxu0 0.0
        %6715 = vmatpush1.msra.mxu0 0.0
        %6716 = vmatprep.subr.mxu0 0.0
        %6717 = vmatpush1.msra.mxu0 0.0
        %6718 = vmatprep.subr.mxu0 0.0
        %6719 = vmatpush1.msra.mxu0 0.0
        %6720 = vmatprep.subr.mxu0 0.0
        %6721 = vmatpush1.msra.mxu0 0.0
        %6722 = vmatprep.subr.mxu0 0.0
        %6723 = vmatpush1.msra.mxu0 0.0
        %6724 = vmatprep.subr.mxu0 0.0
        %6725 = vmatpush1.msra.mxu0 0.0
        %6726 = vmatprep.subr.mxu0 0.0
        %6727 = vmatpush1.msra.mxu0 0.0
        %6728 = vmatprep.subr.mxu0 0.0
        %6729 = vmatpush1.msra.mxu0 0.0
        %6730 = vmatprep.subr.mxu0 0.0
        %6731 = vmatpush1.msra.mxu0 0.0
        %6732 = vmatprep.subr.mxu0 0.0
        %6733 = vmatpush1.msra.mxu0 0.0
        %6734 = vmatprep.subr.mxu0 0.0
        %6735 = vmatpush1.msra.mxu0 0.0
        %6736 = vmatprep.subr.mxu0 0.0
        %6737 = vmatpush1.msra.mxu0 0.0
        %6738 = vmatprep.subr.mxu0 0.0
        %6739 = vmatpush1.msra.mxu0 0.0
        %6740 = vmatprep.subr.mxu0 0.0
        %6741 = vmatpush1.msra.mxu0 0.0
        %6742 = vmatprep.subr.mxu0 0.0
        %6743 = vmatpush1.msra.mxu0 0.0
        %6744 = vmatprep.subr.mxu0 0.0
        %6745 = vmatpush1.msra.mxu0 0.0
        %6746 = vmatprep.subr.mxu0 0.0
        %6747 = vmatpush1.msra.mxu0 0.0
        %6748 = vmatprep.subr.mxu0 0.0
        %6749 = vmatpush1.msra.mxu0 0.0
        %6750 = vmatprep.subr.mxu0 0.0
        %6751 = vmatpush1.msra.mxu0 0.0
        %6752 = vmatprep.subr.mxu0 0.0
        %6753 = vmatpush1.msra.mxu0 0.0
        %6754 = vmatprep.subr.mxu0 0.0
        %6755 = vmatpush1.msra.mxu0 0.0
        %6756 = vmatprep.subr.mxu0 0.0
        %6757 = vmatpush1.msra.mxu0 0.0
        %6758 = vmatprep.subr.mxu0 0.0
        %6759 = vmatpush1.msra.mxu0 0.0
        %6760 = vmatprep.subr.mxu0 0.0
        %6761 = vmatpush1.msra.mxu0 0.0
        %6762 = vmatprep.subr.mxu0 0.0
        %6763 = vmatpush1.msra.mxu0 0.0
        %6764 = vmatprep.subr.mxu0 0.0
        %6765 = vmatpush1.msra.mxu0 0.0
        %6766 = vmatprep.subr.mxu0 0.0
        %6767 = vmatpush1.msra.mxu0 0.0
        %6768 = vmatprep.subr.mxu0 0.0
        %6769 = vmatpush1.msra.mxu0 0.0
        %6770 = vmatprep.subr.mxu0 0.0
        %6771 = vmatpush1.msra.mxu0 0.0
        %6772 = vmatprep.subr.mxu0 0.0
        %6773 = vmatpush1.msra.mxu0 0.0
        %6774 = vmatprep.subr.mxu0 0.0
        %6775 = vmatpush1.msra.mxu0 0.0
        %6776 = vmatprep.mubr.f32.mxu0 0.0
        %6777 = vmatmul.mubr.f32.gmra.mrb[0].mxu0 %v6710
        %v6778 = vpop.f32.mrb[0].mxu0
        %v6779 = vadd.f32 0.0, %v6778
        %v6780 = vpop.f32.mrb[0].mxu0
        %6781 = vdwg.mxu0
        %v6782 = vadd.f32 %v6246, %v6779
        %v6783 = vld [vmem:[#allocation21] sm:$0x1]
        %v6784 = vadd.f32 %v4460, %v6380
        %v6786 = vlaneseq
        %v6787 = vshrl.u32 %v6786, 7
        %v6788 = vsub.s32 0, %v6787
        %v6789 = vrot.slane %v6783, %v6788
        %v6791 = vadd.f32 %v6784, %v6789
        %6792 = vst.msk [vmem:[#allocation2] sm:$0xff] %vm891, %v6791
        %v6793 = vadd.f32 %v4461, %v6514
        %v6794 = vadd.f32 %v6793, %v6789
        %s6795 = scalar_lea.vmem [#allocation2], 8
        %6796 = vst.msk [vmem:[%s6795] sm:$0xff] %vm891, %v6794
        %v6797 = vadd.f32 %v4462, %v6648
        %v6798 = vadd.f32 %v6797, %v6789
        %s6799 = scalar_lea.vmem [#allocation2], 16
        %6800 = vst.msk [vmem:[%s6799] sm:$0xff] %vm891, %v6798
        %v6801 = vadd.f32 %v4463, %v6782
        %v6802 = vadd.f32 %v6801, %v6789
        %s6803 = scalar_lea.vmem [#allocation2], 24
        %6804 = vst.msk [vmem:[%s6803] sm:$0xff] %vm891, %v6802
        %v6805 = vld [vmem:[#allocation2] sm:$0xff]
        %v6806 = vld [vmem:[#allocation2 + $0x8] sm:$0xff]
        %v6807 = vld [vmem:[#allocation2 + $0x10] sm:$0xff]
        %v6808 = vld [vmem:[#allocation2 + $0x18] sm:$0xff]
        %v6809 = vld [vmem:[#allocation23] sm:$0x1]
        %v6810 = vld [vmem:[%s18] sm:$0x1]
        %v6811 = vld [vmem:[%s19] sm:$0xff]
        %v6812 = vld [vmem:[%s19 + $0x8] sm:$0xff]
        %v6813 = vld [vmem:[%s19 + $0x10] sm:$0xff]
        %v6814 = vld [vmem:[%s19 + $0x18] sm:$0xff]
        %v6815 = vld [vmem:[%s20] sm:$0x1]
        %v6816 = vld [vmem:[%s21] sm:$0xff]
        %v6817 = vld [vmem:[%s21 + $0x8] sm:$0xff]
        %v6818 = vld [vmem:[%s21 + $0x10] sm:$0xff]
        %v6819 = vld [vmem:[%s21 + $0x18] sm:$0xff]
        %v6820 = vld [vmem:[%s21 + $0x20] sm:$0xff]
        %v6821 = vld [vmem:[%s21 + $0x28] sm:$0xff]
        %v6822 = vld [vmem:[%s21 + $0x30] sm:$0xff]
        %v6823 = vld [vmem:[%s21 + $0x38] sm:$0xff]
        %v6824 = vld [vmem:[%s22] sm:$0x1]
        %v6825 = vsel %vm891, %v6805, 0.0
        %6826 = vadd.xlane.f32.xlu0 %v6825
        %v6827 = vpop.xlane.xlu0 %6826
        %v6828 = vsel %vm891, %v6806, 0.0
        %6829 = vadd.xlane.f32.xlu0 %v6828
        %v6830 = vpop.xlane.xlu0 %6829
        %v6831 = vsel %vm891, %v6807, 0.0
        %6832 = vadd.xlane.f32.xlu0 %v6831
        %v6833 = vpop.xlane.xlu0 %6832
        %v6834 = vsel %vm891, %v6808, 0.0
        %6835 = vadd.xlane.f32.xlu0 %v6834
        %v6836 = vpop.xlane.xlu0 %6835
        %v6837 = vmul.f32 %v6827, %v904
        %v6838 = vmul.f32 %v6830, %v904
        %v6839 = vmul.f32 %v6833, %v904
        %v6840 = vmul.f32 %v6836, %v904
        %v6841 = vsub.f32 %v6805, %v6837
        %v6842 = vsub.f32 %v6806, %v6838
        %v6843 = vsub.f32 %v6807, %v6839
        %v6844 = vsub.f32 %v6808, %v6840
        %v6845 = vmul.f32 %v6841, %v6841
        %v6846 = vmul.f32 %v6842, %v6842
        %v6847 = vmul.f32 %v6843, %v6843
        %v6848 = vmul.f32 %v6844, %v6844
        %v6849 = vsel %vm891, %v6845, 0.0
        %6850 = vadd.xlane.f32.xlu0 %v6849
        %v6851 = vpop.xlane.xlu0 %6850
        %v6852 = vsel %vm891, %v6846, 0.0
        %6853 = vadd.xlane.f32.xlu0 %v6852
        %v6854 = vpop.xlane.xlu0 %6853
        %v6855 = vsel %vm891, %v6847, 0.0
        %6856 = vadd.xlane.f32.xlu0 %v6855
        %v6857 = vpop.xlane.xlu0 %6856
        %v6858 = vsel %vm891, %v6848, 0.0
        %6859 = vadd.xlane.f32.xlu0 %v6858
        %v6860 = vpop.xlane.xlu0 %6859
        %v6861 = vmul.f32 %v6851, %v904
        %v6862 = vmul.f32 %v6854, %v904
        %v6863 = vmul.f32 %v6857, %v904
        %v6864 = vmul.f32 %v6860, %v904
        %v6865 = vadd.f32 %v6861, 1e-05
        %v6866 = vadd.f32 %v6862, 1e-05
        %v6867 = vadd.f32 %v6863, 1e-05
        %v6868 = vadd.f32 %v6864, 1e-05
        %v6869 = vrsqrt.pop %v6865
        %v6870 = vrsqrt.pop %v6866
        %v6871 = vrsqrt.pop %v6867
        %v6872 = vrsqrt.pop %v6868
        %v6873 = vmul.f32 %v6841, %v6869
        %v6874 = vmul.f32 %v6842, %v6870
        %v6875 = vmul.f32 %v6843, %v6871
        %v6876 = vmul.f32 %v6844, %v6872
        %v6878 = vlaneseq
        %v6879 = vshrl.u32 %v6878, 7
        %v6880 = vsub.s32 0, %v6879
        %v6881 = vrot.slane %v6809, %v6880
        %v6883 = vmul.f32 %v6873, %v6881
        %v6884 = vmul.f32 %v6874, %v6881
        %v6885 = vmul.f32 %v6875, %v6881
        %v6886 = vmul.f32 %v6876, %v6881
        %v6888 = vlaneseq
        %v6889 = vshrl.u32 %v6888, 7
        %v6890 = vsub.s32 0, %v6889
        %v6891 = vrot.slane %v6810, %v6890
        %v6893 = vadd.f32 %v6883, %v6891
        %v6894 = vadd.f32 %v6884, %v6891
        %v6895 = vadd.f32 %v6885, %v6891
        %v6896 = vadd.f32 %v6886, %v6891
        %v6898 = vlaneseq
        %v6899 = vshrl.u32 %v6898, 7
        %v6900 = vsub.s32 0, %v6899
        %v6901 = vrot.slane %v6815, %v6900
        %v6904 = vsel %vm891, %v6893, 0
        %v6907 = vsel %vm891, %v6894, 0
        %v6910 = vsel %vm891, %v6895, 0
        %v6913 = vsel %vm891, %v6896, 0
        %6915 = vmatprep.subr.mxu0 0.0
        %6916 = vmatpush1.msra.mxu0 %v6811
        %6917 = vmatprep.subr.mxu0 0.0
        %6918 = vmatpush1.msra.mxu0 %v6812
        %6919 = vmatprep.subr.mxu0 0.0
        %6920 = vmatpush1.msra.mxu0 %v6813
        %6921 = vmatprep.subr.mxu0 0.0
        %6922 = vmatpush1.msra.mxu0 %v6814
        %6923 = vmatprep.subr.mxu0 0.0
        %6924 = vmatpush1.msra.mxu0 0.0
        %6925 = vmatprep.subr.mxu0 0.0
        %6926 = vmatpush1.msra.mxu0 0.0
        %6927 = vmatprep.subr.mxu0 0.0
        %6928 = vmatpush1.msra.mxu0 0.0
        %6929 = vmatprep.subr.mxu0 0.0
        %6930 = vmatpush1.msra.mxu0 0.0
        %6931 = vmatprep.subr.mxu0 0.0
        %6932 = vmatpush1.msra.mxu0 0.0
        %6933 = vmatprep.subr.mxu0 0.0
        %6934 = vmatpush1.msra.mxu0 0.0
        %6935 = vmatprep.subr.mxu0 0.0
        %6936 = vmatpush1.msra.mxu0 0.0
        %6937 = vmatprep.subr.mxu0 0.0
        %6938 = vmatpush1.msra.mxu0 0.0
        %6939 = vmatprep.subr.mxu0 0.0
        %6940 = vmatpush1.msra.mxu0 0.0
        %6941 = vmatprep.subr.mxu0 0.0
        %6942 = vmatpush1.msra.mxu0 0.0
        %6943 = vmatprep.subr.mxu0 0.0
        %6944 = vmatpush1.msra.mxu0 0.0
        %6945 = vmatprep.subr.mxu0 0.0
        %6946 = vmatpush1.msra.mxu0 0.0
        %6947 = vmatprep.subr.mxu0 0.0
        %6948 = vmatpush1.msra.mxu0 0.0
        %6949 = vmatprep.subr.mxu0 0.0
        %6950 = vmatpush1.msra.mxu0 0.0
        %6951 = vmatprep.subr.mxu0 0.0
        %6952 = vmatpush1.msra.mxu0 0.0
        %6953 = vmatprep.subr.mxu0 0.0
        %6954 = vmatpush1.msra.mxu0 0.0
        %6955 = vmatprep.subr.mxu0 0.0
        %6956 = vmatpush1.msra.mxu0 0.0
        %6957 = vmatprep.subr.mxu0 0.0
        %6958 = vmatpush1.msra.mxu0 0.0
        %6959 = vmatprep.subr.mxu0 0.0
        %6960 = vmatpush1.msra.mxu0 0.0
        %6961 = vmatprep.subr.mxu0 0.0
        %6962 = vmatpush1.msra.mxu0 0.0
        %6963 = vmatprep.subr.mxu0 0.0
        %6964 = vmatpush1.msra.mxu0 0.0
        %6965 = vmatprep.subr.mxu0 0.0
        %6966 = vmatpush1.msra.mxu0 0.0
        %6967 = vmatprep.subr.mxu0 0.0
        %6968 = vmatpush1.msra.mxu0 0.0
        %6969 = vmatprep.subr.mxu0 0.0
        %6970 = vmatpush1.msra.mxu0 0.0
        %6971 = vmatprep.subr.mxu0 0.0
        %6972 = vmatpush1.msra.mxu0 0.0
        %6973 = vmatprep.subr.mxu0 0.0
        %6974 = vmatpush1.msra.mxu0 0.0
        %6975 = vmatprep.subr.mxu0 0.0
        %6976 = vmatpush1.msra.mxu0 0.0
        %6977 = vmatprep.subr.mxu0 0.0
        %6978 = vmatpush1.msra.mxu0 0.0
        %6979 = vmatprep.mubr.f32.mxu0 0.0
        %6980 = vmatmul.mubr.f32.gmra.mrb[0].mxu0 %v6904
        %v6981 = vpop.f32.mrb[0].mxu0
        %v6982 = vadd.f32 %v6901, %v6981
        %v6983 = vpop.f32.mrb[0].mxu0
        %6984 = vmatprep.mubr.f32.mxu0 0.0
        %6985 = vmatmul.mubr.f32.gmra.mrb[0].mxu0 %v6907
        %v6986 = vpop.f32.mrb[0].mxu0
        %v6987 = vadd.f32 %v6901, %v6986
        %v6988 = vpop.f32.mrb[0].mxu0
        %6989 = vmatprep.mubr.f32.mxu0 0.0
        %6990 = vmatmul.mubr.f32.gmra.mrb[0].mxu0 %v6910
        %v6991 = vpop.f32.mrb[0].mxu0
        %v6992 = vadd.f32 %v6901, %v6991
        %v6993 = vpop.f32.mrb[0].mxu0
        %6994 = vmatprep.mubr.f32.mxu0 0.0
        %6995 = vmatmul.mubr.f32.gmra.mrb[0].mxu0 %v6913
        %v6996 = vpop.f32.mrb[0].mxu0
        %v6997 = vadd.f32 %v6901, %v6996
        %v6998 = vpop.f32.mrb[0].mxu0
        %6999 = vdwg.mxu0
        %v7000 = vmul.f32 %v6982, 0.5
        %v7001 = vmul.f32 %v6987, 0.5
        %v7002 = vmul.f32 %v6992, 0.5
        %v7003 = vmul.f32 %v6997, 0.5
        %v7004 = vmul.f32 %v6982, 0.044715
        %v7005 = vmul.f32 %v6987, 0.044715
        %v7006 = vmul.f32 %v6992, 0.044715
        %v7007 = vmul.f32 %v6997, 0.044715
        %v7008 = vmul.f32 %v7004, %v6982
        %v7009 = vmul.f32 %v7005, %v6987
        %v7010 = vmul.f32 %v7006, %v6992
        %v7011 = vmul.f32 %v7007, %v6997
        %v7012 = vmul.f32 %v7008, %v6982
        %v7013 = vmul.f32 %v7009, %v6987
        %v7014 = vmul.f32 %v7010, %v6992
        %v7015 = vmul.f32 %v7011, %v6997
        %v7016 = vadd.f32 %v6982, %v7012
        %v7017 = vadd.f32 %v6987, %v7013
        %v7018 = vadd.f32 %v6992, %v7014
        %v7019 = vadd.f32 %v6997, %v7015
        %v7020 = vmul.f32 %v7016, 0.7978846
        %v7021 = vmul.f32 %v7017, 0.7978846
        %v7022 = vmul.f32 %v7018, 0.7978846
        %v7023 = vmul.f32 %v7019, 0.7978846
        %v7024 = vtanh.pop %v7020
        %v7025 = vtanh.pop %v7021
        %v7026 = vtanh.pop %v7022
        %v7027 = vtanh.pop %v7023
        %v7028 = vadd.f32 %v7024, 1.0
        %v7029 = vadd.f32 %v7025, 1.0
        %v7030 = vadd.f32 %v7026, 1.0
        %v7031 = vadd.f32 %v7027, 1.0
        %v7032 = vmul.f32 %v7000, %v7028
        %v7033 = vmul.f32 %v7001, %v7029
        %v7034 = vmul.f32 %v7002, %v7030
        %v7035 = vmul.f32 %v7003, %v7031
        %v7037 = vsel %vm4352, %v7032, 0
        %v7040 = vsel %vm4352, %v7033, 0
        %v7043 = vsel %vm4352, %v7034, 0
        %v7046 = vsel %vm4352, %v7035, 0
        %7048 = vmatprep.subr.mxu0 0.0
        %7049 = vmatpush1.msra.mxu0 %v6816
        %7050 = vmatprep.subr.mxu0 0.0
        %7051 = vmatpush1.msra.mxu0 %v6817
        %7052 = vmatprep.subr.mxu0 0.0
        %7053 = vmatpush1.msra.mxu0 %v6818
        %7054 = vmatprep.subr.mxu0 0.0
        %7055 = vmatpush1.msra.mxu0 %v6819
        %7056 = vmatprep.subr.mxu0 0.0
        %7057 = vmatpush1.msra.mxu0 %v6820
        %7058 = vmatprep.subr.mxu0 0.0
        %7059 = vmatpush1.msra.mxu0 %v6821
        %7060 = vmatprep.subr.mxu0 0.0
        %7061 = vmatpush1.msra.mxu0 %v6822
        %7062 = vmatprep.subr.mxu0 0.0
        %7063 = vmatpush1.msra.mxu0 %v6823
        %7064 = vmatprep.subr.mxu0 0.0
        %7065 = vmatpush1.msra.mxu0 0.0
        %7066 = vmatprep.subr.mxu0 0.0
        %7067 = vmatpush1.msra.mxu0 0.0
        %7068 = vmatprep.subr.mxu0 0.0
        %7069 = vmatpush1.msra.mxu0 0.0
        %7070 = vmatprep.subr.mxu0 0.0
        %7071 = vmatpush1.msra.mxu0 0.0
        %7072 = vmatprep.subr.mxu0 0.0
        %7073 = vmatpush1.msra.mxu0 0.0
        %7074 = vmatprep.subr.mxu0 0.0
        %7075 = vmatpush1.msra.mxu0 0.0
        %7076 = vmatprep.subr.mxu0 0.0
        %7077 = vmatpush1.msra.mxu0 0.0
        %7078 = vmatprep.subr.mxu0 0.0
        %7079 = vmatpush1.msra.mxu0 0.0
        %7080 = vmatprep.subr.mxu0 0.0
        %7081 = vmatpush1.msra.mxu0 0.0
        %7082 = vmatprep.subr.mxu0 0.0
        %7083 = vmatpush1.msra.mxu0 0.0
        %7084 = vmatprep.subr.mxu0 0.0
        %7085 = vmatpush1.msra.mxu0 0.0
        %7086 = vmatprep.subr.mxu0 0.0
        %7087 = vmatpush1.msra.mxu0 0.0
        %7088 = vmatprep.subr.mxu0 0.0
        %7089 = vmatpush1.msra.mxu0 0.0
        %7090 = vmatprep.subr.mxu0 0.0
        %7091 = vmatpush1.msra.mxu0 0.0
        %7092 = vmatprep.subr.mxu0 0.0
        %7093 = vmatpush1.msra.mxu0 0.0
        %7094 = vmatprep.subr.mxu0 0.0
        %7095 = vmatpush1.msra.mxu0 0.0
        %7096 = vmatprep.subr.mxu0 0.0
        %7097 = vmatpush1.msra.mxu0 0.0
        %7098 = vmatprep.subr.mxu0 0.0
        %7099 = vmatpush1.msra.mxu0 0.0
        %7100 = vmatprep.subr.mxu0 0.0
        %7101 = vmatpush1.msra.mxu0 0.0
        %7102 = vmatprep.subr.mxu0 0.0
        %7103 = vmatpush1.msra.mxu0 0.0
        %7104 = vmatprep.subr.mxu0 0.0
        %7105 = vmatpush1.msra.mxu0 0.0
        %7106 = vmatprep.subr.mxu0 0.0
        %7107 = vmatpush1.msra.mxu0 0.0
        %7108 = vmatprep.subr.mxu0 0.0
        %7109 = vmatpush1.msra.mxu0 0.0
        %7110 = vmatprep.subr.mxu0 0.0
        %7111 = vmatpush1.msra.mxu0 0.0
        %7112 = vmatprep.mubr.f32.mxu0 0.0
        %7113 = vmatmul.mubr.f32.gmra.mrb[0].mxu0 %v7037
        %v7114 = vpop.f32.mrb[0].mxu0
        %v7115 = vadd.f32 0.0, %v7114
        %v7116 = vpop.f32.mrb[0].mxu0
        %7117 = vmatprep.mubr.f32.mxu0 0.0
        %7118 = vmatmul.mubr.f32.gmra.mrb[0].mxu0 %v7040
        %v7119 = vpop.f32.mrb[0].mxu0
        %v7120 = vadd.f32 0.0, %v7119
        %v7121 = vpop.f32.mrb[0].mxu0
        %7122 = vmatprep.mubr.f32.mxu0 0.0
        %7123 = vmatmul.mubr.f32.gmra.mrb[0].mxu0 %v7043
        %v7124 = vpop.f32.mrb[0].mxu0
        %v7125 = vadd.f32 0.0, %v7124
        %v7126 = vpop.f32.mrb[0].mxu0
        %7127 = vmatprep.mubr.f32.mxu0 0.0
        %7128 = vmatmul.mubr.f32.gmra.mrb[0].mxu0 %v7046
        %v7129 = vpop.f32.mrb[0].mxu0
        %v7130 = vadd.f32 0.0, %v7129
        %v7131 = vpop.f32.mrb[0].mxu0
        %7132 = vdwg.mxu0
        %v7133 = vadd.f32 %v6805, %v7115
        %v7134 = vadd.f32 %v6806, %v7120
        %v7135 = vadd.f32 %v6807, %v7125
        %v7136 = vadd.f32 %v6808, %v7130
        %v7138 = vlaneseq
        %v7139 = vshrl.u32 %v7138, 7
        %v7140 = vsub.s32 0, %v7139
        %v7141 = vrot.slane %v6824, %v7140
        %v7143 = vadd.f32 %v7133, %v7141
        %v7144 = vadd.f32 %v7134, %v7141
        %v7145 = vadd.f32 %v7135, %v7141
        %v7146 = vadd.f32 %v7136, %v7141
        %7147 = vst.msk [vmem:[%s870] sm:$0xff] %vm891, %v7143
        %7148 = vst.msk [vmem:[%s870 + $0x8] sm:$0xff] %vm891, %v7144
        %7149 = vst.msk [vmem:[%s870 + $0x10] sm:$0xff] %vm891, %v7145
        %7150 = vst.msk [vmem:[%s870 + $0x18] sm:$0xff] %vm891, %v7146
        %s7151 = sand.u32 %s540, 1
        %s7152 = scalar_lea.sflag [#allocation5], %s7151
        %s7153 = sand.u32 %s540, 1
        %s7154 = smul.addr %s7153, 32
        %s7155 = scalar_lea.vmem [#allocation24], %s7154
        // Predicated region
        $region165: #{tpu_custom_call.1} parent=111 // pred_check
          %p7156 = pneg %p550
        $region166: #{tpu_custom_call.1} parent=111 // pred_check_branch
          %7158 = sbr.rel (%p7156) target = $region168
        $region167: #{tpu_custom_call.1} parent=111 // pred_region
          %s7160 = ssub.s32 512, 512
          %7161 = vsyncadd %s7152, %s7160
          %s7162 = smul.addr %s44, 4
          %s7163 = smul.addr %s7162, 128
          %s7164 = scalar_lea.hbm %s23, %s7163
          %s7165 = sshll.u32 %s7155, 4
          %s7166 = int_to_ptr.vmem [resolvable:$true] %s7165
          %7171 = dma.vmem_to_hbm [thread:$0]  %s7166, 512, %s7164, %s7152, 128, 128, 8
        $region168: #{tpu_custom_call.1} parent=111 // pred_fallthru
          _
      $region112: #{tpu_custom_call.1} parent=5 // pred_fallthru
        _
      %p7172 = scmp.le.s32.totalorder 2, %s39
      // Predicated region
      $region169: #{tpu_custom_call.1} parent=5 // pred_check
        %p7173 = pneg %p7172
      $region170: #{tpu_custom_call.1} parent=5 // pred_check_branch
        %7175 = sbr.rel (%p7173) target = $region172
      $region171: #{tpu_custom_call.1} parent=5 // pred_region
        %s7176 = ssub.s32 %s39, 2
        // Predicated region
        $region173: #{tpu_custom_call.1} parent=171 // pred_check
          %p7177 = pneg %p556
        $region174: #{tpu_custom_call.1} parent=171 // pred_check_branch
          %7179 = sbr.rel (%p7177) target = $region176
        $region175: #{tpu_custom_call.1} parent=171 // pred_region
          %s7180 = sand.u32 %s541, 1
          %s7181 = scalar_lea.sflag [#allocation5], %s7180
          %s7182 = sand.u32 %s541, 1
          %s7183 = smul.addr %s7182, 32
          %s7184 = scalar_lea.vmem [#allocation24], %s7183
          %7185 = dma.done %s7181, 512
        $region176: #{tpu_custom_call.1} parent=171 // pred_fallthru
          _
      $region172: #{tpu_custom_call.1} parent=5 // pred_fallthru
        _
    $region6: #{tpu_custom_call.1} parent=1 // loop_footer
      %s43 = sadd.s32 1, %s39
    $region7: #{tpu_custom_call.1} parent=1 // loop_footer_branch
      %38 = sbr.rel target = $region3
    $region8: #{tpu_custom_call.1} parent=1 // loop_exit
      _
    %7186 = vsyncpa [#allocation4], 1
    %s7187 = scalar_lea.sflag [#allocation4], 1
    %7188 = vsyncpa %s7187, 1
    %7189 = vsyncpa [#allocation7], 1
    %7190 = vsyncpa [#allocation10], 1
    %7191 = vsyncpa [#allocation13], 1
    %7192 = vsyncpa [#allocation16], 1
    %7193 = vsyncpa [#allocation19], 1
    %7194 = vsyncpa [#allocation22], 1
    %7195 = vsyncpa [#allocation5], 1
    %s7196 = scalar_lea.sflag [#allocation5], 1
    %7197 = vsyncpa %s7196, 1

</llo_original>
